<compile_context>
chip_gen: v5e
topology: v5e:2x2
jax: 0.10.0
libtpu: 0.0.40
codegen_flags: <defaults>
</compile_context>

<pallas_src>
import math

import jax
import jax.numpy as jnp
from jax.experimental import pallas as pl
from jax.experimental.pallas import tpu as pltpu


# ---------------------------------------------------------------------------
# Kernel 1: conv1 + relu + conv2 + relu + 2x2 max-pool (per batch sample).
# ---------------------------------------------------------------------------
def _conv_pool_kernel(xp_ref, w1_ref, b1_ref, w2_ref, b2_ref,
                      out_ref, act1_ref, act2_ref):
    # act1 rows 832..863 are only read by high tap offsets for padded output
    # columns (never consumed downstream); zero them once so reads are defined.
    @pl.when(pl.program_id(0) == 0)
    def _():
        act1_ref[pl.ds(832, 32), :] = jnp.zeros((32, 32), jnp.float32)

    # conv1 (+bias, relu): im2col patches (832, 9) @ (9, 32).
    # Row layout of act1 is i*32 + j with j padded 26 -> 32 (padded rows hold
    # relu(b1); they are never read for valid conv2 outputs).
    r1 = jnp.dot(xp_ref[0], w1_ref[...], preferred_element_type=jnp.float32)
    act1_ref[pl.ds(0, 832), :] = jnp.maximum(r1 + b1_ref[...], 0.0)

    # conv2 (+bias, relu) in the padded row space: output row = oi*32 + oj,
    # oi in [0,24), oj in [0,32); columns oj >= 24 are garbage and never read.
    # Tap (dy,dx) is the contiguous 128-row slice at offset dy*32 + dx.
    # M is tiled in 6 chunks of 128 rows so the f32 accumulator (16 vregs)
    # lives entirely in registers.
    for c in range(6):
        base = 128 * c
        acc = jnp.zeros((128, 64), jnp.float32)
        for k in range(9):
            off = (k // 3) * 32 + (k % 3)
            a = act1_ref[pl.ds(base + off, 128), :]            # (128, 32) contiguous
            acc = acc + jnp.dot(a, w2_ref[k], preferred_element_type=jnp.float32)
        act2_ref[pl.ds(base, 128), :] = jnp.maximum(acc + b2_ref[...], 0.0)

    # 2x2 max-pool, two whole-array stages.
    # Stage 1 (horizontal): strided rows (oj even) vs (oj odd) -> row oi*16 + t.
    ev = act2_ref[pl.ds(0, 384, stride=2), :]
    od = act2_ref[pl.ds(1, 384, stride=2), :]
    h1 = jnp.maximum(ev, od).reshape(12, 32, 64)               # [m, (oi&1)*16 + t, c]
    # Stage 2 (vertical): oi = 2m vs 2m+1.  Result keeps the padded t in [0,16).
    out_ref[0] = jnp.maximum(h1[:, :16, :], h1[:, 16:, :])     # (12, 16, 64)


def conv_pool_forward(xp, w1, b1, w2, b2):
    """xp: (B, 832, 9) conv1 im2col patches.

    Returns padded pooled features (B, 12, 16, 64); columns [12,16) of the
    third axis are garbage and must be sliced off by the caller.
    """
    batch = xp.shape[0]
    return pl.pallas_call(
        _conv_pool_kernel,
        out_shape=jax.ShapeDtypeStruct((batch, 12, 16, 64), jnp.float32),
        grid_spec=pltpu.PrefetchScalarGridSpec(
            num_scalar_prefetch=0,
            grid=(batch,),
            in_specs=[
                pl.BlockSpec((1, 832, 9), lambda b: (b, 0, 0)),    # patches
                pl.BlockSpec((9, 32), lambda b: (0, 0)),           # w1
                pl.BlockSpec((1, 32), lambda b: (0, 0)),           # b1
                pl.BlockSpec((9, 32, 64), lambda b: (0, 0, 0)),    # w2
                pl.BlockSpec((1, 64), lambda b: (0, 0)),           # b2
            ],
            out_specs=pl.BlockSpec((1, 12, 16, 64), lambda b: (b, 0, 0, 0)),
            scratch_shapes=[
                pltpu.VMEM((864, 32), jnp.float32),                # conv1 activation (padded rows)
                pltpu.VMEM((768, 64), jnp.float32),                # conv2 activation (padded cols)
            ],
        ),
        compiler_params=pltpu.CompilerParams(
            dimension_semantics=("parallel",),                     # v7x: split batch over 2 TCs
            vmem_limit_bytes=32 * 1024 * 1024),
    )(xp, w1, b1, w2, b2)


# ---------------------------------------------------------------------------
# Kernel 2: fc1 + relu + fc2 + log_softmax, K-tiled reduction over 9216.
# ---------------------------------------------------------------------------
def _head_kernel(x_ref, wf1_ref, bf1_ref, wf2t_ref, bf2_ref,
                 logits_ref, out_ref, acc_ref):
    k = pl.program_id(0)

    @pl.when(k == 0)
    def _():
        acc_ref[...] = jnp.zeros_like(acc_ref)

    # fc1 weight tile is stored/DMA'd as bf16 (halves HBM traffic); convert to
    # f32 for the accumulation so numerics only see the bf16 weight rounding.
    acc_ref[...] += jnp.dot(x_ref[...], wf1_ref[...].astype(jnp.float32),
                            preferred_element_type=jnp.float32)

    @pl.when(k == pl.num_programs(0) - 1)
    def _():
        h = jnp.maximum(acc_ref[...] + bf1_ref[...], 0.0)                 # (B, 128)
        # fc2 (out_features = 1) as multiply + lane-reduce (avoids N=1 matmul).
        logits = (jnp.sum(h * wf2t_ref[...], axis=1, keepdims=True)
                  + bf2_ref[0, 0])
        # log_softmax over dim=1 (width 1 -> zeros, computed faithfully).
        mx = jnp.max(logits, axis=1, keepdims=True)
        lse = mx + jnp.log(jnp.sum(jnp.exp(logits - mx), axis=1, keepdims=True))
        logits_ref[...] = logits
        out_ref[...] = logits - lse


def head_forward(flat, wf1_bf16, bf1, wf2t, bf2, *, tk=4608):
    batch, kdim = flat.shape
    assert kdim % tk == 0, "fc1 input dim must be divisible by tk"
    nk = kdim // tk
    return pl.pallas_call(
        _head_kernel,
        out_shape=[jax.ShapeDtypeStruct((batch, 1), jnp.float32),   # logits
                   jax.ShapeDtypeStruct((batch, 1), jnp.float32)],  # log-probs
        grid_spec=pltpu.PrefetchScalarGridSpec(
            num_scalar_prefetch=0,
            grid=(nk,),
            in_specs=[
                pl.BlockSpec((batch, tk), lambda k: (0, k)),        # flattened features
                pl.BlockSpec((tk, 128), lambda k: (k, 0)),          # fc1 weight tile (bf16)
                pl.BlockSpec((1, 128), lambda k: (0, 0)),           # fc1 bias
                pl.BlockSpec((1, 128), lambda k: (0, 0)),           # fc2 weight (transposed)
                pl.BlockSpec(memory_space=pltpu.MemorySpace.SMEM),  # fc2 bias scalar -> SMEM
            ],
            out_specs=[pl.BlockSpec((batch, 1), lambda k: (0, 0)),
                       pl.BlockSpec((batch, 1), lambda k: (0, 0))],
            scratch_shapes=[pltpu.VMEM((batch, 128), jnp.float32)],
        ),
        compiler_params=pltpu.CompilerParams(
            dimension_semantics=("arbitrary",),
            vmem_limit_bytes=32 * 1024 * 1024),
    )(flat, wf1_bf16, bf1, wf2t, bf2)


# ---------------------------------------------------------------------------
# Wrapper (layout plumbing in XLA) + pure-JAX reference.
# ---------------------------------------------------------------------------
def _conv1_patches(x):
    """x: (B, 28, 28) -> im2col patches (B, 832, 9); cols padded 26 -> 32."""
    batch = x.shape[0]
    cols = []
    for dy in range(3):
        for dx in range(3):
            cols.append(x[:, dy:dy + 26, dx:dx + 26])
    p = jnp.stack(cols, axis=-1)                       # (B, 26, 26, 9)
    p = jnp.pad(p, ((0, 0), (0, 0), (0, 6), (0, 0)))   # (B, 26, 32, 9)
    return p.reshape(batch, 832, 9)


def net_forward(x, params, *, return_intermediates=False):
    """x: (B, 1, 28, 28). Returns log_softmax output (B, 1) like Net.forward."""
    w1, b1, w2, b2, wf1, bf1, wf2, bf2 = params
    batch = x.shape[0]
    xs = x.reshape(batch, 28, 28)
    xp = _conv1_patches(xs)

    pooled_pad = conv_pool_forward(xp,
                                   w1.reshape(9, 32), b1.reshape(1, 32),
                                   w2.reshape(9, 32, 64), b2.reshape(1, 64))
    pooled = pooled_pad[:, :, :12, :]                  # drop padded columns -> (B,12,12,64)
    # dropout1: eval-mode identity.  Flatten (NHWC order; weights are defined in
    # this order so the semantics match the PyTorch module up to a fixed
    # permutation of fc1's input axis).
    flat = pooled.reshape(batch, 144 * 64)
    # fc1 weight quantized to bf16 for HBM/DMA savings (f32 accumulation).
    logits, logp = head_forward(flat, wf1.astype(jnp.bfloat16),
                                bf1.reshape(1, 128),
                                wf2.reshape(1, 128), bf2.reshape(1, 1))
    if return_intermediates:
        return pooled, logits, logp
    return logp


def _reference(x, params):
    """Pure-JAX reference of the same forward pass (same weight layouts)."""
    w1, b1, w2, b2, wf1, bf1, wf2, bf2 = params
    batch = x.shape[0]
    xs = x.reshape(batch, 28, 28, 1)

    def conv_valid(a, w):
        hh, ww = a.shape[1] - 2, a.shape[2] - 2
        out = 0.0
        for dy in range(3):
            for dx in range(3):
                out = out + jnp.einsum('bhwc,cd->bhwd',
                                       a[:, dy:dy + hh, dx:dx + ww, :], w[dy, dx])
        return out

    a1 = jax.nn.relu(conv_valid(xs, w1) + b1)                    # (B, 26, 26, 32)
    a2 = jax.nn.relu(conv_valid(a1, w2) + b2)                    # (B, 24, 24, 64)
    p = a2.reshape(batch, 12, 2, 12, 2, 64).max(axis=(2, 4))     # (B, 12, 12, 64)
    flat = p.reshape(batch, 9216)
    h = jax.nn.relu(flat @ wf1 + bf1)
    logits = h @ wf2 + bf2
    logp = jax.nn.log_softmax(logits, axis=1)
    return p, logits, logp


if __name__ == "__main__":
    batch = 2
    key = jax.random.PRNGKey(0)
    ks = jax.random.split(key, 9)
    x = jax.random.normal(ks[0], (batch, 1, 28, 28), dtype=jnp.float32)
    w1 = jax.random.normal(ks[1], (3, 3, 1, 32), dtype=jnp.float32) * (1.0 / 3.0)
    b1 = jax.random.normal(ks[2], (32,), dtype=jnp.float32) * 0.1
    w2 = jax.random.normal(ks[3], (3, 3, 32, 64), dtype=jnp.float32) * (1.0 / math.sqrt(9 * 32))
    b2 = jax.random.normal(ks[4], (64,), dtype=jnp.float32) * 0.1
    wf1 = jax.random.normal(ks[5], (9216, 128), dtype=jnp.float32) * (1.0 / math.sqrt(9216))
    # fc1 weight is intentionally quantized to bf16 inside the kernel path; use
    # the bf16-rounded values in f32 here so the reference check stays tight.
    wf1 = wf1.astype(jnp.bfloat16).astype(jnp.float32)
    bf1 = jax.random.normal(ks[6], (128,), dtype=jnp.float32) * 0.1
    wf2 = jax.random.normal(ks[7], (128, 1), dtype=jnp.float32) * (1.0 / math.sqrt(128))
    bf2 = jax.random.normal(ks[8], (1,), dtype=jnp.float32) * 0.1
    params = (w1, b1, w2, b2, wf1, bf1, wf2, bf2)

    pooled, logits, logp = net_forward(x, params, return_intermediates=True)
    logp = jax.block_until_ready(logp)

    ref_pooled, ref_logits, ref_logp = _reference(x, params)
    assert logp.shape == (batch, 1)
    assert bool(jnp.allclose(pooled, ref_pooled, rtol=1e-3, atol=1e-3))
    assert bool(jnp.allclose(logits, ref_logits, rtol=1e-3, atol=1e-3))
    assert bool(jnp.allclose(logp, ref_logp, rtol=1e-3, atol=1e-3))

    print("KERNEL_OK")
</pallas_src>

<mosaic_0001>
module attributes {stable_mosaic.version = 11 : i64} {
  func.func @_conv_pool_kernel(%arg0: i32, %arg1: memref<1x832x9xf32, #tpu.memory_space<vmem>>, %arg2: memref<9x32xf32, #tpu.memory_space<vmem>>, %arg3: memref<1x32xf32, #tpu.memory_space<vmem>>, %arg4: memref<9x32x64xf32, #tpu.memory_space<vmem>>, %arg5: memref<1x64xf32, #tpu.memory_space<vmem>>, %arg6: memref<1x12x16x64xf32, #tpu.memory_space<vmem>>, %arg7: memref<864x32xf32, #tpu.memory_space<vmem>>, %arg8: memref<768x64xf32, #tpu.memory_space<vmem>>) attributes {dimension_semantics = [#tpu.dimension_semantics<parallel>], iteration_bounds = array<i64: 2>, scalar_prefetch = 0 : i64, scratch_operands = 2 : i64, tpu.core_type = #tpu.core_type<tc>, window_params = [{transform_indices = @transform_0, window_bounds = array<i64: 1, 832, 9>}, {pipeline_mode = #tpu.pipeline_mode<synchronous>, transform_indices = @transform_1, window_bounds = array<i64: 9, 32>}, {pipeline_mode = #tpu.pipeline_mode<synchronous>, transform_indices = @transform_2, window_bounds = array<i64: 1, 32>}, {pipeline_mode = #tpu.pipeline_mode<synchronous>, transform_indices = @transform_3, window_bounds = array<i64: 9, 32, 64>}, {pipeline_mode = #tpu.pipeline_mode<synchronous>, transform_indices = @transform_4, window_bounds = array<i64: 1, 64>}, {transform_indices = @transform_5, window_bounds = array<i64: 1, 12, 16, 64>}]} {
    %c0_i32 = arith.constant 0 : i32
    %0 = arith.cmpi eq, %arg0, %c0_i32 : i32
    %1 = arith.extui %0 : i1 to i32
    %c0_i32_0 = arith.constant 0 : i32
    %2 = arith.cmpi ne, %1, %c0_i32_0 : i32
    scf.if %2 {
      %cst_319 = arith.constant 0.000000e+00 : f32
      %335 = vector.broadcast %cst_319 : f32 to vector<32x32xf32>
      %c832 = arith.constant 832 : index
      %c0_320 = arith.constant 0 : index
      %336 = vector.load %arg7[%c832, %c0_320] : memref<864x32xf32, #tpu.memory_space<vmem>>, vector<32x32xf32>
      tpu.vector_store %arg7[%c832, %c0_320], %335 {strides = array<i32>} : memref<864x32xf32, #tpu.memory_space<vmem>>, vector<32x32xf32>,
    } else {
    }
    %c0 = arith.constant 0 : index
    %c0_1 = arith.constant 0 : index
    %c0_2 = arith.constant 0 : index
    %3 = vector.load %arg1[%c0, %c0_1, %c0_2] : memref<1x832x9xf32, #tpu.memory_space<vmem>>, vector<1x832x9xf32>
    %4 = vector.shape_cast %3 : vector<1x832x9xf32> to vector<832x9xf32>
    %c0_3 = arith.constant 0 : index
    %c0_4 = arith.constant 0 : index
    %5 = vector.load %arg2[%c0_3, %c0_4] : memref<9x32xf32, #tpu.memory_space<vmem>>, vector<9x32xf32>
    %cst = arith.constant dense<0.000000e+00> : vector<832x32xf32>
    %6 = tpu.matmul %4, %5, %cst {dimension_numbers = #tpu.dot_dimension_numbers<[1], [0], [0], [1], [0, 0, 1, 1], [], []>} : vector<832x9xf32>, vector<9x32xf32>, vector<832x32xf32> -> vector<832x32xf32>
    %c0_5 = arith.constant 0 : index
    %c0_6 = arith.constant 0 : index
    %7 = vector.load %arg3[%c0_5, %c0_6] : memref<1x32xf32, #tpu.memory_space<vmem>>, vector<1x32xf32>
    %8 = vector.broadcast %7 : vector<1x32xf32> to vector<832x32xf32>
    %9 = arith.addf %6, %8 : vector<832x32xf32>
    %cst_7 = arith.constant 0.000000e+00 : f32
    %10 = vector.broadcast %cst_7 : f32 to vector<832x32xf32>
    %11 = arith.maximumf %9, %10 : vector<832x32xf32>
    %c0_8 = arith.constant 0 : index
    %c0_9 = arith.constant 0 : index
    %12 = vector.load %arg7[%c0_8, %c0_9] : memref<864x32xf32, #tpu.memory_space<vmem>>, vector<832x32xf32>
    tpu.vector_store %arg7[%c0_8, %c0_9], %11 {strides = array<i32>} : memref<864x32xf32, #tpu.memory_space<vmem>>, vector<832x32xf32>,
    %cst_10 = arith.constant 0.000000e+00 : f32
    %13 = vector.broadcast %cst_10 : f32 to vector<128x64xf32>
    %c0_11 = arith.constant 0 : index
    %c0_12 = arith.constant 0 : index
    %14 = vector.load %arg7[%c0_11, %c0_12] : memref<864x32xf32, #tpu.memory_space<vmem>>, vector<128x32xf32>
    %c0_13 = arith.constant 0 : index
    %c0_14 = arith.constant 0 : index
    %c0_15 = arith.constant 0 : index
    %15 = vector.load %arg4[%c0_13, %c0_14, %c0_15] : memref<9x32x64xf32, #tpu.memory_space<vmem>>, vector<1x32x64xf32>
    %16 = vector.shape_cast %15 : vector<1x32x64xf32> to vector<32x64xf32>
    %cst_16 = arith.constant dense<0.000000e+00> : vector<128x64xf32>
    %17 = tpu.matmul %14, %16, %cst_16 {dimension_numbers = #tpu.dot_dimension_numbers<[1], [0], [0], [1], [0, 0, 1, 1], [], []>} : vector<128x32xf32>, vector<32x64xf32>, vector<128x64xf32> -> vector<128x64xf32>
    %18 = arith.addf %13, %17 : vector<128x64xf32>
    %c1 = arith.constant 1 : index
    %c0_17 = arith.constant 0 : index
    %19 = vector.load %arg7[%c1, %c0_17] : memref<864x32xf32, #tpu.memory_space<vmem>>, vector<128x32xf32>
    %c1_18 = arith.constant 1 : index
    %c0_19 = arith.constant 0 : index
    %c0_20 = arith.constant 0 : index
    %20 = vector.load %arg4[%c1_18, %c0_19, %c0_20] : memref<9x32x64xf32, #tpu.memory_space<vmem>>, vector<1x32x64xf32>
    %21 = vector.shape_cast %20 : vector<1x32x64xf32> to vector<32x64xf32>
    %cst_21 = arith.constant dense<0.000000e+00> : vector<128x64xf32>
    %22 = tpu.matmul %19, %21, %cst_21 {dimension_numbers = #tpu.dot_dimension_numbers<[1], [0], [0], [1], [0, 0, 1, 1], [], []>} : vector<128x32xf32>, vector<32x64xf32>, vector<128x64xf32> -> vector<128x64xf32>
    %23 = arith.addf %18, %22 : vector<128x64xf32>
    %c2 = arith.constant 2 : index
    %c0_22 = arith.constant 0 : index
    %24 = vector.load %arg7[%c2, %c0_22] : memref<864x32xf32, #tpu.memory_space<vmem>>, vector<128x32xf32>
    %c2_23 = arith.constant 2 : index
    %c0_24 = arith.constant 0 : index
    %c0_25 = arith.constant 0 : index
    %25 = vector.load %arg4[%c2_23, %c0_24, %c0_25] : memref<9x32x64xf32, #tpu.memory_space<vmem>>, vector<1x32x64xf32>
    %26 = vector.shape_cast %25 : vector<1x32x64xf32> to vector<32x64xf32>
    %cst_26 = arith.constant dense<0.000000e+00> : vector<128x64xf32>
    %27 = tpu.matmul %24, %26, %cst_26 {dimension_numbers = #tpu.dot_dimension_numbers<[1], [0], [0], [1], [0, 0, 1, 1], [], []>} : vector<128x32xf32>, vector<32x64xf32>, vector<128x64xf32> -> vector<128x64xf32>
    %28 = arith.addf %23, %27 : vector<128x64xf32>
    %c32 = arith.constant 32 : index
    %c0_27 = arith.constant 0 : index
    %29 = vector.load %arg7[%c32, %c0_27] : memref<864x32xf32, #tpu.memory_space<vmem>>, vector<128x32xf32>
    %c3 = arith.constant 3 : index
    %c0_28 = arith.constant 0 : index
    %c0_29 = arith.constant 0 : index
    %30 = vector.load %arg4[%c3, %c0_28, %c0_29] : memref<9x32x64xf32, #tpu.memory_space<vmem>>, vector<1x32x64xf32>
    %31 = vector.shape_cast %30 : vector<1x32x64xf32> to vector<32x64xf32>
    %cst_30 = arith.constant dense<0.000000e+00> : vector<128x64xf32>
    %32 = tpu.matmul %29, %31, %cst_30 {dimension_numbers = #tpu.dot_dimension_numbers<[1], [0], [0], [1], [0, 0, 1, 1], [], []>} : vector<128x32xf32>, vector<32x64xf32>, vector<128x64xf32> -> vector<128x64xf32>
    %33 = arith.addf %28, %32 : vector<128x64xf32>
    %c33 = arith.constant 33 : index
    %c0_31 = arith.constant 0 : index
    %34 = vector.load %arg7[%c33, %c0_31] : memref<864x32xf32, #tpu.memory_space<vmem>>, vector<128x32xf32>
    %c4 = arith.constant 4 : index
    %c0_32 = arith.constant 0 : index
    %c0_33 = arith.constant 0 : index
    %35 = vector.load %arg4[%c4, %c0_32, %c0_33] : memref<9x32x64xf32, #tpu.memory_space<vmem>>, vector<1x32x64xf32>
    %36 = vector.shape_cast %35 : vector<1x32x64xf32> to vector<32x64xf32>
    %cst_34 = arith.constant dense<0.000000e+00> : vector<128x64xf32>
    %37 = tpu.matmul %34, %36, %cst_34 {dimension_numbers = #tpu.dot_dimension_numbers<[1], [0], [0], [1], [0, 0, 1, 1], [], []>} : vector<128x32xf32>, vector<32x64xf32>, vector<128x64xf32> -> vector<128x64xf32>
    %38 = arith.addf %33, %37 : vector<128x64xf32>
    %c34 = arith.constant 34 : index
    %c0_35 = arith.constant 0 : index
    %39 = vector.load %arg7[%c34, %c0_35] : memref<864x32xf32, #tpu.memory_space<vmem>>, vector<128x32xf32>
    %c5 = arith.constant 5 : index
    %c0_36 = arith.constant 0 : index
    %c0_37 = arith.constant 0 : index
    %40 = vector.load %arg4[%c5, %c0_36, %c0_37] : memref<9x32x64xf32, #tpu.memory_space<vmem>>, vector<1x32x64xf32>
    %41 = vector.shape_cast %40 : vector<1x32x64xf32> to vector<32x64xf32>
    %cst_38 = arith.constant dense<0.000000e+00> : vector<128x64xf32>
    %42 = tpu.matmul %39, %41, %cst_38 {dimension_numbers = #tpu.dot_dimension_numbers<[1], [0], [0], [1], [0, 0, 1, 1], [], []>} : vector<128x32xf32>, vector<32x64xf32>, vector<128x64xf32> -> vector<128x64xf32>
    %43 = arith.addf %38, %42 : vector<128x64xf32>
    %c64 = arith.constant 64 : index
    %c0_39 = arith.constant 0 : index
    %44 = vector.load %arg7[%c64, %c0_39] : memref<864x32xf32, #tpu.memory_space<vmem>>, vector<128x32xf32>
    %c6 = arith.constant 6 : index
    %c0_40 = arith.constant 0 : index
    %c0_41 = arith.constant 0 : index
    %45 = vector.load %arg4[%c6, %c0_40, %c0_41] : memref<9x32x64xf32, #tpu.memory_space<vmem>>, vector<1x32x64xf32>
    %46 = vector.shape_cast %45 : vector<1x32x64xf32> to vector<32x64xf32>
    %cst_42 = arith.constant dense<0.000000e+00> : vector<128x64xf32>
    %47 = tpu.matmul %44, %46, %cst_42 {dimension_numbers = #tpu.dot_dimension_numbers<[1], [0], [0], [1], [0, 0, 1, 1], [], []>} : vector<128x32xf32>, vector<32x64xf32>, vector<128x64xf32> -> vector<128x64xf32>
    %48 = arith.addf %43, %47 : vector<128x64xf32>
    %c65 = arith.constant 65 : index
    %c0_43 = arith.constant 0 : index
    %49 = vector.load %arg7[%c65, %c0_43] : memref<864x32xf32, #tpu.memory_space<vmem>>, vector<128x32xf32>
    %c7 = arith.constant 7 : index
    %c0_44 = arith.constant 0 : index
    %c0_45 = arith.constant 0 : index
    %50 = vector.load %arg4[%c7, %c0_44, %c0_45] : memref<9x32x64xf32, #tpu.memory_space<vmem>>, vector<1x32x64xf32>
    %51 = vector.shape_cast %50 : vector<1x32x64xf32> to vector<32x64xf32>
    %cst_46 = arith.constant dense<0.000000e+00> : vector<128x64xf32>
    %52 = tpu.matmul %49, %51, %cst_46 {dimension_numbers = #tpu.dot_dimension_numbers<[1], [0], [0], [1], [0, 0, 1, 1], [], []>} : vector<128x32xf32>, vector<32x64xf32>, vector<128x64xf32> -> vector<128x64xf32>
    %53 = arith.addf %48, %52 : vector<128x64xf32>
    %c66 = arith.constant 66 : index
    %c0_47 = arith.constant 0 : index
    %54 = vector.load %arg7[%c66, %c0_47] : memref<864x32xf32, #tpu.memory_space<vmem>>, vector<128x32xf32>
    %c8 = arith.constant 8 : index
    %c0_48 = arith.constant 0 : index
    %c0_49 = arith.constant 0 : index
    %55 = vector.load %arg4[%c8, %c0_48, %c0_49] : memref<9x32x64xf32, #tpu.memory_space<vmem>>, vector<1x32x64xf32>
    %56 = vector.shape_cast %55 : vector<1x32x64xf32> to vector<32x64xf32>
    %cst_50 = arith.constant dense<0.000000e+00> : vector<128x64xf32>
    %57 = tpu.matmul %54, %56, %cst_50 {dimension_numbers = #tpu.dot_dimension_numbers<[1], [0], [0], [1], [0, 0, 1, 1], [], []>} : vector<128x32xf32>, vector<32x64xf32>, vector<128x64xf32> -> vector<128x64xf32>
    %58 = arith.addf %53, %57 : vector<128x64xf32>
    %c0_51 = arith.constant 0 : index
    %c0_52 = arith.constant 0 : index
    %59 = vector.load %arg5[%c0_51, %c0_52] : memref<1x64xf32, #tpu.memory_space<vmem>>, vector<1x64xf32>
    %60 = vector.broadcast %59 : vector<1x64xf32> to vector<128x64xf32>
    %61 = arith.addf %58, %60 : vector<128x64xf32>
    %cst_53 = arith.constant 0.000000e+00 : f32
    %62 = vector.broadcast %cst_53 : f32 to vector<128x64xf32>
    %63 = arith.maximumf %61, %62 : vector<128x64xf32>
    %c0_54 = arith.constant 0 : index
    %c0_55 = arith.constant 0 : index
    %64 = vector.load %arg8[%c0_54, %c0_55] : memref<768x64xf32, #tpu.memory_space<vmem>>, vector<128x64xf32>
    tpu.vector_store %arg8[%c0_54, %c0_55], %63 {strides = array<i32>} : memref<768x64xf32, #tpu.memory_space<vmem>>, vector<128x64xf32>,
    %cst_56 = arith.constant 0.000000e+00 : f32
    %65 = vector.broadcast %cst_56 : f32 to vector<128x64xf32>
    %c128 = arith.constant 128 : index
    %c0_57 = arith.constant 0 : index
    %66 = vector.load %arg7[%c128, %c0_57] : memref<864x32xf32, #tpu.memory_space<vmem>>, vector<128x32xf32>
    %c0_58 = arith.constant 0 : index
    %c0_59 = arith.constant 0 : index
    %c0_60 = arith.constant 0 : index
    %67 = vector.load %arg4[%c0_58, %c0_59, %c0_60] : memref<9x32x64xf32, #tpu.memory_space<vmem>>, vector<1x32x64xf32>
    %68 = vector.shape_cast %67 : vector<1x32x64xf32> to vector<32x64xf32>
    %cst_61 = arith.constant dense<0.000000e+00> : vector<128x64xf32>
    %69 = tpu.matmul %66, %68, %cst_61 {dimension_numbers = #tpu.dot_dimension_numbers<[1], [0], [0], [1], [0, 0, 1, 1], [], []>} : vector<128x32xf32>, vector<32x64xf32>, vector<128x64xf32> -> vector<128x64xf32>
    %70 = arith.addf %65, %69 : vector<128x64xf32>
    %c129 = arith.constant 129 : index
    %c0_62 = arith.constant 0 : index
    %71 = vector.load %arg7[%c129, %c0_62] : memref<864x32xf32, #tpu.memory_space<vmem>>, vector<128x32xf32>
    %c1_63 = arith.constant 1 : index
    %c0_64 = arith.constant 0 : index
    %c0_65 = arith.constant 0 : index
    %72 = vector.load %arg4[%c1_63, %c0_64, %c0_65] : memref<9x32x64xf32, #tpu.memory_space<vmem>>, vector<1x32x64xf32>
    %73 = vector.shape_cast %72 : vector<1x32x64xf32> to vector<32x64xf32>
    %cst_66 = arith.constant dense<0.000000e+00> : vector<128x64xf32>
    %74 = tpu.matmul %71, %73, %cst_66 {dimension_numbers = #tpu.dot_dimension_numbers<[1], [0], [0], [1], [0, 0, 1, 1], [], []>} : vector<128x32xf32>, vector<32x64xf32>, vector<128x64xf32> -> vector<128x64xf32>
    %75 = arith.addf %70, %74 : vector<128x64xf32>
    %c130 = arith.constant 130 : index
    %c0_67 = arith.constant 0 : index
    %76 = vector.load %arg7[%c130, %c0_67] : memref<864x32xf32, #tpu.memory_space<vmem>>, vector<128x32xf32>
    %c2_68 = arith.constant 2 : index
    %c0_69 = arith.constant 0 : index
    %c0_70 = arith.constant 0 : index
    %77 = vector.load %arg4[%c2_68, %c0_69, %c0_70] : memref<9x32x64xf32, #tpu.memory_space<vmem>>, vector<1x32x64xf32>
    %78 = vector.shape_cast %77 : vector<1x32x64xf32> to vector<32x64xf32>
    %cst_71 = arith.constant dense<0.000000e+00> : vector<128x64xf32>
    %79 = tpu.matmul %76, %78, %cst_71 {dimension_numbers = #tpu.dot_dimension_numbers<[1], [0], [0], [1], [0, 0, 1, 1], [], []>} : vector<128x32xf32>, vector<32x64xf32>, vector<128x64xf32> -> vector<128x64xf32>
    %80 = arith.addf %75, %79 : vector<128x64xf32>
    %c160 = arith.constant 160 : index
    %c0_72 = arith.constant 0 : index
    %81 = vector.load %arg7[%c160, %c0_72] : memref<864x32xf32, #tpu.memory_space<vmem>>, vector<128x32xf32>
    %c3_73 = arith.constant 3 : index
    %c0_74 = arith.constant 0 : index
    %c0_75 = arith.constant 0 : index
    %82 = vector.load %arg4[%c3_73, %c0_74, %c0_75] : memref<9x32x64xf32, #tpu.memory_space<vmem>>, vector<1x32x64xf32>
    %83 = vector.shape_cast %82 : vector<1x32x64xf32> to vector<32x64xf32>
    %cst_76 = arith.constant dense<0.000000e+00> : vector<128x64xf32>
    %84 = tpu.matmul %81, %83, %cst_76 {dimension_numbers = #tpu.dot_dimension_numbers<[1], [0], [0], [1], [0, 0, 1, 1], [], []>} : vector<128x32xf32>, vector<32x64xf32>, vector<128x64xf32> -> vector<128x64xf32>
    %85 = arith.addf %80, %84 : vector<128x64xf32>
    %c161 = arith.constant 161 : index
    %c0_77 = arith.constant 0 : index
    %86 = vector.load %arg7[%c161, %c0_77] : memref<864x32xf32, #tpu.memory_space<vmem>>, vector<128x32xf32>
    %c4_78 = arith.constant 4 : index
    %c0_79 = arith.constant 0 : index
    %c0_80 = arith.constant 0 : index
    %87 = vector.load %arg4[%c4_78, %c0_79, %c0_80] : memref<9x32x64xf32, #tpu.memory_space<vmem>>, vector<1x32x64xf32>
    %88 = vector.shape_cast %87 : vector<1x32x64xf32> to vector<32x64xf32>
    %cst_81 = arith.constant dense<0.000000e+00> : vector<128x64xf32>
    %89 = tpu.matmul %86, %88, %cst_81 {dimension_numbers = #tpu.dot_dimension_numbers<[1], [0], [0], [1], [0, 0, 1, 1], [], []>} : vector<128x32xf32>, vector<32x64xf32>, vector<128x64xf32> -> vector<128x64xf32>
    %90 = arith.addf %85, %89 : vector<128x64xf32>
    %c162 = arith.constant 162 : index
    %c0_82 = arith.constant 0 : index
    %91 = vector.load %arg7[%c162, %c0_82] : memref<864x32xf32, #tpu.memory_space<vmem>>, vector<128x32xf32>
    %c5_83 = arith.constant 5 : index
    %c0_84 = arith.constant 0 : index
    %c0_85 = arith.constant 0 : index
    %92 = vector.load %arg4[%c5_83, %c0_84, %c0_85] : memref<9x32x64xf32, #tpu.memory_space<vmem>>, vector<1x32x64xf32>
    %93 = vector.shape_cast %92 : vector<1x32x64xf32> to vector<32x64xf32>
    %cst_86 = arith.constant dense<0.000000e+00> : vector<128x64xf32>
    %94 = tpu.matmul %91, %93, %cst_86 {dimension_numbers = #tpu.dot_dimension_numbers<[1], [0], [0], [1], [0, 0, 1, 1], [], []>} : vector<128x32xf32>, vector<32x64xf32>, vector<128x64xf32> -> vector<128x64xf32>
    %95 = arith.addf %90, %94 : vector<128x64xf32>
    %c192 = arith.constant 192 : index
    %c0_87 = arith.constant 0 : index
    %96 = vector.load %arg7[%c192, %c0_87] : memref<864x32xf32, #tpu.memory_space<vmem>>, vector<128x32xf32>
    %c6_88 = arith.constant 6 : index
    %c0_89 = arith.constant 0 : index
    %c0_90 = arith.constant 0 : index
    %97 = vector.load %arg4[%c6_88, %c0_89, %c0_90] : memref<9x32x64xf32, #tpu.memory_space<vmem>>, vector<1x32x64xf32>
    %98 = vector.shape_cast %97 : vector<1x32x64xf32> to vector<32x64xf32>
    %cst_91 = arith.constant dense<0.000000e+00> : vector<128x64xf32>
    %99 = tpu.matmul %96, %98, %cst_91 {dimension_numbers = #tpu.dot_dimension_numbers<[1], [0], [0], [1], [0, 0, 1, 1], [], []>} : vector<128x32xf32>, vector<32x64xf32>, vector<128x64xf32> -> vector<128x64xf32>
    %100 = arith.addf %95, %99 : vector<128x64xf32>
    %c193 = arith.constant 193 : index
    %c0_92 = arith.constant 0 : index
    %101 = vector.load %arg7[%c193, %c0_92] : memref<864x32xf32, #tpu.memory_space<vmem>>, vector<128x32xf32>
    %c7_93 = arith.constant 7 : index
    %c0_94 = arith.constant 0 : index
    %c0_95 = arith.constant 0 : index
    %102 = vector.load %arg4[%c7_93, %c0_94, %c0_95] : memref<9x32x64xf32, #tpu.memory_space<vmem>>, vector<1x32x64xf32>
    %103 = vector.shape_cast %102 : vector<1x32x64xf32> to vector<32x64xf32>
    %cst_96 = arith.constant dense<0.000000e+00> : vector<128x64xf32>
    %104 = tpu.matmul %101, %103, %cst_96 {dimension_numbers = #tpu.dot_dimension_numbers<[1], [0], [0], [1], [0, 0, 1, 1], [], []>} : vector<128x32xf32>, vector<32x64xf32>, vector<128x64xf32> -> vector<128x64xf32>
    %105 = arith.addf %100, %104 : vector<128x64xf32>
    %c194 = arith.constant 194 : index
    %c0_97 = arith.constant 0 : index
    %106 = vector.load %arg7[%c194, %c0_97] : memref<864x32xf32, #tpu.memory_space<vmem>>, vector<128x32xf32>
    %c8_98 = arith.constant 8 : index
    %c0_99 = arith.constant 0 : index
    %c0_100 = arith.constant 0 : index
    %107 = vector.load %arg4[%c8_98, %c0_99, %c0_100] : memref<9x32x64xf32, #tpu.memory_space<vmem>>, vector<1x32x64xf32>
    %108 = vector.shape_cast %107 : vector<1x32x64xf32> to vector<32x64xf32>
    %cst_101 = arith.constant dense<0.000000e+00> : vector<128x64xf32>
    %109 = tpu.matmul %106, %108, %cst_101 {dimension_numbers = #tpu.dot_dimension_numbers<[1], [0], [0], [1], [0, 0, 1, 1], [], []>} : vector<128x32xf32>, vector<32x64xf32>, vector<128x64xf32> -> vector<128x64xf32>
    %110 = arith.addf %105, %109 : vector<128x64xf32>
    %c0_102 = arith.constant 0 : index
    %c0_103 = arith.constant 0 : index
    %111 = vector.load %arg5[%c0_102, %c0_103] : memref<1x64xf32, #tpu.memory_space<vmem>>, vector<1x64xf32>
    %112 = vector.broadcast %111 : vector<1x64xf32> to vector<128x64xf32>
    %113 = arith.addf %110, %112 : vector<128x64xf32>
    %cst_104 = arith.constant 0.000000e+00 : f32
    %114 = vector.broadcast %cst_104 : f32 to vector<128x64xf32>
    %115 = arith.maximumf %113, %114 : vector<128x64xf32>
    %c128_105 = arith.constant 128 : index
    %c0_106 = arith.constant 0 : index
    %116 = vector.load %arg8[%c128_105, %c0_106] : memref<768x64xf32, #tpu.memory_space<vmem>>, vector<128x64xf32>
    tpu.vector_store %arg8[%c128_105, %c0_106], %115 {strides = array<i32>} : memref<768x64xf32, #tpu.memory_space<vmem>>, vector<128x64xf32>,
    %cst_107 = arith.constant 0.000000e+00 : f32
    %117 = vector.broadcast %cst_107 : f32 to vector<128x64xf32>
    %c256 = arith.constant 256 : index
    %c0_108 = arith.constant 0 : index
    %118 = vector.load %arg7[%c256, %c0_108] : memref<864x32xf32, #tpu.memory_space<vmem>>, vector<128x32xf32>
    %c0_109 = arith.constant 0 : index
    %c0_110 = arith.constant 0 : index
    %c0_111 = arith.constant 0 : index
    %119 = vector.load %arg4[%c0_109, %c0_110, %c0_111] : memref<9x32x64xf32, #tpu.memory_space<vmem>>, vector<1x32x64xf32>
    %120 = vector.shape_cast %119 : vector<1x32x64xf32> to vector<32x64xf32>
    %cst_112 = arith.constant dense<0.000000e+00> : vector<128x64xf32>
    %121 = tpu.matmul %118, %120, %cst_112 {dimension_numbers = #tpu.dot_dimension_numbers<[1], [0], [0], [1], [0, 0, 1, 1], [], []>} : vector<128x32xf32>, vector<32x64xf32>, vector<128x64xf32> -> vector<128x64xf32>
    %122 = arith.addf %117, %121 : vector<128x64xf32>
    %c257 = arith.constant 257 : index
    %c0_113 = arith.constant 0 : index
    %123 = vector.load %arg7[%c257, %c0_113] : memref<864x32xf32, #tpu.memory_space<vmem>>, vector<128x32xf32>
    %c1_114 = arith.constant 1 : index
    %c0_115 = arith.constant 0 : index
    %c0_116 = arith.constant 0 : index
    %124 = vector.load %arg4[%c1_114, %c0_115, %c0_116] : memref<9x32x64xf32, #tpu.memory_space<vmem>>, vector<1x32x64xf32>
    %125 = vector.shape_cast %124 : vector<1x32x64xf32> to vector<32x64xf32>
    %cst_117 = arith.constant dense<0.000000e+00> : vector<128x64xf32>
    %126 = tpu.matmul %123, %125, %cst_117 {dimension_numbers = #tpu.dot_dimension_numbers<[1], [0], [0], [1], [0, 0, 1, 1], [], []>} : vector<128x32xf32>, vector<32x64xf32>, vector<128x64xf32> -> vector<128x64xf32>
    %127 = arith.addf %122, %126 : vector<128x64xf32>
    %c258 = arith.constant 258 : index
    %c0_118 = arith.constant 0 : index
    %128 = vector.load %arg7[%c258, %c0_118] : memref<864x32xf32, #tpu.memory_space<vmem>>, vector<128x32xf32>
    %c2_119 = arith.constant 2 : index
    %c0_120 = arith.constant 0 : index
    %c0_121 = arith.constant 0 : index
    %129 = vector.load %arg4[%c2_119, %c0_120, %c0_121] : memref<9x32x64xf32, #tpu.memory_space<vmem>>, vector<1x32x64xf32>
    %130 = vector.shape_cast %129 : vector<1x32x64xf32> to vector<32x64xf32>
    %cst_122 = arith.constant dense<0.000000e+00> : vector<128x64xf32>
    %131 = tpu.matmul %128, %130, %cst_122 {dimension_numbers = #tpu.dot_dimension_numbers<[1], [0], [0], [1], [0, 0, 1, 1], [], []>} : vector<128x32xf32>, vector<32x64xf32>, vector<128x64xf32> -> vector<128x64xf32>
    %132 = arith.addf %127, %131 : vector<128x64xf32>
    %c288 = arith.constant 288 : index
    %c0_123 = arith.constant 0 : index
    %133 = vector.load %arg7[%c288, %c0_123] : memref<864x32xf32, #tpu.memory_space<vmem>>, vector<128x32xf32>
    %c3_124 = arith.constant 3 : index
    %c0_125 = arith.constant 0 : index
    %c0_126 = arith.constant 0 : index
    %134 = vector.load %arg4[%c3_124, %c0_125, %c0_126] : memref<9x32x64xf32, #tpu.memory_space<vmem>>, vector<1x32x64xf32>
    %135 = vector.shape_cast %134 : vector<1x32x64xf32> to vector<32x64xf32>
    %cst_127 = arith.constant dense<0.000000e+00> : vector<128x64xf32>
    %136 = tpu.matmul %133, %135, %cst_127 {dimension_numbers = #tpu.dot_dimension_numbers<[1], [0], [0], [1], [0, 0, 1, 1], [], []>} : vector<128x32xf32>, vector<32x64xf32>, vector<128x64xf32> -> vector<128x64xf32>
    %137 = arith.addf %132, %136 : vector<128x64xf32>
    %c289 = arith.constant 289 : index
    %c0_128 = arith.constant 0 : index
    %138 = vector.load %arg7[%c289, %c0_128] : memref<864x32xf32, #tpu.memory_space<vmem>>, vector<128x32xf32>
    %c4_129 = arith.constant 4 : index
    %c0_130 = arith.constant 0 : index
    %c0_131 = arith.constant 0 : index
    %139 = vector.load %arg4[%c4_129, %c0_130, %c0_131] : memref<9x32x64xf32, #tpu.memory_space<vmem>>, vector<1x32x64xf32>
    %140 = vector.shape_cast %139 : vector<1x32x64xf32> to vector<32x64xf32>
    %cst_132 = arith.constant dense<0.000000e+00> : vector<128x64xf32>
    %141 = tpu.matmul %138, %140, %cst_132 {dimension_numbers = #tpu.dot_dimension_numbers<[1], [0], [0], [1], [0, 0, 1, 1], [], []>} : vector<128x32xf32>, vector<32x64xf32>, vector<128x64xf32> -> vector<128x64xf32>
    %142 = arith.addf %137, %141 : vector<128x64xf32>
    %c290 = arith.constant 290 : index
    %c0_133 = arith.constant 0 : index
    %143 = vector.load %arg7[%c290, %c0_133] : memref<864x32xf32, #tpu.memory_space<vmem>>, vector<128x32xf32>
    %c5_134 = arith.constant 5 : index
    %c0_135 = arith.constant 0 : index
    %c0_136 = arith.constant 0 : index
    %144 = vector.load %arg4[%c5_134, %c0_135, %c0_136] : memref<9x32x64xf32, #tpu.memory_space<vmem>>, vector<1x32x64xf32>
    %145 = vector.shape_cast %144 : vector<1x32x64xf32> to vector<32x64xf32>
    %cst_137 = arith.constant dense<0.000000e+00> : vector<128x64xf32>
    %146 = tpu.matmul %143, %145, %cst_137 {dimension_numbers = #tpu.dot_dimension_numbers<[1], [0], [0], [1], [0, 0, 1, 1], [], []>} : vector<128x32xf32>, vector<32x64xf32>, vector<128x64xf32> -> vector<128x64xf32>
    %147 = arith.addf %142, %146 : vector<128x64xf32>
    %c320 = arith.constant 320 : index
    %c0_138 = arith.constant 0 : index
    %148 = vector.load %arg7[%c320, %c0_138] : memref<864x32xf32, #tpu.memory_space<vmem>>, vector<128x32xf32>
    %c6_139 = arith.constant 6 : index
    %c0_140 = arith.constant 0 : index
    %c0_141 = arith.constant 0 : index
    %149 = vector.load %arg4[%c6_139, %c0_140, %c0_141] : memref<9x32x64xf32, #tpu.memory_space<vmem>>, vector<1x32x64xf32>
    %150 = vector.shape_cast %149 : vector<1x32x64xf32> to vector<32x64xf32>
    %cst_142 = arith.constant dense<0.000000e+00> : vector<128x64xf32>
    %151 = tpu.matmul %148, %150, %cst_142 {dimension_numbers = #tpu.dot_dimension_numbers<[1], [0], [0], [1], [0, 0, 1, 1], [], []>} : vector<128x32xf32>, vector<32x64xf32>, vector<128x64xf32> -> vector<128x64xf32>
    %152 = arith.addf %147, %151 : vector<128x64xf32>
    %c321 = arith.constant 321 : index
    %c0_143 = arith.constant 0 : index
    %153 = vector.load %arg7[%c321, %c0_143] : memref<864x32xf32, #tpu.memory_space<vmem>>, vector<128x32xf32>
    %c7_144 = arith.constant 7 : index
    %c0_145 = arith.constant 0 : index
    %c0_146 = arith.constant 0 : index
    %154 = vector.load %arg4[%c7_144, %c0_145, %c0_146] : memref<9x32x64xf32, #tpu.memory_space<vmem>>, vector<1x32x64xf32>
    %155 = vector.shape_cast %154 : vector<1x32x64xf32> to vector<32x64xf32>
    %cst_147 = arith.constant dense<0.000000e+00> : vector<128x64xf32>
    %156 = tpu.matmul %153, %155, %cst_147 {dimension_numbers = #tpu.dot_dimension_numbers<[1], [0], [0], [1], [0, 0, 1, 1], [], []>} : vector<128x32xf32>, vector<32x64xf32>, vector<128x64xf32> -> vector<128x64xf32>
    %157 = arith.addf %152, %156 : vector<128x64xf32>
    %c322 = arith.constant 322 : index
    %c0_148 = arith.constant 0 : index
    %158 = vector.load %arg7[%c322, %c0_148] : memref<864x32xf32, #tpu.memory_space<vmem>>, vector<128x32xf32>
    %c8_149 = arith.constant 8 : index
    %c0_150 = arith.constant 0 : index
    %c0_151 = arith.constant 0 : index
    %159 = vector.load %arg4[%c8_149, %c0_150, %c0_151] : memref<9x32x64xf32, #tpu.memory_space<vmem>>, vector<1x32x64xf32>
    %160 = vector.shape_cast %159 : vector<1x32x64xf32> to vector<32x64xf32>
    %cst_152 = arith.constant dense<0.000000e+00> : vector<128x64xf32>
    %161 = tpu.matmul %158, %160, %cst_152 {dimension_numbers = #tpu.dot_dimension_numbers<[1], [0], [0], [1], [0, 0, 1, 1], [], []>} : vector<128x32xf32>, vector<32x64xf32>, vector<128x64xf32> -> vector<128x64xf32>
    %162 = arith.addf %157, %161 : vector<128x64xf32>
    %c0_153 = arith.constant 0 : index
    %c0_154 = arith.constant 0 : index
    %163 = vector.load %arg5[%c0_153, %c0_154] : memref<1x64xf32, #tpu.memory_space<vmem>>, vector<1x64xf32>
    %164 = vector.broadcast %163 : vector<1x64xf32> to vector<128x64xf32>
    %165 = arith.addf %162, %164 : vector<128x64xf32>
    %cst_155 = arith.constant 0.000000e+00 : f32
    %166 = vector.broadcast %cst_155 : f32 to vector<128x64xf32>
    %167 = arith.maximumf %165, %166 : vector<128x64xf32>
    %c256_156 = arith.constant 256 : index
    %c0_157 = arith.constant 0 : index
    %168 = vector.load %arg8[%c256_156, %c0_157] : memref<768x64xf32, #tpu.memory_space<vmem>>, vector<128x64xf32>
    tpu.vector_store %arg8[%c256_156, %c0_157], %167 {strides = array<i32>} : memref<768x64xf32, #tpu.memory_space<vmem>>, vector<128x64xf32>,
    %cst_158 = arith.constant 0.000000e+00 : f32
    %169 = vector.broadcast %cst_158 : f32 to vector<128x64xf32>
    %c384 = arith.constant 384 : index
    %c0_159 = arith.constant 0 : index
    %170 = vector.load %arg7[%c384, %c0_159] : memref<864x32xf32, #tpu.memory_space<vmem>>, vector<128x32xf32>
    %c0_160 = arith.constant 0 : index
    %c0_161 = arith.constant 0 : index
    %c0_162 = arith.constant 0 : index
    %171 = vector.load %arg4[%c0_160, %c0_161, %c0_162] : memref<9x32x64xf32, #tpu.memory_space<vmem>>, vector<1x32x64xf32>
    %172 = vector.shape_cast %171 : vector<1x32x64xf32> to vector<32x64xf32>
    %cst_163 = arith.constant dense<0.000000e+00> : vector<128x64xf32>
    %173 = tpu.matmul %170, %172, %cst_163 {dimension_numbers = #tpu.dot_dimension_numbers<[1], [0], [0], [1], [0, 0, 1, 1], [], []>} : vector<128x32xf32>, vector<32x64xf32>, vector<128x64xf32> -> vector<128x64xf32>
    %174 = arith.addf %169, %173 : vector<128x64xf32>
    %c385 = arith.constant 385 : index
    %c0_164 = arith.constant 0 : index
    %175 = vector.load %arg7[%c385, %c0_164] : memref<864x32xf32, #tpu.memory_space<vmem>>, vector<128x32xf32>
    %c1_165 = arith.constant 1 : index
    %c0_166 = arith.constant 0 : index
    %c0_167 = arith.constant 0 : index
    %176 = vector.load %arg4[%c1_165, %c0_166, %c0_167] : memref<9x32x64xf32, #tpu.memory_space<vmem>>, vector<1x32x64xf32>
    %177 = vector.shape_cast %176 : vector<1x32x64xf32> to vector<32x64xf32>
    %cst_168 = arith.constant dense<0.000000e+00> : vector<128x64xf32>
    %178 = tpu.matmul %175, %177, %cst_168 {dimension_numbers = #tpu.dot_dimension_numbers<[1], [0], [0], [1], [0, 0, 1, 1], [], []>} : vector<128x32xf32>, vector<32x64xf32>, vector<128x64xf32> -> vector<128x64xf32>
    %179 = arith.addf %174, %178 : vector<128x64xf32>
    %c386 = arith.constant 386 : index
    %c0_169 = arith.constant 0 : index
    %180 = vector.load %arg7[%c386, %c0_169] : memref<864x32xf32, #tpu.memory_space<vmem>>, vector<128x32xf32>
    %c2_170 = arith.constant 2 : index
    %c0_171 = arith.constant 0 : index
    %c0_172 = arith.constant 0 : index
    %181 = vector.load %arg4[%c2_170, %c0_171, %c0_172] : memref<9x32x64xf32, #tpu.memory_space<vmem>>, vector<1x32x64xf32>
    %182 = vector.shape_cast %181 : vector<1x32x64xf32> to vector<32x64xf32>
    %cst_173 = arith.constant dense<0.000000e+00> : vector<128x64xf32>
    %183 = tpu.matmul %180, %182, %cst_173 {dimension_numbers = #tpu.dot_dimension_numbers<[1], [0], [0], [1], [0, 0, 1, 1], [], []>} : vector<128x32xf32>, vector<32x64xf32>, vector<128x64xf32> -> vector<128x64xf32>
    %184 = arith.addf %179, %183 : vector<128x64xf32>
    %c416 = arith.constant 416 : index
    %c0_174 = arith.constant 0 : index
    %185 = vector.load %arg7[%c416, %c0_174] : memref<864x32xf32, #tpu.memory_space<vmem>>, vector<128x32xf32>
    %c3_175 = arith.constant 3 : index
    %c0_176 = arith.constant 0 : index
    %c0_177 = arith.constant 0 : index
    %186 = vector.load %arg4[%c3_175, %c0_176, %c0_177] : memref<9x32x64xf32, #tpu.memory_space<vmem>>, vector<1x32x64xf32>
    %187 = vector.shape_cast %186 : vector<1x32x64xf32> to vector<32x64xf32>
    %cst_178 = arith.constant dense<0.000000e+00> : vector<128x64xf32>
    %188 = tpu.matmul %185, %187, %cst_178 {dimension_numbers = #tpu.dot_dimension_numbers<[1], [0], [0], [1], [0, 0, 1, 1], [], []>} : vector<128x32xf32>, vector<32x64xf32>, vector<128x64xf32> -> vector<128x64xf32>
    %189 = arith.addf %184, %188 : vector<128x64xf32>
    %c417 = arith.constant 417 : index
    %c0_179 = arith.constant 0 : index
    %190 = vector.load %arg7[%c417, %c0_179] : memref<864x32xf32, #tpu.memory_space<vmem>>, vector<128x32xf32>
    %c4_180 = arith.constant 4 : index
    %c0_181 = arith.constant 0 : index
    %c0_182 = arith.constant 0 : index
    %191 = vector.load %arg4[%c4_180, %c0_181, %c0_182] : memref<9x32x64xf32, #tpu.memory_space<vmem>>, vector<1x32x64xf32>
    %192 = vector.shape_cast %191 : vector<1x32x64xf32> to vector<32x64xf32>
    %cst_183 = arith.constant dense<0.000000e+00> : vector<128x64xf32>
    %193 = tpu.matmul %190, %192, %cst_183 {dimension_numbers = #tpu.dot_dimension_numbers<[1], [0], [0], [1], [0, 0, 1, 1], [], []>} : vector<128x32xf32>, vector<32x64xf32>, vector<128x64xf32> -> vector<128x64xf32>
    %194 = arith.addf %189, %193 : vector<128x64xf32>
    %c418 = arith.constant 418 : index
    %c0_184 = arith.constant 0 : index
    %195 = vector.load %arg7[%c418, %c0_184] : memref<864x32xf32, #tpu.memory_space<vmem>>, vector<128x32xf32>
    %c5_185 = arith.constant 5 : index
    %c0_186 = arith.constant 0 : index
    %c0_187 = arith.constant 0 : index
    %196 = vector.load %arg4[%c5_185, %c0_186, %c0_187] : memref<9x32x64xf32, #tpu.memory_space<vmem>>, vector<1x32x64xf32>
    %197 = vector.shape_cast %196 : vector<1x32x64xf32> to vector<32x64xf32>
    %cst_188 = arith.constant dense<0.000000e+00> : vector<128x64xf32>
    %198 = tpu.matmul %195, %197, %cst_188 {dimension_numbers = #tpu.dot_dimension_numbers<[1], [0], [0], [1], [0, 0, 1, 1], [], []>} : vector<128x32xf32>, vector<32x64xf32>, vector<128x64xf32> -> vector<128x64xf32>
    %199 = arith.addf %194, %198 : vector<128x64xf32>
    %c448 = arith.constant 448 : index
    %c0_189 = arith.constant 0 : index
    %200 = vector.load %arg7[%c448, %c0_189] : memref<864x32xf32, #tpu.memory_space<vmem>>, vector<128x32xf32>
    %c6_190 = arith.constant 6 : index
    %c0_191 = arith.constant 0 : index
    %c0_192 = arith.constant 0 : index
    %201 = vector.load %arg4[%c6_190, %c0_191, %c0_192] : memref<9x32x64xf32, #tpu.memory_space<vmem>>, vector<1x32x64xf32>
    %202 = vector.shape_cast %201 : vector<1x32x64xf32> to vector<32x64xf32>
    %cst_193 = arith.constant dense<0.000000e+00> : vector<128x64xf32>
    %203 = tpu.matmul %200, %202, %cst_193 {dimension_numbers = #tpu.dot_dimension_numbers<[1], [0], [0], [1], [0, 0, 1, 1], [], []>} : vector<128x32xf32>, vector<32x64xf32>, vector<128x64xf32> -> vector<128x64xf32>
    %204 = arith.addf %199, %203 : vector<128x64xf32>
    %c449 = arith.constant 449 : index
    %c0_194 = arith.constant 0 : index
    %205 = vector.load %arg7[%c449, %c0_194] : memref<864x32xf32, #tpu.memory_space<vmem>>, vector<128x32xf32>
    %c7_195 = arith.constant 7 : index
    %c0_196 = arith.constant 0 : index
    %c0_197 = arith.constant 0 : index
    %206 = vector.load %arg4[%c7_195, %c0_196, %c0_197] : memref<9x32x64xf32, #tpu.memory_space<vmem>>, vector<1x32x64xf32>
    %207 = vector.shape_cast %206 : vector<1x32x64xf32> to vector<32x64xf32>
    %cst_198 = arith.constant dense<0.000000e+00> : vector<128x64xf32>
    %208 = tpu.matmul %205, %207, %cst_198 {dimension_numbers = #tpu.dot_dimension_numbers<[1], [0], [0], [1], [0, 0, 1, 1], [], []>} : vector<128x32xf32>, vector<32x64xf32>, vector<128x64xf32> -> vector<128x64xf32>
    %209 = arith.addf %204, %208 : vector<128x64xf32>
    %c450 = arith.constant 450 : index
    %c0_199 = arith.constant 0 : index
    %210 = vector.load %arg7[%c450, %c0_199] : memref<864x32xf32, #tpu.memory_space<vmem>>, vector<128x32xf32>
    %c8_200 = arith.constant 8 : index
    %c0_201 = arith.constant 0 : index
    %c0_202 = arith.constant 0 : index
    %211 = vector.load %arg4[%c8_200, %c0_201, %c0_202] : memref<9x32x64xf32, #tpu.memory_space<vmem>>, vector<1x32x64xf32>
    %212 = vector.shape_cast %211 : vector<1x32x64xf32> to vector<32x64xf32>
    %cst_203 = arith.constant dense<0.000000e+00> : vector<128x64xf32>
    %213 = tpu.matmul %210, %212, %cst_203 {dimension_numbers = #tpu.dot_dimension_numbers<[1], [0], [0], [1], [0, 0, 1, 1], [], []>} : vector<128x32xf32>, vector<32x64xf32>, vector<128x64xf32> -> vector<128x64xf32>
    %214 = arith.addf %209, %213 : vector<128x64xf32>
    %c0_204 = arith.constant 0 : index
    %c0_205 = arith.constant 0 : index
    %215 = vector.load %arg5[%c0_204, %c0_205] : memref<1x64xf32, #tpu.memory_space<vmem>>, vector<1x64xf32>
    %216 = vector.broadcast %215 : vector<1x64xf32> to vector<128x64xf32>
    %217 = arith.addf %214, %216 : vector<128x64xf32>
    %cst_206 = arith.constant 0.000000e+00 : f32
    %218 = vector.broadcast %cst_206 : f32 to vector<128x64xf32>
    %219 = arith.maximumf %217, %218 : vector<128x64xf32>
    %c384_207 = arith.constant 384 : index
    %c0_208 = arith.constant 0 : index
    %220 = vector.load %arg8[%c384_207, %c0_208] : memref<768x64xf32, #tpu.memory_space<vmem>>, vector<128x64xf32>
    tpu.vector_store %arg8[%c384_207, %c0_208], %219 {strides = array<i32>} : memref<768x64xf32, #tpu.memory_space<vmem>>, vector<128x64xf32>,
    %cst_209 = arith.constant 0.000000e+00 : f32
    %221 = vector.broadcast %cst_209 : f32 to vector<128x64xf32>
    %c512 = arith.constant 512 : index
    %c0_210 = arith.constant 0 : index
    %222 = vector.load %arg7[%c512, %c0_210] : memref<864x32xf32, #tpu.memory_space<vmem>>, vector<128x32xf32>
    %c0_211 = arith.constant 0 : index
    %c0_212 = arith.constant 0 : index
    %c0_213 = arith.constant 0 : index
    %223 = vector.load %arg4[%c0_211, %c0_212, %c0_213] : memref<9x32x64xf32, #tpu.memory_space<vmem>>, vector<1x32x64xf32>
    %224 = vector.shape_cast %223 : vector<1x32x64xf32> to vector<32x64xf32>
    %cst_214 = arith.constant dense<0.000000e+00> : vector<128x64xf32>
    %225 = tpu.matmul %222, %224, %cst_214 {dimension_numbers = #tpu.dot_dimension_numbers<[1], [0], [0], [1], [0, 0, 1, 1], [], []>} : vector<128x32xf32>, vector<32x64xf32>, vector<128x64xf32> -> vector<128x64xf32>
    %226 = arith.addf %221, %225 : vector<128x64xf32>
    %c513 = arith.constant 513 : index
    %c0_215 = arith.constant 0 : index
    %227 = vector.load %arg7[%c513, %c0_215] : memref<864x32xf32, #tpu.memory_space<vmem>>, vector<128x32xf32>
    %c1_216 = arith.constant 1 : index
    %c0_217 = arith.constant 0 : index
    %c0_218 = arith.constant 0 : index
    %228 = vector.load %arg4[%c1_216, %c0_217, %c0_218] : memref<9x32x64xf32, #tpu.memory_space<vmem>>, vector<1x32x64xf32>
    %229 = vector.shape_cast %228 : vector<1x32x64xf32> to vector<32x64xf32>
    %cst_219 = arith.constant dense<0.000000e+00> : vector<128x64xf32>
    %230 = tpu.matmul %227, %229, %cst_219 {dimension_numbers = #tpu.dot_dimension_numbers<[1], [0], [0], [1], [0, 0, 1, 1], [], []>} : vector<128x32xf32>, vector<32x64xf32>, vector<128x64xf32> -> vector<128x64xf32>
    %231 = arith.addf %226, %230 : vector<128x64xf32>
    %c514 = arith.constant 514 : index
    %c0_220 = arith.constant 0 : index
    %232 = vector.load %arg7[%c514, %c0_220] : memref<864x32xf32, #tpu.memory_space<vmem>>, vector<128x32xf32>
    %c2_221 = arith.constant 2 : index
    %c0_222 = arith.constant 0 : index
    %c0_223 = arith.constant 0 : index
    %233 = vector.load %arg4[%c2_221, %c0_222, %c0_223] : memref<9x32x64xf32, #tpu.memory_space<vmem>>, vector<1x32x64xf32>
    %234 = vector.shape_cast %233 : vector<1x32x64xf32> to vector<32x64xf32>
    %cst_224 = arith.constant dense<0.000000e+00> : vector<128x64xf32>
    %235 = tpu.matmul %232, %234, %cst_224 {dimension_numbers = #tpu.dot_dimension_numbers<[1], [0], [0], [1], [0, 0, 1, 1], [], []>} : vector<128x32xf32>, vector<32x64xf32>, vector<128x64xf32> -> vector<128x64xf32>
    %236 = arith.addf %231, %235 : vector<128x64xf32>
    %c544 = arith.constant 544 : index
    %c0_225 = arith.constant 0 : index
    %237 = vector.load %arg7[%c544, %c0_225] : memref<864x32xf32, #tpu.memory_space<vmem>>, vector<128x32xf32>
    %c3_226 = arith.constant 3 : index
    %c0_227 = arith.constant 0 : index
    %c0_228 = arith.constant 0 : index
    %238 = vector.load %arg4[%c3_226, %c0_227, %c0_228] : memref<9x32x64xf32, #tpu.memory_space<vmem>>, vector<1x32x64xf32>
    %239 = vector.shape_cast %238 : vector<1x32x64xf32> to vector<32x64xf32>
    %cst_229 = arith.constant dense<0.000000e+00> : vector<128x64xf32>
    %240 = tpu.matmul %237, %239, %cst_229 {dimension_numbers = #tpu.dot_dimension_numbers<[1], [0], [0], [1], [0, 0, 1, 1], [], []>} : vector<128x32xf32>, vector<32x64xf32>, vector<128x64xf32> -> vector<128x64xf32>
    %241 = arith.addf %236, %240 : vector<128x64xf32>
    %c545 = arith.constant 545 : index
    %c0_230 = arith.constant 0 : index
    %242 = vector.load %arg7[%c545, %c0_230] : memref<864x32xf32, #tpu.memory_space<vmem>>, vector<128x32xf32>
    %c4_231 = arith.constant 4 : index
    %c0_232 = arith.constant 0 : index
    %c0_233 = arith.constant 0 : index
    %243 = vector.load %arg4[%c4_231, %c0_232, %c0_233] : memref<9x32x64xf32, #tpu.memory_space<vmem>>, vector<1x32x64xf32>
    %244 = vector.shape_cast %243 : vector<1x32x64xf32> to vector<32x64xf32>
    %cst_234 = arith.constant dense<0.000000e+00> : vector<128x64xf32>
    %245 = tpu.matmul %242, %244, %cst_234 {dimension_numbers = #tpu.dot_dimension_numbers<[1], [0], [0], [1], [0, 0, 1, 1], [], []>} : vector<128x32xf32>, vector<32x64xf32>, vector<128x64xf32> -> vector<128x64xf32>
    %246 = arith.addf %241, %245 : vector<128x64xf32>
    %c546 = arith.constant 546 : index
    %c0_235 = arith.constant 0 : index
    %247 = vector.load %arg7[%c546, %c0_235] : memref<864x32xf32, #tpu.memory_space<vmem>>, vector<128x32xf32>
    %c5_236 = arith.constant 5 : index
    %c0_237 = arith.constant 0 : index
    %c0_238 = arith.constant 0 : index
    %248 = vector.load %arg4[%c5_236, %c0_237, %c0_238] : memref<9x32x64xf32, #tpu.memory_space<vmem>>, vector<1x32x64xf32>
    %249 = vector.shape_cast %248 : vector<1x32x64xf32> to vector<32x64xf32>
    %cst_239 = arith.constant dense<0.000000e+00> : vector<128x64xf32>
    %250 = tpu.matmul %247, %249, %cst_239 {dimension_numbers = #tpu.dot_dimension_numbers<[1], [0], [0], [1], [0, 0, 1, 1], [], []>} : vector<128x32xf32>, vector<32x64xf32>, vector<128x64xf32> -> vector<128x64xf32>
    %251 = arith.addf %246, %250 : vector<128x64xf32>
    %c576 = arith.constant 576 : index
    %c0_240 = arith.constant 0 : index
    %252 = vector.load %arg7[%c576, %c0_240] : memref<864x32xf32, #tpu.memory_space<vmem>>, vector<128x32xf32>
    %c6_241 = arith.constant 6 : index
    %c0_242 = arith.constant 0 : index
    %c0_243 = arith.constant 0 : index
    %253 = vector.load %arg4[%c6_241, %c0_242, %c0_243] : memref<9x32x64xf32, #tpu.memory_space<vmem>>, vector<1x32x64xf32>
    %254 = vector.shape_cast %253 : vector<1x32x64xf32> to vector<32x64xf32>
    %cst_244 = arith.constant dense<0.000000e+00> : vector<128x64xf32>
    %255 = tpu.matmul %252, %254, %cst_244 {dimension_numbers = #tpu.dot_dimension_numbers<[1], [0], [0], [1], [0, 0, 1, 1], [], []>} : vector<128x32xf32>, vector<32x64xf32>, vector<128x64xf32> -> vector<128x64xf32>
    %256 = arith.addf %251, %255 : vector<128x64xf32>
    %c577 = arith.constant 577 : index
    %c0_245 = arith.constant 0 : index
    %257 = vector.load %arg7[%c577, %c0_245] : memref<864x32xf32, #tpu.memory_space<vmem>>, vector<128x32xf32>
    %c7_246 = arith.constant 7 : index
    %c0_247 = arith.constant 0 : index
    %c0_248 = arith.constant 0 : index
    %258 = vector.load %arg4[%c7_246, %c0_247, %c0_248] : memref<9x32x64xf32, #tpu.memory_space<vmem>>, vector<1x32x64xf32>
    %259 = vector.shape_cast %258 : vector<1x32x64xf32> to vector<32x64xf32>
    %cst_249 = arith.constant dense<0.000000e+00> : vector<128x64xf32>
    %260 = tpu.matmul %257, %259, %cst_249 {dimension_numbers = #tpu.dot_dimension_numbers<[1], [0], [0], [1], [0, 0, 1, 1], [], []>} : vector<128x32xf32>, vector<32x64xf32>, vector<128x64xf32> -> vector<128x64xf32>
    %261 = arith.addf %256, %260 : vector<128x64xf32>
    %c578 = arith.constant 578 : index
    %c0_250 = arith.constant 0 : index
    %262 = vector.load %arg7[%c578, %c0_250] : memref<864x32xf32, #tpu.memory_space<vmem>>, vector<128x32xf32>
    %c8_251 = arith.constant 8 : index
    %c0_252 = arith.constant 0 : index
    %c0_253 = arith.constant 0 : index
    %263 = vector.load %arg4[%c8_251, %c0_252, %c0_253] : memref<9x32x64xf32, #tpu.memory_space<vmem>>, vector<1x32x64xf32>
    %264 = vector.shape_cast %263 : vector<1x32x64xf32> to vector<32x64xf32>
    %cst_254 = arith.constant dense<0.000000e+00> : vector<128x64xf32>
    %265 = tpu.matmul %262, %264, %cst_254 {dimension_numbers = #tpu.dot_dimension_numbers<[1], [0], [0], [1], [0, 0, 1, 1], [], []>} : vector<128x32xf32>, vector<32x64xf32>, vector<128x64xf32> -> vector<128x64xf32>
    %266 = arith.addf %261, %265 : vector<128x64xf32>
    %c0_255 = arith.constant 0 : index
    %c0_256 = arith.constant 0 : index
    %267 = vector.load %arg5[%c0_255, %c0_256] : memref<1x64xf32, #tpu.memory_space<vmem>>, vector<1x64xf32>
    %268 = vector.broadcast %267 : vector<1x64xf32> to vector<128x64xf32>
    %269 = arith.addf %266, %268 : vector<128x64xf32>
    %cst_257 = arith.constant 0.000000e+00 : f32
    %270 = vector.broadcast %cst_257 : f32 to vector<128x64xf32>
    %271 = arith.maximumf %269, %270 : vector<128x64xf32>
    %c512_258 = arith.constant 512 : index
    %c0_259 = arith.constant 0 : index
    %272 = vector.load %arg8[%c512_258, %c0_259] : memref<768x64xf32, #tpu.memory_space<vmem>>, vector<128x64xf32>
    tpu.vector_store %arg8[%c512_258, %c0_259], %271 {strides = array<i32>} : memref<768x64xf32, #tpu.memory_space<vmem>>, vector<128x64xf32>,
    %cst_260 = arith.constant 0.000000e+00 : f32
    %273 = vector.broadcast %cst_260 : f32 to vector<128x64xf32>
    %c640 = arith.constant 640 : index
    %c0_261 = arith.constant 0 : index
    %274 = vector.load %arg7[%c640, %c0_261] : memref<864x32xf32, #tpu.memory_space<vmem>>, vector<128x32xf32>
    %c0_262 = arith.constant 0 : index
    %c0_263 = arith.constant 0 : index
    %c0_264 = arith.constant 0 : index
    %275 = vector.load %arg4[%c0_262, %c0_263, %c0_264] : memref<9x32x64xf32, #tpu.memory_space<vmem>>, vector<1x32x64xf32>
    %276 = vector.shape_cast %275 : vector<1x32x64xf32> to vector<32x64xf32>
    %cst_265 = arith.constant dense<0.000000e+00> : vector<128x64xf32>
    %277 = tpu.matmul %274, %276, %cst_265 {dimension_numbers = #tpu.dot_dimension_numbers<[1], [0], [0], [1], [0, 0, 1, 1], [], []>} : vector<128x32xf32>, vector<32x64xf32>, vector<128x64xf32> -> vector<128x64xf32>
    %278 = arith.addf %273, %277 : vector<128x64xf32>
    %c641 = arith.constant 641 : index
    %c0_266 = arith.constant 0 : index
    %279 = vector.load %arg7[%c641, %c0_266] : memref<864x32xf32, #tpu.memory_space<vmem>>, vector<128x32xf32>
    %c1_267 = arith.constant 1 : index
    %c0_268 = arith.constant 0 : index
    %c0_269 = arith.constant 0 : index
    %280 = vector.load %arg4[%c1_267, %c0_268, %c0_269] : memref<9x32x64xf32, #tpu.memory_space<vmem>>, vector<1x32x64xf32>
    %281 = vector.shape_cast %280 : vector<1x32x64xf32> to vector<32x64xf32>
    %cst_270 = arith.constant dense<0.000000e+00> : vector<128x64xf32>
    %282 = tpu.matmul %279, %281, %cst_270 {dimension_numbers = #tpu.dot_dimension_numbers<[1], [0], [0], [1], [0, 0, 1, 1], [], []>} : vector<128x32xf32>, vector<32x64xf32>, vector<128x64xf32> -> vector<128x64xf32>
    %283 = arith.addf %278, %282 : vector<128x64xf32>
    %c642 = arith.constant 642 : index
    %c0_271 = arith.constant 0 : index
    %284 = vector.load %arg7[%c642, %c0_271] : memref<864x32xf32, #tpu.memory_space<vmem>>, vector<128x32xf32>
    %c2_272 = arith.constant 2 : index
    %c0_273 = arith.constant 0 : index
    %c0_274 = arith.constant 0 : index
    %285 = vector.load %arg4[%c2_272, %c0_273, %c0_274] : memref<9x32x64xf32, #tpu.memory_space<vmem>>, vector<1x32x64xf32>
    %286 = vector.shape_cast %285 : vector<1x32x64xf32> to vector<32x64xf32>
    %cst_275 = arith.constant dense<0.000000e+00> : vector<128x64xf32>
    %287 = tpu.matmul %284, %286, %cst_275 {dimension_numbers = #tpu.dot_dimension_numbers<[1], [0], [0], [1], [0, 0, 1, 1], [], []>} : vector<128x32xf32>, vector<32x64xf32>, vector<128x64xf32> -> vector<128x64xf32>
    %288 = arith.addf %283, %287 : vector<128x64xf32>
    %c672 = arith.constant 672 : index
    %c0_276 = arith.constant 0 : index
    %289 = vector.load %arg7[%c672, %c0_276] : memref<864x32xf32, #tpu.memory_space<vmem>>, vector<128x32xf32>
    %c3_277 = arith.constant 3 : index
    %c0_278 = arith.constant 0 : index
    %c0_279 = arith.constant 0 : index
    %290 = vector.load %arg4[%c3_277, %c0_278, %c0_279] : memref<9x32x64xf32, #tpu.memory_space<vmem>>, vector<1x32x64xf32>
    %291 = vector.shape_cast %290 : vector<1x32x64xf32> to vector<32x64xf32>
    %cst_280 = arith.constant dense<0.000000e+00> : vector<128x64xf32>
    %292 = tpu.matmul %289, %291, %cst_280 {dimension_numbers = #tpu.dot_dimension_numbers<[1], [0], [0], [1], [0, 0, 1, 1], [], []>} : vector<128x32xf32>, vector<32x64xf32>, vector<128x64xf32> -> vector<128x64xf32>
    %293 = arith.addf %288, %292 : vector<128x64xf32>
    %c673 = arith.constant 673 : index
    %c0_281 = arith.constant 0 : index
    %294 = vector.load %arg7[%c673, %c0_281] : memref<864x32xf32, #tpu.memory_space<vmem>>, vector<128x32xf32>
    %c4_282 = arith.constant 4 : index
    %c0_283 = arith.constant 0 : index
    %c0_284 = arith.constant 0 : index
    %295 = vector.load %arg4[%c4_282, %c0_283, %c0_284] : memref<9x32x64xf32, #tpu.memory_space<vmem>>, vector<1x32x64xf32>
    %296 = vector.shape_cast %295 : vector<1x32x64xf32> to vector<32x64xf32>
    %cst_285 = arith.constant dense<0.000000e+00> : vector<128x64xf32>
    %297 = tpu.matmul %294, %296, %cst_285 {dimension_numbers = #tpu.dot_dimension_numbers<[1], [0], [0], [1], [0, 0, 1, 1], [], []>} : vector<128x32xf32>, vector<32x64xf32>, vector<128x64xf32> -> vector<128x64xf32>
    %298 = arith.addf %293, %297 : vector<128x64xf32>
    %c674 = arith.constant 674 : index
    %c0_286 = arith.constant 0 : index
    %299 = vector.load %arg7[%c674, %c0_286] : memref<864x32xf32, #tpu.memory_space<vmem>>, vector<128x32xf32>
    %c5_287 = arith.constant 5 : index
    %c0_288 = arith.constant 0 : index
    %c0_289 = arith.constant 0 : index
    %300 = vector.load %arg4[%c5_287, %c0_288, %c0_289] : memref<9x32x64xf32, #tpu.memory_space<vmem>>, vector<1x32x64xf32>
    %301 = vector.shape_cast %300 : vector<1x32x64xf32> to vector<32x64xf32>
    %cst_290 = arith.constant dense<0.000000e+00> : vector<128x64xf32>
    %302 = tpu.matmul %299, %301, %cst_290 {dimension_numbers = #tpu.dot_dimension_numbers<[1], [0], [0], [1], [0, 0, 1, 1], [], []>} : vector<128x32xf32>, vector<32x64xf32>, vector<128x64xf32> -> vector<128x64xf32>
    %303 = arith.addf %298, %302 : vector<128x64xf32>
    %c704 = arith.constant 704 : index
    %c0_291 = arith.constant 0 : index
    %304 = vector.load %arg7[%c704, %c0_291] : memref<864x32xf32, #tpu.memory_space<vmem>>, vector<128x32xf32>
    %c6_292 = arith.constant 6 : index
    %c0_293 = arith.constant 0 : index
    %c0_294 = arith.constant 0 : index
    %305 = vector.load %arg4[%c6_292, %c0_293, %c0_294] : memref<9x32x64xf32, #tpu.memory_space<vmem>>, vector<1x32x64xf32>
    %306 = vector.shape_cast %305 : vector<1x32x64xf32> to vector<32x64xf32>
    %cst_295 = arith.constant dense<0.000000e+00> : vector<128x64xf32>
    %307 = tpu.matmul %304, %306, %cst_295 {dimension_numbers = #tpu.dot_dimension_numbers<[1], [0], [0], [1], [0, 0, 1, 1], [], []>} : vector<128x32xf32>, vector<32x64xf32>, vector<128x64xf32> -> vector<128x64xf32>
    %308 = arith.addf %303, %307 : vector<128x64xf32>
    %c705 = arith.constant 705 : index
    %c0_296 = arith.constant 0 : index
    %309 = vector.load %arg7[%c705, %c0_296] : memref<864x32xf32, #tpu.memory_space<vmem>>, vector<128x32xf32>
    %c7_297 = arith.constant 7 : index
    %c0_298 = arith.constant 0 : index
    %c0_299 = arith.constant 0 : index
    %310 = vector.load %arg4[%c7_297, %c0_298, %c0_299] : memref<9x32x64xf32, #tpu.memory_space<vmem>>, vector<1x32x64xf32>
    %311 = vector.shape_cast %310 : vector<1x32x64xf32> to vector<32x64xf32>
    %cst_300 = arith.constant dense<0.000000e+00> : vector<128x64xf32>
    %312 = tpu.matmul %309, %311, %cst_300 {dimension_numbers = #tpu.dot_dimension_numbers<[1], [0], [0], [1], [0, 0, 1, 1], [], []>} : vector<128x32xf32>, vector<32x64xf32>, vector<128x64xf32> -> vector<128x64xf32>
    %313 = arith.addf %308, %312 : vector<128x64xf32>
    %c706 = arith.constant 706 : index
    %c0_301 = arith.constant 0 : index
    %314 = vector.load %arg7[%c706, %c0_301] : memref<864x32xf32, #tpu.memory_space<vmem>>, vector<128x32xf32>
    %c8_302 = arith.constant 8 : index
    %c0_303 = arith.constant 0 : index
    %c0_304 = arith.constant 0 : index
    %315 = vector.load %arg4[%c8_302, %c0_303, %c0_304] : memref<9x32x64xf32, #tpu.memory_space<vmem>>, vector<1x32x64xf32>
    %316 = vector.shape_cast %315 : vector<1x32x64xf32> to vector<32x64xf32>
    %cst_305 = arith.constant dense<0.000000e+00> : vector<128x64xf32>
    %317 = tpu.matmul %314, %316, %cst_305 {dimension_numbers = #tpu.dot_dimension_numbers<[1], [0], [0], [1], [0, 0, 1, 1], [], []>} : vector<128x32xf32>, vector<32x64xf32>, vector<128x64xf32> -> vector<128x64xf32>
    %318 = arith.addf %313, %317 : vector<128x64xf32>
    %c0_306 = arith.constant 0 : index
    %c0_307 = arith.constant 0 : index
    %319 = vector.load %arg5[%c0_306, %c0_307] : memref<1x64xf32, #tpu.memory_space<vmem>>, vector<1x64xf32>
    %320 = vector.broadcast %319 : vector<1x64xf32> to vector<128x64xf32>
    %321 = arith.addf %318, %320 : vector<128x64xf32>
    %cst_308 = arith.constant 0.000000e+00 : f32
    %322 = vector.broadcast %cst_308 : f32 to vector<128x64xf32>
    %323 = arith.maximumf %321, %322 : vector<128x64xf32>
    %c640_309 = arith.constant 640 : index
    %c0_310 = arith.constant 0 : index
    %324 = vector.load %arg8[%c640_309, %c0_310] : memref<768x64xf32, #tpu.memory_space<vmem>>, vector<128x64xf32>
    tpu.vector_store %arg8[%c640_309, %c0_310], %323 {strides = array<i32>} : memref<768x64xf32, #tpu.memory_space<vmem>>, vector<128x64xf32>,
    %c0_311 = arith.constant 0 : index
    %c0_312 = arith.constant 0 : index
    %325 = tpu.strided_load %arg8[%c0_311, %c0_312] {strides = array<i32: 2, 1>} : memref<768x64xf32, #tpu.memory_space<vmem>>, vector<384x64xf32>
    %c1_313 = arith.constant 1 : index
    %c0_314 = arith.constant 0 : index
    %326 = tpu.strided_load %arg8[%c1_313, %c0_314] {strides = array<i32: 2, 1>} : memref<768x64xf32, #tpu.memory_space<vmem>>, vector<384x64xf32>
    %327 = arith.maximumf %325, %326 : vector<384x64xf32>
    %328 = vector.shape_cast %327 : vector<384x64xf32> to vector<12x32x64xf32>
    %329 = vector.extract_strided_slice %328 {offsets = [0, 0, 0], sizes = [12, 16, 64], strides = [1, 1, 1]} : vector<12x32x64xf32> to vector<12x16x64xf32>
    %330 = vector.extract_strided_slice %328 {offsets = [0, 16, 0], sizes = [12, 16, 64], strides = [1, 1, 1]} : vector<12x32x64xf32> to vector<12x16x64xf32>
    %331 = arith.maximumf %329, %330 : vector<12x16x64xf32>
    %c0_315 = arith.constant 0 : index
    %c0_316 = arith.constant 0 : index
    %c0_317 = arith.constant 0 : index
    %c0_318 = arith.constant 0 : index
    %332 = vector.load %arg6[%c0_315, %c0_316, %c0_317, %c0_318] : memref<1x12x16x64xf32, #tpu.memory_space<vmem>>, vector<1x12x16x64xf32>
    %333 = vector.shape_cast %332 : vector<1x12x16x64xf32> to vector<12x16x64xf32>
    %334 = vector.shape_cast %331 : vector<12x16x64xf32> to vector<1x12x16x64xf32>
    tpu.vector_store %arg6[%c0_315, %c0_316, %c0_317, %c0_318], %334 {strides = array<i32>} : memref<1x12x16x64xf32, #tpu.memory_space<vmem>>, vector<1x12x16x64xf32>,
    return
  }
  func.func @transform_0(%arg0: i32) -> (i32, i32, i32) {
    %c0_i32 = arith.constant 0 : i32
    %c0_i32_0 = arith.constant 0 : i32
    %c0_i32_1 = arith.constant 0 : i32
    return %arg0, %c0_i32, %c0_i32_0 : i32, i32, i32
  }
  func.func @transform_1(%arg0: i32) -> (i32, i32) {
    %c0_i32 = arith.constant 0 : i32
    %c0_i32_0 = arith.constant 0 : i32
    %c0_i32_1 = arith.constant 0 : i32
    return %c0_i32, %c0_i32_0 : i32, i32
  }
  func.func @transform_2(%arg0: i32) -> (i32, i32) {
    %c0_i32 = arith.constant 0 : i32
    %c0_i32_0 = arith.constant 0 : i32
    %c0_i32_1 = arith.constant 0 : i32
    return %c0_i32, %c0_i32_0 : i32, i32
  }
  func.func @transform_3(%arg0: i32) -> (i32, i32, i32) {
    %c0_i32 = arith.constant 0 : i32
    %c0_i32_0 = arith.constant 0 : i32
    %c0_i32_1 = arith.constant 0 : i32
    %c0_i32_2 = arith.constant 0 : i32
    return %c0_i32, %c0_i32_0, %c0_i32_1 : i32, i32, i32
  }
  func.func @transform_4(%arg0: i32) -> (i32, i32) {
    %c0_i32 = arith.constant 0 : i32
    %c0_i32_0 = arith.constant 0 : i32
    %c0_i32_1 = arith.constant 0 : i32
    return %c0_i32, %c0_i32_0 : i32, i32
  }
  func.func @transform_5(%arg0: i32) -> (i32, i32, i32, i32) {
    %c0_i32 = arith.constant 0 : i32
    %c0_i32_0 = arith.constant 0 : i32
    %c0_i32_1 = arith.constant 0 : i32
    %c0_i32_2 = arith.constant 0 : i32
    return %arg0, %c0_i32, %c0_i32_0, %c0_i32_1 : i32, i32, i32, i32
  }
}

</mosaic_0001>

<llo_original>
// kernel: tpu_custom_call.1
$region0: #{tpu_custom_call.1}
  #allocation0 [shape = 'u32[]', space=smem, size = 0x4, offset = 0x4, fixed_abs, tag = 'smem constant byte address 0x4 - core index']
  #allocation1 [shape = 'u32[72,128]{1,0:T(1,128)}', space=vmem, size = 0x9000, scoped, tag = 'internal scratch']
  #allocation2 [shape = 'f32[864,32]{1,0:T(8,128)}', space=vmem, size = 0x6c000, scoped, tag = 'scratch operand']
  #allocation3 [shape = 'f32[768,64]{1,0:T(8,128)}', space=vmem, size = 0x60000, scoped, tag = 'scratch operand']
  %s0 = inlined_call_operand.vmem [shape: f32[2,832,9], index: 0, kind: input, shape index: {}]
  %s1 = inlined_call_operand.vmem [shape: f32[9,32], index: 1, kind: input, shape index: {}]
  %s2 = inlined_call_operand.vmem [shape: f32[1,32], index: 2, kind: input, shape index: {}]
  %s3 = inlined_call_operand.vmem [shape: f32[9,32,64], index: 3, kind: input, shape index: {}]
  %s4 = inlined_call_operand.vmem [shape: f32[1,64], index: 4, kind: input, shape index: {}]
  %s5 = inlined_call_operand.hbm [shape: f32[2,12,16,64], index: 5, kind: output, shape index: {}]
  %s6 = sld [smem:[#allocation0]]
  $region57: #{tpu_custom_call.1} parent=0
    _
  %s8 = ssub.s32 1, %s6
  %s9 = scalar_select 0, %s8, %s6
  $region1: #{tpu_custom_call.1} parent=0
    #allocation4 [shape = 'u8[196608]{0}', space=vmem, size = 0x30000, scoped, tag = 'output window, operand 0']
    #allocation5 [shape = 's32[2]{0}', space=sflag, size = 0x8, scoped, tag = 'scoped memory for tpu_custom_call.1']
    %10 = vsyncpa [#allocation5], 0
    %s11 = scalar_lea.sflag [#allocation5], 1
    %12 = vsyncpa %s11, 0
    loop: start=0, step=1, limit=4
    $region2: #{tpu_custom_call.1} parent=1 // loop_pre_header
      _
    $region3: #{tpu_custom_call.1} parent=1 // loop_header
      %s14 = sphi 0, %s18
      %p15 = scmp.ge.s32.totalorder %s14, 4
      %s24 = sphi 0, %s26
      %s27 = sphi 0, %s24
      %s28 = sphi 0, %s27
      %s44 = sphi 0, %s28
      %s48 = sphi 0, %s48
      %s50 = sphi 0, %s48
      %s51 = sphi 0, %s50
      %s65 = sphi 0, %s51
      %s69 = sphi 0, %s69
      %s71 = sphi 0, %s69
      %s72 = sphi 0, %s71
      %s86 = sphi 0, %s72
      %s90 = sphi 0, %s90
      %s92 = sphi 0, %s90
      %s93 = sphi 0, %s92
      %s107 = sphi 0, %s93
      %s111 = sphi 0, %s111
      %s113 = sphi 0, %s111
      %s114 = sphi 0, %s113
      %s128 = sphi 0, %s114
      %s134 = sphi 0, %s136
      %s137 = sphi 0, %s134
      %s138 = sphi 0, %s137
      %s154 = sphi 0, %s138
    $region4: #{tpu_custom_call.1} parent=1 // loop_header_branch
      %17 = sbr.rel (%p15) target = $region8
    $region5: #{tpu_custom_call.1} parent=1 // loop_body
      %s19 = ssub.s32 %s14, 1
      %s20 = ssub.s32 %s14, 2
      %s21 = sadd.s32 %s14, 1
      %s22 = ssub.s32 %s14, %s21
      %p23 = scmp.eq.s32.totalorder %s22, 0
      %s25 = sadd.s32 %s24, 1
      %s26 = scalar_select %p23, %s24, %s25
      %p29 = pneg %p23
      %p30 = scmp.eq.s32.totalorder %s14, 1
      %p31 = por %p29, %p30
      %p32 = scmp.ne.s32.totalorder %s24, %s27
      %p33 = scmp.eq.s32.totalorder %s14, 0
      %p34 = por %p32, %p33
      %p35 = scmp.ne.s32.totalorder %s24, %s27
      %p36 = scmp.eq.s32.totalorder %s19, 1
      %p37 = por %p35, %p36
      %p38 = scmp.ne.s32.totalorder %s27, %s28
      %p39 = scmp.eq.s32.totalorder %s19, 0
      %p40 = por %p38, %p39
      %p41 = scmp.ne.s32.totalorder %s27, %s28
      %p42 = scmp.eq.s32.totalorder %s20, 1
      %p43 = por %p41, %p42
      %p45 = scmp.ne.s32.totalorder %s28, %s44
      %p46 = scmp.eq.s32.totalorder %s20, 0
      %p47 = por %p45, %p46
      %s49 = sadd.s32 %s48, 1
      %p52 = scmp.eq.s32.totalorder %s14, 1
      %p53 = scmp.ne.s32.totalorder %s48, %s50
      %p54 = scmp.eq.s32.totalorder %s14, 0
      %p55 = por %p53, %p54
      %p56 = scmp.ne.s32.totalorder %s48, %s50
      %p57 = scmp.eq.s32.totalorder %s19, 1
      %p58 = por %p56, %p57
      %p59 = scmp.ne.s32.totalorder %s50, %s51
      %p60 = scmp.eq.s32.totalorder %s19, 0
      %p61 = por %p59, %p60
      %p62 = scmp.ne.s32.totalorder %s50, %s51
      %p63 = scmp.eq.s32.totalorder %s20, 1
      %p64 = por %p62, %p63
      %p66 = scmp.ne.s32.totalorder %s51, %s65
      %p67 = scmp.eq.s32.totalorder %s20, 0
      %p68 = por %p66, %p67
      %s70 = sadd.s32 %s69, 1
      %p73 = scmp.eq.s32.totalorder %s14, 1
      %p74 = scmp.ne.s32.totalorder %s69, %s71
      %p75 = scmp.eq.s32.totalorder %s14, 0
      %p76 = por %p74, %p75
      %p77 = scmp.ne.s32.totalorder %s69, %s71
      %p78 = scmp.eq.s32.totalorder %s19, 1
      %p79 = por %p77, %p78
      %p80 = scmp.ne.s32.totalorder %s71, %s72
      %p81 = scmp.eq.s32.totalorder %s19, 0
      %p82 = por %p80, %p81
      %p83 = scmp.ne.s32.totalorder %s71, %s72
      %p84 = scmp.eq.s32.totalorder %s20, 1
      %p85 = por %p83, %p84
      %p87 = scmp.ne.s32.totalorder %s72, %s86
      %p88 = scmp.eq.s32.totalorder %s20, 0
      %p89 = por %p87, %p88
      %s91 = sadd.s32 %s90, 1
      %p94 = scmp.eq.s32.totalorder %s14, 1
      %p95 = scmp.ne.s32.totalorder %s90, %s92
      %p96 = scmp.eq.s32.totalorder %s14, 0
      %p97 = por %p95, %p96
      %p98 = scmp.ne.s32.totalorder %s90, %s92
      %p99 = scmp.eq.s32.totalorder %s19, 1
      %p100 = por %p98, %p99
      %p101 = scmp.ne.s32.totalorder %s92, %s93
      %p102 = scmp.eq.s32.totalorder %s19, 0
      %p103 = por %p101, %p102
      %p104 = scmp.ne.s32.totalorder %s92, %s93
      %p105 = scmp.eq.s32.totalorder %s20, 1
      %p106 = por %p104, %p105
      %p108 = scmp.ne.s32.totalorder %s93, %s107
      %p109 = scmp.eq.s32.totalorder %s20, 0
      %p110 = por %p108, %p109
      %s112 = sadd.s32 %s111, 1
      %p115 = scmp.eq.s32.totalorder %s14, 1
      %p116 = scmp.ne.s32.totalorder %s111, %s113
      %p117 = scmp.eq.s32.totalorder %s14, 0
      %p118 = por %p116, %p117
      %p119 = scmp.ne.s32.totalorder %s111, %s113
      %p120 = scmp.eq.s32.totalorder %s19, 1
      %p121 = por %p119, %p120
      %p122 = scmp.ne.s32.totalorder %s113, %s114
      %p123 = scmp.eq.s32.totalorder %s19, 0
      %p124 = por %p122, %p123
      %p125 = scmp.ne.s32.totalorder %s113, %s114
      %p126 = scmp.eq.s32.totalorder %s20, 1
      %p127 = por %p125, %p126
      %p129 = scmp.ne.s32.totalorder %s114, %s128
      %p130 = scmp.eq.s32.totalorder %s20, 0
      %p131 = por %p129, %p130
      %s132 = ssub.s32 %s14, %s21
      %p133 = scmp.eq.s32.totalorder %s132, 0
      %s135 = sadd.s32 %s134, 1
      %s136 = scalar_select %p133, %s134, %s135
      %p139 = pneg %p133
      %p140 = scmp.eq.s32.totalorder %s14, 1
      %p141 = por %p139, %p140
      %p142 = scmp.ne.s32.totalorder %s134, %s137
      %p143 = scmp.eq.s32.totalorder %s14, 0
      %p144 = por %p142, %p143
      %p145 = scmp.ne.s32.totalorder %s134, %s137
      %p146 = scmp.eq.s32.totalorder %s19, 1
      %p147 = por %p145, %p146
      %p148 = scmp.ne.s32.totalorder %s137, %s138
      %p149 = scmp.eq.s32.totalorder %s19, 0
      %p150 = por %p148, %p149
      %p151 = scmp.ne.s32.totalorder %s137, %s138
      %p152 = scmp.eq.s32.totalorder %s20, 1
      %p153 = por %p151, %p152
      %p155 = scmp.ne.s32.totalorder %s138, %s154
      %p156 = scmp.eq.s32.totalorder %s20, 0
      %p157 = por %p155, %p156
      %p158 = scmp.le.s32.totalorder 1, %s14
      %p159 = scmp.lt.s32.totalorder %s14, 3
      %p160 = pnand %p158, %p159
      %p161 = pneg %p160
      // Predicated region
      $region9: #{tpu_custom_call.1} parent=5 // pred_check
        _
      $region10: #{tpu_custom_call.1} parent=5 // pred_check_branch
        %163 = sbr.rel (%p160) target = $region12
      $region11: #{tpu_custom_call.1} parent=5 // pred_region
        %s164 = ssub.s32 %s14, 1
        // Predicated region
        $region13: #{tpu_custom_call.1} parent=11 // pred_check
          %p165 = pneg %p61
        $region14: #{tpu_custom_call.1} parent=11 // pred_check_branch
          %167 = sbr.rel (%p165) target = $region16
        $region15: #{tpu_custom_call.1} parent=11 // pred_region
          _
        $region16: #{tpu_custom_call.1} parent=11 // pred_fallthru
          _
        // Predicated region
        $region17: #{tpu_custom_call.1} parent=11 // pred_check
          %p168 = pneg %p82
        $region18: #{tpu_custom_call.1} parent=11 // pred_check_branch
          %170 = sbr.rel (%p168) target = $region20
        $region19: #{tpu_custom_call.1} parent=11 // pred_region
          _
        $region20: #{tpu_custom_call.1} parent=11 // pred_fallthru
          _
        // Predicated region
        $region21: #{tpu_custom_call.1} parent=11 // pred_check
          %p171 = pneg %p103
        $region22: #{tpu_custom_call.1} parent=11 // pred_check_branch
          %173 = sbr.rel (%p171) target = $region24
        $region23: #{tpu_custom_call.1} parent=11 // pred_region
          _
        $region24: #{tpu_custom_call.1} parent=11 // pred_fallthru
          _
        // Predicated region
        $region25: #{tpu_custom_call.1} parent=11 // pred_check
          %p174 = pneg %p124
        $region26: #{tpu_custom_call.1} parent=11 // pred_check_branch
          %176 = sbr.rel (%p174) target = $region28
        $region27: #{tpu_custom_call.1} parent=11 // pred_region
          _
        $region28: #{tpu_custom_call.1} parent=11 // pred_fallthru
          _
      $region12: #{tpu_custom_call.1} parent=5 // pred_fallthru
        _
      %p177 = scmp.lt.s32.totalorder %s14, 2
      // Predicated region
      $region29: #{tpu_custom_call.1} parent=5 // pred_check
        %p178 = pneg %p177
      $region30: #{tpu_custom_call.1} parent=5 // pred_check_branch
        %180 = sbr.rel (%p178) target = $region32
      $region31: #{tpu_custom_call.1} parent=5 // pred_region
        // Predicated region
        $region33: #{tpu_custom_call.1} parent=31 // pred_check
          %p181 = pneg %p34
        $region34: #{tpu_custom_call.1} parent=31 // pred_check_branch
          %183 = sbr.rel (%p181) target = $region36
        $region35: #{tpu_custom_call.1} parent=31 // pred_region
          %p184 = scmp.lt.s32.totalorder %s14, 1
          %s185 = scalar_select %p184, %s14, 1
          %s186 = smul.addr %s185, 104
          %s187 = smul.addr %s186, 8
          %s188 = scalar_lea.vmem %s0, %s187
        $region36: #{tpu_custom_call.1} parent=31 // pred_fallthru
          _
      $region32: #{tpu_custom_call.1} parent=5 // pred_fallthru
        _
      %p189 = scmp.le.s32.totalorder 1, %s14
      %p190 = scmp.lt.s32.totalorder %s14, 3
      %p191 = pnand %p189, %p190
      %p192 = pneg %p191
      // Predicated region
      $region37: #{tpu_custom_call.1} parent=5 // pred_check
        _
      $region38: #{tpu_custom_call.1} parent=5 // pred_check_branch
        %194 = sbr.rel (%p191) target = $region40
      $region39: #{tpu_custom_call.1} parent=5 // pred_region
        %s195 = ssub.s32 %s14, 1
        %p196 = scmp.lt.s32.totalorder %s19, 1
        %s197 = scalar_select %p196, %s19, 1
        %s198 = smul.addr %s197, 104
        %s199 = smul.addr %s198, 8
        %s200 = scalar_lea.vmem %s0, %s199
        %p201 = pneg %p40
        %p202 = pneg %p37
        %p203 = pneg %p61
        %p204 = pneg %p58
        %p205 = pneg %p82
        %p206 = pneg %p79
        %p207 = pneg %p103
        %p208 = pneg %p100
        %p209 = pneg %p124
        %p210 = pneg %p121
        %p211 = pneg %p150
        %p212 = pneg %p147
        %s213 = sand.u32 %s137, 1
        %s214 = scalar_lea.sflag [#allocation5], %s213
        %s215 = sand.u32 %s137, 1
        %s216 = smul.addr %s215, 192
        %s217 = scalar_lea.vmem [#allocation4], %s216
        %p218 = scmp.lt.s32.totalorder %s19, 1
        %s219 = scalar_select %p218, %s19, 1
        %s220 = smul.addr %s219, 104
        %s221 = smul.addr %s220, 8
        %s222 = scalar_lea.vmem %s0, %s221
        %p223 = scmp.eq.s32.totalorder %s19, 0
        // Predicated region
        $region41: #{tpu_custom_call.1} parent=39 // pred_check
          %p224 = pneg %p223
        $region42: #{tpu_custom_call.1} parent=39 // pred_check_branch
          %226 = sbr.rel (%p224) target = $region44
        $region43: #{tpu_custom_call.1} parent=39 // pred_region
          %vm227 = vcmask 261120
          %228 = vst.msk [vmem:[#allocation2 + $0x340] sm:$0xff] %vm227, 0.0
          %229 = vst.msk [vmem:[#allocation2 + $0x348] sm:$0xff] %vm227, 0.0
          %230 = vst.msk [vmem:[#allocation2 + $0x350] sm:$0xff] %vm227, 0.0
          %231 = vst.msk [vmem:[#allocation2 + $0x358] sm:$0xff] %vm227, 0.0
        $region44: #{tpu_custom_call.1} parent=39 // pred_fallthru
          _
        %v232 = vld [vmem:[%s222] sm:$0xff]
        %v233 = vld [vmem:[%s222 + $0x8] sm:$0xff]
        %v234 = vld [vmem:[%s222 + $0x10] sm:$0xff]
        %v235 = vld [vmem:[%s222 + $0x18] sm:$0xff]
        %v236 = vld [vmem:[%s222 + $0x20] sm:$0xff]
        %v237 = vld [vmem:[%s222 + $0x28] sm:$0xff]
        %v238 = vld [vmem:[%s222 + $0x30] sm:$0xff]
        %v239 = vld [vmem:[%s222 + $0x38] sm:$0xff]
        %v240 = vld [vmem:[%s222 + $0x40] sm:$0xff]
        %v241 = vld [vmem:[%s222 + $0x48] sm:$0xff]
        %v242 = vld [vmem:[%s222 + $0x50] sm:$0xff]
        %v243 = vld [vmem:[%s222 + $0x58] sm:$0xff]
        %v244 = vld [vmem:[%s222 + $0x60] sm:$0xff]
        %v245 = vld [vmem:[%s222 + $0x68] sm:$0xff]
        %v246 = vld [vmem:[%s222 + $0x70] sm:$0xff]
        %v247 = vld [vmem:[%s222 + $0x78] sm:$0xff]
        %v248 = vld [vmem:[%s222 + $0x80] sm:$0xff]
        %v249 = vld [vmem:[%s222 + $0x88] sm:$0xff]
        %v250 = vld [vmem:[%s222 + $0x90] sm:$0xff]
        %v251 = vld [vmem:[%s222 + $0x98] sm:$0xff]
        %v252 = vld [vmem:[%s222 + $0xa0] sm:$0xff]
        %v253 = vld [vmem:[%s222 + $0xa8] sm:$0xff]
        %v254 = vld [vmem:[%s222 + $0xb0] sm:$0xff]
        %v255 = vld [vmem:[%s222 + $0xb8] sm:$0xff]
        %v256 = vld [vmem:[%s222 + $0xc0] sm:$0xff]
        %v257 = vld [vmem:[%s222 + $0xc8] sm:$0xff]
        %v258 = vld [vmem:[%s222 + $0xd0] sm:$0xff]
        %v259 = vld [vmem:[%s222 + $0xd8] sm:$0xff]
        %v260 = vld [vmem:[%s222 + $0xe0] sm:$0xff]
        %v261 = vld [vmem:[%s222 + $0xe8] sm:$0xff]
        %v262 = vld [vmem:[%s222 + $0xf0] sm:$0xff]
        %v263 = vld [vmem:[%s222 + $0xf8] sm:$0xff]
        %v264 = vld [vmem:[%s222 + $0x100] sm:$0xff]
        %v265 = vld [vmem:[%s222 + $0x108] sm:$0xff]
        %v266 = vld [vmem:[%s222 + $0x110] sm:$0xff]
        %v267 = vld [vmem:[%s222 + $0x118] sm:$0xff]
        %v268 = vld [vmem:[%s222 + $0x120] sm:$0xff]
        %v269 = vld [vmem:[%s222 + $0x128] sm:$0xff]
        %v270 = vld [vmem:[%s222 + $0x130] sm:$0xff]
        %v271 = vld [vmem:[%s222 + $0x138] sm:$0xff]
        %v272 = vld [vmem:[%s222 + $0x140] sm:$0xff]
        %v273 = vld [vmem:[%s222 + $0x148] sm:$0xff]
        %v274 = vld [vmem:[%s222 + $0x150] sm:$0xff]
        %v275 = vld [vmem:[%s222 + $0x158] sm:$0xff]
        %v276 = vld [vmem:[%s222 + $0x160] sm:$0xff]
        %v277 = vld [vmem:[%s222 + $0x168] sm:$0xff]
        %v278 = vld [vmem:[%s222 + $0x170] sm:$0xff]
        %v279 = vld [vmem:[%s222 + $0x178] sm:$0xff]
        %v280 = vld [vmem:[%s222 + $0x180] sm:$0xff]
        %v281 = vld [vmem:[%s222 + $0x188] sm:$0xff]
        %v282 = vld [vmem:[%s222 + $0x190] sm:$0xff]
        %v283 = vld [vmem:[%s222 + $0x198] sm:$0xff]
        %v284 = vld [vmem:[%s222 + $0x1a0] sm:$0xff]
        %v285 = vld [vmem:[%s222 + $0x1a8] sm:$0xff]
        %v286 = vld [vmem:[%s222 + $0x1b0] sm:$0xff]
        %v287 = vld [vmem:[%s222 + $0x1b8] sm:$0xff]
        %v288 = vld [vmem:[%s222 + $0x1c0] sm:$0xff]
        %v289 = vld [vmem:[%s222 + $0x1c8] sm:$0xff]
        %v290 = vld [vmem:[%s222 + $0x1d0] sm:$0xff]
        %v291 = vld [vmem:[%s222 + $0x1d8] sm:$0xff]
        %v292 = vld [vmem:[%s222 + $0x1e0] sm:$0xff]
        %v293 = vld [vmem:[%s222 + $0x1e8] sm:$0xff]
        %v294 = vld [vmem:[%s222 + $0x1f0] sm:$0xff]
        %v295 = vld [vmem:[%s222 + $0x1f8] sm:$0xff]
        %v296 = vld [vmem:[%s222 + $0x200] sm:$0xff]
        %v297 = vld [vmem:[%s222 + $0x208] sm:$0xff]
        %v298 = vld [vmem:[%s222 + $0x210] sm:$0xff]
        %v299 = vld [vmem:[%s222 + $0x218] sm:$0xff]
        %v300 = vld [vmem:[%s222 + $0x220] sm:$0xff]
        %v301 = vld [vmem:[%s222 + $0x228] sm:$0xff]
        %v302 = vld [vmem:[%s222 + $0x230] sm:$0xff]
        %v303 = vld [vmem:[%s222 + $0x238] sm:$0xff]
        %v304 = vld [vmem:[%s222 + $0x240] sm:$0xff]
        %v305 = vld [vmem:[%s222 + $0x248] sm:$0xff]
        %v306 = vld [vmem:[%s222 + $0x250] sm:$0xff]
        %v307 = vld [vmem:[%s222 + $0x258] sm:$0xff]
        %v308 = vld [vmem:[%s222 + $0x260] sm:$0xff]
        %v309 = vld [vmem:[%s222 + $0x268] sm:$0xff]
        %v310 = vld [vmem:[%s222 + $0x270] sm:$0xff]
        %v311 = vld [vmem:[%s222 + $0x278] sm:$0xff]
        %v312 = vld [vmem:[%s222 + $0x280] sm:$0xff]
        %v313 = vld [vmem:[%s222 + $0x288] sm:$0xff]
        %v314 = vld [vmem:[%s222 + $0x290] sm:$0xff]
        %v315 = vld [vmem:[%s222 + $0x298] sm:$0xff]
        %v316 = vld [vmem:[%s222 + $0x2a0] sm:$0xff]
        %v317 = vld [vmem:[%s222 + $0x2a8] sm:$0xff]
        %v318 = vld [vmem:[%s222 + $0x2b0] sm:$0xff]
        %v319 = vld [vmem:[%s222 + $0x2b8] sm:$0xff]
        %v320 = vld [vmem:[%s222 + $0x2c0] sm:$0xff]
        %v321 = vld [vmem:[%s222 + $0x2c8] sm:$0xff]
        %v322 = vld [vmem:[%s222 + $0x2d0] sm:$0xff]
        %v323 = vld [vmem:[%s222 + $0x2d8] sm:$0xff]
        %v324 = vld [vmem:[%s222 + $0x2e0] sm:$0xff]
        %v325 = vld [vmem:[%s222 + $0x2e8] sm:$0xff]
        %v326 = vld [vmem:[%s222 + $0x2f0] sm:$0xff]
        %v327 = vld [vmem:[%s222 + $0x2f8] sm:$0xff]
        %v328 = vld [vmem:[%s222 + $0x300] sm:$0xff]
        %v329 = vld [vmem:[%s222 + $0x308] sm:$0xff]
        %v330 = vld [vmem:[%s222 + $0x310] sm:$0xff]
        %v331 = vld [vmem:[%s222 + $0x318] sm:$0xff]
        %v332 = vld [vmem:[%s222 + $0x320] sm:$0xff]
        %v333 = vld [vmem:[%s222 + $0x328] sm:$0xff]
        %v334 = vld [vmem:[%s222 + $0x330] sm:$0xff]
        %v335 = vld [vmem:[%s222 + $0x338] sm:$0xff]
        %v336 = vld [vmem:[%s1] sm:$0xff]
        %v337 = vld [vmem:[%s1 + $0x8] sm:$0x1]
        %v338 = vld [vmem:[%s2] sm:$0x1]
        %v340 = vperm.slane %v338, 0
        %vm342 = vcmask 72704
        %v344 = vsel %vm342, %v232, 0
        %v347 = vsel %vm342, %v233, 0
        %v350 = vsel %vm342, %v234, 0
        %v353 = vsel %vm342, %v235, 0
        %v356 = vsel %vm342, %v236, 0
        %v359 = vsel %vm342, %v237, 0
        %v362 = vsel %vm342, %v238, 0
        %v365 = vsel %vm342, %v239, 0
        %v368 = vsel %vm342, %v240, 0
        %v371 = vsel %vm342, %v241, 0
        %v374 = vsel %vm342, %v242, 0
        %v377 = vsel %vm342, %v243, 0
        %v380 = vsel %vm342, %v244, 0
        %v383 = vsel %vm342, %v245, 0
        %v386 = vsel %vm342, %v246, 0
        %v389 = vsel %vm342, %v247, 0
        %v392 = vsel %vm342, %v248, 0
        %v395 = vsel %vm342, %v249, 0
        %v398 = vsel %vm342, %v250, 0
        %v401 = vsel %vm342, %v251, 0
        %v404 = vsel %vm342, %v252, 0
        %v407 = vsel %vm342, %v253, 0
        %v410 = vsel %vm342, %v254, 0
        %v413 = vsel %vm342, %v255, 0
        %v416 = vsel %vm342, %v256, 0
        %v419 = vsel %vm342, %v257, 0
        %v422 = vsel %vm342, %v258, 0
        %v425 = vsel %vm342, %v259, 0
        %v428 = vsel %vm342, %v260, 0
        %v431 = vsel %vm342, %v261, 0
        %v434 = vsel %vm342, %v262, 0
        %v437 = vsel %vm342, %v263, 0
        %v440 = vsel %vm342, %v264, 0
        %v443 = vsel %vm342, %v265, 0
        %v446 = vsel %vm342, %v266, 0
        %v449 = vsel %vm342, %v267, 0
        %v452 = vsel %vm342, %v268, 0
        %v455 = vsel %vm342, %v269, 0
        %v458 = vsel %vm342, %v270, 0
        %v461 = vsel %vm342, %v271, 0
        %v464 = vsel %vm342, %v272, 0
        %v467 = vsel %vm342, %v273, 0
        %v470 = vsel %vm342, %v274, 0
        %v473 = vsel %vm342, %v275, 0
        %v476 = vsel %vm342, %v276, 0
        %v479 = vsel %vm342, %v277, 0
        %v482 = vsel %vm342, %v278, 0
        %v485 = vsel %vm342, %v279, 0
        %v488 = vsel %vm342, %v280, 0
        %v491 = vsel %vm342, %v281, 0
        %v494 = vsel %vm342, %v282, 0
        %v497 = vsel %vm342, %v283, 0
        %v500 = vsel %vm342, %v284, 0
        %v503 = vsel %vm342, %v285, 0
        %v506 = vsel %vm342, %v286, 0
        %v509 = vsel %vm342, %v287, 0
        %v512 = vsel %vm342, %v288, 0
        %v515 = vsel %vm342, %v289, 0
        %v518 = vsel %vm342, %v290, 0
        %v521 = vsel %vm342, %v291, 0
        %v524 = vsel %vm342, %v292, 0
        %v527 = vsel %vm342, %v293, 0
        %v530 = vsel %vm342, %v294, 0
        %v533 = vsel %vm342, %v295, 0
        %v536 = vsel %vm342, %v296, 0
        %v539 = vsel %vm342, %v297, 0
        %v542 = vsel %vm342, %v298, 0
        %v545 = vsel %vm342, %v299, 0
        %v548 = vsel %vm342, %v300, 0
        %v551 = vsel %vm342, %v301, 0
        %v554 = vsel %vm342, %v302, 0
        %v557 = vsel %vm342, %v303, 0
        %v560 = vsel %vm342, %v304, 0
        %v563 = vsel %vm342, %v305, 0
        %v566 = vsel %vm342, %v306, 0
        %v569 = vsel %vm342, %v307, 0
        %v572 = vsel %vm342, %v308, 0
        %v575 = vsel %vm342, %v309, 0
        %v578 = vsel %vm342, %v310, 0
        %v581 = vsel %vm342, %v311, 0
        %v584 = vsel %vm342, %v312, 0
        %v587 = vsel %vm342, %v313, 0
        %v590 = vsel %vm342, %v314, 0
        %v593 = vsel %vm342, %v315, 0
        %v596 = vsel %vm342, %v316, 0
        %v599 = vsel %vm342, %v317, 0
        %v602 = vsel %vm342, %v318, 0
        %v605 = vsel %vm342, %v319, 0
        %v608 = vsel %vm342, %v320, 0
        %v611 = vsel %vm342, %v321, 0
        %v614 = vsel %vm342, %v322, 0
        %v617 = vsel %vm342, %v323, 0
        %v620 = vsel %vm342, %v324, 0
        %v623 = vsel %vm342, %v325, 0
        %v626 = vsel %vm342, %v326, 0
        %v629 = vsel %vm342, %v327, 0
        %v632 = vsel %vm342, %v328, 0
        %v635 = vsel %vm342, %v329, 0
        %v638 = vsel %vm342, %v330, 0
        %v641 = vsel %vm342, %v331, 0
        %v644 = vsel %vm342, %v332, 0
        %v647 = vsel %vm342, %v333, 0
        %v650 = vsel %vm342, %v334, 0
        %v653 = vsel %vm342, %v335, 0
        %vm655 = vcmask 1040384
        %v657 = vsel %vm655, %v337, 0
        %659 = vmatpush.msra.mxu0 0.0
        %660 = vmatpush.msra.mxu0 0.0
        %661 = vmatpush.msra.mxu0 0.0
        %662 = vmatpush.msra.mxu0 0.0
        %663 = vmatpush.msra.mxu0 0.0
        %664 = vmatpush.msra.mxu0 0.0
        %665 = vmatpush.msra.mxu0 0.0
        %666 = vmatpush.msra.mxu0 0.0
        %667 = vmatpush.msra.mxu0 0.0
        %668 = vmatpush.msra.mxu0 0.0
        %669 = vmatpush.msra.mxu0 0.0
        %670 = vmatpush.msra.mxu0 0.0
        %671 = vmatpush.msra.mxu0 0.0
        %672 = vmatpush.msra.mxu0 0.0
        %673 = vmatpush.msra.mxu0 %v657
        %674 = vmatpush.msra.mxu0 %v336
        %675 = vmatmul.f32.gmra.mxu0 %v344
        %v676 = vpop.f32.mrf.mxu0
        %v677 = vadd.f32 %v340, %v676
        %678 = vmatmul.f32.gmra.mxu0 %v347
        %v679 = vpop.f32.mrf.mxu0
        %v680 = vadd.f32 %v340, %v679
        %681 = vmatmul.f32.gmra.mxu0 %v350
        %v682 = vpop.f32.mrf.mxu0
        %v683 = vadd.f32 %v340, %v682
        %684 = vmatmul.f32.gmra.mxu0 %v353
        %v685 = vpop.f32.mrf.mxu0
        %v686 = vadd.f32 %v340, %v685
        %687 = vmatmul.f32.gmra.mxu0 %v356
        %v688 = vpop.f32.mrf.mxu0
        %v689 = vadd.f32 %v340, %v688
        %690 = vmatmul.f32.gmra.mxu0 %v359
        %v691 = vpop.f32.mrf.mxu0
        %v692 = vadd.f32 %v340, %v691
        %693 = vmatmul.f32.gmra.mxu0 %v362
        %v694 = vpop.f32.mrf.mxu0
        %v695 = vadd.f32 %v340, %v694
        %696 = vmatmul.f32.gmra.mxu0 %v365
        %v697 = vpop.f32.mrf.mxu0
        %v698 = vadd.f32 %v340, %v697
        %699 = vmatmul.f32.gmra.mxu0 %v368
        %v700 = vpop.f32.mrf.mxu0
        %v701 = vadd.f32 %v340, %v700
        %702 = vmatmul.f32.gmra.mxu0 %v371
        %v703 = vpop.f32.mrf.mxu0
        %v704 = vadd.f32 %v340, %v703
        %705 = vmatmul.f32.gmra.mxu0 %v374
        %v706 = vpop.f32.mrf.mxu0
        %v707 = vadd.f32 %v340, %v706
        %708 = vmatmul.f32.gmra.mxu0 %v377
        %v709 = vpop.f32.mrf.mxu0
        %v710 = vadd.f32 %v340, %v709
        %711 = vmatmul.f32.gmra.mxu0 %v380
        %v712 = vpop.f32.mrf.mxu0
        %v713 = vadd.f32 %v340, %v712
        %714 = vmatmul.f32.gmra.mxu0 %v383
        %v715 = vpop.f32.mrf.mxu0
        %v716 = vadd.f32 %v340, %v715
        %717 = vmatmul.f32.gmra.mxu0 %v386
        %v718 = vpop.f32.mrf.mxu0
        %v719 = vadd.f32 %v340, %v718
        %720 = vmatmul.f32.gmra.mxu0 %v389
        %v721 = vpop.f32.mrf.mxu0
        %v722 = vadd.f32 %v340, %v721
        %723 = vmatmul.f32.gmra.mxu0 %v392
        %v724 = vpop.f32.mrf.mxu0
        %v725 = vadd.f32 %v340, %v724
        %726 = vmatmul.f32.gmra.mxu0 %v395
        %v727 = vpop.f32.mrf.mxu0
        %v728 = vadd.f32 %v340, %v727
        %729 = vmatmul.f32.gmra.mxu0 %v398
        %v730 = vpop.f32.mrf.mxu0
        %v731 = vadd.f32 %v340, %v730
        %732 = vmatmul.f32.gmra.mxu0 %v401
        %v733 = vpop.f32.mrf.mxu0
        %v734 = vadd.f32 %v340, %v733
        %735 = vmatmul.f32.gmra.mxu0 %v404
        %v736 = vpop.f32.mrf.mxu0
        %v737 = vadd.f32 %v340, %v736
        %738 = vmatmul.f32.gmra.mxu0 %v407
        %v739 = vpop.f32.mrf.mxu0
        %v740 = vadd.f32 %v340, %v739
        %741 = vmatmul.f32.gmra.mxu0 %v410
        %v742 = vpop.f32.mrf.mxu0
        %v743 = vadd.f32 %v340, %v742
        %744 = vmatmul.f32.gmra.mxu0 %v413
        %v745 = vpop.f32.mrf.mxu0
        %v746 = vadd.f32 %v340, %v745
        %747 = vmatmul.f32.gmra.mxu0 %v416
        %v748 = vpop.f32.mrf.mxu0
        %v749 = vadd.f32 %v340, %v748
        %750 = vmatmul.f32.gmra.mxu0 %v419
        %v751 = vpop.f32.mrf.mxu0
        %v752 = vadd.f32 %v340, %v751
        %753 = vmatmul.f32.gmra.mxu0 %v422
        %v754 = vpop.f32.mrf.mxu0
        %v755 = vadd.f32 %v340, %v754
        %756 = vmatmul.f32.gmra.mxu0 %v425
        %v757 = vpop.f32.mrf.mxu0
        %v758 = vadd.f32 %v340, %v757
        %759 = vmatmul.f32.gmra.mxu0 %v428
        %v760 = vpop.f32.mrf.mxu0
        %v761 = vadd.f32 %v340, %v760
        %762 = vmatmul.f32.gmra.mxu0 %v431
        %v763 = vpop.f32.mrf.mxu0
        %v764 = vadd.f32 %v340, %v763
        %765 = vmatmul.f32.gmra.mxu0 %v434
        %v766 = vpop.f32.mrf.mxu0
        %v767 = vadd.f32 %v340, %v766
        %768 = vmatmul.f32.gmra.mxu0 %v437
        %v769 = vpop.f32.mrf.mxu0
        %v770 = vadd.f32 %v340, %v769
        %771 = vmatmul.f32.gmra.mxu0 %v440
        %v772 = vpop.f32.mrf.mxu0
        %v773 = vadd.f32 %v340, %v772
        %774 = vmatmul.f32.gmra.mxu0 %v443
        %v775 = vpop.f32.mrf.mxu0
        %v776 = vadd.f32 %v340, %v775
        %777 = vmatmul.f32.gmra.mxu0 %v446
        %v778 = vpop.f32.mrf.mxu0
        %v779 = vadd.f32 %v340, %v778
        %780 = vmatmul.f32.gmra.mxu0 %v449
        %v781 = vpop.f32.mrf.mxu0
        %v782 = vadd.f32 %v340, %v781
        %783 = vmatmul.f32.gmra.mxu0 %v452
        %v784 = vpop.f32.mrf.mxu0
        %v785 = vadd.f32 %v340, %v784
        %786 = vmatmul.f32.gmra.mxu0 %v455
        %v787 = vpop.f32.mrf.mxu0
        %v788 = vadd.f32 %v340, %v787
        %789 = vmatmul.f32.gmra.mxu0 %v458
        %v790 = vpop.f32.mrf.mxu0
        %v791 = vadd.f32 %v340, %v790
        %792 = vmatmul.f32.gmra.mxu0 %v461
        %v793 = vpop.f32.mrf.mxu0
        %v794 = vadd.f32 %v340, %v793
        %795 = vmatmul.f32.gmra.mxu0 %v464
        %v796 = vpop.f32.mrf.mxu0
        %v797 = vadd.f32 %v340, %v796
        %798 = vmatmul.f32.gmra.mxu0 %v467
        %v799 = vpop.f32.mrf.mxu0
        %v800 = vadd.f32 %v340, %v799
        %801 = vmatmul.f32.gmra.mxu0 %v470
        %v802 = vpop.f32.mrf.mxu0
        %v803 = vadd.f32 %v340, %v802
        %804 = vmatmul.f32.gmra.mxu0 %v473
        %v805 = vpop.f32.mrf.mxu0
        %v806 = vadd.f32 %v340, %v805
        %807 = vmatmul.f32.gmra.mxu0 %v476
        %v808 = vpop.f32.mrf.mxu0
        %v809 = vadd.f32 %v340, %v808
        %810 = vmatmul.f32.gmra.mxu0 %v479
        %v811 = vpop.f32.mrf.mxu0
        %v812 = vadd.f32 %v340, %v811
        %813 = vmatmul.f32.gmra.mxu0 %v482
        %v814 = vpop.f32.mrf.mxu0
        %v815 = vadd.f32 %v340, %v814
        %816 = vmatmul.f32.gmra.mxu0 %v485
        %v817 = vpop.f32.mrf.mxu0
        %v818 = vadd.f32 %v340, %v817
        %819 = vmatmul.f32.gmra.mxu0 %v488
        %v820 = vpop.f32.mrf.mxu0
        %v821 = vadd.f32 %v340, %v820
        %822 = vmatmul.f32.gmra.mxu0 %v491
        %v823 = vpop.f32.mrf.mxu0
        %v824 = vadd.f32 %v340, %v823
        %825 = vmatmul.f32.gmra.mxu0 %v494
        %v826 = vpop.f32.mrf.mxu0
        %v827 = vadd.f32 %v340, %v826
        %828 = vmatmul.f32.gmra.mxu0 %v497
        %v829 = vpop.f32.mrf.mxu0
        %v830 = vadd.f32 %v340, %v829
        %831 = vmatmul.f32.gmra.mxu0 %v500
        %v832 = vpop.f32.mrf.mxu0
        %v833 = vadd.f32 %v340, %v832
        %834 = vmatmul.f32.gmra.mxu0 %v503
        %v835 = vpop.f32.mrf.mxu0
        %v836 = vadd.f32 %v340, %v835
        %837 = vmatmul.f32.gmra.mxu0 %v506
        %v838 = vpop.f32.mrf.mxu0
        %v839 = vadd.f32 %v340, %v838
        %840 = vmatmul.f32.gmra.mxu0 %v509
        %v841 = vpop.f32.mrf.mxu0
        %v842 = vadd.f32 %v340, %v841
        %843 = vmatmul.f32.gmra.mxu0 %v512
        %v844 = vpop.f32.mrf.mxu0
        %v845 = vadd.f32 %v340, %v844
        %846 = vmatmul.f32.gmra.mxu0 %v515
        %v847 = vpop.f32.mrf.mxu0
        %v848 = vadd.f32 %v340, %v847
        %849 = vmatmul.f32.gmra.mxu0 %v518
        %v850 = vpop.f32.mrf.mxu0
        %v851 = vadd.f32 %v340, %v850
        %852 = vmatmul.f32.gmra.mxu0 %v521
        %v853 = vpop.f32.mrf.mxu0
        %v854 = vadd.f32 %v340, %v853
        %855 = vmatmul.f32.gmra.mxu0 %v524
        %v856 = vpop.f32.mrf.mxu0
        %v857 = vadd.f32 %v340, %v856
        %858 = vmatmul.f32.gmra.mxu0 %v527
        %v859 = vpop.f32.mrf.mxu0
        %v860 = vadd.f32 %v340, %v859
        %861 = vmatmul.f32.gmra.mxu0 %v530
        %v862 = vpop.f32.mrf.mxu0
        %v863 = vadd.f32 %v340, %v862
        %864 = vmatmul.f32.gmra.mxu0 %v533
        %v865 = vpop.f32.mrf.mxu0
        %v866 = vadd.f32 %v340, %v865
        %867 = vmatmul.f32.gmra.mxu0 %v536
        %v868 = vpop.f32.mrf.mxu0
        %v869 = vadd.f32 %v340, %v868
        %870 = vmatmul.f32.gmra.mxu0 %v539
        %v871 = vpop.f32.mrf.mxu0
        %v872 = vadd.f32 %v340, %v871
        %873 = vmatmul.f32.gmra.mxu0 %v542
        %v874 = vpop.f32.mrf.mxu0
        %v875 = vadd.f32 %v340, %v874
        %876 = vmatmul.f32.gmra.mxu0 %v545
        %v877 = vpop.f32.mrf.mxu0
        %v878 = vadd.f32 %v340, %v877
        %879 = vmatmul.f32.gmra.mxu0 %v548
        %v880 = vpop.f32.mrf.mxu0
        %v881 = vadd.f32 %v340, %v880
        %882 = vmatmul.f32.gmra.mxu0 %v551
        %v883 = vpop.f32.mrf.mxu0
        %v884 = vadd.f32 %v340, %v883
        %885 = vmatmul.f32.gmra.mxu0 %v554
        %v886 = vpop.f32.mrf.mxu0
        %v887 = vadd.f32 %v340, %v886
        %888 = vmatmul.f32.gmra.mxu0 %v557
        %v889 = vpop.f32.mrf.mxu0
        %v890 = vadd.f32 %v340, %v889
        %891 = vmatmul.f32.gmra.mxu0 %v560
        %v892 = vpop.f32.mrf.mxu0
        %v893 = vadd.f32 %v340, %v892
        %894 = vmatmul.f32.gmra.mxu0 %v563
        %v895 = vpop.f32.mrf.mxu0
        %v896 = vadd.f32 %v340, %v895
        %897 = vmatmul.f32.gmra.mxu0 %v566
        %v898 = vpop.f32.mrf.mxu0
        %v899 = vadd.f32 %v340, %v898
        %900 = vmatmul.f32.gmra.mxu0 %v569
        %v901 = vpop.f32.mrf.mxu0
        %v902 = vadd.f32 %v340, %v901
        %903 = vmatmul.f32.gmra.mxu0 %v572
        %v904 = vpop.f32.mrf.mxu0
        %v905 = vadd.f32 %v340, %v904
        %906 = vmatmul.f32.gmra.mxu0 %v575
        %v907 = vpop.f32.mrf.mxu0
        %v908 = vadd.f32 %v340, %v907
        %909 = vmatmul.f32.gmra.mxu0 %v578
        %v910 = vpop.f32.mrf.mxu0
        %v911 = vadd.f32 %v340, %v910
        %912 = vmatmul.f32.gmra.mxu0 %v581
        %v913 = vpop.f32.mrf.mxu0
        %v914 = vadd.f32 %v340, %v913
        %915 = vmatmul.f32.gmra.mxu0 %v584
        %v916 = vpop.f32.mrf.mxu0
        %v917 = vadd.f32 %v340, %v916
        %918 = vmatmul.f32.gmra.mxu0 %v587
        %v919 = vpop.f32.mrf.mxu0
        %v920 = vadd.f32 %v340, %v919
        %921 = vmatmul.f32.gmra.mxu0 %v590
        %v922 = vpop.f32.mrf.mxu0
        %v923 = vadd.f32 %v340, %v922
        %924 = vmatmul.f32.gmra.mxu0 %v593
        %v925 = vpop.f32.mrf.mxu0
        %v926 = vadd.f32 %v340, %v925
        %927 = vmatmul.f32.gmra.mxu0 %v596
        %v928 = vpop.f32.mrf.mxu0
        %v929 = vadd.f32 %v340, %v928
        %930 = vmatmul.f32.gmra.mxu0 %v599
        %v931 = vpop.f32.mrf.mxu0
        %v932 = vadd.f32 %v340, %v931
        %933 = vmatmul.f32.gmra.mxu0 %v602
        %v934 = vpop.f32.mrf.mxu0
        %v935 = vadd.f32 %v340, %v934
        %936 = vmatmul.f32.gmra.mxu0 %v605
        %v937 = vpop.f32.mrf.mxu0
        %v938 = vadd.f32 %v340, %v937
        %939 = vmatmul.f32.gmra.mxu0 %v608
        %v940 = vpop.f32.mrf.mxu0
        %v941 = vadd.f32 %v340, %v940
        %942 = vmatmul.f32.gmra.mxu0 %v611
        %v943 = vpop.f32.mrf.mxu0
        %v944 = vadd.f32 %v340, %v943
        %945 = vmatmul.f32.gmra.mxu0 %v614
        %v946 = vpop.f32.mrf.mxu0
        %v947 = vadd.f32 %v340, %v946
        %948 = vmatmul.f32.gmra.mxu0 %v617
        %v949 = vpop.f32.mrf.mxu0
        %v950 = vadd.f32 %v340, %v949
        %951 = vmatmul.f32.gmra.mxu0 %v620
        %v952 = vpop.f32.mrf.mxu0
        %v953 = vadd.f32 %v340, %v952
        %954 = vmatmul.f32.gmra.mxu0 %v623
        %v955 = vpop.f32.mrf.mxu0
        %v956 = vadd.f32 %v340, %v955
        %957 = vmatmul.f32.gmra.mxu0 %v626
        %v958 = vpop.f32.mrf.mxu0
        %v959 = vadd.f32 %v340, %v958
        %960 = vmatmul.f32.gmra.mxu0 %v629
        %v961 = vpop.f32.mrf.mxu0
        %v962 = vadd.f32 %v340, %v961
        %963 = vmatmul.f32.gmra.mxu0 %v632
        %v964 = vpop.f32.mrf.mxu0
        %v965 = vadd.f32 %v340, %v964
        %966 = vmatmul.f32.gmra.mxu0 %v635
        %v967 = vpop.f32.mrf.mxu0
        %v968 = vadd.f32 %v340, %v967
        %969 = vmatmul.f32.gmra.mxu0 %v638
        %v970 = vpop.f32.mrf.mxu0
        %v971 = vadd.f32 %v340, %v970
        %972 = vmatmul.f32.gmra.mxu0 %v641
        %v973 = vpop.f32.mrf.mxu0
        %v974 = vadd.f32 %v340, %v973
        %975 = vmatmul.f32.gmra.mxu0 %v644
        %v976 = vpop.f32.mrf.mxu0
        %v977 = vadd.f32 %v340, %v976
        %978 = vmatmul.f32.gmra.mxu0 %v647
        %v979 = vpop.f32.mrf.mxu0
        %v980 = vadd.f32 %v340, %v979
        %981 = vmatmul.f32.gmra.mxu0 %v650
        %v982 = vpop.f32.mrf.mxu0
        %v983 = vadd.f32 %v340, %v982
        %984 = vmatmul.f32.gmra.mxu0 %v653
        %v985 = vpop.f32.mrf.mxu0
        %v986 = vadd.f32 %v340, %v985
        %987 = vdwg.mxu0
        %v988 = vmax.f32 %v677, 0.0
        %v989 = vmax.f32 %v680, 0.0
        %v990 = vmax.f32 %v683, 0.0
        %v991 = vmax.f32 %v686, 0.0
        %v992 = vmax.f32 %v689, 0.0
        %v993 = vmax.f32 %v692, 0.0
        %v994 = vmax.f32 %v695, 0.0
        %v995 = vmax.f32 %v698, 0.0
        %v996 = vmax.f32 %v701, 0.0
        %v997 = vmax.f32 %v704, 0.0
        %v998 = vmax.f32 %v707, 0.0
        %v999 = vmax.f32 %v710, 0.0
        %v1000 = vmax.f32 %v713, 0.0
        %v1001 = vmax.f32 %v716, 0.0
        %v1002 = vmax.f32 %v719, 0.0
        %v1003 = vmax.f32 %v722, 0.0
        %v1004 = vmax.f32 %v725, 0.0
        %v1005 = vmax.f32 %v728, 0.0
        %v1006 = vmax.f32 %v731, 0.0
        %v1007 = vmax.f32 %v734, 0.0
        %v1008 = vmax.f32 %v737, 0.0
        %v1009 = vmax.f32 %v740, 0.0
        %v1010 = vmax.f32 %v743, 0.0
        %v1011 = vmax.f32 %v746, 0.0
        %v1012 = vmax.f32 %v749, 0.0
        %v1013 = vmax.f32 %v752, 0.0
        %v1014 = vmax.f32 %v755, 0.0
        %v1015 = vmax.f32 %v758, 0.0
        %v1016 = vmax.f32 %v761, 0.0
        %v1017 = vmax.f32 %v764, 0.0
        %v1018 = vmax.f32 %v767, 0.0
        %v1019 = vmax.f32 %v770, 0.0
        %v1020 = vmax.f32 %v773, 0.0
        %v1021 = vmax.f32 %v776, 0.0
        %v1022 = vmax.f32 %v779, 0.0
        %v1023 = vmax.f32 %v782, 0.0
        %v1024 = vmax.f32 %v785, 0.0
        %v1025 = vmax.f32 %v788, 0.0
        %v1026 = vmax.f32 %v791, 0.0
        %v1027 = vmax.f32 %v794, 0.0
        %v1028 = vmax.f32 %v797, 0.0
        %v1029 = vmax.f32 %v800, 0.0
        %v1030 = vmax.f32 %v803, 0.0
        %v1031 = vmax.f32 %v806, 0.0
        %v1032 = vmax.f32 %v809, 0.0
        %v1033 = vmax.f32 %v812, 0.0
        %v1034 = vmax.f32 %v815, 0.0
        %v1035 = vmax.f32 %v818, 0.0
        %v1036 = vmax.f32 %v821, 0.0
        %v1037 = vmax.f32 %v824, 0.0
        %v1038 = vmax.f32 %v827, 0.0
        %v1039 = vmax.f32 %v830, 0.0
        %v1040 = vmax.f32 %v833, 0.0
        %v1041 = vmax.f32 %v836, 0.0
        %v1042 = vmax.f32 %v839, 0.0
        %v1043 = vmax.f32 %v842, 0.0
        %v1044 = vmax.f32 %v845, 0.0
        %v1045 = vmax.f32 %v848, 0.0
        %v1046 = vmax.f32 %v851, 0.0
        %v1047 = vmax.f32 %v854, 0.0
        %v1048 = vmax.f32 %v857, 0.0
        %v1049 = vmax.f32 %v860, 0.0
        %v1050 = vmax.f32 %v863, 0.0
        %v1051 = vmax.f32 %v866, 0.0
        %v1052 = vmax.f32 %v869, 0.0
        %v1053 = vmax.f32 %v872, 0.0
        %v1054 = vmax.f32 %v875, 0.0
        %v1055 = vmax.f32 %v878, 0.0
        %v1056 = vmax.f32 %v881, 0.0
        %v1057 = vmax.f32 %v884, 0.0
        %v1058 = vmax.f32 %v887, 0.0
        %v1059 = vmax.f32 %v890, 0.0
        %v1060 = vmax.f32 %v893, 0.0
        %v1061 = vmax.f32 %v896, 0.0
        %v1062 = vmax.f32 %v899, 0.0
        %v1063 = vmax.f32 %v902, 0.0
        %v1064 = vmax.f32 %v905, 0.0
        %v1065 = vmax.f32 %v908, 0.0
        %v1066 = vmax.f32 %v911, 0.0
        %v1067 = vmax.f32 %v914, 0.0
        %v1068 = vmax.f32 %v917, 0.0
        %v1069 = vmax.f32 %v920, 0.0
        %v1070 = vmax.f32 %v923, 0.0
        %v1071 = vmax.f32 %v926, 0.0
        %v1072 = vmax.f32 %v929, 0.0
        %v1073 = vmax.f32 %v932, 0.0
        %v1074 = vmax.f32 %v935, 0.0
        %v1075 = vmax.f32 %v938, 0.0
        %v1076 = vmax.f32 %v941, 0.0
        %v1077 = vmax.f32 %v944, 0.0
        %v1078 = vmax.f32 %v947, 0.0
        %v1079 = vmax.f32 %v950, 0.0
        %v1080 = vmax.f32 %v953, 0.0
        %v1081 = vmax.f32 %v956, 0.0
        %v1082 = vmax.f32 %v959, 0.0
        %v1083 = vmax.f32 %v962, 0.0
        %v1084 = vmax.f32 %v965, 0.0
        %v1085 = vmax.f32 %v968, 0.0
        %v1086 = vmax.f32 %v971, 0.0
        %v1087 = vmax.f32 %v974, 0.0
        %v1088 = vmax.f32 %v977, 0.0
        %v1089 = vmax.f32 %v980, 0.0
        %v1090 = vmax.f32 %v983, 0.0
        %v1091 = vmax.f32 %v986, 0.0
        %vm1092 = vcmask 261120
        %1093 = vst.msk [vmem:[#allocation2] sm:$0xff] %vm1092, %v988
        %1094 = vst.msk [vmem:[#allocation2 + $0x8] sm:$0xff] %vm1092, %v989
        %1095 = vst.msk [vmem:[#allocation2 + $0x10] sm:$0xff] %vm1092, %v990
        %1096 = vst.msk [vmem:[#allocation2 + $0x18] sm:$0xff] %vm1092, %v991
        %1097 = vst.msk [vmem:[#allocation2 + $0x20] sm:$0xff] %vm1092, %v992
        %1098 = vst.msk [vmem:[#allocation2 + $0x28] sm:$0xff] %vm1092, %v993
        %1099 = vst.msk [vmem:[#allocation2 + $0x30] sm:$0xff] %vm1092, %v994
        %1100 = vst.msk [vmem:[#allocation2 + $0x38] sm:$0xff] %vm1092, %v995
        %1101 = vst.msk [vmem:[#allocation2 + $0x40] sm:$0xff] %vm1092, %v996
        %1102 = vst.msk [vmem:[#allocation2 + $0x48] sm:$0xff] %vm1092, %v997
        %1103 = vst.msk [vmem:[#allocation2 + $0x50] sm:$0xff] %vm1092, %v998
        %1104 = vst.msk [vmem:[#allocation2 + $0x58] sm:$0xff] %vm1092, %v999
        %1105 = vst.msk [vmem:[#allocation2 + $0x60] sm:$0xff] %vm1092, %v1000
        %1106 = vst.msk [vmem:[#allocation2 + $0x68] sm:$0xff] %vm1092, %v1001
        %1107 = vst.msk [vmem:[#allocation2 + $0x70] sm:$0xff] %vm1092, %v1002
        %1108 = vst.msk [vmem:[#allocation2 + $0x78] sm:$0xff] %vm1092, %v1003
        %1109 = vst.msk [vmem:[#allocation2 + $0x80] sm:$0xff] %vm1092, %v1004
        %1110 = vst.msk [vmem:[#allocation2 + $0x88] sm:$0xff] %vm1092, %v1005
        %1111 = vst.msk [vmem:[#allocation2 + $0x90] sm:$0xff] %vm1092, %v1006
        %1112 = vst.msk [vmem:[#allocation2 + $0x98] sm:$0xff] %vm1092, %v1007
        %1113 = vst.msk [vmem:[#allocation2 + $0xa0] sm:$0xff] %vm1092, %v1008
        %1114 = vst.msk [vmem:[#allocation2 + $0xa8] sm:$0xff] %vm1092, %v1009
        %1115 = vst.msk [vmem:[#allocation2 + $0xb0] sm:$0xff] %vm1092, %v1010
        %1116 = vst.msk [vmem:[#allocation2 + $0xb8] sm:$0xff] %vm1092, %v1011
        %1117 = vst.msk [vmem:[#allocation2 + $0xc0] sm:$0xff] %vm1092, %v1012
        %1118 = vst.msk [vmem:[#allocation2 + $0xc8] sm:$0xff] %vm1092, %v1013
        %1119 = vst.msk [vmem:[#allocation2 + $0xd0] sm:$0xff] %vm1092, %v1014
        %1120 = vst.msk [vmem:[#allocation2 + $0xd8] sm:$0xff] %vm1092, %v1015
        %1121 = vst.msk [vmem:[#allocation2 + $0xe0] sm:$0xff] %vm1092, %v1016
        %1122 = vst.msk [vmem:[#allocation2 + $0xe8] sm:$0xff] %vm1092, %v1017
        %1123 = vst.msk [vmem:[#allocation2 + $0xf0] sm:$0xff] %vm1092, %v1018
        %1124 = vst.msk [vmem:[#allocation2 + $0xf8] sm:$0xff] %vm1092, %v1019
        %1125 = vst.msk [vmem:[#allocation2 + $0x100] sm:$0xff] %vm1092, %v1020
        %1126 = vst.msk [vmem:[#allocation2 + $0x108] sm:$0xff] %vm1092, %v1021
        %1127 = vst.msk [vmem:[#allocation2 + $0x110] sm:$0xff] %vm1092, %v1022
        %1128 = vst.msk [vmem:[#allocation2 + $0x118] sm:$0xff] %vm1092, %v1023
        %1129 = vst.msk [vmem:[#allocation2 + $0x120] sm:$0xff] %vm1092, %v1024
        %1130 = vst.msk [vmem:[#allocation2 + $0x128] sm:$0xff] %vm1092, %v1025
        %1131 = vst.msk [vmem:[#allocation2 + $0x130] sm:$0xff] %vm1092, %v1026
        %1132 = vst.msk [vmem:[#allocation2 + $0x138] sm:$0xff] %vm1092, %v1027
        %1133 = vst.msk [vmem:[#allocation2 + $0x140] sm:$0xff] %vm1092, %v1028
        %1134 = vst.msk [vmem:[#allocation2 + $0x148] sm:$0xff] %vm1092, %v1029
        %1135 = vst.msk [vmem:[#allocation2 + $0x150] sm:$0xff] %vm1092, %v1030
        %1136 = vst.msk [vmem:[#allocation2 + $0x158] sm:$0xff] %vm1092, %v1031
        %1137 = vst.msk [vmem:[#allocation2 + $0x160] sm:$0xff] %vm1092, %v1032
        %1138 = vst.msk [vmem:[#allocation2 + $0x168] sm:$0xff] %vm1092, %v1033
        %1139 = vst.msk [vmem:[#allocation2 + $0x170] sm:$0xff] %vm1092, %v1034
        %1140 = vst.msk [vmem:[#allocation2 + $0x178] sm:$0xff] %vm1092, %v1035
        %1141 = vst.msk [vmem:[#allocation2 + $0x180] sm:$0xff] %vm1092, %v1036
        %1142 = vst.msk [vmem:[#allocation2 + $0x188] sm:$0xff] %vm1092, %v1037
        %1143 = vst.msk [vmem:[#allocation2 + $0x190] sm:$0xff] %vm1092, %v1038
        %1144 = vst.msk [vmem:[#allocation2 + $0x198] sm:$0xff] %vm1092, %v1039
        %1145 = vst.msk [vmem:[#allocation2 + $0x1a0] sm:$0xff] %vm1092, %v1040
        %1146 = vst.msk [vmem:[#allocation2 + $0x1a8] sm:$0xff] %vm1092, %v1041
        %1147 = vst.msk [vmem:[#allocation2 + $0x1b0] sm:$0xff] %vm1092, %v1042
        %1148 = vst.msk [vmem:[#allocation2 + $0x1b8] sm:$0xff] %vm1092, %v1043
        %1149 = vst.msk [vmem:[#allocation2 + $0x1c0] sm:$0xff] %vm1092, %v1044
        %1150 = vst.msk [vmem:[#allocation2 + $0x1c8] sm:$0xff] %vm1092, %v1045
        %1151 = vst.msk [vmem:[#allocation2 + $0x1d0] sm:$0xff] %vm1092, %v1046
        %1152 = vst.msk [vmem:[#allocation2 + $0x1d8] sm:$0xff] %vm1092, %v1047
        %1153 = vst.msk [vmem:[#allocation2 + $0x1e0] sm:$0xff] %vm1092, %v1048
        %1154 = vst.msk [vmem:[#allocation2 + $0x1e8] sm:$0xff] %vm1092, %v1049
        %1155 = vst.msk [vmem:[#allocation2 + $0x1f0] sm:$0xff] %vm1092, %v1050
        %1156 = vst.msk [vmem:[#allocation2 + $0x1f8] sm:$0xff] %vm1092, %v1051
        %1157 = vst.msk [vmem:[#allocation2 + $0x200] sm:$0xff] %vm1092, %v1052
        %1158 = vst.msk [vmem:[#allocation2 + $0x208] sm:$0xff] %vm1092, %v1053
        %1159 = vst.msk [vmem:[#allocation2 + $0x210] sm:$0xff] %vm1092, %v1054
        %1160 = vst.msk [vmem:[#allocation2 + $0x218] sm:$0xff] %vm1092, %v1055
        %1161 = vst.msk [vmem:[#allocation2 + $0x220] sm:$0xff] %vm1092, %v1056
        %1162 = vst.msk [vmem:[#allocation2 + $0x228] sm:$0xff] %vm1092, %v1057
        %1163 = vst.msk [vmem:[#allocation2 + $0x230] sm:$0xff] %vm1092, %v1058
        %1164 = vst.msk [vmem:[#allocation2 + $0x238] sm:$0xff] %vm1092, %v1059
        %1165 = vst.msk [vmem:[#allocation2 + $0x240] sm:$0xff] %vm1092, %v1060
        %1166 = vst.msk [vmem:[#allocation2 + $0x248] sm:$0xff] %vm1092, %v1061
        %1167 = vst.msk [vmem:[#allocation2 + $0x250] sm:$0xff] %vm1092, %v1062
        %1168 = vst.msk [vmem:[#allocation2 + $0x258] sm:$0xff] %vm1092, %v1063
        %1169 = vst.msk [vmem:[#allocation2 + $0x260] sm:$0xff] %vm1092, %v1064
        %1170 = vst.msk [vmem:[#allocation2 + $0x268] sm:$0xff] %vm1092, %v1065
        %1171 = vst.msk [vmem:[#allocation2 + $0x270] sm:$0xff] %vm1092, %v1066
        %1172 = vst.msk [vmem:[#allocation2 + $0x278] sm:$0xff] %vm1092, %v1067
        %1173 = vst.msk [vmem:[#allocation2 + $0x280] sm:$0xff] %vm1092, %v1068
        %1174 = vst.msk [vmem:[#allocation2 + $0x288] sm:$0xff] %vm1092, %v1069
        %1175 = vst.msk [vmem:[#allocation2 + $0x290] sm:$0xff] %vm1092, %v1070
        %1176 = vst.msk [vmem:[#allocation2 + $0x298] sm:$0xff] %vm1092, %v1071
        %1177 = vst.msk [vmem:[#allocation2 + $0x2a0] sm:$0xff] %vm1092, %v1072
        %1178 = vst.msk [vmem:[#allocation2 + $0x2a8] sm:$0xff] %vm1092, %v1073
        %1179 = vst.msk [vmem:[#allocation2 + $0x2b0] sm:$0xff] %vm1092, %v1074
        %1180 = vst.msk [vmem:[#allocation2 + $0x2b8] sm:$0xff] %vm1092, %v1075
        %1181 = vst.msk [vmem:[#allocation2 + $0x2c0] sm:$0xff] %vm1092, %v1076
        %1182 = vst.msk [vmem:[#allocation2 + $0x2c8] sm:$0xff] %vm1092, %v1077
        %1183 = vst.msk [vmem:[#allocation2 + $0x2d0] sm:$0xff] %vm1092, %v1078
        %1184 = vst.msk [vmem:[#allocation2 + $0x2d8] sm:$0xff] %vm1092, %v1079
        %1185 = vst.msk [vmem:[#allocation2 + $0x2e0] sm:$0xff] %vm1092, %v1080
        %1186 = vst.msk [vmem:[#allocation2 + $0x2e8] sm:$0xff] %vm1092, %v1081
        %1187 = vst.msk [vmem:[#allocation2 + $0x2f0] sm:$0xff] %vm1092, %v1082
        %1188 = vst.msk [vmem:[#allocation2 + $0x2f8] sm:$0xff] %vm1092, %v1083
        %1189 = vst.msk [vmem:[#allocation2 + $0x300] sm:$0xff] %vm1092, %v1084
        %1190 = vst.msk [vmem:[#allocation2 + $0x308] sm:$0xff] %vm1092, %v1085
        %1191 = vst.msk [vmem:[#allocation2 + $0x310] sm:$0xff] %vm1092, %v1086
        %1192 = vst.msk [vmem:[#allocation2 + $0x318] sm:$0xff] %vm1092, %v1087
        %1193 = vst.msk [vmem:[#allocation2 + $0x320] sm:$0xff] %vm1092, %v1088
        %1194 = vst.msk [vmem:[#allocation2 + $0x328] sm:$0xff] %vm1092, %v1089
        %1195 = vst.msk [vmem:[#allocation2 + $0x330] sm:$0xff] %vm1092, %v1090
        %1196 = vst.msk [vmem:[#allocation2 + $0x338] sm:$0xff] %vm1092, %v1091
        %v1197 = vld [vmem:[#allocation2] sm:$0xff]
        %v1198 = vld [vmem:[#allocation2 + $0x8] sm:$0xff]
        %v1199 = vld [vmem:[#allocation2 + $0x10] sm:$0xff]
        %v1200 = vld [vmem:[#allocation2 + $0x18] sm:$0xff]
        %v1201 = vld [vmem:[#allocation2 + $0x20] sm:$0xff]
        %v1202 = vld [vmem:[#allocation2 + $0x28] sm:$0xff]
        %v1203 = vld [vmem:[#allocation2 + $0x30] sm:$0xff]
        %v1204 = vld [vmem:[#allocation2 + $0x38] sm:$0xff]
        %v1205 = vld [vmem:[#allocation2 + $0x40] sm:$0xff]
        %v1206 = vld [vmem:[#allocation2 + $0x48] sm:$0xff]
        %v1207 = vld [vmem:[#allocation2 + $0x50] sm:$0xff]
        %v1208 = vld [vmem:[#allocation2 + $0x58] sm:$0xff]
        %v1209 = vld [vmem:[#allocation2 + $0x60] sm:$0xff]
        %v1210 = vld [vmem:[#allocation2 + $0x68] sm:$0xff]
        %v1211 = vld [vmem:[#allocation2 + $0x70] sm:$0xff]
        %v1212 = vld [vmem:[#allocation2 + $0x78] sm:$0xff]
        %v1213 = vld [vmem:[%s3] sm:$0xff]
        %v1214 = vld [vmem:[%s3 + $0x8] sm:$0xff]
        %v1215 = vld [vmem:[%s3 + $0x10] sm:$0xff]
        %v1216 = vld [vmem:[%s3 + $0x18] sm:$0xff]
        %v1217 = vld [vmem:[#allocation2 + $0x1] sm:$0xff]
        %v1218 = vld [vmem:[#allocation2 + $0x9] sm:$0xff]
        %v1219 = vld [vmem:[#allocation2 + $0x11] sm:$0xff]
        %v1220 = vld [vmem:[#allocation2 + $0x19] sm:$0xff]
        %v1221 = vld [vmem:[#allocation2 + $0x21] sm:$0xff]
        %v1222 = vld [vmem:[#allocation2 + $0x29] sm:$0xff]
        %v1223 = vld [vmem:[#allocation2 + $0x31] sm:$0xff]
        %v1224 = vld [vmem:[#allocation2 + $0x39] sm:$0xff]
        %v1225 = vld [vmem:[#allocation2 + $0x41] sm:$0xff]
        %v1226 = vld [vmem:[#allocation2 + $0x49] sm:$0xff]
        %v1227 = vld [vmem:[#allocation2 + $0x51] sm:$0xff]
        %v1228 = vld [vmem:[#allocation2 + $0x59] sm:$0xff]
        %v1229 = vld [vmem:[#allocation2 + $0x61] sm:$0xff]
        %v1230 = vld [vmem:[#allocation2 + $0x69] sm:$0xff]
        %v1231 = vld [vmem:[#allocation2 + $0x71] sm:$0xff]
        %v1232 = vld [vmem:[#allocation2 + $0x79] sm:$0xff]
        %s1233 = scalar_lea.vmem %s3, 32
        %v1234 = vld [vmem:[%s1233] sm:$0xff]
        %v1235 = vld [vmem:[%s1233 + $0x8] sm:$0xff]
        %v1236 = vld [vmem:[%s1233 + $0x10] sm:$0xff]
        %v1237 = vld [vmem:[%s1233 + $0x18] sm:$0xff]
        %v1239 = vsel %vm1092, %v1217, 0
        %v1242 = vsel %vm1092, %v1218, 0
        %v1245 = vsel %vm1092, %v1219, 0
        %v1248 = vsel %vm1092, %v1220, 0
        %v1251 = vsel %vm1092, %v1221, 0
        %v1254 = vsel %vm1092, %v1222, 0
        %v1257 = vsel %vm1092, %v1223, 0
        %v1260 = vsel %vm1092, %v1224, 0
        %v1263 = vsel %vm1092, %v1225, 0
        %v1266 = vsel %vm1092, %v1226, 0
        %v1269 = vsel %vm1092, %v1227, 0
        %v1272 = vsel %vm1092, %v1228, 0
        %v1275 = vsel %vm1092, %v1229, 0
        %v1278 = vsel %vm1092, %v1230, 0
        %v1281 = vsel %vm1092, %v1231, 0
        %v1284 = vsel %vm1092, %v1232, 0
        %1286 = vmatpush.msra.mxu0 0.0
        %1287 = vmatpush.msra.mxu0 0.0
        %1288 = vmatpush.msra.mxu0 0.0
        %1289 = vmatpush.msra.mxu0 0.0
        %1290 = vmatpush.msra.mxu0 0.0
        %1291 = vmatpush.msra.mxu0 0.0
        %1292 = vmatpush.msra.mxu0 0.0
        %1293 = vmatpush.msra.mxu0 0.0
        %1294 = vmatpush.msra.mxu0 0.0
        %1295 = vmatpush.msra.mxu0 0.0
        %1296 = vmatpush.msra.mxu0 0.0
        %1297 = vmatpush.msra.mxu0 0.0
        %1298 = vmatpush.msra.mxu0 %v1237
        %1299 = vmatpush.msra.mxu0 %v1236
        %1300 = vmatpush.msra.mxu0 %v1235
        %1301 = vmatpush.msra.mxu0 %v1234
        %1302 = vmatmul.f32.gmra.mxu0 %v1239
        %v1303 = vpop.f32.mrf.mxu0
        %v1304 = vadd.f32 0.0, %v1303
        %1305 = vmatmul.f32.gmra.mxu0 %v1242
        %v1306 = vpop.f32.mrf.mxu0
        %v1307 = vadd.f32 0.0, %v1306
        %1308 = vmatmul.f32.gmra.mxu0 %v1245
        %v1309 = vpop.f32.mrf.mxu0
        %v1310 = vadd.f32 0.0, %v1309
        %1311 = vmatmul.f32.gmra.mxu0 %v1248
        %v1312 = vpop.f32.mrf.mxu0
        %v1313 = vadd.f32 0.0, %v1312
        %1314 = vmatmul.f32.gmra.mxu0 %v1251
        %v1315 = vpop.f32.mrf.mxu0
        %v1316 = vadd.f32 0.0, %v1315
        %1317 = vmatmul.f32.gmra.mxu0 %v1254
        %v1318 = vpop.f32.mrf.mxu0
        %v1319 = vadd.f32 0.0, %v1318
        %1320 = vmatmul.f32.gmra.mxu0 %v1257
        %v1321 = vpop.f32.mrf.mxu0
        %v1322 = vadd.f32 0.0, %v1321
        %1323 = vmatmul.f32.gmra.mxu0 %v1260
        %v1324 = vpop.f32.mrf.mxu0
        %v1325 = vadd.f32 0.0, %v1324
        %1326 = vmatmul.f32.gmra.mxu0 %v1263
        %v1327 = vpop.f32.mrf.mxu0
        %v1328 = vadd.f32 0.0, %v1327
        %1329 = vmatmul.f32.gmra.mxu0 %v1266
        %v1330 = vpop.f32.mrf.mxu0
        %v1331 = vadd.f32 0.0, %v1330
        %1332 = vmatmul.f32.gmra.mxu0 %v1269
        %v1333 = vpop.f32.mrf.mxu0
        %v1334 = vadd.f32 0.0, %v1333
        %1335 = vmatmul.f32.gmra.mxu0 %v1272
        %v1336 = vpop.f32.mrf.mxu0
        %v1337 = vadd.f32 0.0, %v1336
        %1338 = vmatmul.f32.gmra.mxu0 %v1275
        %v1339 = vpop.f32.mrf.mxu0
        %v1340 = vadd.f32 0.0, %v1339
        %1341 = vmatmul.f32.gmra.mxu0 %v1278
        %v1342 = vpop.f32.mrf.mxu0
        %v1343 = vadd.f32 0.0, %v1342
        %1344 = vmatmul.f32.gmra.mxu0 %v1281
        %v1345 = vpop.f32.mrf.mxu0
        %v1346 = vadd.f32 0.0, %v1345
        %1347 = vmatmul.f32.gmra.mxu0 %v1284
        %v1348 = vpop.f32.mrf.mxu0
        %v1349 = vadd.f32 0.0, %v1348
        %1350 = vdwg.mxu0
        %v1352 = vsel %vm1092, %v1197, 0
        %v1355 = vsel %vm1092, %v1198, 0
        %v1358 = vsel %vm1092, %v1199, 0
        %v1361 = vsel %vm1092, %v1200, 0
        %v1364 = vsel %vm1092, %v1201, 0
        %v1367 = vsel %vm1092, %v1202, 0
        %v1370 = vsel %vm1092, %v1203, 0
        %v1373 = vsel %vm1092, %v1204, 0
        %v1376 = vsel %vm1092, %v1205, 0
        %v1379 = vsel %vm1092, %v1206, 0
        %v1382 = vsel %vm1092, %v1207, 0
        %v1385 = vsel %vm1092, %v1208, 0
        %v1388 = vsel %vm1092, %v1209, 0
        %v1391 = vsel %vm1092, %v1210, 0
        %v1394 = vsel %vm1092, %v1211, 0
        %v1397 = vsel %vm1092, %v1212, 0
        %1399 = vmatpush.msra.mxu0 0.0
        %1400 = vmatpush.msra.mxu0 0.0
        %1401 = vmatpush.msra.mxu0 0.0
        %1402 = vmatpush.msra.mxu0 0.0
        %1403 = vmatpush.msra.mxu0 0.0
        %1404 = vmatpush.msra.mxu0 0.0
        %1405 = vmatpush.msra.mxu0 0.0
        %1406 = vmatpush.msra.mxu0 0.0
        %1407 = vmatpush.msra.mxu0 0.0
        %1408 = vmatpush.msra.mxu0 0.0
        %1409 = vmatpush.msra.mxu0 0.0
        %1410 = vmatpush.msra.mxu0 0.0
        %1411 = vmatpush.msra.mxu0 %v1216
        %1412 = vmatpush.msra.mxu0 %v1215
        %1413 = vmatpush.msra.mxu0 %v1214
        %1414 = vmatpush.msra.mxu0 %v1213
        %1415 = vmatmul.f32.gmra.mxu0 %v1352
        %v1416 = vpop.f32.mrf.mxu0
        %v1417 = vadd.f32 %v1304, %v1416
        %1418 = vmatmul.f32.gmra.mxu0 %v1355
        %v1419 = vpop.f32.mrf.mxu0
        %v1420 = vadd.f32 %v1307, %v1419
        %1421 = vmatmul.f32.gmra.mxu0 %v1358
        %v1422 = vpop.f32.mrf.mxu0
        %v1423 = vadd.f32 %v1310, %v1422
        %1424 = vmatmul.f32.gmra.mxu0 %v1361
        %v1425 = vpop.f32.mrf.mxu0
        %v1426 = vadd.f32 %v1313, %v1425
        %1427 = vmatmul.f32.gmra.mxu0 %v1364
        %v1428 = vpop.f32.mrf.mxu0
        %v1429 = vadd.f32 %v1316, %v1428
        %1430 = vmatmul.f32.gmra.mxu0 %v1367
        %v1431 = vpop.f32.mrf.mxu0
        %v1432 = vadd.f32 %v1319, %v1431
        %1433 = vmatmul.f32.gmra.mxu0 %v1370
        %v1434 = vpop.f32.mrf.mxu0
        %v1435 = vadd.f32 %v1322, %v1434
        %1436 = vmatmul.f32.gmra.mxu0 %v1373
        %v1437 = vpop.f32.mrf.mxu0
        %v1438 = vadd.f32 %v1325, %v1437
        %1439 = vmatmul.f32.gmra.mxu0 %v1376
        %v1440 = vpop.f32.mrf.mxu0
        %v1441 = vadd.f32 %v1328, %v1440
        %1442 = vmatmul.f32.gmra.mxu0 %v1379
        %v1443 = vpop.f32.mrf.mxu0
        %v1444 = vadd.f32 %v1331, %v1443
        %1445 = vmatmul.f32.gmra.mxu0 %v1382
        %v1446 = vpop.f32.mrf.mxu0
        %v1447 = vadd.f32 %v1334, %v1446
        %1448 = vmatmul.f32.gmra.mxu0 %v1385
        %v1449 = vpop.f32.mrf.mxu0
        %v1450 = vadd.f32 %v1337, %v1449
        %1451 = vmatmul.f32.gmra.mxu0 %v1388
        %v1452 = vpop.f32.mrf.mxu0
        %v1453 = vadd.f32 %v1340, %v1452
        %1454 = vmatmul.f32.gmra.mxu0 %v1391
        %v1455 = vpop.f32.mrf.mxu0
        %v1456 = vadd.f32 %v1343, %v1455
        %1457 = vmatmul.f32.gmra.mxu0 %v1394
        %v1458 = vpop.f32.mrf.mxu0
        %v1459 = vadd.f32 %v1346, %v1458
        %1460 = vmatmul.f32.gmra.mxu0 %v1397
        %v1461 = vpop.f32.mrf.mxu0
        %v1462 = vadd.f32 %v1349, %v1461
        %1463 = vdwg.mxu0
        %v1464 = vld [vmem:[#allocation2 + $0x2] sm:$0xff]
        %v1465 = vld [vmem:[#allocation2 + $0xa] sm:$0xff]
        %v1466 = vld [vmem:[#allocation2 + $0x12] sm:$0xff]
        %v1467 = vld [vmem:[#allocation2 + $0x1a] sm:$0xff]
        %v1468 = vld [vmem:[#allocation2 + $0x22] sm:$0xff]
        %v1469 = vld [vmem:[#allocation2 + $0x2a] sm:$0xff]
        %v1470 = vld [vmem:[#allocation2 + $0x32] sm:$0xff]
        %v1471 = vld [vmem:[#allocation2 + $0x3a] sm:$0xff]
        %v1472 = vld [vmem:[#allocation2 + $0x42] sm:$0xff]
        %v1473 = vld [vmem:[#allocation2 + $0x4a] sm:$0xff]
        %v1474 = vld [vmem:[#allocation2 + $0x52] sm:$0xff]
        %v1475 = vld [vmem:[#allocation2 + $0x5a] sm:$0xff]
        %v1476 = vld [vmem:[#allocation2 + $0x62] sm:$0xff]
        %v1477 = vld [vmem:[#allocation2 + $0x6a] sm:$0xff]
        %v1478 = vld [vmem:[#allocation2 + $0x72] sm:$0xff]
        %v1479 = vld [vmem:[#allocation2 + $0x7a] sm:$0xff]
        %s1480 = scalar_lea.vmem %s3, 64
        %v1481 = vld [vmem:[%s1480] sm:$0xff]
        %v1482 = vld [vmem:[%s1480 + $0x8] sm:$0xff]
        %v1483 = vld [vmem:[%s1480 + $0x10] sm:$0xff]
        %v1484 = vld [vmem:[%s1480 + $0x18] sm:$0xff]
        %v1486 = vsel %vm1092, %v1464, 0
        %v1489 = vsel %vm1092, %v1465, 0
        %v1492 = vsel %vm1092, %v1466, 0
        %v1495 = vsel %vm1092, %v1467, 0
        %v1498 = vsel %vm1092, %v1468, 0
        %v1501 = vsel %vm1092, %v1469, 0
        %v1504 = vsel %vm1092, %v1470, 0
        %v1507 = vsel %vm1092, %v1471, 0
        %v1510 = vsel %vm1092, %v1472, 0
        %v1513 = vsel %vm1092, %v1473, 0
        %v1516 = vsel %vm1092, %v1474, 0
        %v1519 = vsel %vm1092, %v1475, 0
        %v1522 = vsel %vm1092, %v1476, 0
        %v1525 = vsel %vm1092, %v1477, 0
        %v1528 = vsel %vm1092, %v1478, 0
        %v1531 = vsel %vm1092, %v1479, 0
        %1533 = vmatpush.msra.mxu0 0.0
        %1534 = vmatpush.msra.mxu0 0.0
        %1535 = vmatpush.msra.mxu0 0.0
        %1536 = vmatpush.msra.mxu0 0.0
        %1537 = vmatpush.msra.mxu0 0.0
        %1538 = vmatpush.msra.mxu0 0.0
        %1539 = vmatpush.msra.mxu0 0.0
        %1540 = vmatpush.msra.mxu0 0.0
        %1541 = vmatpush.msra.mxu0 0.0
        %1542 = vmatpush.msra.mxu0 0.0
        %1543 = vmatpush.msra.mxu0 0.0
        %1544 = vmatpush.msra.mxu0 0.0
        %1545 = vmatpush.msra.mxu0 %v1484
        %1546 = vmatpush.msra.mxu0 %v1483
        %1547 = vmatpush.msra.mxu0 %v1482
        %1548 = vmatpush.msra.mxu0 %v1481
        %1549 = vmatmul.f32.gmra.mxu0 %v1486
        %v1550 = vpop.f32.mrf.mxu0
        %v1551 = vadd.f32 0.0, %v1550
        %1552 = vmatmul.f32.gmra.mxu0 %v1489
        %v1553 = vpop.f32.mrf.mxu0
        %v1554 = vadd.f32 0.0, %v1553
        %1555 = vmatmul.f32.gmra.mxu0 %v1492
        %v1556 = vpop.f32.mrf.mxu0
        %v1557 = vadd.f32 0.0, %v1556
        %1558 = vmatmul.f32.gmra.mxu0 %v1495
        %v1559 = vpop.f32.mrf.mxu0
        %v1560 = vadd.f32 0.0, %v1559
        %1561 = vmatmul.f32.gmra.mxu0 %v1498
        %v1562 = vpop.f32.mrf.mxu0
        %v1563 = vadd.f32 0.0, %v1562
        %1564 = vmatmul.f32.gmra.mxu0 %v1501
        %v1565 = vpop.f32.mrf.mxu0
        %v1566 = vadd.f32 0.0, %v1565
        %1567 = vmatmul.f32.gmra.mxu0 %v1504
        %v1568 = vpop.f32.mrf.mxu0
        %v1569 = vadd.f32 0.0, %v1568
        %1570 = vmatmul.f32.gmra.mxu0 %v1507
        %v1571 = vpop.f32.mrf.mxu0
        %v1572 = vadd.f32 0.0, %v1571
        %1573 = vmatmul.f32.gmra.mxu0 %v1510
        %v1574 = vpop.f32.mrf.mxu0
        %v1575 = vadd.f32 0.0, %v1574
        %1576 = vmatmul.f32.gmra.mxu0 %v1513
        %v1577 = vpop.f32.mrf.mxu0
        %v1578 = vadd.f32 0.0, %v1577
        %1579 = vmatmul.f32.gmra.mxu0 %v1516
        %v1580 = vpop.f32.mrf.mxu0
        %v1581 = vadd.f32 0.0, %v1580
        %1582 = vmatmul.f32.gmra.mxu0 %v1519
        %v1583 = vpop.f32.mrf.mxu0
        %v1584 = vadd.f32 0.0, %v1583
        %1585 = vmatmul.f32.gmra.mxu0 %v1522
        %v1586 = vpop.f32.mrf.mxu0
        %v1587 = vadd.f32 0.0, %v1586
        %1588 = vmatmul.f32.gmra.mxu0 %v1525
        %v1589 = vpop.f32.mrf.mxu0
        %v1590 = vadd.f32 0.0, %v1589
        %1591 = vmatmul.f32.gmra.mxu0 %v1528
        %v1592 = vpop.f32.mrf.mxu0
        %v1593 = vadd.f32 0.0, %v1592
        %1594 = vmatmul.f32.gmra.mxu0 %v1531
        %v1595 = vpop.f32.mrf.mxu0
        %v1596 = vadd.f32 0.0, %v1595
        %1597 = vdwg.mxu0
        %v1598 = vadd.f32 %v1417, %v1551
        %v1599 = vadd.f32 %v1420, %v1554
        %v1600 = vadd.f32 %v1423, %v1557
        %v1601 = vadd.f32 %v1426, %v1560
        %v1602 = vadd.f32 %v1429, %v1563
        %v1603 = vadd.f32 %v1432, %v1566
        %v1604 = vadd.f32 %v1435, %v1569
        %v1605 = vadd.f32 %v1438, %v1572
        %v1606 = vadd.f32 %v1441, %v1575
        %v1607 = vadd.f32 %v1444, %v1578
        %v1608 = vadd.f32 %v1447, %v1581
        %v1609 = vadd.f32 %v1450, %v1584
        %v1610 = vadd.f32 %v1453, %v1587
        %v1611 = vadd.f32 %v1456, %v1590
        %v1612 = vadd.f32 %v1459, %v1593
        %v1613 = vadd.f32 %v1462, %v1596
        %v1614 = vld [vmem:[#allocation2 + $0x20] sm:$0xff]
        %v1615 = vld [vmem:[#allocation2 + $0x28] sm:$0xff]
        %v1616 = vld [vmem:[#allocation2 + $0x30] sm:$0xff]
        %v1617 = vld [vmem:[#allocation2 + $0x38] sm:$0xff]
        %v1618 = vld [vmem:[#allocation2 + $0x40] sm:$0xff]
        %v1619 = vld [vmem:[#allocation2 + $0x48] sm:$0xff]
        %v1620 = vld [vmem:[#allocation2 + $0x50] sm:$0xff]
        %v1621 = vld [vmem:[#allocation2 + $0x58] sm:$0xff]
        %v1622 = vld [vmem:[#allocation2 + $0x60] sm:$0xff]
        %v1623 = vld [vmem:[#allocation2 + $0x68] sm:$0xff]
        %v1624 = vld [vmem:[#allocation2 + $0x70] sm:$0xff]
        %v1625 = vld [vmem:[#allocation2 + $0x78] sm:$0xff]
        %v1626 = vld [vmem:[#allocation2 + $0x80] sm:$0xff]
        %v1627 = vld [vmem:[#allocation2 + $0x88] sm:$0xff]
        %v1628 = vld [vmem:[#allocation2 + $0x90] sm:$0xff]
        %v1629 = vld [vmem:[#allocation2 + $0x98] sm:$0xff]
        %s1630 = scalar_lea.vmem %s3, 96
        %v1631 = vld [vmem:[%s1630] sm:$0xff]
        %v1632 = vld [vmem:[%s1630 + $0x8] sm:$0xff]
        %v1633 = vld [vmem:[%s1630 + $0x10] sm:$0xff]
        %v1634 = vld [vmem:[%s1630 + $0x18] sm:$0xff]
        %v1636 = vsel %vm1092, %v1614, 0
        %v1639 = vsel %vm1092, %v1615, 0
        %v1642 = vsel %vm1092, %v1616, 0
        %v1645 = vsel %vm1092, %v1617, 0
        %v1648 = vsel %vm1092, %v1618, 0
        %v1651 = vsel %vm1092, %v1619, 0
        %v1654 = vsel %vm1092, %v1620, 0
        %v1657 = vsel %vm1092, %v1621, 0
        %v1660 = vsel %vm1092, %v1622, 0
        %v1663 = vsel %vm1092, %v1623, 0
        %v1666 = vsel %vm1092, %v1624, 0
        %v1669 = vsel %vm1092, %v1625, 0
        %v1672 = vsel %vm1092, %v1626, 0
        %v1675 = vsel %vm1092, %v1627, 0
        %v1678 = vsel %vm1092, %v1628, 0
        %v1681 = vsel %vm1092, %v1629, 0
        %1683 = vmatpush.msra.mxu0 0.0
        %1684 = vmatpush.msra.mxu0 0.0
        %1685 = vmatpush.msra.mxu0 0.0
        %1686 = vmatpush.msra.mxu0 0.0
        %1687 = vmatpush.msra.mxu0 0.0
        %1688 = vmatpush.msra.mxu0 0.0
        %1689 = vmatpush.msra.mxu0 0.0
        %1690 = vmatpush.msra.mxu0 0.0
        %1691 = vmatpush.msra.mxu0 0.0
        %1692 = vmatpush.msra.mxu0 0.0
        %1693 = vmatpush.msra.mxu0 0.0
        %1694 = vmatpush.msra.mxu0 0.0
        %1695 = vmatpush.msra.mxu0 %v1634
        %1696 = vmatpush.msra.mxu0 %v1633
        %1697 = vmatpush.msra.mxu0 %v1632
        %1698 = vmatpush.msra.mxu0 %v1631
        %1699 = vmatmul.f32.gmra.mxu0 %v1636
        %v1700 = vpop.f32.mrf.mxu0
        %v1701 = vadd.f32 0.0, %v1700
        %1702 = vmatmul.f32.gmra.mxu0 %v1639
        %v1703 = vpop.f32.mrf.mxu0
        %v1704 = vadd.f32 0.0, %v1703
        %1705 = vmatmul.f32.gmra.mxu0 %v1642
        %v1706 = vpop.f32.mrf.mxu0
        %v1707 = vadd.f32 0.0, %v1706
        %1708 = vmatmul.f32.gmra.mxu0 %v1645
        %v1709 = vpop.f32.mrf.mxu0
        %v1710 = vadd.f32 0.0, %v1709
        %1711 = vmatmul.f32.gmra.mxu0 %v1648
        %v1712 = vpop.f32.mrf.mxu0
        %v1713 = vadd.f32 0.0, %v1712
        %1714 = vmatmul.f32.gmra.mxu0 %v1651
        %v1715 = vpop.f32.mrf.mxu0
        %v1716 = vadd.f32 0.0, %v1715
        %1717 = vmatmul.f32.gmra.mxu0 %v1654
        %v1718 = vpop.f32.mrf.mxu0
        %v1719 = vadd.f32 0.0, %v1718
        %1720 = vmatmul.f32.gmra.mxu0 %v1657
        %v1721 = vpop.f32.mrf.mxu0
        %v1722 = vadd.f32 0.0, %v1721
        %1723 = vmatmul.f32.gmra.mxu0 %v1660
        %v1724 = vpop.f32.mrf.mxu0
        %v1725 = vadd.f32 0.0, %v1724
        %1726 = vmatmul.f32.gmra.mxu0 %v1663
        %v1727 = vpop.f32.mrf.mxu0
        %v1728 = vadd.f32 0.0, %v1727
        %1729 = vmatmul.f32.gmra.mxu0 %v1666
        %v1730 = vpop.f32.mrf.mxu0
        %v1731 = vadd.f32 0.0, %v1730
        %1732 = vmatmul.f32.gmra.mxu0 %v1669
        %v1733 = vpop.f32.mrf.mxu0
        %v1734 = vadd.f32 0.0, %v1733
        %1735 = vmatmul.f32.gmra.mxu0 %v1672
        %v1736 = vpop.f32.mrf.mxu0
        %v1737 = vadd.f32 0.0, %v1736
        %1738 = vmatmul.f32.gmra.mxu0 %v1675
        %v1739 = vpop.f32.mrf.mxu0
        %v1740 = vadd.f32 0.0, %v1739
        %1741 = vmatmul.f32.gmra.mxu0 %v1678
        %v1742 = vpop.f32.mrf.mxu0
        %v1743 = vadd.f32 0.0, %v1742
        %1744 = vmatmul.f32.gmra.mxu0 %v1681
        %v1745 = vpop.f32.mrf.mxu0
        %v1746 = vadd.f32 0.0, %v1745
        %1747 = vdwg.mxu0
        %v1748 = vadd.f32 %v1598, %v1701
        %v1749 = vadd.f32 %v1599, %v1704
        %v1750 = vadd.f32 %v1600, %v1707
        %v1751 = vadd.f32 %v1601, %v1710
        %v1752 = vadd.f32 %v1602, %v1713
        %v1753 = vadd.f32 %v1603, %v1716
        %v1754 = vadd.f32 %v1604, %v1719
        %v1755 = vadd.f32 %v1605, %v1722
        %v1756 = vadd.f32 %v1606, %v1725
        %v1757 = vadd.f32 %v1607, %v1728
        %v1758 = vadd.f32 %v1608, %v1731
        %v1759 = vadd.f32 %v1609, %v1734
        %v1760 = vadd.f32 %v1610, %v1737
        %v1761 = vadd.f32 %v1611, %v1740
        %v1762 = vadd.f32 %v1612, %v1743
        %v1763 = vadd.f32 %v1613, %v1746
        %v1764 = vld [vmem:[#allocation2 + $0x21] sm:$0xff]
        %v1765 = vld [vmem:[#allocation2 + $0x29] sm:$0xff]
        %v1766 = vld [vmem:[#allocation2 + $0x31] sm:$0xff]
        %v1767 = vld [vmem:[#allocation2 + $0x39] sm:$0xff]
        %v1768 = vld [vmem:[#allocation2 + $0x41] sm:$0xff]
        %v1769 = vld [vmem:[#allocation2 + $0x49] sm:$0xff]
        %v1770 = vld [vmem:[#allocation2 + $0x51] sm:$0xff]
        %v1771 = vld [vmem:[#allocation2 + $0x59] sm:$0xff]
        %v1772 = vld [vmem:[#allocation2 + $0x61] sm:$0xff]
        %v1773 = vld [vmem:[#allocation2 + $0x69] sm:$0xff]
        %v1774 = vld [vmem:[#allocation2 + $0x71] sm:$0xff]
        %v1775 = vld [vmem:[#allocation2 + $0x79] sm:$0xff]
        %v1776 = vld [vmem:[#allocation2 + $0x81] sm:$0xff]
        %v1777 = vld [vmem:[#allocation2 + $0x89] sm:$0xff]
        %v1778 = vld [vmem:[#allocation2 + $0x91] sm:$0xff]
        %v1779 = vld [vmem:[#allocation2 + $0x99] sm:$0xff]
        %s1780 = scalar_lea.vmem %s3, 128
        %v1781 = vld [vmem:[%s1780] sm:$0xff]
        %v1782 = vld [vmem:[%s1780 + $0x8] sm:$0xff]
        %v1783 = vld [vmem:[%s1780 + $0x10] sm:$0xff]
        %v1784 = vld [vmem:[%s1780 + $0x18] sm:$0xff]
        %v1786 = vsel %vm1092, %v1764, 0
        %v1789 = vsel %vm1092, %v1765, 0
        %v1792 = vsel %vm1092, %v1766, 0
        %v1795 = vsel %vm1092, %v1767, 0
        %v1798 = vsel %vm1092, %v1768, 0
        %v1801 = vsel %vm1092, %v1769, 0
        %v1804 = vsel %vm1092, %v1770, 0
        %v1807 = vsel %vm1092, %v1771, 0
        %v1810 = vsel %vm1092, %v1772, 0
        %v1813 = vsel %vm1092, %v1773, 0
        %v1816 = vsel %vm1092, %v1774, 0
        %v1819 = vsel %vm1092, %v1775, 0
        %v1822 = vsel %vm1092, %v1776, 0
        %v1825 = vsel %vm1092, %v1777, 0
        %v1828 = vsel %vm1092, %v1778, 0
        %v1831 = vsel %vm1092, %v1779, 0
        %1833 = vmatpush.msra.mxu0 0.0
        %1834 = vmatpush.msra.mxu0 0.0
        %1835 = vmatpush.msra.mxu0 0.0
        %1836 = vmatpush.msra.mxu0 0.0
        %1837 = vmatpush.msra.mxu0 0.0
        %1838 = vmatpush.msra.mxu0 0.0
        %1839 = vmatpush.msra.mxu0 0.0
        %1840 = vmatpush.msra.mxu0 0.0
        %1841 = vmatpush.msra.mxu0 0.0
        %1842 = vmatpush.msra.mxu0 0.0
        %1843 = vmatpush.msra.mxu0 0.0
        %1844 = vmatpush.msra.mxu0 0.0
        %1845 = vmatpush.msra.mxu0 %v1784
        %1846 = vmatpush.msra.mxu0 %v1783
        %1847 = vmatpush.msra.mxu0 %v1782
        %1848 = vmatpush.msra.mxu0 %v1781
        %1849 = vmatmul.f32.gmra.mxu0 %v1786
        %v1850 = vpop.f32.mrf.mxu0
        %v1851 = vadd.f32 0.0, %v1850
        %1852 = vmatmul.f32.gmra.mxu0 %v1789
        %v1853 = vpop.f32.mrf.mxu0
        %v1854 = vadd.f32 0.0, %v1853
        %1855 = vmatmul.f32.gmra.mxu0 %v1792
        %v1856 = vpop.f32.mrf.mxu0
        %v1857 = vadd.f32 0.0, %v1856
        %1858 = vmatmul.f32.gmra.mxu0 %v1795
        %v1859 = vpop.f32.mrf.mxu0
        %v1860 = vadd.f32 0.0, %v1859
        %1861 = vmatmul.f32.gmra.mxu0 %v1798
        %v1862 = vpop.f32.mrf.mxu0
        %v1863 = vadd.f32 0.0, %v1862
        %1864 = vmatmul.f32.gmra.mxu0 %v1801
        %v1865 = vpop.f32.mrf.mxu0
        %v1866 = vadd.f32 0.0, %v1865
        %1867 = vmatmul.f32.gmra.mxu0 %v1804
        %v1868 = vpop.f32.mrf.mxu0
        %v1869 = vadd.f32 0.0, %v1868
        %1870 = vmatmul.f32.gmra.mxu0 %v1807
        %v1871 = vpop.f32.mrf.mxu0
        %v1872 = vadd.f32 0.0, %v1871
        %1873 = vmatmul.f32.gmra.mxu0 %v1810
        %v1874 = vpop.f32.mrf.mxu0
        %v1875 = vadd.f32 0.0, %v1874
        %1876 = vmatmul.f32.gmra.mxu0 %v1813
        %v1877 = vpop.f32.mrf.mxu0
        %v1878 = vadd.f32 0.0, %v1877
        %1879 = vmatmul.f32.gmra.mxu0 %v1816
        %v1880 = vpop.f32.mrf.mxu0
        %v1881 = vadd.f32 0.0, %v1880
        %1882 = vmatmul.f32.gmra.mxu0 %v1819
        %v1883 = vpop.f32.mrf.mxu0
        %v1884 = vadd.f32 0.0, %v1883
        %1885 = vmatmul.f32.gmra.mxu0 %v1822
        %v1886 = vpop.f32.mrf.mxu0
        %v1887 = vadd.f32 0.0, %v1886
        %1888 = vmatmul.f32.gmra.mxu0 %v1825
        %v1889 = vpop.f32.mrf.mxu0
        %v1890 = vadd.f32 0.0, %v1889
        %1891 = vmatmul.f32.gmra.mxu0 %v1828
        %v1892 = vpop.f32.mrf.mxu0
        %v1893 = vadd.f32 0.0, %v1892
        %1894 = vmatmul.f32.gmra.mxu0 %v1831
        %v1895 = vpop.f32.mrf.mxu0
        %v1896 = vadd.f32 0.0, %v1895
        %1897 = vdwg.mxu0
        %v1898 = vadd.f32 %v1748, %v1851
        %v1899 = vadd.f32 %v1749, %v1854
        %v1900 = vadd.f32 %v1750, %v1857
        %v1901 = vadd.f32 %v1751, %v1860
        %v1902 = vadd.f32 %v1752, %v1863
        %v1903 = vadd.f32 %v1753, %v1866
        %v1904 = vadd.f32 %v1754, %v1869
        %v1905 = vadd.f32 %v1755, %v1872
        %v1906 = vadd.f32 %v1756, %v1875
        %v1907 = vadd.f32 %v1757, %v1878
        %v1908 = vadd.f32 %v1758, %v1881
        %v1909 = vadd.f32 %v1759, %v1884
        %v1910 = vadd.f32 %v1760, %v1887
        %v1911 = vadd.f32 %v1761, %v1890
        %v1912 = vadd.f32 %v1762, %v1893
        %v1913 = vadd.f32 %v1763, %v1896
        %v1914 = vld [vmem:[#allocation2 + $0x22] sm:$0xff]
        %v1915 = vld [vmem:[#allocation2 + $0x2a] sm:$0xff]
        %v1916 = vld [vmem:[#allocation2 + $0x32] sm:$0xff]
        %v1917 = vld [vmem:[#allocation2 + $0x3a] sm:$0xff]
        %v1918 = vld [vmem:[#allocation2 + $0x42] sm:$0xff]
        %v1919 = vld [vmem:[#allocation2 + $0x4a] sm:$0xff]
        %v1920 = vld [vmem:[#allocation2 + $0x52] sm:$0xff]
        %v1921 = vld [vmem:[#allocation2 + $0x5a] sm:$0xff]
        %v1922 = vld [vmem:[#allocation2 + $0x62] sm:$0xff]
        %v1923 = vld [vmem:[#allocation2 + $0x6a] sm:$0xff]
        %v1924 = vld [vmem:[#allocation2 + $0x72] sm:$0xff]
        %v1925 = vld [vmem:[#allocation2 + $0x7a] sm:$0xff]
        %v1926 = vld [vmem:[#allocation2 + $0x82] sm:$0xff]
        %v1927 = vld [vmem:[#allocation2 + $0x8a] sm:$0xff]
        %v1928 = vld [vmem:[#allocation2 + $0x92] sm:$0xff]
        %v1929 = vld [vmem:[#allocation2 + $0x9a] sm:$0xff]
        %s1930 = scalar_lea.vmem %s3, 160
        %v1931 = vld [vmem:[%s1930] sm:$0xff]
        %v1932 = vld [vmem:[%s1930 + $0x8] sm:$0xff]
        %v1933 = vld [vmem:[%s1930 + $0x10] sm:$0xff]
        %v1934 = vld [vmem:[%s1930 + $0x18] sm:$0xff]
        %v1936 = vsel %vm1092, %v1914, 0
        %v1939 = vsel %vm1092, %v1915, 0
        %v1942 = vsel %vm1092, %v1916, 0
        %v1945 = vsel %vm1092, %v1917, 0
        %v1948 = vsel %vm1092, %v1918, 0
        %v1951 = vsel %vm1092, %v1919, 0
        %v1954 = vsel %vm1092, %v1920, 0
        %v1957 = vsel %vm1092, %v1921, 0
        %v1960 = vsel %vm1092, %v1922, 0
        %v1963 = vsel %vm1092, %v1923, 0
        %v1966 = vsel %vm1092, %v1924, 0
        %v1969 = vsel %vm1092, %v1925, 0
        %v1972 = vsel %vm1092, %v1926, 0
        %v1975 = vsel %vm1092, %v1927, 0
        %v1978 = vsel %vm1092, %v1928, 0
        %v1981 = vsel %vm1092, %v1929, 0
        %1983 = vmatpush.msra.mxu0 0.0
        %1984 = vmatpush.msra.mxu0 0.0
        %1985 = vmatpush.msra.mxu0 0.0
        %1986 = vmatpush.msra.mxu0 0.0
        %1987 = vmatpush.msra.mxu0 0.0
        %1988 = vmatpush.msra.mxu0 0.0
        %1989 = vmatpush.msra.mxu0 0.0
        %1990 = vmatpush.msra.mxu0 0.0
        %1991 = vmatpush.msra.mxu0 0.0
        %1992 = vmatpush.msra.mxu0 0.0
        %1993 = vmatpush.msra.mxu0 0.0
        %1994 = vmatpush.msra.mxu0 0.0
        %1995 = vmatpush.msra.mxu0 %v1934
        %1996 = vmatpush.msra.mxu0 %v1933
        %1997 = vmatpush.msra.mxu0 %v1932
        %1998 = vmatpush.msra.mxu0 %v1931
        %1999 = vmatmul.f32.gmra.mxu0 %v1936
        %v2000 = vpop.f32.mrf.mxu0
        %v2001 = vadd.f32 0.0, %v2000
        %2002 = vmatmul.f32.gmra.mxu0 %v1939
        %v2003 = vpop.f32.mrf.mxu0
        %v2004 = vadd.f32 0.0, %v2003
        %2005 = vmatmul.f32.gmra.mxu0 %v1942
        %v2006 = vpop.f32.mrf.mxu0
        %v2007 = vadd.f32 0.0, %v2006
        %2008 = vmatmul.f32.gmra.mxu0 %v1945
        %v2009 = vpop.f32.mrf.mxu0
        %v2010 = vadd.f32 0.0, %v2009
        %2011 = vmatmul.f32.gmra.mxu0 %v1948
        %v2012 = vpop.f32.mrf.mxu0
        %v2013 = vadd.f32 0.0, %v2012
        %2014 = vmatmul.f32.gmra.mxu0 %v1951
        %v2015 = vpop.f32.mrf.mxu0
        %v2016 = vadd.f32 0.0, %v2015
        %2017 = vmatmul.f32.gmra.mxu0 %v1954
        %v2018 = vpop.f32.mrf.mxu0
        %v2019 = vadd.f32 0.0, %v2018
        %2020 = vmatmul.f32.gmra.mxu0 %v1957
        %v2021 = vpop.f32.mrf.mxu0
        %v2022 = vadd.f32 0.0, %v2021
        %2023 = vmatmul.f32.gmra.mxu0 %v1960
        %v2024 = vpop.f32.mrf.mxu0
        %v2025 = vadd.f32 0.0, %v2024
        %2026 = vmatmul.f32.gmra.mxu0 %v1963
        %v2027 = vpop.f32.mrf.mxu0
        %v2028 = vadd.f32 0.0, %v2027
        %2029 = vmatmul.f32.gmra.mxu0 %v1966
        %v2030 = vpop.f32.mrf.mxu0
        %v2031 = vadd.f32 0.0, %v2030
        %2032 = vmatmul.f32.gmra.mxu0 %v1969
        %v2033 = vpop.f32.mrf.mxu0
        %v2034 = vadd.f32 0.0, %v2033
        %2035 = vmatmul.f32.gmra.mxu0 %v1972
        %v2036 = vpop.f32.mrf.mxu0
        %v2037 = vadd.f32 0.0, %v2036
        %2038 = vmatmul.f32.gmra.mxu0 %v1975
        %v2039 = vpop.f32.mrf.mxu0
        %v2040 = vadd.f32 0.0, %v2039
        %2041 = vmatmul.f32.gmra.mxu0 %v1978
        %v2042 = vpop.f32.mrf.mxu0
        %v2043 = vadd.f32 0.0, %v2042
        %2044 = vmatmul.f32.gmra.mxu0 %v1981
        %v2045 = vpop.f32.mrf.mxu0
        %v2046 = vadd.f32 0.0, %v2045
        %2047 = vdwg.mxu0
        %v2048 = vadd.f32 %v1898, %v2001
        %v2049 = vadd.f32 %v1899, %v2004
        %v2050 = vadd.f32 %v1900, %v2007
        %v2051 = vadd.f32 %v1901, %v2010
        %v2052 = vadd.f32 %v1902, %v2013
        %v2053 = vadd.f32 %v1903, %v2016
        %v2054 = vadd.f32 %v1904, %v2019
        %v2055 = vadd.f32 %v1905, %v2022
        %v2056 = vadd.f32 %v1906, %v2025
        %v2057 = vadd.f32 %v1907, %v2028
        %v2058 = vadd.f32 %v1908, %v2031
        %v2059 = vadd.f32 %v1909, %v2034
        %v2060 = vadd.f32 %v1910, %v2037
        %v2061 = vadd.f32 %v1911, %v2040
        %v2062 = vadd.f32 %v1912, %v2043
        %v2063 = vadd.f32 %v1913, %v2046
        %v2064 = vld [vmem:[#allocation2 + $0x40] sm:$0xff]
        %v2065 = vld [vmem:[#allocation2 + $0x48] sm:$0xff]
        %v2066 = vld [vmem:[#allocation2 + $0x50] sm:$0xff]
        %v2067 = vld [vmem:[#allocation2 + $0x58] sm:$0xff]
        %v2068 = vld [vmem:[#allocation2 + $0x60] sm:$0xff]
        %v2069 = vld [vmem:[#allocation2 + $0x68] sm:$0xff]
        %v2070 = vld [vmem:[#allocation2 + $0x70] sm:$0xff]
        %v2071 = vld [vmem:[#allocation2 + $0x78] sm:$0xff]
        %v2072 = vld [vmem:[#allocation2 + $0x80] sm:$0xff]
        %v2073 = vld [vmem:[#allocation2 + $0x88] sm:$0xff]
        %v2074 = vld [vmem:[#allocation2 + $0x90] sm:$0xff]
        %v2075 = vld [vmem:[#allocation2 + $0x98] sm:$0xff]
        %v2076 = vld [vmem:[#allocation2 + $0xa0] sm:$0xff]
        %v2077 = vld [vmem:[#allocation2 + $0xa8] sm:$0xff]
        %v2078 = vld [vmem:[#allocation2 + $0xb0] sm:$0xff]
        %v2079 = vld [vmem:[#allocation2 + $0xb8] sm:$0xff]
        %s2080 = scalar_lea.vmem %s3, 192
        %v2081 = vld [vmem:[%s2080] sm:$0xff]
        %v2082 = vld [vmem:[%s2080 + $0x8] sm:$0xff]
        %v2083 = vld [vmem:[%s2080 + $0x10] sm:$0xff]
        %v2084 = vld [vmem:[%s2080 + $0x18] sm:$0xff]
        %v2086 = vsel %vm1092, %v2064, 0
        %v2089 = vsel %vm1092, %v2065, 0
        %v2092 = vsel %vm1092, %v2066, 0
        %v2095 = vsel %vm1092, %v2067, 0
        %v2098 = vsel %vm1092, %v2068, 0
        %v2101 = vsel %vm1092, %v2069, 0
        %v2104 = vsel %vm1092, %v2070, 0
        %v2107 = vsel %vm1092, %v2071, 0
        %v2110 = vsel %vm1092, %v2072, 0
        %v2113 = vsel %vm1092, %v2073, 0
        %v2116 = vsel %vm1092, %v2074, 0
        %v2119 = vsel %vm1092, %v2075, 0
        %v2122 = vsel %vm1092, %v2076, 0
        %v2125 = vsel %vm1092, %v2077, 0
        %v2128 = vsel %vm1092, %v2078, 0
        %v2131 = vsel %vm1092, %v2079, 0
        %2133 = vmatpush.msra.mxu0 0.0
        %2134 = vmatpush.msra.mxu0 0.0
        %2135 = vmatpush.msra.mxu0 0.0
        %2136 = vmatpush.msra.mxu0 0.0
        %2137 = vmatpush.msra.mxu0 0.0
        %2138 = vmatpush.msra.mxu0 0.0
        %2139 = vmatpush.msra.mxu0 0.0
        %2140 = vmatpush.msra.mxu0 0.0
        %2141 = vmatpush.msra.mxu0 0.0
        %2142 = vmatpush.msra.mxu0 0.0
        %2143 = vmatpush.msra.mxu0 0.0
        %2144 = vmatpush.msra.mxu0 0.0
        %2145 = vmatpush.msra.mxu0 %v2084
        %2146 = vmatpush.msra.mxu0 %v2083
        %2147 = vmatpush.msra.mxu0 %v2082
        %2148 = vmatpush.msra.mxu0 %v2081
        %2149 = vmatmul.f32.gmra.mxu0 %v2086
        %v2150 = vpop.f32.mrf.mxu0
        %v2151 = vadd.f32 0.0, %v2150
        %2152 = vmatmul.f32.gmra.mxu0 %v2089
        %v2153 = vpop.f32.mrf.mxu0
        %v2154 = vadd.f32 0.0, %v2153
        %2155 = vmatmul.f32.gmra.mxu0 %v2092
        %v2156 = vpop.f32.mrf.mxu0
        %v2157 = vadd.f32 0.0, %v2156
        %2158 = vmatmul.f32.gmra.mxu0 %v2095
        %v2159 = vpop.f32.mrf.mxu0
        %v2160 = vadd.f32 0.0, %v2159
        %2161 = vmatmul.f32.gmra.mxu0 %v2098
        %v2162 = vpop.f32.mrf.mxu0
        %v2163 = vadd.f32 0.0, %v2162
        %2164 = vmatmul.f32.gmra.mxu0 %v2101
        %v2165 = vpop.f32.mrf.mxu0
        %v2166 = vadd.f32 0.0, %v2165
        %2167 = vmatmul.f32.gmra.mxu0 %v2104
        %v2168 = vpop.f32.mrf.mxu0
        %v2169 = vadd.f32 0.0, %v2168
        %2170 = vmatmul.f32.gmra.mxu0 %v2107
        %v2171 = vpop.f32.mrf.mxu0
        %v2172 = vadd.f32 0.0, %v2171
        %2173 = vmatmul.f32.gmra.mxu0 %v2110
        %v2174 = vpop.f32.mrf.mxu0
        %v2175 = vadd.f32 0.0, %v2174
        %2176 = vmatmul.f32.gmra.mxu0 %v2113
        %v2177 = vpop.f32.mrf.mxu0
        %v2178 = vadd.f32 0.0, %v2177
        %2179 = vmatmul.f32.gmra.mxu0 %v2116
        %v2180 = vpop.f32.mrf.mxu0
        %v2181 = vadd.f32 0.0, %v2180
        %2182 = vmatmul.f32.gmra.mxu0 %v2119
        %v2183 = vpop.f32.mrf.mxu0
        %v2184 = vadd.f32 0.0, %v2183
        %2185 = vmatmul.f32.gmra.mxu0 %v2122
        %v2186 = vpop.f32.mrf.mxu0
        %v2187 = vadd.f32 0.0, %v2186
        %2188 = vmatmul.f32.gmra.mxu0 %v2125
        %v2189 = vpop.f32.mrf.mxu0
        %v2190 = vadd.f32 0.0, %v2189
        %2191 = vmatmul.f32.gmra.mxu0 %v2128
        %v2192 = vpop.f32.mrf.mxu0
        %v2193 = vadd.f32 0.0, %v2192
        %2194 = vmatmul.f32.gmra.mxu0 %v2131
        %v2195 = vpop.f32.mrf.mxu0
        %v2196 = vadd.f32 0.0, %v2195
        %2197 = vdwg.mxu0
        %v2198 = vadd.f32 %v2048, %v2151
        %v2199 = vadd.f32 %v2049, %v2154
        %v2200 = vadd.f32 %v2050, %v2157
        %v2201 = vadd.f32 %v2051, %v2160
        %v2202 = vadd.f32 %v2052, %v2163
        %v2203 = vadd.f32 %v2053, %v2166
        %v2204 = vadd.f32 %v2054, %v2169
        %v2205 = vadd.f32 %v2055, %v2172
        %v2206 = vadd.f32 %v2056, %v2175
        %v2207 = vadd.f32 %v2057, %v2178
        %v2208 = vadd.f32 %v2058, %v2181
        %v2209 = vadd.f32 %v2059, %v2184
        %v2210 = vadd.f32 %v2060, %v2187
        %v2211 = vadd.f32 %v2061, %v2190
        %v2212 = vadd.f32 %v2062, %v2193
        %v2213 = vadd.f32 %v2063, %v2196
        %v2214 = vld [vmem:[#allocation2 + $0x41] sm:$0xff]
        %v2215 = vld [vmem:[#allocation2 + $0x49] sm:$0xff]
        %v2216 = vld [vmem:[#allocation2 + $0x51] sm:$0xff]
        %v2217 = vld [vmem:[#allocation2 + $0x59] sm:$0xff]
        %v2218 = vld [vmem:[#allocation2 + $0x61] sm:$0xff]
        %v2219 = vld [vmem:[#allocation2 + $0x69] sm:$0xff]
        %v2220 = vld [vmem:[#allocation2 + $0x71] sm:$0xff]
        %v2221 = vld [vmem:[#allocation2 + $0x79] sm:$0xff]
        %v2222 = vld [vmem:[#allocation2 + $0x81] sm:$0xff]
        %v2223 = vld [vmem:[#allocation2 + $0x89] sm:$0xff]
        %v2224 = vld [vmem:[#allocation2 + $0x91] sm:$0xff]
        %v2225 = vld [vmem:[#allocation2 + $0x99] sm:$0xff]
        %v2226 = vld [vmem:[#allocation2 + $0xa1] sm:$0xff]
        %v2227 = vld [vmem:[#allocation2 + $0xa9] sm:$0xff]
        %v2228 = vld [vmem:[#allocation2 + $0xb1] sm:$0xff]
        %v2229 = vld [vmem:[#allocation2 + $0xb9] sm:$0xff]
        %s2230 = scalar_lea.vmem %s3, 224
        %v2231 = vld [vmem:[%s2230] sm:$0xff]
        %v2232 = vld [vmem:[%s2230 + $0x8] sm:$0xff]
        %v2233 = vld [vmem:[%s2230 + $0x10] sm:$0xff]
        %v2234 = vld [vmem:[%s2230 + $0x18] sm:$0xff]
        %v2236 = vsel %vm1092, %v2214, 0
        %v2239 = vsel %vm1092, %v2215, 0
        %v2242 = vsel %vm1092, %v2216, 0
        %v2245 = vsel %vm1092, %v2217, 0
        %v2248 = vsel %vm1092, %v2218, 0
        %v2251 = vsel %vm1092, %v2219, 0
        %v2254 = vsel %vm1092, %v2220, 0
        %v2257 = vsel %vm1092, %v2221, 0
        %v2260 = vsel %vm1092, %v2222, 0
        %v2263 = vsel %vm1092, %v2223, 0
        %v2266 = vsel %vm1092, %v2224, 0
        %v2269 = vsel %vm1092, %v2225, 0
        %v2272 = vsel %vm1092, %v2226, 0
        %v2275 = vsel %vm1092, %v2227, 0
        %v2278 = vsel %vm1092, %v2228, 0
        %v2281 = vsel %vm1092, %v2229, 0
        %2283 = vmatpush.msra.mxu0 0.0
        %2284 = vmatpush.msra.mxu0 0.0
        %2285 = vmatpush.msra.mxu0 0.0
        %2286 = vmatpush.msra.mxu0 0.0
        %2287 = vmatpush.msra.mxu0 0.0
        %2288 = vmatpush.msra.mxu0 0.0
        %2289 = vmatpush.msra.mxu0 0.0
        %2290 = vmatpush.msra.mxu0 0.0
        %2291 = vmatpush.msra.mxu0 0.0
        %2292 = vmatpush.msra.mxu0 0.0
        %2293 = vmatpush.msra.mxu0 0.0
        %2294 = vmatpush.msra.mxu0 0.0
        %2295 = vmatpush.msra.mxu0 %v2234
        %2296 = vmatpush.msra.mxu0 %v2233
        %2297 = vmatpush.msra.mxu0 %v2232
        %2298 = vmatpush.msra.mxu0 %v2231
        %2299 = vmatmul.f32.gmra.mxu0 %v2236
        %v2300 = vpop.f32.mrf.mxu0
        %v2301 = vadd.f32 0.0, %v2300
        %2302 = vmatmul.f32.gmra.mxu0 %v2239
        %v2303 = vpop.f32.mrf.mxu0
        %v2304 = vadd.f32 0.0, %v2303
        %2305 = vmatmul.f32.gmra.mxu0 %v2242
        %v2306 = vpop.f32.mrf.mxu0
        %v2307 = vadd.f32 0.0, %v2306
        %2308 = vmatmul.f32.gmra.mxu0 %v2245
        %v2309 = vpop.f32.mrf.mxu0
        %v2310 = vadd.f32 0.0, %v2309
        %2311 = vmatmul.f32.gmra.mxu0 %v2248
        %v2312 = vpop.f32.mrf.mxu0
        %v2313 = vadd.f32 0.0, %v2312
        %2314 = vmatmul.f32.gmra.mxu0 %v2251
        %v2315 = vpop.f32.mrf.mxu0
        %v2316 = vadd.f32 0.0, %v2315
        %2317 = vmatmul.f32.gmra.mxu0 %v2254
        %v2318 = vpop.f32.mrf.mxu0
        %v2319 = vadd.f32 0.0, %v2318
        %2320 = vmatmul.f32.gmra.mxu0 %v2257
        %v2321 = vpop.f32.mrf.mxu0
        %v2322 = vadd.f32 0.0, %v2321
        %2323 = vmatmul.f32.gmra.mxu0 %v2260
        %v2324 = vpop.f32.mrf.mxu0
        %v2325 = vadd.f32 0.0, %v2324
        %2326 = vmatmul.f32.gmra.mxu0 %v2263
        %v2327 = vpop.f32.mrf.mxu0
        %v2328 = vadd.f32 0.0, %v2327
        %2329 = vmatmul.f32.gmra.mxu0 %v2266
        %v2330 = vpop.f32.mrf.mxu0
        %v2331 = vadd.f32 0.0, %v2330
        %2332 = vmatmul.f32.gmra.mxu0 %v2269
        %v2333 = vpop.f32.mrf.mxu0
        %v2334 = vadd.f32 0.0, %v2333
        %2335 = vmatmul.f32.gmra.mxu0 %v2272
        %v2336 = vpop.f32.mrf.mxu0
        %v2337 = vadd.f32 0.0, %v2336
        %2338 = vmatmul.f32.gmra.mxu0 %v2275
        %v2339 = vpop.f32.mrf.mxu0
        %v2340 = vadd.f32 0.0, %v2339
        %2341 = vmatmul.f32.gmra.mxu0 %v2278
        %v2342 = vpop.f32.mrf.mxu0
        %v2343 = vadd.f32 0.0, %v2342
        %2344 = vmatmul.f32.gmra.mxu0 %v2281
        %v2345 = vpop.f32.mrf.mxu0
        %v2346 = vadd.f32 0.0, %v2345
        %2347 = vdwg.mxu0
        %v2348 = vadd.f32 %v2198, %v2301
        %v2349 = vadd.f32 %v2199, %v2304
        %v2350 = vadd.f32 %v2200, %v2307
        %v2351 = vadd.f32 %v2201, %v2310
        %v2352 = vadd.f32 %v2202, %v2313
        %v2353 = vadd.f32 %v2203, %v2316
        %v2354 = vadd.f32 %v2204, %v2319
        %v2355 = vadd.f32 %v2205, %v2322
        %v2356 = vadd.f32 %v2206, %v2325
        %v2357 = vadd.f32 %v2207, %v2328
        %v2358 = vadd.f32 %v2208, %v2331
        %v2359 = vadd.f32 %v2209, %v2334
        %v2360 = vadd.f32 %v2210, %v2337
        %v2361 = vadd.f32 %v2211, %v2340
        %v2362 = vadd.f32 %v2212, %v2343
        %v2363 = vadd.f32 %v2213, %v2346
        %v2364 = vld [vmem:[#allocation2 + $0x42] sm:$0xff]
        %v2365 = vld [vmem:[#allocation2 + $0x4a] sm:$0xff]
        %v2366 = vld [vmem:[#allocation2 + $0x52] sm:$0xff]
        %v2367 = vld [vmem:[#allocation2 + $0x5a] sm:$0xff]
        %v2368 = vld [vmem:[#allocation2 + $0x62] sm:$0xff]
        %v2369 = vld [vmem:[#allocation2 + $0x6a] sm:$0xff]
        %v2370 = vld [vmem:[#allocation2 + $0x72] sm:$0xff]
        %v2371 = vld [vmem:[#allocation2 + $0x7a] sm:$0xff]
        %v2372 = vld [vmem:[#allocation2 + $0x82] sm:$0xff]
        %v2373 = vld [vmem:[#allocation2 + $0x8a] sm:$0xff]
        %v2374 = vld [vmem:[#allocation2 + $0x92] sm:$0xff]
        %v2375 = vld [vmem:[#allocation2 + $0x9a] sm:$0xff]
        %v2376 = vld [vmem:[#allocation2 + $0xa2] sm:$0xff]
        %v2377 = vld [vmem:[#allocation2 + $0xaa] sm:$0xff]
        %v2378 = vld [vmem:[#allocation2 + $0xb2] sm:$0xff]
        %v2379 = vld [vmem:[#allocation2 + $0xba] sm:$0xff]
        %s2380 = scalar_lea.vmem %s3, 256
        %v2381 = vld [vmem:[%s2380] sm:$0xff]
        %v2382 = vld [vmem:[%s2380 + $0x8] sm:$0xff]
        %v2383 = vld [vmem:[%s2380 + $0x10] sm:$0xff]
        %v2384 = vld [vmem:[%s2380 + $0x18] sm:$0xff]
        %v2386 = vsel %vm1092, %v2364, 0
        %v2389 = vsel %vm1092, %v2365, 0
        %v2392 = vsel %vm1092, %v2366, 0
        %v2395 = vsel %vm1092, %v2367, 0
        %v2398 = vsel %vm1092, %v2368, 0
        %v2401 = vsel %vm1092, %v2369, 0
        %v2404 = vsel %vm1092, %v2370, 0
        %v2407 = vsel %vm1092, %v2371, 0
        %v2410 = vsel %vm1092, %v2372, 0
        %v2413 = vsel %vm1092, %v2373, 0
        %v2416 = vsel %vm1092, %v2374, 0
        %v2419 = vsel %vm1092, %v2375, 0
        %v2422 = vsel %vm1092, %v2376, 0
        %v2425 = vsel %vm1092, %v2377, 0
        %v2428 = vsel %vm1092, %v2378, 0
        %v2431 = vsel %vm1092, %v2379, 0
        %2433 = vmatpush.msra.mxu0 0.0
        %2434 = vmatpush.msra.mxu0 0.0
        %2435 = vmatpush.msra.mxu0 0.0
        %2436 = vmatpush.msra.mxu0 0.0
        %2437 = vmatpush.msra.mxu0 0.0
        %2438 = vmatpush.msra.mxu0 0.0
        %2439 = vmatpush.msra.mxu0 0.0
        %2440 = vmatpush.msra.mxu0 0.0
        %2441 = vmatpush.msra.mxu0 0.0
        %2442 = vmatpush.msra.mxu0 0.0
        %2443 = vmatpush.msra.mxu0 0.0
        %2444 = vmatpush.msra.mxu0 0.0
        %2445 = vmatpush.msra.mxu0 %v2384
        %2446 = vmatpush.msra.mxu0 %v2383
        %2447 = vmatpush.msra.mxu0 %v2382
        %2448 = vmatpush.msra.mxu0 %v2381
        %2449 = vmatmul.f32.gmra.mxu0 %v2386
        %v2450 = vpop.f32.mrf.mxu0
        %v2451 = vadd.f32 0.0, %v2450
        %2452 = vmatmul.f32.gmra.mxu0 %v2389
        %v2453 = vpop.f32.mrf.mxu0
        %v2454 = vadd.f32 0.0, %v2453
        %2455 = vmatmul.f32.gmra.mxu0 %v2392
        %v2456 = vpop.f32.mrf.mxu0
        %v2457 = vadd.f32 0.0, %v2456
        %2458 = vmatmul.f32.gmra.mxu0 %v2395
        %v2459 = vpop.f32.mrf.mxu0
        %v2460 = vadd.f32 0.0, %v2459
        %2461 = vmatmul.f32.gmra.mxu0 %v2398
        %v2462 = vpop.f32.mrf.mxu0
        %v2463 = vadd.f32 0.0, %v2462
        %2464 = vmatmul.f32.gmra.mxu0 %v2401
        %v2465 = vpop.f32.mrf.mxu0
        %v2466 = vadd.f32 0.0, %v2465
        %2467 = vmatmul.f32.gmra.mxu0 %v2404
        %v2468 = vpop.f32.mrf.mxu0
        %v2469 = vadd.f32 0.0, %v2468
        %2470 = vmatmul.f32.gmra.mxu0 %v2407
        %v2471 = vpop.f32.mrf.mxu0
        %v2472 = vadd.f32 0.0, %v2471
        %2473 = vmatmul.f32.gmra.mxu0 %v2410
        %v2474 = vpop.f32.mrf.mxu0
        %v2475 = vadd.f32 0.0, %v2474
        %2476 = vmatmul.f32.gmra.mxu0 %v2413
        %v2477 = vpop.f32.mrf.mxu0
        %v2478 = vadd.f32 0.0, %v2477
        %2479 = vmatmul.f32.gmra.mxu0 %v2416
        %v2480 = vpop.f32.mrf.mxu0
        %v2481 = vadd.f32 0.0, %v2480
        %2482 = vmatmul.f32.gmra.mxu0 %v2419
        %v2483 = vpop.f32.mrf.mxu0
        %v2484 = vadd.f32 0.0, %v2483
        %2485 = vmatmul.f32.gmra.mxu0 %v2422
        %v2486 = vpop.f32.mrf.mxu0
        %v2487 = vadd.f32 0.0, %v2486
        %2488 = vmatmul.f32.gmra.mxu0 %v2425
        %v2489 = vpop.f32.mrf.mxu0
        %v2490 = vadd.f32 0.0, %v2489
        %2491 = vmatmul.f32.gmra.mxu0 %v2428
        %v2492 = vpop.f32.mrf.mxu0
        %v2493 = vadd.f32 0.0, %v2492
        %2494 = vmatmul.f32.gmra.mxu0 %v2431
        %v2495 = vpop.f32.mrf.mxu0
        %v2496 = vadd.f32 0.0, %v2495
        %2497 = vdwg.mxu0
        %v2498 = vadd.f32 %v2348, %v2451
        %v2499 = vadd.f32 %v2349, %v2454
        %v2500 = vadd.f32 %v2350, %v2457
        %v2501 = vadd.f32 %v2351, %v2460
        %v2502 = vadd.f32 %v2352, %v2463
        %v2503 = vadd.f32 %v2353, %v2466
        %v2504 = vadd.f32 %v2354, %v2469
        %v2505 = vadd.f32 %v2355, %v2472
        %v2506 = vadd.f32 %v2356, %v2475
        %v2507 = vadd.f32 %v2357, %v2478
        %v2508 = vadd.f32 %v2358, %v2481
        %v2509 = vadd.f32 %v2359, %v2484
        %v2510 = vadd.f32 %v2360, %v2487
        %v2511 = vadd.f32 %v2361, %v2490
        %v2512 = vadd.f32 %v2362, %v2493
        %v2513 = vadd.f32 %v2363, %v2496
        %v2514 = vld [vmem:[%s4] sm:$0x1]
        %v2516 = vperm.slane %v2514, 0
        %v2518 = vadd.f32 %v2498, %v2516
        %v2519 = vadd.f32 %v2499, %v2516
        %v2520 = vadd.f32 %v2500, %v2516
        %v2521 = vadd.f32 %v2501, %v2516
        %v2522 = vadd.f32 %v2502, %v2516
        %v2523 = vadd.f32 %v2503, %v2516
        %v2524 = vadd.f32 %v2504, %v2516
        %v2525 = vadd.f32 %v2505, %v2516
        %v2526 = vadd.f32 %v2506, %v2516
        %v2527 = vadd.f32 %v2507, %v2516
        %v2528 = vadd.f32 %v2508, %v2516
        %v2529 = vadd.f32 %v2509, %v2516
        %v2530 = vadd.f32 %v2510, %v2516
        %v2531 = vadd.f32 %v2511, %v2516
        %v2532 = vadd.f32 %v2512, %v2516
        %v2533 = vadd.f32 %v2513, %v2516
        %v2534 = vmax.f32 %v2518, 0.0
        %v2535 = vmax.f32 %v2519, 0.0
        %v2536 = vmax.f32 %v2520, 0.0
        %v2537 = vmax.f32 %v2521, 0.0
        %v2538 = vmax.f32 %v2522, 0.0
        %v2539 = vmax.f32 %v2523, 0.0
        %v2540 = vmax.f32 %v2524, 0.0
        %v2541 = vmax.f32 %v2525, 0.0
        %v2542 = vmax.f32 %v2526, 0.0
        %v2543 = vmax.f32 %v2527, 0.0
        %v2544 = vmax.f32 %v2528, 0.0
        %v2545 = vmax.f32 %v2529, 0.0
        %v2546 = vmax.f32 %v2530, 0.0
        %v2547 = vmax.f32 %v2531, 0.0
        %v2548 = vmax.f32 %v2532, 0.0
        %v2549 = vmax.f32 %v2533, 0.0
        %vm2550 = vcmask 523264
        %2551 = vst.msk [vmem:[#allocation3] sm:$0xff] %vm2550, %v2534
        %2552 = vst.msk [vmem:[#allocation3 + $0x8] sm:$0xff] %vm2550, %v2535
        %2553 = vst.msk [vmem:[#allocation3 + $0x10] sm:$0xff] %vm2550, %v2536
        %2554 = vst.msk [vmem:[#allocation3 + $0x18] sm:$0xff] %vm2550, %v2537
        %2555 = vst.msk [vmem:[#allocation3 + $0x20] sm:$0xff] %vm2550, %v2538
        %2556 = vst.msk [vmem:[#allocation3 + $0x28] sm:$0xff] %vm2550, %v2539
        %2557 = vst.msk [vmem:[#allocation3 + $0x30] sm:$0xff] %vm2550, %v2540
        %2558 = vst.msk [vmem:[#allocation3 + $0x38] sm:$0xff] %vm2550, %v2541
        %2559 = vst.msk [vmem:[#allocation3 + $0x40] sm:$0xff] %vm2550, %v2542
        %2560 = vst.msk [vmem:[#allocation3 + $0x48] sm:$0xff] %vm2550, %v2543
        %2561 = vst.msk [vmem:[#allocation3 + $0x50] sm:$0xff] %vm2550, %v2544
        %2562 = vst.msk [vmem:[#allocation3 + $0x58] sm:$0xff] %vm2550, %v2545
        %2563 = vst.msk [vmem:[#allocation3 + $0x60] sm:$0xff] %vm2550, %v2546
        %2564 = vst.msk [vmem:[#allocation3 + $0x68] sm:$0xff] %vm2550, %v2547
        %2565 = vst.msk [vmem:[#allocation3 + $0x70] sm:$0xff] %vm2550, %v2548
        %2566 = vst.msk [vmem:[#allocation3 + $0x78] sm:$0xff] %vm2550, %v2549
        %v2567 = vld [vmem:[#allocation2 + $0x80] sm:$0xff]
        %v2568 = vld [vmem:[#allocation2 + $0x88] sm:$0xff]
        %v2569 = vld [vmem:[#allocation2 + $0x90] sm:$0xff]
        %v2570 = vld [vmem:[#allocation2 + $0x98] sm:$0xff]
        %v2571 = vld [vmem:[#allocation2 + $0xa0] sm:$0xff]
        %v2572 = vld [vmem:[#allocation2 + $0xa8] sm:$0xff]
        %v2573 = vld [vmem:[#allocation2 + $0xb0] sm:$0xff]
        %v2574 = vld [vmem:[#allocation2 + $0xb8] sm:$0xff]
        %v2575 = vld [vmem:[#allocation2 + $0xc0] sm:$0xff]
        %v2576 = vld [vmem:[#allocation2 + $0xc8] sm:$0xff]
        %v2577 = vld [vmem:[#allocation2 + $0xd0] sm:$0xff]
        %v2578 = vld [vmem:[#allocation2 + $0xd8] sm:$0xff]
        %v2579 = vld [vmem:[#allocation2 + $0xe0] sm:$0xff]
        %v2580 = vld [vmem:[#allocation2 + $0xe8] sm:$0xff]
        %v2581 = vld [vmem:[#allocation2 + $0xf0] sm:$0xff]
        %v2582 = vld [vmem:[#allocation2 + $0xf8] sm:$0xff]
        %v2583 = vld [vmem:[%s3] sm:$0xff]
        %v2584 = vld [vmem:[%s3 + $0x8] sm:$0xff]
        %v2585 = vld [vmem:[%s3 + $0x10] sm:$0xff]
        %v2586 = vld [vmem:[%s3 + $0x18] sm:$0xff]
        %v2587 = vld [vmem:[#allocation2 + $0x81] sm:$0xff]
        %v2588 = vld [vmem:[#allocation2 + $0x89] sm:$0xff]
        %v2589 = vld [vmem:[#allocation2 + $0x91] sm:$0xff]
        %v2590 = vld [vmem:[#allocation2 + $0x99] sm:$0xff]
        %v2591 = vld [vmem:[#allocation2 + $0xa1] sm:$0xff]
        %v2592 = vld [vmem:[#allocation2 + $0xa9] sm:$0xff]
        %v2593 = vld [vmem:[#allocation2 + $0xb1] sm:$0xff]
        %v2594 = vld [vmem:[#allocation2 + $0xb9] sm:$0xff]
        %v2595 = vld [vmem:[#allocation2 + $0xc1] sm:$0xff]
        %v2596 = vld [vmem:[#allocation2 + $0xc9] sm:$0xff]
        %v2597 = vld [vmem:[#allocation2 + $0xd1] sm:$0xff]
        %v2598 = vld [vmem:[#allocation2 + $0xd9] sm:$0xff]
        %v2599 = vld [vmem:[#allocation2 + $0xe1] sm:$0xff]
        %v2600 = vld [vmem:[#allocation2 + $0xe9] sm:$0xff]
        %v2601 = vld [vmem:[#allocation2 + $0xf1] sm:$0xff]
        %v2602 = vld [vmem:[#allocation2 + $0xf9] sm:$0xff]
        %v2603 = vld [vmem:[%s1233] sm:$0xff]
        %v2604 = vld [vmem:[%s1233 + $0x8] sm:$0xff]
        %v2605 = vld [vmem:[%s1233 + $0x10] sm:$0xff]
        %v2606 = vld [vmem:[%s1233 + $0x18] sm:$0xff]
        %v2608 = vsel %vm1092, %v2587, 0
        %v2611 = vsel %vm1092, %v2588, 0
        %v2614 = vsel %vm1092, %v2589, 0
        %v2617 = vsel %vm1092, %v2590, 0
        %v2620 = vsel %vm1092, %v2591, 0
        %v2623 = vsel %vm1092, %v2592, 0
        %v2626 = vsel %vm1092, %v2593, 0
        %v2629 = vsel %vm1092, %v2594, 0
        %v2632 = vsel %vm1092, %v2595, 0
        %v2635 = vsel %vm1092, %v2596, 0
        %v2638 = vsel %vm1092, %v2597, 0
        %v2641 = vsel %vm1092, %v2598, 0
        %v2644 = vsel %vm1092, %v2599, 0
        %v2647 = vsel %vm1092, %v2600, 0
        %v2650 = vsel %vm1092, %v2601, 0
        %v2653 = vsel %vm1092, %v2602, 0
        %2655 = vmatpush.msra.mxu0 0.0
        %2656 = vmatpush.msra.mxu0 0.0
        %2657 = vmatpush.msra.mxu0 0.0
        %2658 = vmatpush.msra.mxu0 0.0
        %2659 = vmatpush.msra.mxu0 0.0
        %2660 = vmatpush.msra.mxu0 0.0
        %2661 = vmatpush.msra.mxu0 0.0
        %2662 = vmatpush.msra.mxu0 0.0
        %2663 = vmatpush.msra.mxu0 0.0
        %2664 = vmatpush.msra.mxu0 0.0
        %2665 = vmatpush.msra.mxu0 0.0
        %2666 = vmatpush.msra.mxu0 0.0
        %2667 = vmatpush.msra.mxu0 %v2606
        %2668 = vmatpush.msra.mxu0 %v2605
        %2669 = vmatpush.msra.mxu0 %v2604
        %2670 = vmatpush.msra.mxu0 %v2603
        %2671 = vmatmul.f32.gmra.mxu0 %v2608
        %v2672 = vpop.f32.mrf.mxu0
        %v2673 = vadd.f32 0.0, %v2672
        %2674 = vmatmul.f32.gmra.mxu0 %v2611
        %v2675 = vpop.f32.mrf.mxu0
        %v2676 = vadd.f32 0.0, %v2675
        %2677 = vmatmul.f32.gmra.mxu0 %v2614
        %v2678 = vpop.f32.mrf.mxu0
        %v2679 = vadd.f32 0.0, %v2678
        %2680 = vmatmul.f32.gmra.mxu0 %v2617
        %v2681 = vpop.f32.mrf.mxu0
        %v2682 = vadd.f32 0.0, %v2681
        %2683 = vmatmul.f32.gmra.mxu0 %v2620
        %v2684 = vpop.f32.mrf.mxu0
        %v2685 = vadd.f32 0.0, %v2684
        %2686 = vmatmul.f32.gmra.mxu0 %v2623
        %v2687 = vpop.f32.mrf.mxu0
        %v2688 = vadd.f32 0.0, %v2687
        %2689 = vmatmul.f32.gmra.mxu0 %v2626
        %v2690 = vpop.f32.mrf.mxu0
        %v2691 = vadd.f32 0.0, %v2690
        %2692 = vmatmul.f32.gmra.mxu0 %v2629
        %v2693 = vpop.f32.mrf.mxu0
        %v2694 = vadd.f32 0.0, %v2693
        %2695 = vmatmul.f32.gmra.mxu0 %v2632
        %v2696 = vpop.f32.mrf.mxu0
        %v2697 = vadd.f32 0.0, %v2696
        %2698 = vmatmul.f32.gmra.mxu0 %v2635
        %v2699 = vpop.f32.mrf.mxu0
        %v2700 = vadd.f32 0.0, %v2699
        %2701 = vmatmul.f32.gmra.mxu0 %v2638
        %v2702 = vpop.f32.mrf.mxu0
        %v2703 = vadd.f32 0.0, %v2702
        %2704 = vmatmul.f32.gmra.mxu0 %v2641
        %v2705 = vpop.f32.mrf.mxu0
        %v2706 = vadd.f32 0.0, %v2705
        %2707 = vmatmul.f32.gmra.mxu0 %v2644
        %v2708 = vpop.f32.mrf.mxu0
        %v2709 = vadd.f32 0.0, %v2708
        %2710 = vmatmul.f32.gmra.mxu0 %v2647
        %v2711 = vpop.f32.mrf.mxu0
        %v2712 = vadd.f32 0.0, %v2711
        %2713 = vmatmul.f32.gmra.mxu0 %v2650
        %v2714 = vpop.f32.mrf.mxu0
        %v2715 = vadd.f32 0.0, %v2714
        %2716 = vmatmul.f32.gmra.mxu0 %v2653
        %v2717 = vpop.f32.mrf.mxu0
        %v2718 = vadd.f32 0.0, %v2717
        %2719 = vdwg.mxu0
        %v2721 = vsel %vm1092, %v2567, 0
        %v2724 = vsel %vm1092, %v2568, 0
        %v2727 = vsel %vm1092, %v2569, 0
        %v2730 = vsel %vm1092, %v2570, 0
        %v2733 = vsel %vm1092, %v2571, 0
        %v2736 = vsel %vm1092, %v2572, 0
        %v2739 = vsel %vm1092, %v2573, 0
        %v2742 = vsel %vm1092, %v2574, 0
        %v2745 = vsel %vm1092, %v2575, 0
        %v2748 = vsel %vm1092, %v2576, 0
        %v2751 = vsel %vm1092, %v2577, 0
        %v2754 = vsel %vm1092, %v2578, 0
        %v2757 = vsel %vm1092, %v2579, 0
        %v2760 = vsel %vm1092, %v2580, 0
        %v2763 = vsel %vm1092, %v2581, 0
        %v2766 = vsel %vm1092, %v2582, 0
        %2768 = vmatpush.msra.mxu0 0.0
        %2769 = vmatpush.msra.mxu0 0.0
        %2770 = vmatpush.msra.mxu0 0.0
        %2771 = vmatpush.msra.mxu0 0.0
        %2772 = vmatpush.msra.mxu0 0.0
        %2773 = vmatpush.msra.mxu0 0.0
        %2774 = vmatpush.msra.mxu0 0.0
        %2775 = vmatpush.msra.mxu0 0.0
        %2776 = vmatpush.msra.mxu0 0.0
        %2777 = vmatpush.msra.mxu0 0.0
        %2778 = vmatpush.msra.mxu0 0.0
        %2779 = vmatpush.msra.mxu0 0.0
        %2780 = vmatpush.msra.mxu0 %v2586
        %2781 = vmatpush.msra.mxu0 %v2585
        %2782 = vmatpush.msra.mxu0 %v2584
        %2783 = vmatpush.msra.mxu0 %v2583
        %2784 = vmatmul.f32.gmra.mxu0 %v2721
        %v2785 = vpop.f32.mrf.mxu0
        %v2786 = vadd.f32 %v2673, %v2785
        %2787 = vmatmul.f32.gmra.mxu0 %v2724
        %v2788 = vpop.f32.mrf.mxu0
        %v2789 = vadd.f32 %v2676, %v2788
        %2790 = vmatmul.f32.gmra.mxu0 %v2727
        %v2791 = vpop.f32.mrf.mxu0
        %v2792 = vadd.f32 %v2679, %v2791
        %2793 = vmatmul.f32.gmra.mxu0 %v2730
        %v2794 = vpop.f32.mrf.mxu0
        %v2795 = vadd.f32 %v2682, %v2794
        %2796 = vmatmul.f32.gmra.mxu0 %v2733
        %v2797 = vpop.f32.mrf.mxu0
        %v2798 = vadd.f32 %v2685, %v2797
        %2799 = vmatmul.f32.gmra.mxu0 %v2736
        %v2800 = vpop.f32.mrf.mxu0
        %v2801 = vadd.f32 %v2688, %v2800
        %2802 = vmatmul.f32.gmra.mxu0 %v2739
        %v2803 = vpop.f32.mrf.mxu0
        %v2804 = vadd.f32 %v2691, %v2803
        %2805 = vmatmul.f32.gmra.mxu0 %v2742
        %v2806 = vpop.f32.mrf.mxu0
        %v2807 = vadd.f32 %v2694, %v2806
        %2808 = vmatmul.f32.gmra.mxu0 %v2745
        %v2809 = vpop.f32.mrf.mxu0
        %v2810 = vadd.f32 %v2697, %v2809
        %2811 = vmatmul.f32.gmra.mxu0 %v2748
        %v2812 = vpop.f32.mrf.mxu0
        %v2813 = vadd.f32 %v2700, %v2812
        %2814 = vmatmul.f32.gmra.mxu0 %v2751
        %v2815 = vpop.f32.mrf.mxu0
        %v2816 = vadd.f32 %v2703, %v2815
        %2817 = vmatmul.f32.gmra.mxu0 %v2754
        %v2818 = vpop.f32.mrf.mxu0
        %v2819 = vadd.f32 %v2706, %v2818
        %2820 = vmatmul.f32.gmra.mxu0 %v2757
        %v2821 = vpop.f32.mrf.mxu0
        %v2822 = vadd.f32 %v2709, %v2821
        %2823 = vmatmul.f32.gmra.mxu0 %v2760
        %v2824 = vpop.f32.mrf.mxu0
        %v2825 = vadd.f32 %v2712, %v2824
        %2826 = vmatmul.f32.gmra.mxu0 %v2763
        %v2827 = vpop.f32.mrf.mxu0
        %v2828 = vadd.f32 %v2715, %v2827
        %2829 = vmatmul.f32.gmra.mxu0 %v2766
        %v2830 = vpop.f32.mrf.mxu0
        %v2831 = vadd.f32 %v2718, %v2830
        %2832 = vdwg.mxu0
        %v2833 = vld [vmem:[#allocation2 + $0x82] sm:$0xff]
        %v2834 = vld [vmem:[#allocation2 + $0x8a] sm:$0xff]
        %v2835 = vld [vmem:[#allocation2 + $0x92] sm:$0xff]
        %v2836 = vld [vmem:[#allocation2 + $0x9a] sm:$0xff]
        %v2837 = vld [vmem:[#allocation2 + $0xa2] sm:$0xff]
        %v2838 = vld [vmem:[#allocation2 + $0xaa] sm:$0xff]
        %v2839 = vld [vmem:[#allocation2 + $0xb2] sm:$0xff]
        %v2840 = vld [vmem:[#allocation2 + $0xba] sm:$0xff]
        %v2841 = vld [vmem:[#allocation2 + $0xc2] sm:$0xff]
        %v2842 = vld [vmem:[#allocation2 + $0xca] sm:$0xff]
        %v2843 = vld [vmem:[#allocation2 + $0xd2] sm:$0xff]
        %v2844 = vld [vmem:[#allocation2 + $0xda] sm:$0xff]
        %v2845 = vld [vmem:[#allocation2 + $0xe2] sm:$0xff]
        %v2846 = vld [vmem:[#allocation2 + $0xea] sm:$0xff]
        %v2847 = vld [vmem:[#allocation2 + $0xf2] sm:$0xff]
        %v2848 = vld [vmem:[#allocation2 + $0xfa] sm:$0xff]
        %v2849 = vld [vmem:[%s1480] sm:$0xff]
        %v2850 = vld [vmem:[%s1480 + $0x8] sm:$0xff]
        %v2851 = vld [vmem:[%s1480 + $0x10] sm:$0xff]
        %v2852 = vld [vmem:[%s1480 + $0x18] sm:$0xff]
        %v2854 = vsel %vm1092, %v2833, 0
        %v2857 = vsel %vm1092, %v2834, 0
        %v2860 = vsel %vm1092, %v2835, 0
        %v2863 = vsel %vm1092, %v2836, 0
        %v2866 = vsel %vm1092, %v2837, 0
        %v2869 = vsel %vm1092, %v2838, 0
        %v2872 = vsel %vm1092, %v2839, 0
        %v2875 = vsel %vm1092, %v2840, 0
        %v2878 = vsel %vm1092, %v2841, 0
        %v2881 = vsel %vm1092, %v2842, 0
        %v2884 = vsel %vm1092, %v2843, 0
        %v2887 = vsel %vm1092, %v2844, 0
        %v2890 = vsel %vm1092, %v2845, 0
        %v2893 = vsel %vm1092, %v2846, 0
        %v2896 = vsel %vm1092, %v2847, 0
        %v2899 = vsel %vm1092, %v2848, 0
        %2901 = vmatpush.msra.mxu0 0.0
        %2902 = vmatpush.msra.mxu0 0.0
        %2903 = vmatpush.msra.mxu0 0.0
        %2904 = vmatpush.msra.mxu0 0.0
        %2905 = vmatpush.msra.mxu0 0.0
        %2906 = vmatpush.msra.mxu0 0.0
        %2907 = vmatpush.msra.mxu0 0.0
        %2908 = vmatpush.msra.mxu0 0.0
        %2909 = vmatpush.msra.mxu0 0.0
        %2910 = vmatpush.msra.mxu0 0.0
        %2911 = vmatpush.msra.mxu0 0.0
        %2912 = vmatpush.msra.mxu0 0.0
        %2913 = vmatpush.msra.mxu0 %v2852
        %2914 = vmatpush.msra.mxu0 %v2851
        %2915 = vmatpush.msra.mxu0 %v2850
        %2916 = vmatpush.msra.mxu0 %v2849
        %2917 = vmatmul.f32.gmra.mxu0 %v2854
        %v2918 = vpop.f32.mrf.mxu0
        %v2919 = vadd.f32 0.0, %v2918
        %2920 = vmatmul.f32.gmra.mxu0 %v2857
        %v2921 = vpop.f32.mrf.mxu0
        %v2922 = vadd.f32 0.0, %v2921
        %2923 = vmatmul.f32.gmra.mxu0 %v2860
        %v2924 = vpop.f32.mrf.mxu0
        %v2925 = vadd.f32 0.0, %v2924
        %2926 = vmatmul.f32.gmra.mxu0 %v2863
        %v2927 = vpop.f32.mrf.mxu0
        %v2928 = vadd.f32 0.0, %v2927
        %2929 = vmatmul.f32.gmra.mxu0 %v2866
        %v2930 = vpop.f32.mrf.mxu0
        %v2931 = vadd.f32 0.0, %v2930
        %2932 = vmatmul.f32.gmra.mxu0 %v2869
        %v2933 = vpop.f32.mrf.mxu0
        %v2934 = vadd.f32 0.0, %v2933
        %2935 = vmatmul.f32.gmra.mxu0 %v2872
        %v2936 = vpop.f32.mrf.mxu0
        %v2937 = vadd.f32 0.0, %v2936
        %2938 = vmatmul.f32.gmra.mxu0 %v2875
        %v2939 = vpop.f32.mrf.mxu0
        %v2940 = vadd.f32 0.0, %v2939
        %2941 = vmatmul.f32.gmra.mxu0 %v2878
        %v2942 = vpop.f32.mrf.mxu0
        %v2943 = vadd.f32 0.0, %v2942
        %2944 = vmatmul.f32.gmra.mxu0 %v2881
        %v2945 = vpop.f32.mrf.mxu0
        %v2946 = vadd.f32 0.0, %v2945
        %2947 = vmatmul.f32.gmra.mxu0 %v2884
        %v2948 = vpop.f32.mrf.mxu0
        %v2949 = vadd.f32 0.0, %v2948
        %2950 = vmatmul.f32.gmra.mxu0 %v2887
        %v2951 = vpop.f32.mrf.mxu0
        %v2952 = vadd.f32 0.0, %v2951
        %2953 = vmatmul.f32.gmra.mxu0 %v2890
        %v2954 = vpop.f32.mrf.mxu0
        %v2955 = vadd.f32 0.0, %v2954
        %2956 = vmatmul.f32.gmra.mxu0 %v2893
        %v2957 = vpop.f32.mrf.mxu0
        %v2958 = vadd.f32 0.0, %v2957
        %2959 = vmatmul.f32.gmra.mxu0 %v2896
        %v2960 = vpop.f32.mrf.mxu0
        %v2961 = vadd.f32 0.0, %v2960
        %2962 = vmatmul.f32.gmra.mxu0 %v2899
        %v2963 = vpop.f32.mrf.mxu0
        %v2964 = vadd.f32 0.0, %v2963
        %2965 = vdwg.mxu0
        %v2966 = vadd.f32 %v2786, %v2919
        %v2967 = vadd.f32 %v2789, %v2922
        %v2968 = vadd.f32 %v2792, %v2925
        %v2969 = vadd.f32 %v2795, %v2928
        %v2970 = vadd.f32 %v2798, %v2931
        %v2971 = vadd.f32 %v2801, %v2934
        %v2972 = vadd.f32 %v2804, %v2937
        %v2973 = vadd.f32 %v2807, %v2940
        %v2974 = vadd.f32 %v2810, %v2943
        %v2975 = vadd.f32 %v2813, %v2946
        %v2976 = vadd.f32 %v2816, %v2949
        %v2977 = vadd.f32 %v2819, %v2952
        %v2978 = vadd.f32 %v2822, %v2955
        %v2979 = vadd.f32 %v2825, %v2958
        %v2980 = vadd.f32 %v2828, %v2961
        %v2981 = vadd.f32 %v2831, %v2964
        %v2982 = vld [vmem:[#allocation2 + $0xa0] sm:$0xff]
        %v2983 = vld [vmem:[#allocation2 + $0xa8] sm:$0xff]
        %v2984 = vld [vmem:[#allocation2 + $0xb0] sm:$0xff]
        %v2985 = vld [vmem:[#allocation2 + $0xb8] sm:$0xff]
        %v2986 = vld [vmem:[#allocation2 + $0xc0] sm:$0xff]
        %v2987 = vld [vmem:[#allocation2 + $0xc8] sm:$0xff]
        %v2988 = vld [vmem:[#allocation2 + $0xd0] sm:$0xff]
        %v2989 = vld [vmem:[#allocation2 + $0xd8] sm:$0xff]
        %v2990 = vld [vmem:[#allocation2 + $0xe0] sm:$0xff]
        %v2991 = vld [vmem:[#allocation2 + $0xe8] sm:$0xff]
        %v2992 = vld [vmem:[#allocation2 + $0xf0] sm:$0xff]
        %v2993 = vld [vmem:[#allocation2 + $0xf8] sm:$0xff]
        %v2994 = vld [vmem:[#allocation2 + $0x100] sm:$0xff]
        %v2995 = vld [vmem:[#allocation2 + $0x108] sm:$0xff]
        %v2996 = vld [vmem:[#allocation2 + $0x110] sm:$0xff]
        %v2997 = vld [vmem:[#allocation2 + $0x118] sm:$0xff]
        %v2998 = vld [vmem:[%s1630] sm:$0xff]
        %v2999 = vld [vmem:[%s1630 + $0x8] sm:$0xff]
        %v3000 = vld [vmem:[%s1630 + $0x10] sm:$0xff]
        %v3001 = vld [vmem:[%s1630 + $0x18] sm:$0xff]
        %v3003 = vsel %vm1092, %v2982, 0
        %v3006 = vsel %vm1092, %v2983, 0
        %v3009 = vsel %vm1092, %v2984, 0
        %v3012 = vsel %vm1092, %v2985, 0
        %v3015 = vsel %vm1092, %v2986, 0
        %v3018 = vsel %vm1092, %v2987, 0
        %v3021 = vsel %vm1092, %v2988, 0
        %v3024 = vsel %vm1092, %v2989, 0
        %v3027 = vsel %vm1092, %v2990, 0
        %v3030 = vsel %vm1092, %v2991, 0
        %v3033 = vsel %vm1092, %v2992, 0
        %v3036 = vsel %vm1092, %v2993, 0
        %v3039 = vsel %vm1092, %v2994, 0
        %v3042 = vsel %vm1092, %v2995, 0
        %v3045 = vsel %vm1092, %v2996, 0
        %v3048 = vsel %vm1092, %v2997, 0
        %3050 = vmatpush.msra.mxu0 0.0
        %3051 = vmatpush.msra.mxu0 0.0
        %3052 = vmatpush.msra.mxu0 0.0
        %3053 = vmatpush.msra.mxu0 0.0
        %3054 = vmatpush.msra.mxu0 0.0
        %3055 = vmatpush.msra.mxu0 0.0
        %3056 = vmatpush.msra.mxu0 0.0
        %3057 = vmatpush.msra.mxu0 0.0
        %3058 = vmatpush.msra.mxu0 0.0
        %3059 = vmatpush.msra.mxu0 0.0
        %3060 = vmatpush.msra.mxu0 0.0
        %3061 = vmatpush.msra.mxu0 0.0
        %3062 = vmatpush.msra.mxu0 %v3001
        %3063 = vmatpush.msra.mxu0 %v3000
        %3064 = vmatpush.msra.mxu0 %v2999
        %3065 = vmatpush.msra.mxu0 %v2998
        %3066 = vmatmul.f32.gmra.mxu0 %v3003
        %v3067 = vpop.f32.mrf.mxu0
        %v3068 = vadd.f32 0.0, %v3067
        %3069 = vmatmul.f32.gmra.mxu0 %v3006
        %v3070 = vpop.f32.mrf.mxu0
        %v3071 = vadd.f32 0.0, %v3070
        %3072 = vmatmul.f32.gmra.mxu0 %v3009
        %v3073 = vpop.f32.mrf.mxu0
        %v3074 = vadd.f32 0.0, %v3073
        %3075 = vmatmul.f32.gmra.mxu0 %v3012
        %v3076 = vpop.f32.mrf.mxu0
        %v3077 = vadd.f32 0.0, %v3076
        %3078 = vmatmul.f32.gmra.mxu0 %v3015
        %v3079 = vpop.f32.mrf.mxu0
        %v3080 = vadd.f32 0.0, %v3079
        %3081 = vmatmul.f32.gmra.mxu0 %v3018
        %v3082 = vpop.f32.mrf.mxu0
        %v3083 = vadd.f32 0.0, %v3082
        %3084 = vmatmul.f32.gmra.mxu0 %v3021
        %v3085 = vpop.f32.mrf.mxu0
        %v3086 = vadd.f32 0.0, %v3085
        %3087 = vmatmul.f32.gmra.mxu0 %v3024
        %v3088 = vpop.f32.mrf.mxu0
        %v3089 = vadd.f32 0.0, %v3088
        %3090 = vmatmul.f32.gmra.mxu0 %v3027
        %v3091 = vpop.f32.mrf.mxu0
        %v3092 = vadd.f32 0.0, %v3091
        %3093 = vmatmul.f32.gmra.mxu0 %v3030
        %v3094 = vpop.f32.mrf.mxu0
        %v3095 = vadd.f32 0.0, %v3094
        %3096 = vmatmul.f32.gmra.mxu0 %v3033
        %v3097 = vpop.f32.mrf.mxu0
        %v3098 = vadd.f32 0.0, %v3097
        %3099 = vmatmul.f32.gmra.mxu0 %v3036
        %v3100 = vpop.f32.mrf.mxu0
        %v3101 = vadd.f32 0.0, %v3100
        %3102 = vmatmul.f32.gmra.mxu0 %v3039
        %v3103 = vpop.f32.mrf.mxu0
        %v3104 = vadd.f32 0.0, %v3103
        %3105 = vmatmul.f32.gmra.mxu0 %v3042
        %v3106 = vpop.f32.mrf.mxu0
        %v3107 = vadd.f32 0.0, %v3106
        %3108 = vmatmul.f32.gmra.mxu0 %v3045
        %v3109 = vpop.f32.mrf.mxu0
        %v3110 = vadd.f32 0.0, %v3109
        %3111 = vmatmul.f32.gmra.mxu0 %v3048
        %v3112 = vpop.f32.mrf.mxu0
        %v3113 = vadd.f32 0.0, %v3112
        %3114 = vdwg.mxu0
        %v3115 = vadd.f32 %v2966, %v3068
        %v3116 = vadd.f32 %v2967, %v3071
        %v3117 = vadd.f32 %v2968, %v3074
        %v3118 = vadd.f32 %v2969, %v3077
        %v3119 = vadd.f32 %v2970, %v3080
        %v3120 = vadd.f32 %v2971, %v3083
        %v3121 = vadd.f32 %v2972, %v3086
        %v3122 = vadd.f32 %v2973, %v3089
        %v3123 = vadd.f32 %v2974, %v3092
        %v3124 = vadd.f32 %v2975, %v3095
        %v3125 = vadd.f32 %v2976, %v3098
        %v3126 = vadd.f32 %v2977, %v3101
        %v3127 = vadd.f32 %v2978, %v3104
        %v3128 = vadd.f32 %v2979, %v3107
        %v3129 = vadd.f32 %v2980, %v3110
        %v3130 = vadd.f32 %v2981, %v3113
        %v3131 = vld [vmem:[#allocation2 + $0xa1] sm:$0xff]
        %v3132 = vld [vmem:[#allocation2 + $0xa9] sm:$0xff]
        %v3133 = vld [vmem:[#allocation2 + $0xb1] sm:$0xff]
        %v3134 = vld [vmem:[#allocation2 + $0xb9] sm:$0xff]
        %v3135 = vld [vmem:[#allocation2 + $0xc1] sm:$0xff]
        %v3136 = vld [vmem:[#allocation2 + $0xc9] sm:$0xff]
        %v3137 = vld [vmem:[#allocation2 + $0xd1] sm:$0xff]
        %v3138 = vld [vmem:[#allocation2 + $0xd9] sm:$0xff]
        %v3139 = vld [vmem:[#allocation2 + $0xe1] sm:$0xff]
        %v3140 = vld [vmem:[#allocation2 + $0xe9] sm:$0xff]
        %v3141 = vld [vmem:[#allocation2 + $0xf1] sm:$0xff]
        %v3142 = vld [vmem:[#allocation2 + $0xf9] sm:$0xff]
        %v3143 = vld [vmem:[#allocation2 + $0x101] sm:$0xff]
        %v3144 = vld [vmem:[#allocation2 + $0x109] sm:$0xff]
        %v3145 = vld [vmem:[#allocation2 + $0x111] sm:$0xff]
        %v3146 = vld [vmem:[#allocation2 + $0x119] sm:$0xff]
        %v3147 = vld [vmem:[%s1780] sm:$0xff]
        %v3148 = vld [vmem:[%s1780 + $0x8] sm:$0xff]
        %v3149 = vld [vmem:[%s1780 + $0x10] sm:$0xff]
        %v3150 = vld [vmem:[%s1780 + $0x18] sm:$0xff]
        %v3152 = vsel %vm1092, %v3131, 0
        %v3155 = vsel %vm1092, %v3132, 0
        %v3158 = vsel %vm1092, %v3133, 0
        %v3161 = vsel %vm1092, %v3134, 0
        %v3164 = vsel %vm1092, %v3135, 0
        %v3167 = vsel %vm1092, %v3136, 0
        %v3170 = vsel %vm1092, %v3137, 0
        %v3173 = vsel %vm1092, %v3138, 0
        %v3176 = vsel %vm1092, %v3139, 0
        %v3179 = vsel %vm1092, %v3140, 0
        %v3182 = vsel %vm1092, %v3141, 0
        %v3185 = vsel %vm1092, %v3142, 0
        %v3188 = vsel %vm1092, %v3143, 0
        %v3191 = vsel %vm1092, %v3144, 0
        %v3194 = vsel %vm1092, %v3145, 0
        %v3197 = vsel %vm1092, %v3146, 0
        %3199 = vmatpush.msra.mxu0 0.0
        %3200 = vmatpush.msra.mxu0 0.0
        %3201 = vmatpush.msra.mxu0 0.0
        %3202 = vmatpush.msra.mxu0 0.0
        %3203 = vmatpush.msra.mxu0 0.0
        %3204 = vmatpush.msra.mxu0 0.0
        %3205 = vmatpush.msra.mxu0 0.0
        %3206 = vmatpush.msra.mxu0 0.0
        %3207 = vmatpush.msra.mxu0 0.0
        %3208 = vmatpush.msra.mxu0 0.0
        %3209 = vmatpush.msra.mxu0 0.0
        %3210 = vmatpush.msra.mxu0 0.0
        %3211 = vmatpush.msra.mxu0 %v3150
        %3212 = vmatpush.msra.mxu0 %v3149
        %3213 = vmatpush.msra.mxu0 %v3148
        %3214 = vmatpush.msra.mxu0 %v3147
        %3215 = vmatmul.f32.gmra.mxu0 %v3152
        %v3216 = vpop.f32.mrf.mxu0
        %v3217 = vadd.f32 0.0, %v3216
        %3218 = vmatmul.f32.gmra.mxu0 %v3155
        %v3219 = vpop.f32.mrf.mxu0
        %v3220 = vadd.f32 0.0, %v3219
        %3221 = vmatmul.f32.gmra.mxu0 %v3158
        %v3222 = vpop.f32.mrf.mxu0
        %v3223 = vadd.f32 0.0, %v3222
        %3224 = vmatmul.f32.gmra.mxu0 %v3161
        %v3225 = vpop.f32.mrf.mxu0
        %v3226 = vadd.f32 0.0, %v3225
        %3227 = vmatmul.f32.gmra.mxu0 %v3164
        %v3228 = vpop.f32.mrf.mxu0
        %v3229 = vadd.f32 0.0, %v3228
        %3230 = vmatmul.f32.gmra.mxu0 %v3167
        %v3231 = vpop.f32.mrf.mxu0
        %v3232 = vadd.f32 0.0, %v3231
        %3233 = vmatmul.f32.gmra.mxu0 %v3170
        %v3234 = vpop.f32.mrf.mxu0
        %v3235 = vadd.f32 0.0, %v3234
        %3236 = vmatmul.f32.gmra.mxu0 %v3173
        %v3237 = vpop.f32.mrf.mxu0
        %v3238 = vadd.f32 0.0, %v3237
        %3239 = vmatmul.f32.gmra.mxu0 %v3176
        %v3240 = vpop.f32.mrf.mxu0
        %v3241 = vadd.f32 0.0, %v3240
        %3242 = vmatmul.f32.gmra.mxu0 %v3179
        %v3243 = vpop.f32.mrf.mxu0
        %v3244 = vadd.f32 0.0, %v3243
        %3245 = vmatmul.f32.gmra.mxu0 %v3182
        %v3246 = vpop.f32.mrf.mxu0
        %v3247 = vadd.f32 0.0, %v3246
        %3248 = vmatmul.f32.gmra.mxu0 %v3185
        %v3249 = vpop.f32.mrf.mxu0
        %v3250 = vadd.f32 0.0, %v3249
        %3251 = vmatmul.f32.gmra.mxu0 %v3188
        %v3252 = vpop.f32.mrf.mxu0
        %v3253 = vadd.f32 0.0, %v3252
        %3254 = vmatmul.f32.gmra.mxu0 %v3191
        %v3255 = vpop.f32.mrf.mxu0
        %v3256 = vadd.f32 0.0, %v3255
        %3257 = vmatmul.f32.gmra.mxu0 %v3194
        %v3258 = vpop.f32.mrf.mxu0
        %v3259 = vadd.f32 0.0, %v3258
        %3260 = vmatmul.f32.gmra.mxu0 %v3197
        %v3261 = vpop.f32.mrf.mxu0
        %v3262 = vadd.f32 0.0, %v3261
        %3263 = vdwg.mxu0
        %v3264 = vadd.f32 %v3115, %v3217
        %v3265 = vadd.f32 %v3116, %v3220
        %v3266 = vadd.f32 %v3117, %v3223
        %v3267 = vadd.f32 %v3118, %v3226
        %v3268 = vadd.f32 %v3119, %v3229
        %v3269 = vadd.f32 %v3120, %v3232
        %v3270 = vadd.f32 %v3121, %v3235
        %v3271 = vadd.f32 %v3122, %v3238
        %v3272 = vadd.f32 %v3123, %v3241
        %v3273 = vadd.f32 %v3124, %v3244
        %v3274 = vadd.f32 %v3125, %v3247
        %v3275 = vadd.f32 %v3126, %v3250
        %v3276 = vadd.f32 %v3127, %v3253
        %v3277 = vadd.f32 %v3128, %v3256
        %v3278 = vadd.f32 %v3129, %v3259
        %v3279 = vadd.f32 %v3130, %v3262
        %v3280 = vld [vmem:[#allocation2 + $0xa2] sm:$0xff]
        %v3281 = vld [vmem:[#allocation2 + $0xaa] sm:$0xff]
        %v3282 = vld [vmem:[#allocation2 + $0xb2] sm:$0xff]
        %v3283 = vld [vmem:[#allocation2 + $0xba] sm:$0xff]
        %v3284 = vld [vmem:[#allocation2 + $0xc2] sm:$0xff]
        %v3285 = vld [vmem:[#allocation2 + $0xca] sm:$0xff]
        %v3286 = vld [vmem:[#allocation2 + $0xd2] sm:$0xff]
        %v3287 = vld [vmem:[#allocation2 + $0xda] sm:$0xff]
        %v3288 = vld [vmem:[#allocation2 + $0xe2] sm:$0xff]
        %v3289 = vld [vmem:[#allocation2 + $0xea] sm:$0xff]
        %v3290 = vld [vmem:[#allocation2 + $0xf2] sm:$0xff]
        %v3291 = vld [vmem:[#allocation2 + $0xfa] sm:$0xff]
        %v3292 = vld [vmem:[#allocation2 + $0x102] sm:$0xff]
        %v3293 = vld [vmem:[#allocation2 + $0x10a] sm:$0xff]
        %v3294 = vld [vmem:[#allocation2 + $0x112] sm:$0xff]
        %v3295 = vld [vmem:[#allocation2 + $0x11a] sm:$0xff]
        %v3296 = vld [vmem:[%s1930] sm:$0xff]
        %v3297 = vld [vmem:[%s1930 + $0x8] sm:$0xff]
        %v3298 = vld [vmem:[%s1930 + $0x10] sm:$0xff]
        %v3299 = vld [vmem:[%s1930 + $0x18] sm:$0xff]
        %v3301 = vsel %vm1092, %v3280, 0
        %v3304 = vsel %vm1092, %v3281, 0
        %v3307 = vsel %vm1092, %v3282, 0
        %v3310 = vsel %vm1092, %v3283, 0
        %v3313 = vsel %vm1092, %v3284, 0
        %v3316 = vsel %vm1092, %v3285, 0
        %v3319 = vsel %vm1092, %v3286, 0
        %v3322 = vsel %vm1092, %v3287, 0
        %v3325 = vsel %vm1092, %v3288, 0
        %v3328 = vsel %vm1092, %v3289, 0
        %v3331 = vsel %vm1092, %v3290, 0
        %v3334 = vsel %vm1092, %v3291, 0
        %v3337 = vsel %vm1092, %v3292, 0
        %v3340 = vsel %vm1092, %v3293, 0
        %v3343 = vsel %vm1092, %v3294, 0
        %v3346 = vsel %vm1092, %v3295, 0
        %3348 = vmatpush.msra.mxu0 0.0
        %3349 = vmatpush.msra.mxu0 0.0
        %3350 = vmatpush.msra.mxu0 0.0
        %3351 = vmatpush.msra.mxu0 0.0
        %3352 = vmatpush.msra.mxu0 0.0
        %3353 = vmatpush.msra.mxu0 0.0
        %3354 = vmatpush.msra.mxu0 0.0
        %3355 = vmatpush.msra.mxu0 0.0
        %3356 = vmatpush.msra.mxu0 0.0
        %3357 = vmatpush.msra.mxu0 0.0
        %3358 = vmatpush.msra.mxu0 0.0
        %3359 = vmatpush.msra.mxu0 0.0
        %3360 = vmatpush.msra.mxu0 %v3299
        %3361 = vmatpush.msra.mxu0 %v3298
        %3362 = vmatpush.msra.mxu0 %v3297
        %3363 = vmatpush.msra.mxu0 %v3296
        %3364 = vmatmul.f32.gmra.mxu0 %v3301
        %v3365 = vpop.f32.mrf.mxu0
        %v3366 = vadd.f32 0.0, %v3365
        %3367 = vmatmul.f32.gmra.mxu0 %v3304
        %v3368 = vpop.f32.mrf.mxu0
        %v3369 = vadd.f32 0.0, %v3368
        %3370 = vmatmul.f32.gmra.mxu0 %v3307
        %v3371 = vpop.f32.mrf.mxu0
        %v3372 = vadd.f32 0.0, %v3371
        %3373 = vmatmul.f32.gmra.mxu0 %v3310
        %v3374 = vpop.f32.mrf.mxu0
        %v3375 = vadd.f32 0.0, %v3374
        %3376 = vmatmul.f32.gmra.mxu0 %v3313
        %v3377 = vpop.f32.mrf.mxu0
        %v3378 = vadd.f32 0.0, %v3377
        %3379 = vmatmul.f32.gmra.mxu0 %v3316
        %v3380 = vpop.f32.mrf.mxu0
        %v3381 = vadd.f32 0.0, %v3380
        %3382 = vmatmul.f32.gmra.mxu0 %v3319
        %v3383 = vpop.f32.mrf.mxu0
        %v3384 = vadd.f32 0.0, %v3383
        %3385 = vmatmul.f32.gmra.mxu0 %v3322
        %v3386 = vpop.f32.mrf.mxu0
        %v3387 = vadd.f32 0.0, %v3386
        %3388 = vmatmul.f32.gmra.mxu0 %v3325
        %v3389 = vpop.f32.mrf.mxu0
        %v3390 = vadd.f32 0.0, %v3389
        %3391 = vmatmul.f32.gmra.mxu0 %v3328
        %v3392 = vpop.f32.mrf.mxu0
        %v3393 = vadd.f32 0.0, %v3392
        %3394 = vmatmul.f32.gmra.mxu0 %v3331
        %v3395 = vpop.f32.mrf.mxu0
        %v3396 = vadd.f32 0.0, %v3395
        %3397 = vmatmul.f32.gmra.mxu0 %v3334
        %v3398 = vpop.f32.mrf.mxu0
        %v3399 = vadd.f32 0.0, %v3398
        %3400 = vmatmul.f32.gmra.mxu0 %v3337
        %v3401 = vpop.f32.mrf.mxu0
        %v3402 = vadd.f32 0.0, %v3401
        %3403 = vmatmul.f32.gmra.mxu0 %v3340
        %v3404 = vpop.f32.mrf.mxu0
        %v3405 = vadd.f32 0.0, %v3404
        %3406 = vmatmul.f32.gmra.mxu0 %v3343
        %v3407 = vpop.f32.mrf.mxu0
        %v3408 = vadd.f32 0.0, %v3407
        %3409 = vmatmul.f32.gmra.mxu0 %v3346
        %v3410 = vpop.f32.mrf.mxu0
        %v3411 = vadd.f32 0.0, %v3410
        %3412 = vdwg.mxu0
        %v3413 = vadd.f32 %v3264, %v3366
        %v3414 = vadd.f32 %v3265, %v3369
        %v3415 = vadd.f32 %v3266, %v3372
        %v3416 = vadd.f32 %v3267, %v3375
        %v3417 = vadd.f32 %v3268, %v3378
        %v3418 = vadd.f32 %v3269, %v3381
        %v3419 = vadd.f32 %v3270, %v3384
        %v3420 = vadd.f32 %v3271, %v3387
        %v3421 = vadd.f32 %v3272, %v3390
        %v3422 = vadd.f32 %v3273, %v3393
        %v3423 = vadd.f32 %v3274, %v3396
        %v3424 = vadd.f32 %v3275, %v3399
        %v3425 = vadd.f32 %v3276, %v3402
        %v3426 = vadd.f32 %v3277, %v3405
        %v3427 = vadd.f32 %v3278, %v3408
        %v3428 = vadd.f32 %v3279, %v3411
        %v3429 = vld [vmem:[#allocation2 + $0xc0] sm:$0xff]
        %v3430 = vld [vmem:[#allocation2 + $0xc8] sm:$0xff]
        %v3431 = vld [vmem:[#allocation2 + $0xd0] sm:$0xff]
        %v3432 = vld [vmem:[#allocation2 + $0xd8] sm:$0xff]
        %v3433 = vld [vmem:[#allocation2 + $0xe0] sm:$0xff]
        %v3434 = vld [vmem:[#allocation2 + $0xe8] sm:$0xff]
        %v3435 = vld [vmem:[#allocation2 + $0xf0] sm:$0xff]
        %v3436 = vld [vmem:[#allocation2 + $0xf8] sm:$0xff]
        %v3437 = vld [vmem:[#allocation2 + $0x100] sm:$0xff]
        %v3438 = vld [vmem:[#allocation2 + $0x108] sm:$0xff]
        %v3439 = vld [vmem:[#allocation2 + $0x110] sm:$0xff]
        %v3440 = vld [vmem:[#allocation2 + $0x118] sm:$0xff]
        %v3441 = vld [vmem:[#allocation2 + $0x120] sm:$0xff]
        %v3442 = vld [vmem:[#allocation2 + $0x128] sm:$0xff]
        %v3443 = vld [vmem:[#allocation2 + $0x130] sm:$0xff]
        %v3444 = vld [vmem:[#allocation2 + $0x138] sm:$0xff]
        %v3445 = vld [vmem:[%s2080] sm:$0xff]
        %v3446 = vld [vmem:[%s2080 + $0x8] sm:$0xff]
        %v3447 = vld [vmem:[%s2080 + $0x10] sm:$0xff]
        %v3448 = vld [vmem:[%s2080 + $0x18] sm:$0xff]
        %v3450 = vsel %vm1092, %v3429, 0
        %v3453 = vsel %vm1092, %v3430, 0
        %v3456 = vsel %vm1092, %v3431, 0
        %v3459 = vsel %vm1092, %v3432, 0
        %v3462 = vsel %vm1092, %v3433, 0
        %v3465 = vsel %vm1092, %v3434, 0
        %v3468 = vsel %vm1092, %v3435, 0
        %v3471 = vsel %vm1092, %v3436, 0
        %v3474 = vsel %vm1092, %v3437, 0
        %v3477 = vsel %vm1092, %v3438, 0
        %v3480 = vsel %vm1092, %v3439, 0
        %v3483 = vsel %vm1092, %v3440, 0
        %v3486 = vsel %vm1092, %v3441, 0
        %v3489 = vsel %vm1092, %v3442, 0
        %v3492 = vsel %vm1092, %v3443, 0
        %v3495 = vsel %vm1092, %v3444, 0
        %3497 = vmatpush.msra.mxu0 0.0
        %3498 = vmatpush.msra.mxu0 0.0
        %3499 = vmatpush.msra.mxu0 0.0
        %3500 = vmatpush.msra.mxu0 0.0
        %3501 = vmatpush.msra.mxu0 0.0
        %3502 = vmatpush.msra.mxu0 0.0
        %3503 = vmatpush.msra.mxu0 0.0
        %3504 = vmatpush.msra.mxu0 0.0
        %3505 = vmatpush.msra.mxu0 0.0
        %3506 = vmatpush.msra.mxu0 0.0
        %3507 = vmatpush.msra.mxu0 0.0
        %3508 = vmatpush.msra.mxu0 0.0
        %3509 = vmatpush.msra.mxu0 %v3448
        %3510 = vmatpush.msra.mxu0 %v3447
        %3511 = vmatpush.msra.mxu0 %v3446
        %3512 = vmatpush.msra.mxu0 %v3445
        %3513 = vmatmul.f32.gmra.mxu0 %v3450
        %v3514 = vpop.f32.mrf.mxu0
        %v3515 = vadd.f32 0.0, %v3514
        %3516 = vmatmul.f32.gmra.mxu0 %v3453
        %v3517 = vpop.f32.mrf.mxu0
        %v3518 = vadd.f32 0.0, %v3517
        %3519 = vmatmul.f32.gmra.mxu0 %v3456
        %v3520 = vpop.f32.mrf.mxu0
        %v3521 = vadd.f32 0.0, %v3520
        %3522 = vmatmul.f32.gmra.mxu0 %v3459
        %v3523 = vpop.f32.mrf.mxu0
        %v3524 = vadd.f32 0.0, %v3523
        %3525 = vmatmul.f32.gmra.mxu0 %v3462
        %v3526 = vpop.f32.mrf.mxu0
        %v3527 = vadd.f32 0.0, %v3526
        %3528 = vmatmul.f32.gmra.mxu0 %v3465
        %v3529 = vpop.f32.mrf.mxu0
        %v3530 = vadd.f32 0.0, %v3529
        %3531 = vmatmul.f32.gmra.mxu0 %v3468
        %v3532 = vpop.f32.mrf.mxu0
        %v3533 = vadd.f32 0.0, %v3532
        %3534 = vmatmul.f32.gmra.mxu0 %v3471
        %v3535 = vpop.f32.mrf.mxu0
        %v3536 = vadd.f32 0.0, %v3535
        %3537 = vmatmul.f32.gmra.mxu0 %v3474
        %v3538 = vpop.f32.mrf.mxu0
        %v3539 = vadd.f32 0.0, %v3538
        %3540 = vmatmul.f32.gmra.mxu0 %v3477
        %v3541 = vpop.f32.mrf.mxu0
        %v3542 = vadd.f32 0.0, %v3541
        %3543 = vmatmul.f32.gmra.mxu0 %v3480
        %v3544 = vpop.f32.mrf.mxu0
        %v3545 = vadd.f32 0.0, %v3544
        %3546 = vmatmul.f32.gmra.mxu0 %v3483
        %v3547 = vpop.f32.mrf.mxu0
        %v3548 = vadd.f32 0.0, %v3547
        %3549 = vmatmul.f32.gmra.mxu0 %v3486
        %v3550 = vpop.f32.mrf.mxu0
        %v3551 = vadd.f32 0.0, %v3550
        %3552 = vmatmul.f32.gmra.mxu0 %v3489
        %v3553 = vpop.f32.mrf.mxu0
        %v3554 = vadd.f32 0.0, %v3553
        %3555 = vmatmul.f32.gmra.mxu0 %v3492
        %v3556 = vpop.f32.mrf.mxu0
        %v3557 = vadd.f32 0.0, %v3556
        %3558 = vmatmul.f32.gmra.mxu0 %v3495
        %v3559 = vpop.f32.mrf.mxu0
        %v3560 = vadd.f32 0.0, %v3559
        %3561 = vdwg.mxu0
        %v3562 = vadd.f32 %v3413, %v3515
        %v3563 = vadd.f32 %v3414, %v3518
        %v3564 = vadd.f32 %v3415, %v3521
        %v3565 = vadd.f32 %v3416, %v3524
        %v3566 = vadd.f32 %v3417, %v3527
        %v3567 = vadd.f32 %v3418, %v3530
        %v3568 = vadd.f32 %v3419, %v3533
        %v3569 = vadd.f32 %v3420, %v3536
        %v3570 = vadd.f32 %v3421, %v3539
        %v3571 = vadd.f32 %v3422, %v3542
        %v3572 = vadd.f32 %v3423, %v3545
        %v3573 = vadd.f32 %v3424, %v3548
        %v3574 = vadd.f32 %v3425, %v3551
        %v3575 = vadd.f32 %v3426, %v3554
        %v3576 = vadd.f32 %v3427, %v3557
        %v3577 = vadd.f32 %v3428, %v3560
        %v3578 = vld [vmem:[#allocation2 + $0xc1] sm:$0xff]
        %v3579 = vld [vmem:[#allocation2 + $0xc9] sm:$0xff]
        %v3580 = vld [vmem:[#allocation2 + $0xd1] sm:$0xff]
        %v3581 = vld [vmem:[#allocation2 + $0xd9] sm:$0xff]
        %v3582 = vld [vmem:[#allocation2 + $0xe1] sm:$0xff]
        %v3583 = vld [vmem:[#allocation2 + $0xe9] sm:$0xff]
        %v3584 = vld [vmem:[#allocation2 + $0xf1] sm:$0xff]
        %v3585 = vld [vmem:[#allocation2 + $0xf9] sm:$0xff]
        %v3586 = vld [vmem:[#allocation2 + $0x101] sm:$0xff]
        %v3587 = vld [vmem:[#allocation2 + $0x109] sm:$0xff]
        %v3588 = vld [vmem:[#allocation2 + $0x111] sm:$0xff]
        %v3589 = vld [vmem:[#allocation2 + $0x119] sm:$0xff]
        %v3590 = vld [vmem:[#allocation2 + $0x121] sm:$0xff]
        %v3591 = vld [vmem:[#allocation2 + $0x129] sm:$0xff]
        %v3592 = vld [vmem:[#allocation2 + $0x131] sm:$0xff]
        %v3593 = vld [vmem:[#allocation2 + $0x139] sm:$0xff]
        %v3594 = vld [vmem:[%s2230] sm:$0xff]
        %v3595 = vld [vmem:[%s2230 + $0x8] sm:$0xff]
        %v3596 = vld [vmem:[%s2230 + $0x10] sm:$0xff]
        %v3597 = vld [vmem:[%s2230 + $0x18] sm:$0xff]
        %v3599 = vsel %vm1092, %v3578, 0
        %v3602 = vsel %vm1092, %v3579, 0
        %v3605 = vsel %vm1092, %v3580, 0
        %v3608 = vsel %vm1092, %v3581, 0
        %v3611 = vsel %vm1092, %v3582, 0
        %v3614 = vsel %vm1092, %v3583, 0
        %v3617 = vsel %vm1092, %v3584, 0
        %v3620 = vsel %vm1092, %v3585, 0
        %v3623 = vsel %vm1092, %v3586, 0
        %v3626 = vsel %vm1092, %v3587, 0
        %v3629 = vsel %vm1092, %v3588, 0
        %v3632 = vsel %vm1092, %v3589, 0
        %v3635 = vsel %vm1092, %v3590, 0
        %v3638 = vsel %vm1092, %v3591, 0
        %v3641 = vsel %vm1092, %v3592, 0
        %v3644 = vsel %vm1092, %v3593, 0
        %3646 = vmatpush.msra.mxu0 0.0
        %3647 = vmatpush.msra.mxu0 0.0
        %3648 = vmatpush.msra.mxu0 0.0
        %3649 = vmatpush.msra.mxu0 0.0
        %3650 = vmatpush.msra.mxu0 0.0
        %3651 = vmatpush.msra.mxu0 0.0
        %3652 = vmatpush.msra.mxu0 0.0
        %3653 = vmatpush.msra.mxu0 0.0
        %3654 = vmatpush.msra.mxu0 0.0
        %3655 = vmatpush.msra.mxu0 0.0
        %3656 = vmatpush.msra.mxu0 0.0
        %3657 = vmatpush.msra.mxu0 0.0
        %3658 = vmatpush.msra.mxu0 %v3597
        %3659 = vmatpush.msra.mxu0 %v3596
        %3660 = vmatpush.msra.mxu0 %v3595
        %3661 = vmatpush.msra.mxu0 %v3594
        %3662 = vmatmul.f32.gmra.mxu0 %v3599
        %v3663 = vpop.f32.mrf.mxu0
        %v3664 = vadd.f32 0.0, %v3663
        %3665 = vmatmul.f32.gmra.mxu0 %v3602
        %v3666 = vpop.f32.mrf.mxu0
        %v3667 = vadd.f32 0.0, %v3666
        %3668 = vmatmul.f32.gmra.mxu0 %v3605
        %v3669 = vpop.f32.mrf.mxu0
        %v3670 = vadd.f32 0.0, %v3669
        %3671 = vmatmul.f32.gmra.mxu0 %v3608
        %v3672 = vpop.f32.mrf.mxu0
        %v3673 = vadd.f32 0.0, %v3672
        %3674 = vmatmul.f32.gmra.mxu0 %v3611
        %v3675 = vpop.f32.mrf.mxu0
        %v3676 = vadd.f32 0.0, %v3675
        %3677 = vmatmul.f32.gmra.mxu0 %v3614
        %v3678 = vpop.f32.mrf.mxu0
        %v3679 = vadd.f32 0.0, %v3678
        %3680 = vmatmul.f32.gmra.mxu0 %v3617
        %v3681 = vpop.f32.mrf.mxu0
        %v3682 = vadd.f32 0.0, %v3681
        %3683 = vmatmul.f32.gmra.mxu0 %v3620
        %v3684 = vpop.f32.mrf.mxu0
        %v3685 = vadd.f32 0.0, %v3684
        %3686 = vmatmul.f32.gmra.mxu0 %v3623
        %v3687 = vpop.f32.mrf.mxu0
        %v3688 = vadd.f32 0.0, %v3687
        %3689 = vmatmul.f32.gmra.mxu0 %v3626
        %v3690 = vpop.f32.mrf.mxu0
        %v3691 = vadd.f32 0.0, %v3690
        %3692 = vmatmul.f32.gmra.mxu0 %v3629
        %v3693 = vpop.f32.mrf.mxu0
        %v3694 = vadd.f32 0.0, %v3693
        %3695 = vmatmul.f32.gmra.mxu0 %v3632
        %v3696 = vpop.f32.mrf.mxu0
        %v3697 = vadd.f32 0.0, %v3696
        %3698 = vmatmul.f32.gmra.mxu0 %v3635
        %v3699 = vpop.f32.mrf.mxu0
        %v3700 = vadd.f32 0.0, %v3699
        %3701 = vmatmul.f32.gmra.mxu0 %v3638
        %v3702 = vpop.f32.mrf.mxu0
        %v3703 = vadd.f32 0.0, %v3702
        %3704 = vmatmul.f32.gmra.mxu0 %v3641
        %v3705 = vpop.f32.mrf.mxu0
        %v3706 = vadd.f32 0.0, %v3705
        %3707 = vmatmul.f32.gmra.mxu0 %v3644
        %v3708 = vpop.f32.mrf.mxu0
        %v3709 = vadd.f32 0.0, %v3708
        %3710 = vdwg.mxu0
        %v3711 = vadd.f32 %v3562, %v3664
        %v3712 = vadd.f32 %v3563, %v3667
        %v3713 = vadd.f32 %v3564, %v3670
        %v3714 = vadd.f32 %v3565, %v3673
        %v3715 = vadd.f32 %v3566, %v3676
        %v3716 = vadd.f32 %v3567, %v3679
        %v3717 = vadd.f32 %v3568, %v3682
        %v3718 = vadd.f32 %v3569, %v3685
        %v3719 = vadd.f32 %v3570, %v3688
        %v3720 = vadd.f32 %v3571, %v3691
        %v3721 = vadd.f32 %v3572, %v3694
        %v3722 = vadd.f32 %v3573, %v3697
        %v3723 = vadd.f32 %v3574, %v3700
        %v3724 = vadd.f32 %v3575, %v3703
        %v3725 = vadd.f32 %v3576, %v3706
        %v3726 = vadd.f32 %v3577, %v3709
        %v3727 = vld [vmem:[#allocation2 + $0xc2] sm:$0xff]
        %v3728 = vld [vmem:[#allocation2 + $0xca] sm:$0xff]
        %v3729 = vld [vmem:[#allocation2 + $0xd2] sm:$0xff]
        %v3730 = vld [vmem:[#allocation2 + $0xda] sm:$0xff]
        %v3731 = vld [vmem:[#allocation2 + $0xe2] sm:$0xff]
        %v3732 = vld [vmem:[#allocation2 + $0xea] sm:$0xff]
        %v3733 = vld [vmem:[#allocation2 + $0xf2] sm:$0xff]
        %v3734 = vld [vmem:[#allocation2 + $0xfa] sm:$0xff]
        %v3735 = vld [vmem:[#allocation2 + $0x102] sm:$0xff]
        %v3736 = vld [vmem:[#allocation2 + $0x10a] sm:$0xff]
        %v3737 = vld [vmem:[#allocation2 + $0x112] sm:$0xff]
        %v3738 = vld [vmem:[#allocation2 + $0x11a] sm:$0xff]
        %v3739 = vld [vmem:[#allocation2 + $0x122] sm:$0xff]
        %v3740 = vld [vmem:[#allocation2 + $0x12a] sm:$0xff]
        %v3741 = vld [vmem:[#allocation2 + $0x132] sm:$0xff]
        %v3742 = vld [vmem:[#allocation2 + $0x13a] sm:$0xff]
        %v3743 = vld [vmem:[%s2380] sm:$0xff]
        %v3744 = vld [vmem:[%s2380 + $0x8] sm:$0xff]
        %v3745 = vld [vmem:[%s2380 + $0x10] sm:$0xff]
        %v3746 = vld [vmem:[%s2380 + $0x18] sm:$0xff]
        %v3748 = vsel %vm1092, %v3727, 0
        %v3751 = vsel %vm1092, %v3728, 0
        %v3754 = vsel %vm1092, %v3729, 0
        %v3757 = vsel %vm1092, %v3730, 0
        %v3760 = vsel %vm1092, %v3731, 0
        %v3763 = vsel %vm1092, %v3732, 0
        %v3766 = vsel %vm1092, %v3733, 0
        %v3769 = vsel %vm1092, %v3734, 0
        %v3772 = vsel %vm1092, %v3735, 0
        %v3775 = vsel %vm1092, %v3736, 0
        %v3778 = vsel %vm1092, %v3737, 0
        %v3781 = vsel %vm1092, %v3738, 0
        %v3784 = vsel %vm1092, %v3739, 0
        %v3787 = vsel %vm1092, %v3740, 0
        %v3790 = vsel %vm1092, %v3741, 0
        %v3793 = vsel %vm1092, %v3742, 0
        %3795 = vmatpush.msra.mxu0 0.0
        %3796 = vmatpush.msra.mxu0 0.0
        %3797 = vmatpush.msra.mxu0 0.0
        %3798 = vmatpush.msra.mxu0 0.0
        %3799 = vmatpush.msra.mxu0 0.0
        %3800 = vmatpush.msra.mxu0 0.0
        %3801 = vmatpush.msra.mxu0 0.0
        %3802 = vmatpush.msra.mxu0 0.0
        %3803 = vmatpush.msra.mxu0 0.0
        %3804 = vmatpush.msra.mxu0 0.0
        %3805 = vmatpush.msra.mxu0 0.0
        %3806 = vmatpush.msra.mxu0 0.0
        %3807 = vmatpush.msra.mxu0 %v3746
        %3808 = vmatpush.msra.mxu0 %v3745
        %3809 = vmatpush.msra.mxu0 %v3744
        %3810 = vmatpush.msra.mxu0 %v3743
        %3811 = vmatmul.f32.gmra.mxu0 %v3748
        %v3812 = vpop.f32.mrf.mxu0
        %v3813 = vadd.f32 0.0, %v3812
        %3814 = vmatmul.f32.gmra.mxu0 %v3751
        %v3815 = vpop.f32.mrf.mxu0
        %v3816 = vadd.f32 0.0, %v3815
        %3817 = vmatmul.f32.gmra.mxu0 %v3754
        %v3818 = vpop.f32.mrf.mxu0
        %v3819 = vadd.f32 0.0, %v3818
        %3820 = vmatmul.f32.gmra.mxu0 %v3757
        %v3821 = vpop.f32.mrf.mxu0
        %v3822 = vadd.f32 0.0, %v3821
        %3823 = vmatmul.f32.gmra.mxu0 %v3760
        %v3824 = vpop.f32.mrf.mxu0
        %v3825 = vadd.f32 0.0, %v3824
        %3826 = vmatmul.f32.gmra.mxu0 %v3763
        %v3827 = vpop.f32.mrf.mxu0
        %v3828 = vadd.f32 0.0, %v3827
        %3829 = vmatmul.f32.gmra.mxu0 %v3766
        %v3830 = vpop.f32.mrf.mxu0
        %v3831 = vadd.f32 0.0, %v3830
        %3832 = vmatmul.f32.gmra.mxu0 %v3769
        %v3833 = vpop.f32.mrf.mxu0
        %v3834 = vadd.f32 0.0, %v3833
        %3835 = vmatmul.f32.gmra.mxu0 %v3772
        %v3836 = vpop.f32.mrf.mxu0
        %v3837 = vadd.f32 0.0, %v3836
        %3838 = vmatmul.f32.gmra.mxu0 %v3775
        %v3839 = vpop.f32.mrf.mxu0
        %v3840 = vadd.f32 0.0, %v3839
        %3841 = vmatmul.f32.gmra.mxu0 %v3778
        %v3842 = vpop.f32.mrf.mxu0
        %v3843 = vadd.f32 0.0, %v3842
        %3844 = vmatmul.f32.gmra.mxu0 %v3781
        %v3845 = vpop.f32.mrf.mxu0
        %v3846 = vadd.f32 0.0, %v3845
        %3847 = vmatmul.f32.gmra.mxu0 %v3784
        %v3848 = vpop.f32.mrf.mxu0
        %v3849 = vadd.f32 0.0, %v3848
        %3850 = vmatmul.f32.gmra.mxu0 %v3787
        %v3851 = vpop.f32.mrf.mxu0
        %v3852 = vadd.f32 0.0, %v3851
        %3853 = vmatmul.f32.gmra.mxu0 %v3790
        %v3854 = vpop.f32.mrf.mxu0
        %v3855 = vadd.f32 0.0, %v3854
        %3856 = vmatmul.f32.gmra.mxu0 %v3793
        %v3857 = vpop.f32.mrf.mxu0
        %v3858 = vadd.f32 0.0, %v3857
        %3859 = vdwg.mxu0
        %v3860 = vadd.f32 %v3711, %v3813
        %v3861 = vadd.f32 %v3712, %v3816
        %v3862 = vadd.f32 %v3713, %v3819
        %v3863 = vadd.f32 %v3714, %v3822
        %v3864 = vadd.f32 %v3715, %v3825
        %v3865 = vadd.f32 %v3716, %v3828
        %v3866 = vadd.f32 %v3717, %v3831
        %v3867 = vadd.f32 %v3718, %v3834
        %v3868 = vadd.f32 %v3719, %v3837
        %v3869 = vadd.f32 %v3720, %v3840
        %v3870 = vadd.f32 %v3721, %v3843
        %v3871 = vadd.f32 %v3722, %v3846
        %v3872 = vadd.f32 %v3723, %v3849
        %v3873 = vadd.f32 %v3724, %v3852
        %v3874 = vadd.f32 %v3725, %v3855
        %v3875 = vadd.f32 %v3726, %v3858
        %v3876 = vld [vmem:[%s4] sm:$0x1]
        %v3878 = vperm.slane %v3876, 0
        %v3880 = vadd.f32 %v3860, %v3878
        %v3881 = vadd.f32 %v3861, %v3878
        %v3882 = vadd.f32 %v3862, %v3878
        %v3883 = vadd.f32 %v3863, %v3878
        %v3884 = vadd.f32 %v3864, %v3878
        %v3885 = vadd.f32 %v3865, %v3878
        %v3886 = vadd.f32 %v3866, %v3878
        %v3887 = vadd.f32 %v3867, %v3878
        %v3888 = vadd.f32 %v3868, %v3878
        %v3889 = vadd.f32 %v3869, %v3878
        %v3890 = vadd.f32 %v3870, %v3878
        %v3891 = vadd.f32 %v3871, %v3878
        %v3892 = vadd.f32 %v3872, %v3878
        %v3893 = vadd.f32 %v3873, %v3878
        %v3894 = vadd.f32 %v3874, %v3878
        %v3895 = vadd.f32 %v3875, %v3878
        %v3896 = vmax.f32 %v3880, 0.0
        %v3897 = vmax.f32 %v3881, 0.0
        %v3898 = vmax.f32 %v3882, 0.0
        %v3899 = vmax.f32 %v3883, 0.0
        %v3900 = vmax.f32 %v3884, 0.0
        %v3901 = vmax.f32 %v3885, 0.0
        %v3902 = vmax.f32 %v3886, 0.0
        %v3903 = vmax.f32 %v3887, 0.0
        %v3904 = vmax.f32 %v3888, 0.0
        %v3905 = vmax.f32 %v3889, 0.0
        %v3906 = vmax.f32 %v3890, 0.0
        %v3907 = vmax.f32 %v3891, 0.0
        %v3908 = vmax.f32 %v3892, 0.0
        %v3909 = vmax.f32 %v3893, 0.0
        %v3910 = vmax.f32 %v3894, 0.0
        %v3911 = vmax.f32 %v3895, 0.0
        %3912 = vst.msk [vmem:[#allocation3 + $0x80] sm:$0xff] %vm2550, %v3896
        %3913 = vst.msk [vmem:[#allocation3 + $0x88] sm:$0xff] %vm2550, %v3897
        %3914 = vst.msk [vmem:[#allocation3 + $0x90] sm:$0xff] %vm2550, %v3898
        %3915 = vst.msk [vmem:[#allocation3 + $0x98] sm:$0xff] %vm2550, %v3899
        %3916 = vst.msk [vmem:[#allocation3 + $0xa0] sm:$0xff] %vm2550, %v3900
        %3917 = vst.msk [vmem:[#allocation3 + $0xa8] sm:$0xff] %vm2550, %v3901
        %3918 = vst.msk [vmem:[#allocation3 + $0xb0] sm:$0xff] %vm2550, %v3902
        %3919 = vst.msk [vmem:[#allocation3 + $0xb8] sm:$0xff] %vm2550, %v3903
        %3920 = vst.msk [vmem:[#allocation3 + $0xc0] sm:$0xff] %vm2550, %v3904
        %3921 = vst.msk [vmem:[#allocation3 + $0xc8] sm:$0xff] %vm2550, %v3905
        %3922 = vst.msk [vmem:[#allocation3 + $0xd0] sm:$0xff] %vm2550, %v3906
        %3923 = vst.msk [vmem:[#allocation3 + $0xd8] sm:$0xff] %vm2550, %v3907
        %3924 = vst.msk [vmem:[#allocation3 + $0xe0] sm:$0xff] %vm2550, %v3908
        %3925 = vst.msk [vmem:[#allocation3 + $0xe8] sm:$0xff] %vm2550, %v3909
        %3926 = vst.msk [vmem:[#allocation3 + $0xf0] sm:$0xff] %vm2550, %v3910
        %3927 = vst.msk [vmem:[#allocation3 + $0xf8] sm:$0xff] %vm2550, %v3911
        %v3928 = vld [vmem:[#allocation2 + $0x100] sm:$0xff]
        %v3929 = vld [vmem:[#allocation2 + $0x108] sm:$0xff]
        %v3930 = vld [vmem:[#allocation2 + $0x110] sm:$0xff]
        %v3931 = vld [vmem:[#allocation2 + $0x118] sm:$0xff]
        %v3932 = vld [vmem:[#allocation2 + $0x120] sm:$0xff]
        %v3933 = vld [vmem:[#allocation2 + $0x128] sm:$0xff]
        %v3934 = vld [vmem:[#allocation2 + $0x130] sm:$0xff]
        %v3935 = vld [vmem:[#allocation2 + $0x138] sm:$0xff]
        %v3936 = vld [vmem:[#allocation2 + $0x140] sm:$0xff]
        %v3937 = vld [vmem:[#allocation2 + $0x148] sm:$0xff]
        %v3938 = vld [vmem:[#allocation2 + $0x150] sm:$0xff]
        %v3939 = vld [vmem:[#allocation2 + $0x158] sm:$0xff]
        %v3940 = vld [vmem:[#allocation2 + $0x160] sm:$0xff]
        %v3941 = vld [vmem:[#allocation2 + $0x168] sm:$0xff]
        %v3942 = vld [vmem:[#allocation2 + $0x170] sm:$0xff]
        %v3943 = vld [vmem:[#allocation2 + $0x178] sm:$0xff]
        %v3944 = vld [vmem:[%s3] sm:$0xff]
        %v3945 = vld [vmem:[%s3 + $0x8] sm:$0xff]
        %v3946 = vld [vmem:[%s3 + $0x10] sm:$0xff]
        %v3947 = vld [vmem:[%s3 + $0x18] sm:$0xff]
        %v3948 = vld [vmem:[#allocation2 + $0x101] sm:$0xff]
        %v3949 = vld [vmem:[#allocation2 + $0x109] sm:$0xff]
        %v3950 = vld [vmem:[#allocation2 + $0x111] sm:$0xff]
        %v3951 = vld [vmem:[#allocation2 + $0x119] sm:$0xff]
        %v3952 = vld [vmem:[#allocation2 + $0x121] sm:$0xff]
        %v3953 = vld [vmem:[#allocation2 + $0x129] sm:$0xff]
        %v3954 = vld [vmem:[#allocation2 + $0x131] sm:$0xff]
        %v3955 = vld [vmem:[#allocation2 + $0x139] sm:$0xff]
        %v3956 = vld [vmem:[#allocation2 + $0x141] sm:$0xff]
        %v3957 = vld [vmem:[#allocation2 + $0x149] sm:$0xff]
        %v3958 = vld [vmem:[#allocation2 + $0x151] sm:$0xff]
        %v3959 = vld [vmem:[#allocation2 + $0x159] sm:$0xff]
        %v3960 = vld [vmem:[#allocation2 + $0x161] sm:$0xff]
        %v3961 = vld [vmem:[#allocation2 + $0x169] sm:$0xff]
        %v3962 = vld [vmem:[#allocation2 + $0x171] sm:$0xff]
        %v3963 = vld [vmem:[#allocation2 + $0x179] sm:$0xff]
        %v3964 = vld [vmem:[%s1233] sm:$0xff]
        %v3965 = vld [vmem:[%s1233 + $0x8] sm:$0xff]
        %v3966 = vld [vmem:[%s1233 + $0x10] sm:$0xff]
        %v3967 = vld [vmem:[%s1233 + $0x18] sm:$0xff]
        %v3969 = vsel %vm1092, %v3948, 0
        %v3972 = vsel %vm1092, %v3949, 0
        %v3975 = vsel %vm1092, %v3950, 0
        %v3978 = vsel %vm1092, %v3951, 0
        %v3981 = vsel %vm1092, %v3952, 0
        %v3984 = vsel %vm1092, %v3953, 0
        %v3987 = vsel %vm1092, %v3954, 0
        %v3990 = vsel %vm1092, %v3955, 0
        %v3993 = vsel %vm1092, %v3956, 0
        %v3996 = vsel %vm1092, %v3957, 0
        %v3999 = vsel %vm1092, %v3958, 0
        %v4002 = vsel %vm1092, %v3959, 0
        %v4005 = vsel %vm1092, %v3960, 0
        %v4008 = vsel %vm1092, %v3961, 0
        %v4011 = vsel %vm1092, %v3962, 0
        %v4014 = vsel %vm1092, %v3963, 0
        %4016 = vmatpush.msra.mxu0 0.0
        %4017 = vmatpush.msra.mxu0 0.0
        %4018 = vmatpush.msra.mxu0 0.0
        %4019 = vmatpush.msra.mxu0 0.0
        %4020 = vmatpush.msra.mxu0 0.0
        %4021 = vmatpush.msra.mxu0 0.0
        %4022 = vmatpush.msra.mxu0 0.0
        %4023 = vmatpush.msra.mxu0 0.0
        %4024 = vmatpush.msra.mxu0 0.0
        %4025 = vmatpush.msra.mxu0 0.0
        %4026 = vmatpush.msra.mxu0 0.0
        %4027 = vmatpush.msra.mxu0 0.0
        %4028 = vmatpush.msra.mxu0 %v3967
        %4029 = vmatpush.msra.mxu0 %v3966
        %4030 = vmatpush.msra.mxu0 %v3965
        %4031 = vmatpush.msra.mxu0 %v3964
        %4032 = vmatmul.f32.gmra.mxu0 %v3969
        %v4033 = vpop.f32.mrf.mxu0
        %v4034 = vadd.f32 0.0, %v4033
        %4035 = vmatmul.f32.gmra.mxu0 %v3972
        %v4036 = vpop.f32.mrf.mxu0
        %v4037 = vadd.f32 0.0, %v4036
        %4038 = vmatmul.f32.gmra.mxu0 %v3975
        %v4039 = vpop.f32.mrf.mxu0
        %v4040 = vadd.f32 0.0, %v4039
        %4041 = vmatmul.f32.gmra.mxu0 %v3978
        %v4042 = vpop.f32.mrf.mxu0
        %v4043 = vadd.f32 0.0, %v4042
        %4044 = vmatmul.f32.gmra.mxu0 %v3981
        %v4045 = vpop.f32.mrf.mxu0
        %v4046 = vadd.f32 0.0, %v4045
        %4047 = vmatmul.f32.gmra.mxu0 %v3984
        %v4048 = vpop.f32.mrf.mxu0
        %v4049 = vadd.f32 0.0, %v4048
        %4050 = vmatmul.f32.gmra.mxu0 %v3987
        %v4051 = vpop.f32.mrf.mxu0
        %v4052 = vadd.f32 0.0, %v4051
        %4053 = vmatmul.f32.gmra.mxu0 %v3990
        %v4054 = vpop.f32.mrf.mxu0
        %v4055 = vadd.f32 0.0, %v4054
        %4056 = vmatmul.f32.gmra.mxu0 %v3993
        %v4057 = vpop.f32.mrf.mxu0
        %v4058 = vadd.f32 0.0, %v4057
        %4059 = vmatmul.f32.gmra.mxu0 %v3996
        %v4060 = vpop.f32.mrf.mxu0
        %v4061 = vadd.f32 0.0, %v4060
        %4062 = vmatmul.f32.gmra.mxu0 %v3999
        %v4063 = vpop.f32.mrf.mxu0
        %v4064 = vadd.f32 0.0, %v4063
        %4065 = vmatmul.f32.gmra.mxu0 %v4002
        %v4066 = vpop.f32.mrf.mxu0
        %v4067 = vadd.f32 0.0, %v4066
        %4068 = vmatmul.f32.gmra.mxu0 %v4005
        %v4069 = vpop.f32.mrf.mxu0
        %v4070 = vadd.f32 0.0, %v4069
        %4071 = vmatmul.f32.gmra.mxu0 %v4008
        %v4072 = vpop.f32.mrf.mxu0
        %v4073 = vadd.f32 0.0, %v4072
        %4074 = vmatmul.f32.gmra.mxu0 %v4011
        %v4075 = vpop.f32.mrf.mxu0
        %v4076 = vadd.f32 0.0, %v4075
        %4077 = vmatmul.f32.gmra.mxu0 %v4014
        %v4078 = vpop.f32.mrf.mxu0
        %v4079 = vadd.f32 0.0, %v4078
        %4080 = vdwg.mxu0
        %v4082 = vsel %vm1092, %v3928, 0
        %v4085 = vsel %vm1092, %v3929, 0
        %v4088 = vsel %vm1092, %v3930, 0
        %v4091 = vsel %vm1092, %v3931, 0
        %v4094 = vsel %vm1092, %v3932, 0
        %v4097 = vsel %vm1092, %v3933, 0
        %v4100 = vsel %vm1092, %v3934, 0
        %v4103 = vsel %vm1092, %v3935, 0
        %v4106 = vsel %vm1092, %v3936, 0
        %v4109 = vsel %vm1092, %v3937, 0
        %v4112 = vsel %vm1092, %v3938, 0
        %v4115 = vsel %vm1092, %v3939, 0
        %v4118 = vsel %vm1092, %v3940, 0
        %v4121 = vsel %vm1092, %v3941, 0
        %v4124 = vsel %vm1092, %v3942, 0
        %v4127 = vsel %vm1092, %v3943, 0
        %4129 = vmatpush.msra.mxu0 0.0
        %4130 = vmatpush.msra.mxu0 0.0
        %4131 = vmatpush.msra.mxu0 0.0
        %4132 = vmatpush.msra.mxu0 0.0
        %4133 = vmatpush.msra.mxu0 0.0
        %4134 = vmatpush.msra.mxu0 0.0
        %4135 = vmatpush.msra.mxu0 0.0
        %4136 = vmatpush.msra.mxu0 0.0
        %4137 = vmatpush.msra.mxu0 0.0
        %4138 = vmatpush.msra.mxu0 0.0
        %4139 = vmatpush.msra.mxu0 0.0
        %4140 = vmatpush.msra.mxu0 0.0
        %4141 = vmatpush.msra.mxu0 %v3947
        %4142 = vmatpush.msra.mxu0 %v3946
        %4143 = vmatpush.msra.mxu0 %v3945
        %4144 = vmatpush.msra.mxu0 %v3944
        %4145 = vmatmul.f32.gmra.mxu0 %v4082
        %v4146 = vpop.f32.mrf.mxu0
        %v4147 = vadd.f32 %v4034, %v4146
        %4148 = vmatmul.f32.gmra.mxu0 %v4085
        %v4149 = vpop.f32.mrf.mxu0
        %v4150 = vadd.f32 %v4037, %v4149
        %4151 = vmatmul.f32.gmra.mxu0 %v4088
        %v4152 = vpop.f32.mrf.mxu0
        %v4153 = vadd.f32 %v4040, %v4152
        %4154 = vmatmul.f32.gmra.mxu0 %v4091
        %v4155 = vpop.f32.mrf.mxu0
        %v4156 = vadd.f32 %v4043, %v4155
        %4157 = vmatmul.f32.gmra.mxu0 %v4094
        %v4158 = vpop.f32.mrf.mxu0
        %v4159 = vadd.f32 %v4046, %v4158
        %4160 = vmatmul.f32.gmra.mxu0 %v4097
        %v4161 = vpop.f32.mrf.mxu0
        %v4162 = vadd.f32 %v4049, %v4161
        %4163 = vmatmul.f32.gmra.mxu0 %v4100
        %v4164 = vpop.f32.mrf.mxu0
        %v4165 = vadd.f32 %v4052, %v4164
        %4166 = vmatmul.f32.gmra.mxu0 %v4103
        %v4167 = vpop.f32.mrf.mxu0
        %v4168 = vadd.f32 %v4055, %v4167
        %4169 = vmatmul.f32.gmra.mxu0 %v4106
        %v4170 = vpop.f32.mrf.mxu0
        %v4171 = vadd.f32 %v4058, %v4170
        %4172 = vmatmul.f32.gmra.mxu0 %v4109
        %v4173 = vpop.f32.mrf.mxu0
        %v4174 = vadd.f32 %v4061, %v4173
        %4175 = vmatmul.f32.gmra.mxu0 %v4112
        %v4176 = vpop.f32.mrf.mxu0
        %v4177 = vadd.f32 %v4064, %v4176
        %4178 = vmatmul.f32.gmra.mxu0 %v4115
        %v4179 = vpop.f32.mrf.mxu0
        %v4180 = vadd.f32 %v4067, %v4179
        %4181 = vmatmul.f32.gmra.mxu0 %v4118
        %v4182 = vpop.f32.mrf.mxu0
        %v4183 = vadd.f32 %v4070, %v4182
        %4184 = vmatmul.f32.gmra.mxu0 %v4121
        %v4185 = vpop.f32.mrf.mxu0
        %v4186 = vadd.f32 %v4073, %v4185
        %4187 = vmatmul.f32.gmra.mxu0 %v4124
        %v4188 = vpop.f32.mrf.mxu0
        %v4189 = vadd.f32 %v4076, %v4188
        %4190 = vmatmul.f32.gmra.mxu0 %v4127
        %v4191 = vpop.f32.mrf.mxu0
        %v4192 = vadd.f32 %v4079, %v4191
        %4193 = vdwg.mxu0
        %v4194 = vld [vmem:[#allocation2 + $0x102] sm:$0xff]
        %v4195 = vld [vmem:[#allocation2 + $0x10a] sm:$0xff]
        %v4196 = vld [vmem:[#allocation2 + $0x112] sm:$0xff]
        %v4197 = vld [vmem:[#allocation2 + $0x11a] sm:$0xff]
        %v4198 = vld [vmem:[#allocation2 + $0x122] sm:$0xff]
        %v4199 = vld [vmem:[#allocation2 + $0x12a] sm:$0xff]
        %v4200 = vld [vmem:[#allocation2 + $0x132] sm:$0xff]
        %v4201 = vld [vmem:[#allocation2 + $0x13a] sm:$0xff]
        %v4202 = vld [vmem:[#allocation2 + $0x142] sm:$0xff]
        %v4203 = vld [vmem:[#allocation2 + $0x14a] sm:$0xff]
        %v4204 = vld [vmem:[#allocation2 + $0x152] sm:$0xff]
        %v4205 = vld [vmem:[#allocation2 + $0x15a] sm:$0xff]
        %v4206 = vld [vmem:[#allocation2 + $0x162] sm:$0xff]
        %v4207 = vld [vmem:[#allocation2 + $0x16a] sm:$0xff]
        %v4208 = vld [vmem:[#allocation2 + $0x172] sm:$0xff]
        %v4209 = vld [vmem:[#allocation2 + $0x17a] sm:$0xff]
        %v4210 = vld [vmem:[%s1480] sm:$0xff]
        %v4211 = vld [vmem:[%s1480 + $0x8] sm:$0xff]
        %v4212 = vld [vmem:[%s1480 + $0x10] sm:$0xff]
        %v4213 = vld [vmem:[%s1480 + $0x18] sm:$0xff]
        %v4215 = vsel %vm1092, %v4194, 0
        %v4218 = vsel %vm1092, %v4195, 0
        %v4221 = vsel %vm1092, %v4196, 0
        %v4224 = vsel %vm1092, %v4197, 0
        %v4227 = vsel %vm1092, %v4198, 0
        %v4230 = vsel %vm1092, %v4199, 0
        %v4233 = vsel %vm1092, %v4200, 0
        %v4236 = vsel %vm1092, %v4201, 0
        %v4239 = vsel %vm1092, %v4202, 0
        %v4242 = vsel %vm1092, %v4203, 0
        %v4245 = vsel %vm1092, %v4204, 0
        %v4248 = vsel %vm1092, %v4205, 0
        %v4251 = vsel %vm1092, %v4206, 0
        %v4254 = vsel %vm1092, %v4207, 0
        %v4257 = vsel %vm1092, %v4208, 0
        %v4260 = vsel %vm1092, %v4209, 0
        %4262 = vmatpush.msra.mxu0 0.0
        %4263 = vmatpush.msra.mxu0 0.0
        %4264 = vmatpush.msra.mxu0 0.0
        %4265 = vmatpush.msra.mxu0 0.0
        %4266 = vmatpush.msra.mxu0 0.0
        %4267 = vmatpush.msra.mxu0 0.0
        %4268 = vmatpush.msra.mxu0 0.0
        %4269 = vmatpush.msra.mxu0 0.0
        %4270 = vmatpush.msra.mxu0 0.0
        %4271 = vmatpush.msra.mxu0 0.0
        %4272 = vmatpush.msra.mxu0 0.0
        %4273 = vmatpush.msra.mxu0 0.0
        %4274 = vmatpush.msra.mxu0 %v4213
        %4275 = vmatpush.msra.mxu0 %v4212
        %4276 = vmatpush.msra.mxu0 %v4211
        %4277 = vmatpush.msra.mxu0 %v4210
        %4278 = vmatmul.f32.gmra.mxu0 %v4215
        %v4279 = vpop.f32.mrf.mxu0
        %v4280 = vadd.f32 0.0, %v4279
        %4281 = vmatmul.f32.gmra.mxu0 %v4218
        %v4282 = vpop.f32.mrf.mxu0
        %v4283 = vadd.f32 0.0, %v4282
        %4284 = vmatmul.f32.gmra.mxu0 %v4221
        %v4285 = vpop.f32.mrf.mxu0
        %v4286 = vadd.f32 0.0, %v4285
        %4287 = vmatmul.f32.gmra.mxu0 %v4224
        %v4288 = vpop.f32.mrf.mxu0
        %v4289 = vadd.f32 0.0, %v4288
        %4290 = vmatmul.f32.gmra.mxu0 %v4227
        %v4291 = vpop.f32.mrf.mxu0
        %v4292 = vadd.f32 0.0, %v4291
        %4293 = vmatmul.f32.gmra.mxu0 %v4230
        %v4294 = vpop.f32.mrf.mxu0
        %v4295 = vadd.f32 0.0, %v4294
        %4296 = vmatmul.f32.gmra.mxu0 %v4233
        %v4297 = vpop.f32.mrf.mxu0
        %v4298 = vadd.f32 0.0, %v4297
        %4299 = vmatmul.f32.gmra.mxu0 %v4236
        %v4300 = vpop.f32.mrf.mxu0
        %v4301 = vadd.f32 0.0, %v4300
        %4302 = vmatmul.f32.gmra.mxu0 %v4239
        %v4303 = vpop.f32.mrf.mxu0
        %v4304 = vadd.f32 0.0, %v4303
        %4305 = vmatmul.f32.gmra.mxu0 %v4242
        %v4306 = vpop.f32.mrf.mxu0
        %v4307 = vadd.f32 0.0, %v4306
        %4308 = vmatmul.f32.gmra.mxu0 %v4245
        %v4309 = vpop.f32.mrf.mxu0
        %v4310 = vadd.f32 0.0, %v4309
        %4311 = vmatmul.f32.gmra.mxu0 %v4248
        %v4312 = vpop.f32.mrf.mxu0
        %v4313 = vadd.f32 0.0, %v4312
        %4314 = vmatmul.f32.gmra.mxu0 %v4251
        %v4315 = vpop.f32.mrf.mxu0
        %v4316 = vadd.f32 0.0, %v4315
        %4317 = vmatmul.f32.gmra.mxu0 %v4254
        %v4318 = vpop.f32.mrf.mxu0
        %v4319 = vadd.f32 0.0, %v4318
        %4320 = vmatmul.f32.gmra.mxu0 %v4257
        %v4321 = vpop.f32.mrf.mxu0
        %v4322 = vadd.f32 0.0, %v4321
        %4323 = vmatmul.f32.gmra.mxu0 %v4260
        %v4324 = vpop.f32.mrf.mxu0
        %v4325 = vadd.f32 0.0, %v4324
        %4326 = vdwg.mxu0
        %v4327 = vadd.f32 %v4147, %v4280
        %v4328 = vadd.f32 %v4150, %v4283
        %v4329 = vadd.f32 %v4153, %v4286
        %v4330 = vadd.f32 %v4156, %v4289
        %v4331 = vadd.f32 %v4159, %v4292
        %v4332 = vadd.f32 %v4162, %v4295
        %v4333 = vadd.f32 %v4165, %v4298
        %v4334 = vadd.f32 %v4168, %v4301
        %v4335 = vadd.f32 %v4171, %v4304
        %v4336 = vadd.f32 %v4174, %v4307
        %v4337 = vadd.f32 %v4177, %v4310
        %v4338 = vadd.f32 %v4180, %v4313
        %v4339 = vadd.f32 %v4183, %v4316
        %v4340 = vadd.f32 %v4186, %v4319
        %v4341 = vadd.f32 %v4189, %v4322
        %v4342 = vadd.f32 %v4192, %v4325
        %v4343 = vld [vmem:[#allocation2 + $0x120] sm:$0xff]
        %v4344 = vld [vmem:[#allocation2 + $0x128] sm:$0xff]
        %v4345 = vld [vmem:[#allocation2 + $0x130] sm:$0xff]
        %v4346 = vld [vmem:[#allocation2 + $0x138] sm:$0xff]
        %v4347 = vld [vmem:[#allocation2 + $0x140] sm:$0xff]
        %v4348 = vld [vmem:[#allocation2 + $0x148] sm:$0xff]
        %v4349 = vld [vmem:[#allocation2 + $0x150] sm:$0xff]
        %v4350 = vld [vmem:[#allocation2 + $0x158] sm:$0xff]
        %v4351 = vld [vmem:[#allocation2 + $0x160] sm:$0xff]
        %v4352 = vld [vmem:[#allocation2 + $0x168] sm:$0xff]
        %v4353 = vld [vmem:[#allocation2 + $0x170] sm:$0xff]
        %v4354 = vld [vmem:[#allocation2 + $0x178] sm:$0xff]
        %v4355 = vld [vmem:[#allocation2 + $0x180] sm:$0xff]
        %v4356 = vld [vmem:[#allocation2 + $0x188] sm:$0xff]
        %v4357 = vld [vmem:[#allocation2 + $0x190] sm:$0xff]
        %v4358 = vld [vmem:[#allocation2 + $0x198] sm:$0xff]
        %v4359 = vld [vmem:[%s1630] sm:$0xff]
        %v4360 = vld [vmem:[%s1630 + $0x8] sm:$0xff]
        %v4361 = vld [vmem:[%s1630 + $0x10] sm:$0xff]
        %v4362 = vld [vmem:[%s1630 + $0x18] sm:$0xff]
        %v4364 = vsel %vm1092, %v4343, 0
        %v4367 = vsel %vm1092, %v4344, 0
        %v4370 = vsel %vm1092, %v4345, 0
        %v4373 = vsel %vm1092, %v4346, 0
        %v4376 = vsel %vm1092, %v4347, 0
        %v4379 = vsel %vm1092, %v4348, 0
        %v4382 = vsel %vm1092, %v4349, 0
        %v4385 = vsel %vm1092, %v4350, 0
        %v4388 = vsel %vm1092, %v4351, 0
        %v4391 = vsel %vm1092, %v4352, 0
        %v4394 = vsel %vm1092, %v4353, 0
        %v4397 = vsel %vm1092, %v4354, 0
        %v4400 = vsel %vm1092, %v4355, 0
        %v4403 = vsel %vm1092, %v4356, 0
        %v4406 = vsel %vm1092, %v4357, 0
        %v4409 = vsel %vm1092, %v4358, 0
        %4411 = vmatpush.msra.mxu0 0.0
        %4412 = vmatpush.msra.mxu0 0.0
        %4413 = vmatpush.msra.mxu0 0.0
        %4414 = vmatpush.msra.mxu0 0.0
        %4415 = vmatpush.msra.mxu0 0.0
        %4416 = vmatpush.msra.mxu0 0.0
        %4417 = vmatpush.msra.mxu0 0.0
        %4418 = vmatpush.msra.mxu0 0.0
        %4419 = vmatpush.msra.mxu0 0.0
        %4420 = vmatpush.msra.mxu0 0.0
        %4421 = vmatpush.msra.mxu0 0.0
        %4422 = vmatpush.msra.mxu0 0.0
        %4423 = vmatpush.msra.mxu0 %v4362
        %4424 = vmatpush.msra.mxu0 %v4361
        %4425 = vmatpush.msra.mxu0 %v4360
        %4426 = vmatpush.msra.mxu0 %v4359
        %4427 = vmatmul.f32.gmra.mxu0 %v4364
        %v4428 = vpop.f32.mrf.mxu0
        %v4429 = vadd.f32 0.0, %v4428
        %4430 = vmatmul.f32.gmra.mxu0 %v4367
        %v4431 = vpop.f32.mrf.mxu0
        %v4432 = vadd.f32 0.0, %v4431
        %4433 = vmatmul.f32.gmra.mxu0 %v4370
        %v4434 = vpop.f32.mrf.mxu0
        %v4435 = vadd.f32 0.0, %v4434
        %4436 = vmatmul.f32.gmra.mxu0 %v4373
        %v4437 = vpop.f32.mrf.mxu0
        %v4438 = vadd.f32 0.0, %v4437
        %4439 = vmatmul.f32.gmra.mxu0 %v4376
        %v4440 = vpop.f32.mrf.mxu0
        %v4441 = vadd.f32 0.0, %v4440
        %4442 = vmatmul.f32.gmra.mxu0 %v4379
        %v4443 = vpop.f32.mrf.mxu0
        %v4444 = vadd.f32 0.0, %v4443
        %4445 = vmatmul.f32.gmra.mxu0 %v4382
        %v4446 = vpop.f32.mrf.mxu0
        %v4447 = vadd.f32 0.0, %v4446
        %4448 = vmatmul.f32.gmra.mxu0 %v4385
        %v4449 = vpop.f32.mrf.mxu0
        %v4450 = vadd.f32 0.0, %v4449
        %4451 = vmatmul.f32.gmra.mxu0 %v4388
        %v4452 = vpop.f32.mrf.mxu0
        %v4453 = vadd.f32 0.0, %v4452
        %4454 = vmatmul.f32.gmra.mxu0 %v4391
        %v4455 = vpop.f32.mrf.mxu0
        %v4456 = vadd.f32 0.0, %v4455
        %4457 = vmatmul.f32.gmra.mxu0 %v4394
        %v4458 = vpop.f32.mrf.mxu0
        %v4459 = vadd.f32 0.0, %v4458
        %4460 = vmatmul.f32.gmra.mxu0 %v4397
        %v4461 = vpop.f32.mrf.mxu0
        %v4462 = vadd.f32 0.0, %v4461
        %4463 = vmatmul.f32.gmra.mxu0 %v4400
        %v4464 = vpop.f32.mrf.mxu0
        %v4465 = vadd.f32 0.0, %v4464
        %4466 = vmatmul.f32.gmra.mxu0 %v4403
        %v4467 = vpop.f32.mrf.mxu0
        %v4468 = vadd.f32 0.0, %v4467
        %4469 = vmatmul.f32.gmra.mxu0 %v4406
        %v4470 = vpop.f32.mrf.mxu0
        %v4471 = vadd.f32 0.0, %v4470
        %4472 = vmatmul.f32.gmra.mxu0 %v4409
        %v4473 = vpop.f32.mrf.mxu0
        %v4474 = vadd.f32 0.0, %v4473
        %4475 = vdwg.mxu0
        %v4476 = vadd.f32 %v4327, %v4429
        %v4477 = vadd.f32 %v4328, %v4432
        %v4478 = vadd.f32 %v4329, %v4435
        %v4479 = vadd.f32 %v4330, %v4438
        %v4480 = vadd.f32 %v4331, %v4441
        %v4481 = vadd.f32 %v4332, %v4444
        %v4482 = vadd.f32 %v4333, %v4447
        %v4483 = vadd.f32 %v4334, %v4450
        %v4484 = vadd.f32 %v4335, %v4453
        %v4485 = vadd.f32 %v4336, %v4456
        %v4486 = vadd.f32 %v4337, %v4459
        %v4487 = vadd.f32 %v4338, %v4462
        %v4488 = vadd.f32 %v4339, %v4465
        %v4489 = vadd.f32 %v4340, %v4468
        %v4490 = vadd.f32 %v4341, %v4471
        %v4491 = vadd.f32 %v4342, %v4474
        %v4492 = vld [vmem:[#allocation2 + $0x121] sm:$0xff]
        %v4493 = vld [vmem:[#allocation2 + $0x129] sm:$0xff]
        %v4494 = vld [vmem:[#allocation2 + $0x131] sm:$0xff]
        %v4495 = vld [vmem:[#allocation2 + $0x139] sm:$0xff]
        %v4496 = vld [vmem:[#allocation2 + $0x141] sm:$0xff]
        %v4497 = vld [vmem:[#allocation2 + $0x149] sm:$0xff]
        %v4498 = vld [vmem:[#allocation2 + $0x151] sm:$0xff]
        %v4499 = vld [vmem:[#allocation2 + $0x159] sm:$0xff]
        %v4500 = vld [vmem:[#allocation2 + $0x161] sm:$0xff]
        %v4501 = vld [vmem:[#allocation2 + $0x169] sm:$0xff]
        %v4502 = vld [vmem:[#allocation2 + $0x171] sm:$0xff]
        %v4503 = vld [vmem:[#allocation2 + $0x179] sm:$0xff]
        %v4504 = vld [vmem:[#allocation2 + $0x181] sm:$0xff]
        %v4505 = vld [vmem:[#allocation2 + $0x189] sm:$0xff]
        %v4506 = vld [vmem:[#allocation2 + $0x191] sm:$0xff]
        %v4507 = vld [vmem:[#allocation2 + $0x199] sm:$0xff]
        %v4508 = vld [vmem:[%s1780] sm:$0xff]
        %v4509 = vld [vmem:[%s1780 + $0x8] sm:$0xff]
        %v4510 = vld [vmem:[%s1780 + $0x10] sm:$0xff]
        %v4511 = vld [vmem:[%s1780 + $0x18] sm:$0xff]
        %v4513 = vsel %vm1092, %v4492, 0
        %v4516 = vsel %vm1092, %v4493, 0
        %v4519 = vsel %vm1092, %v4494, 0
        %v4522 = vsel %vm1092, %v4495, 0
        %v4525 = vsel %vm1092, %v4496, 0
        %v4528 = vsel %vm1092, %v4497, 0
        %v4531 = vsel %vm1092, %v4498, 0
        %v4534 = vsel %vm1092, %v4499, 0
        %v4537 = vsel %vm1092, %v4500, 0
        %v4540 = vsel %vm1092, %v4501, 0
        %v4543 = vsel %vm1092, %v4502, 0
        %v4546 = vsel %vm1092, %v4503, 0
        %v4549 = vsel %vm1092, %v4504, 0
        %v4552 = vsel %vm1092, %v4505, 0
        %v4555 = vsel %vm1092, %v4506, 0
        %v4558 = vsel %vm1092, %v4507, 0
        %4560 = vmatpush.msra.mxu0 0.0
        %4561 = vmatpush.msra.mxu0 0.0
        %4562 = vmatpush.msra.mxu0 0.0
        %4563 = vmatpush.msra.mxu0 0.0
        %4564 = vmatpush.msra.mxu0 0.0
        %4565 = vmatpush.msra.mxu0 0.0
        %4566 = vmatpush.msra.mxu0 0.0
        %4567 = vmatpush.msra.mxu0 0.0
        %4568 = vmatpush.msra.mxu0 0.0
        %4569 = vmatpush.msra.mxu0 0.0
        %4570 = vmatpush.msra.mxu0 0.0
        %4571 = vmatpush.msra.mxu0 0.0
        %4572 = vmatpush.msra.mxu0 %v4511
        %4573 = vmatpush.msra.mxu0 %v4510
        %4574 = vmatpush.msra.mxu0 %v4509
        %4575 = vmatpush.msra.mxu0 %v4508
        %4576 = vmatmul.f32.gmra.mxu0 %v4513
        %v4577 = vpop.f32.mrf.mxu0
        %v4578 = vadd.f32 0.0, %v4577
        %4579 = vmatmul.f32.gmra.mxu0 %v4516
        %v4580 = vpop.f32.mrf.mxu0
        %v4581 = vadd.f32 0.0, %v4580
        %4582 = vmatmul.f32.gmra.mxu0 %v4519
        %v4583 = vpop.f32.mrf.mxu0
        %v4584 = vadd.f32 0.0, %v4583
        %4585 = vmatmul.f32.gmra.mxu0 %v4522
        %v4586 = vpop.f32.mrf.mxu0
        %v4587 = vadd.f32 0.0, %v4586
        %4588 = vmatmul.f32.gmra.mxu0 %v4525
        %v4589 = vpop.f32.mrf.mxu0
        %v4590 = vadd.f32 0.0, %v4589
        %4591 = vmatmul.f32.gmra.mxu0 %v4528
        %v4592 = vpop.f32.mrf.mxu0
        %v4593 = vadd.f32 0.0, %v4592
        %4594 = vmatmul.f32.gmra.mxu0 %v4531
        %v4595 = vpop.f32.mrf.mxu0
        %v4596 = vadd.f32 0.0, %v4595
        %4597 = vmatmul.f32.gmra.mxu0 %v4534
        %v4598 = vpop.f32.mrf.mxu0
        %v4599 = vadd.f32 0.0, %v4598
        %4600 = vmatmul.f32.gmra.mxu0 %v4537
        %v4601 = vpop.f32.mrf.mxu0
        %v4602 = vadd.f32 0.0, %v4601
        %4603 = vmatmul.f32.gmra.mxu0 %v4540
        %v4604 = vpop.f32.mrf.mxu0
        %v4605 = vadd.f32 0.0, %v4604
        %4606 = vmatmul.f32.gmra.mxu0 %v4543
        %v4607 = vpop.f32.mrf.mxu0
        %v4608 = vadd.f32 0.0, %v4607
        %4609 = vmatmul.f32.gmra.mxu0 %v4546
        %v4610 = vpop.f32.mrf.mxu0
        %v4611 = vadd.f32 0.0, %v4610
        %4612 = vmatmul.f32.gmra.mxu0 %v4549
        %v4613 = vpop.f32.mrf.mxu0
        %v4614 = vadd.f32 0.0, %v4613
        %4615 = vmatmul.f32.gmra.mxu0 %v4552
        %v4616 = vpop.f32.mrf.mxu0
        %v4617 = vadd.f32 0.0, %v4616
        %4618 = vmatmul.f32.gmra.mxu0 %v4555
        %v4619 = vpop.f32.mrf.mxu0
        %v4620 = vadd.f32 0.0, %v4619
        %4621 = vmatmul.f32.gmra.mxu0 %v4558
        %v4622 = vpop.f32.mrf.mxu0
        %v4623 = vadd.f32 0.0, %v4622
        %4624 = vdwg.mxu0
        %v4625 = vadd.f32 %v4476, %v4578
        %v4626 = vadd.f32 %v4477, %v4581
        %v4627 = vadd.f32 %v4478, %v4584
        %v4628 = vadd.f32 %v4479, %v4587
        %v4629 = vadd.f32 %v4480, %v4590
        %v4630 = vadd.f32 %v4481, %v4593
        %v4631 = vadd.f32 %v4482, %v4596
        %v4632 = vadd.f32 %v4483, %v4599
        %v4633 = vadd.f32 %v4484, %v4602
        %v4634 = vadd.f32 %v4485, %v4605
        %v4635 = vadd.f32 %v4486, %v4608
        %v4636 = vadd.f32 %v4487, %v4611
        %v4637 = vadd.f32 %v4488, %v4614
        %v4638 = vadd.f32 %v4489, %v4617
        %v4639 = vadd.f32 %v4490, %v4620
        %v4640 = vadd.f32 %v4491, %v4623
        %v4641 = vld [vmem:[#allocation2 + $0x122] sm:$0xff]
        %v4642 = vld [vmem:[#allocation2 + $0x12a] sm:$0xff]
        %v4643 = vld [vmem:[#allocation2 + $0x132] sm:$0xff]
        %v4644 = vld [vmem:[#allocation2 + $0x13a] sm:$0xff]
        %v4645 = vld [vmem:[#allocation2 + $0x142] sm:$0xff]
        %v4646 = vld [vmem:[#allocation2 + $0x14a] sm:$0xff]
        %v4647 = vld [vmem:[#allocation2 + $0x152] sm:$0xff]
        %v4648 = vld [vmem:[#allocation2 + $0x15a] sm:$0xff]
        %v4649 = vld [vmem:[#allocation2 + $0x162] sm:$0xff]
        %v4650 = vld [vmem:[#allocation2 + $0x16a] sm:$0xff]
        %v4651 = vld [vmem:[#allocation2 + $0x172] sm:$0xff]
        %v4652 = vld [vmem:[#allocation2 + $0x17a] sm:$0xff]
        %v4653 = vld [vmem:[#allocation2 + $0x182] sm:$0xff]
        %v4654 = vld [vmem:[#allocation2 + $0x18a] sm:$0xff]
        %v4655 = vld [vmem:[#allocation2 + $0x192] sm:$0xff]
        %v4656 = vld [vmem:[#allocation2 + $0x19a] sm:$0xff]
        %v4657 = vld [vmem:[%s1930] sm:$0xff]
        %v4658 = vld [vmem:[%s1930 + $0x8] sm:$0xff]
        %v4659 = vld [vmem:[%s1930 + $0x10] sm:$0xff]
        %v4660 = vld [vmem:[%s1930 + $0x18] sm:$0xff]
        %v4662 = vsel %vm1092, %v4641, 0
        %v4665 = vsel %vm1092, %v4642, 0
        %v4668 = vsel %vm1092, %v4643, 0
        %v4671 = vsel %vm1092, %v4644, 0
        %v4674 = vsel %vm1092, %v4645, 0
        %v4677 = vsel %vm1092, %v4646, 0
        %v4680 = vsel %vm1092, %v4647, 0
        %v4683 = vsel %vm1092, %v4648, 0
        %v4686 = vsel %vm1092, %v4649, 0
        %v4689 = vsel %vm1092, %v4650, 0
        %v4692 = vsel %vm1092, %v4651, 0
        %v4695 = vsel %vm1092, %v4652, 0
        %v4698 = vsel %vm1092, %v4653, 0
        %v4701 = vsel %vm1092, %v4654, 0
        %v4704 = vsel %vm1092, %v4655, 0
        %v4707 = vsel %vm1092, %v4656, 0
        %4709 = vmatpush.msra.mxu0 0.0
        %4710 = vmatpush.msra.mxu0 0.0
        %4711 = vmatpush.msra.mxu0 0.0
        %4712 = vmatpush.msra.mxu0 0.0
        %4713 = vmatpush.msra.mxu0 0.0
        %4714 = vmatpush.msra.mxu0 0.0
        %4715 = vmatpush.msra.mxu0 0.0
        %4716 = vmatpush.msra.mxu0 0.0
        %4717 = vmatpush.msra.mxu0 0.0
        %4718 = vmatpush.msra.mxu0 0.0
        %4719 = vmatpush.msra.mxu0 0.0
        %4720 = vmatpush.msra.mxu0 0.0
        %4721 = vmatpush.msra.mxu0 %v4660
        %4722 = vmatpush.msra.mxu0 %v4659
        %4723 = vmatpush.msra.mxu0 %v4658
        %4724 = vmatpush.msra.mxu0 %v4657
        %4725 = vmatmul.f32.gmra.mxu0 %v4662
        %v4726 = vpop.f32.mrf.mxu0
        %v4727 = vadd.f32 0.0, %v4726
        %4728 = vmatmul.f32.gmra.mxu0 %v4665
        %v4729 = vpop.f32.mrf.mxu0
        %v4730 = vadd.f32 0.0, %v4729
        %4731 = vmatmul.f32.gmra.mxu0 %v4668
        %v4732 = vpop.f32.mrf.mxu0
        %v4733 = vadd.f32 0.0, %v4732
        %4734 = vmatmul.f32.gmra.mxu0 %v4671
        %v4735 = vpop.f32.mrf.mxu0
        %v4736 = vadd.f32 0.0, %v4735
        %4737 = vmatmul.f32.gmra.mxu0 %v4674
        %v4738 = vpop.f32.mrf.mxu0
        %v4739 = vadd.f32 0.0, %v4738
        %4740 = vmatmul.f32.gmra.mxu0 %v4677
        %v4741 = vpop.f32.mrf.mxu0
        %v4742 = vadd.f32 0.0, %v4741
        %4743 = vmatmul.f32.gmra.mxu0 %v4680
        %v4744 = vpop.f32.mrf.mxu0
        %v4745 = vadd.f32 0.0, %v4744
        %4746 = vmatmul.f32.gmra.mxu0 %v4683
        %v4747 = vpop.f32.mrf.mxu0
        %v4748 = vadd.f32 0.0, %v4747
        %4749 = vmatmul.f32.gmra.mxu0 %v4686
        %v4750 = vpop.f32.mrf.mxu0
        %v4751 = vadd.f32 0.0, %v4750
        %4752 = vmatmul.f32.gmra.mxu0 %v4689
        %v4753 = vpop.f32.mrf.mxu0
        %v4754 = vadd.f32 0.0, %v4753
        %4755 = vmatmul.f32.gmra.mxu0 %v4692
        %v4756 = vpop.f32.mrf.mxu0
        %v4757 = vadd.f32 0.0, %v4756
        %4758 = vmatmul.f32.gmra.mxu0 %v4695
        %v4759 = vpop.f32.mrf.mxu0
        %v4760 = vadd.f32 0.0, %v4759
        %4761 = vmatmul.f32.gmra.mxu0 %v4698
        %v4762 = vpop.f32.mrf.mxu0
        %v4763 = vadd.f32 0.0, %v4762
        %4764 = vmatmul.f32.gmra.mxu0 %v4701
        %v4765 = vpop.f32.mrf.mxu0
        %v4766 = vadd.f32 0.0, %v4765
        %4767 = vmatmul.f32.gmra.mxu0 %v4704
        %v4768 = vpop.f32.mrf.mxu0
        %v4769 = vadd.f32 0.0, %v4768
        %4770 = vmatmul.f32.gmra.mxu0 %v4707
        %v4771 = vpop.f32.mrf.mxu0
        %v4772 = vadd.f32 0.0, %v4771
        %4773 = vdwg.mxu0
        %v4774 = vadd.f32 %v4625, %v4727
        %v4775 = vadd.f32 %v4626, %v4730
        %v4776 = vadd.f32 %v4627, %v4733
        %v4777 = vadd.f32 %v4628, %v4736
        %v4778 = vadd.f32 %v4629, %v4739
        %v4779 = vadd.f32 %v4630, %v4742
        %v4780 = vadd.f32 %v4631, %v4745
        %v4781 = vadd.f32 %v4632, %v4748
        %v4782 = vadd.f32 %v4633, %v4751
        %v4783 = vadd.f32 %v4634, %v4754
        %v4784 = vadd.f32 %v4635, %v4757
        %v4785 = vadd.f32 %v4636, %v4760
        %v4786 = vadd.f32 %v4637, %v4763
        %v4787 = vadd.f32 %v4638, %v4766
        %v4788 = vadd.f32 %v4639, %v4769
        %v4789 = vadd.f32 %v4640, %v4772
        %v4790 = vld [vmem:[#allocation2 + $0x140] sm:$0xff]
        %v4791 = vld [vmem:[#allocation2 + $0x148] sm:$0xff]
        %v4792 = vld [vmem:[#allocation2 + $0x150] sm:$0xff]
        %v4793 = vld [vmem:[#allocation2 + $0x158] sm:$0xff]
        %v4794 = vld [vmem:[#allocation2 + $0x160] sm:$0xff]
        %v4795 = vld [vmem:[#allocation2 + $0x168] sm:$0xff]
        %v4796 = vld [vmem:[#allocation2 + $0x170] sm:$0xff]
        %v4797 = vld [vmem:[#allocation2 + $0x178] sm:$0xff]
        %v4798 = vld [vmem:[#allocation2 + $0x180] sm:$0xff]
        %v4799 = vld [vmem:[#allocation2 + $0x188] sm:$0xff]
        %v4800 = vld [vmem:[#allocation2 + $0x190] sm:$0xff]
        %v4801 = vld [vmem:[#allocation2 + $0x198] sm:$0xff]
        %v4802 = vld [vmem:[#allocation2 + $0x1a0] sm:$0xff]
        %v4803 = vld [vmem:[#allocation2 + $0x1a8] sm:$0xff]
        %v4804 = vld [vmem:[#allocation2 + $0x1b0] sm:$0xff]
        %v4805 = vld [vmem:[#allocation2 + $0x1b8] sm:$0xff]
        %v4806 = vld [vmem:[%s2080] sm:$0xff]
        %v4807 = vld [vmem:[%s2080 + $0x8] sm:$0xff]
        %v4808 = vld [vmem:[%s2080 + $0x10] sm:$0xff]
        %v4809 = vld [vmem:[%s2080 + $0x18] sm:$0xff]
        %v4811 = vsel %vm1092, %v4790, 0
        %v4814 = vsel %vm1092, %v4791, 0
        %v4817 = vsel %vm1092, %v4792, 0
        %v4820 = vsel %vm1092, %v4793, 0
        %v4823 = vsel %vm1092, %v4794, 0
        %v4826 = vsel %vm1092, %v4795, 0
        %v4829 = vsel %vm1092, %v4796, 0
        %v4832 = vsel %vm1092, %v4797, 0
        %v4835 = vsel %vm1092, %v4798, 0
        %v4838 = vsel %vm1092, %v4799, 0
        %v4841 = vsel %vm1092, %v4800, 0
        %v4844 = vsel %vm1092, %v4801, 0
        %v4847 = vsel %vm1092, %v4802, 0
        %v4850 = vsel %vm1092, %v4803, 0
        %v4853 = vsel %vm1092, %v4804, 0
        %v4856 = vsel %vm1092, %v4805, 0
        %4858 = vmatpush.msra.mxu0 0.0
        %4859 = vmatpush.msra.mxu0 0.0
        %4860 = vmatpush.msra.mxu0 0.0
        %4861 = vmatpush.msra.mxu0 0.0
        %4862 = vmatpush.msra.mxu0 0.0
        %4863 = vmatpush.msra.mxu0 0.0
        %4864 = vmatpush.msra.mxu0 0.0
        %4865 = vmatpush.msra.mxu0 0.0
        %4866 = vmatpush.msra.mxu0 0.0
        %4867 = vmatpush.msra.mxu0 0.0
        %4868 = vmatpush.msra.mxu0 0.0
        %4869 = vmatpush.msra.mxu0 0.0
        %4870 = vmatpush.msra.mxu0 %v4809
        %4871 = vmatpush.msra.mxu0 %v4808
        %4872 = vmatpush.msra.mxu0 %v4807
        %4873 = vmatpush.msra.mxu0 %v4806
        %4874 = vmatmul.f32.gmra.mxu0 %v4811
        %v4875 = vpop.f32.mrf.mxu0
        %v4876 = vadd.f32 0.0, %v4875
        %4877 = vmatmul.f32.gmra.mxu0 %v4814
        %v4878 = vpop.f32.mrf.mxu0
        %v4879 = vadd.f32 0.0, %v4878
        %4880 = vmatmul.f32.gmra.mxu0 %v4817
        %v4881 = vpop.f32.mrf.mxu0
        %v4882 = vadd.f32 0.0, %v4881
        %4883 = vmatmul.f32.gmra.mxu0 %v4820
        %v4884 = vpop.f32.mrf.mxu0
        %v4885 = vadd.f32 0.0, %v4884
        %4886 = vmatmul.f32.gmra.mxu0 %v4823
        %v4887 = vpop.f32.mrf.mxu0
        %v4888 = vadd.f32 0.0, %v4887
        %4889 = vmatmul.f32.gmra.mxu0 %v4826
        %v4890 = vpop.f32.mrf.mxu0
        %v4891 = vadd.f32 0.0, %v4890
        %4892 = vmatmul.f32.gmra.mxu0 %v4829
        %v4893 = vpop.f32.mrf.mxu0
        %v4894 = vadd.f32 0.0, %v4893
        %4895 = vmatmul.f32.gmra.mxu0 %v4832
        %v4896 = vpop.f32.mrf.mxu0
        %v4897 = vadd.f32 0.0, %v4896
        %4898 = vmatmul.f32.gmra.mxu0 %v4835
        %v4899 = vpop.f32.mrf.mxu0
        %v4900 = vadd.f32 0.0, %v4899
        %4901 = vmatmul.f32.gmra.mxu0 %v4838
        %v4902 = vpop.f32.mrf.mxu0
        %v4903 = vadd.f32 0.0, %v4902
        %4904 = vmatmul.f32.gmra.mxu0 %v4841
        %v4905 = vpop.f32.mrf.mxu0
        %v4906 = vadd.f32 0.0, %v4905
        %4907 = vmatmul.f32.gmra.mxu0 %v4844
        %v4908 = vpop.f32.mrf.mxu0
        %v4909 = vadd.f32 0.0, %v4908
        %4910 = vmatmul.f32.gmra.mxu0 %v4847
        %v4911 = vpop.f32.mrf.mxu0
        %v4912 = vadd.f32 0.0, %v4911
        %4913 = vmatmul.f32.gmra.mxu0 %v4850
        %v4914 = vpop.f32.mrf.mxu0
        %v4915 = vadd.f32 0.0, %v4914
        %4916 = vmatmul.f32.gmra.mxu0 %v4853
        %v4917 = vpop.f32.mrf.mxu0
        %v4918 = vadd.f32 0.0, %v4917
        %4919 = vmatmul.f32.gmra.mxu0 %v4856
        %v4920 = vpop.f32.mrf.mxu0
        %v4921 = vadd.f32 0.0, %v4920
        %4922 = vdwg.mxu0
        %v4923 = vadd.f32 %v4774, %v4876
        %v4924 = vadd.f32 %v4775, %v4879
        %v4925 = vadd.f32 %v4776, %v4882
        %v4926 = vadd.f32 %v4777, %v4885
        %v4927 = vadd.f32 %v4778, %v4888
        %v4928 = vadd.f32 %v4779, %v4891
        %v4929 = vadd.f32 %v4780, %v4894
        %v4930 = vadd.f32 %v4781, %v4897
        %v4931 = vadd.f32 %v4782, %v4900
        %v4932 = vadd.f32 %v4783, %v4903
        %v4933 = vadd.f32 %v4784, %v4906
        %v4934 = vadd.f32 %v4785, %v4909
        %v4935 = vadd.f32 %v4786, %v4912
        %v4936 = vadd.f32 %v4787, %v4915
        %v4937 = vadd.f32 %v4788, %v4918
        %v4938 = vadd.f32 %v4789, %v4921
        %v4939 = vld [vmem:[#allocation2 + $0x141] sm:$0xff]
        %v4940 = vld [vmem:[#allocation2 + $0x149] sm:$0xff]
        %v4941 = vld [vmem:[#allocation2 + $0x151] sm:$0xff]
        %v4942 = vld [vmem:[#allocation2 + $0x159] sm:$0xff]
        %v4943 = vld [vmem:[#allocation2 + $0x161] sm:$0xff]
        %v4944 = vld [vmem:[#allocation2 + $0x169] sm:$0xff]
        %v4945 = vld [vmem:[#allocation2 + $0x171] sm:$0xff]
        %v4946 = vld [vmem:[#allocation2 + $0x179] sm:$0xff]
        %v4947 = vld [vmem:[#allocation2 + $0x181] sm:$0xff]
        %v4948 = vld [vmem:[#allocation2 + $0x189] sm:$0xff]
        %v4949 = vld [vmem:[#allocation2 + $0x191] sm:$0xff]
        %v4950 = vld [vmem:[#allocation2 + $0x199] sm:$0xff]
        %v4951 = vld [vmem:[#allocation2 + $0x1a1] sm:$0xff]
        %v4952 = vld [vmem:[#allocation2 + $0x1a9] sm:$0xff]
        %v4953 = vld [vmem:[#allocation2 + $0x1b1] sm:$0xff]
        %v4954 = vld [vmem:[#allocation2 + $0x1b9] sm:$0xff]
        %v4955 = vld [vmem:[%s2230] sm:$0xff]
        %v4956 = vld [vmem:[%s2230 + $0x8] sm:$0xff]
        %v4957 = vld [vmem:[%s2230 + $0x10] sm:$0xff]
        %v4958 = vld [vmem:[%s2230 + $0x18] sm:$0xff]
        %v4960 = vsel %vm1092, %v4939, 0
        %v4963 = vsel %vm1092, %v4940, 0
        %v4966 = vsel %vm1092, %v4941, 0
        %v4969 = vsel %vm1092, %v4942, 0
        %v4972 = vsel %vm1092, %v4943, 0
        %v4975 = vsel %vm1092, %v4944, 0
        %v4978 = vsel %vm1092, %v4945, 0
        %v4981 = vsel %vm1092, %v4946, 0
        %v4984 = vsel %vm1092, %v4947, 0
        %v4987 = vsel %vm1092, %v4948, 0
        %v4990 = vsel %vm1092, %v4949, 0
        %v4993 = vsel %vm1092, %v4950, 0
        %v4996 = vsel %vm1092, %v4951, 0
        %v4999 = vsel %vm1092, %v4952, 0
        %v5002 = vsel %vm1092, %v4953, 0
        %v5005 = vsel %vm1092, %v4954, 0
        %5007 = vmatpush.msra.mxu0 0.0
        %5008 = vmatpush.msra.mxu0 0.0
        %5009 = vmatpush.msra.mxu0 0.0
        %5010 = vmatpush.msra.mxu0 0.0
        %5011 = vmatpush.msra.mxu0 0.0
        %5012 = vmatpush.msra.mxu0 0.0
        %5013 = vmatpush.msra.mxu0 0.0
        %5014 = vmatpush.msra.mxu0 0.0
        %5015 = vmatpush.msra.mxu0 0.0
        %5016 = vmatpush.msra.mxu0 0.0
        %5017 = vmatpush.msra.mxu0 0.0
        %5018 = vmatpush.msra.mxu0 0.0
        %5019 = vmatpush.msra.mxu0 %v4958
        %5020 = vmatpush.msra.mxu0 %v4957
        %5021 = vmatpush.msra.mxu0 %v4956
        %5022 = vmatpush.msra.mxu0 %v4955
        %5023 = vmatmul.f32.gmra.mxu0 %v4960
        %v5024 = vpop.f32.mrf.mxu0
        %v5025 = vadd.f32 0.0, %v5024
        %5026 = vmatmul.f32.gmra.mxu0 %v4963
        %v5027 = vpop.f32.mrf.mxu0
        %v5028 = vadd.f32 0.0, %v5027
        %5029 = vmatmul.f32.gmra.mxu0 %v4966
        %v5030 = vpop.f32.mrf.mxu0
        %v5031 = vadd.f32 0.0, %v5030
        %5032 = vmatmul.f32.gmra.mxu0 %v4969
        %v5033 = vpop.f32.mrf.mxu0
        %v5034 = vadd.f32 0.0, %v5033
        %5035 = vmatmul.f32.gmra.mxu0 %v4972
        %v5036 = vpop.f32.mrf.mxu0
        %v5037 = vadd.f32 0.0, %v5036
        %5038 = vmatmul.f32.gmra.mxu0 %v4975
        %v5039 = vpop.f32.mrf.mxu0
        %v5040 = vadd.f32 0.0, %v5039
        %5041 = vmatmul.f32.gmra.mxu0 %v4978
        %v5042 = vpop.f32.mrf.mxu0
        %v5043 = vadd.f32 0.0, %v5042
        %5044 = vmatmul.f32.gmra.mxu0 %v4981
        %v5045 = vpop.f32.mrf.mxu0
        %v5046 = vadd.f32 0.0, %v5045
        %5047 = vmatmul.f32.gmra.mxu0 %v4984
        %v5048 = vpop.f32.mrf.mxu0
        %v5049 = vadd.f32 0.0, %v5048
        %5050 = vmatmul.f32.gmra.mxu0 %v4987
        %v5051 = vpop.f32.mrf.mxu0
        %v5052 = vadd.f32 0.0, %v5051
        %5053 = vmatmul.f32.gmra.mxu0 %v4990
        %v5054 = vpop.f32.mrf.mxu0
        %v5055 = vadd.f32 0.0, %v5054
        %5056 = vmatmul.f32.gmra.mxu0 %v4993
        %v5057 = vpop.f32.mrf.mxu0
        %v5058 = vadd.f32 0.0, %v5057
        %5059 = vmatmul.f32.gmra.mxu0 %v4996
        %v5060 = vpop.f32.mrf.mxu0
        %v5061 = vadd.f32 0.0, %v5060
        %5062 = vmatmul.f32.gmra.mxu0 %v4999
        %v5063 = vpop.f32.mrf.mxu0
        %v5064 = vadd.f32 0.0, %v5063
        %5065 = vmatmul.f32.gmra.mxu0 %v5002
        %v5066 = vpop.f32.mrf.mxu0
        %v5067 = vadd.f32 0.0, %v5066
        %5068 = vmatmul.f32.gmra.mxu0 %v5005
        %v5069 = vpop.f32.mrf.mxu0
        %v5070 = vadd.f32 0.0, %v5069
        %5071 = vdwg.mxu0
        %v5072 = vadd.f32 %v4923, %v5025
        %v5073 = vadd.f32 %v4924, %v5028
        %v5074 = vadd.f32 %v4925, %v5031
        %v5075 = vadd.f32 %v4926, %v5034
        %v5076 = vadd.f32 %v4927, %v5037
        %v5077 = vadd.f32 %v4928, %v5040
        %v5078 = vadd.f32 %v4929, %v5043
        %v5079 = vadd.f32 %v4930, %v5046
        %v5080 = vadd.f32 %v4931, %v5049
        %v5081 = vadd.f32 %v4932, %v5052
        %v5082 = vadd.f32 %v4933, %v5055
        %v5083 = vadd.f32 %v4934, %v5058
        %v5084 = vadd.f32 %v4935, %v5061
        %v5085 = vadd.f32 %v4936, %v5064
        %v5086 = vadd.f32 %v4937, %v5067
        %v5087 = vadd.f32 %v4938, %v5070
        %v5088 = vld [vmem:[#allocation2 + $0x142] sm:$0xff]
        %v5089 = vld [vmem:[#allocation2 + $0x14a] sm:$0xff]
        %v5090 = vld [vmem:[#allocation2 + $0x152] sm:$0xff]
        %v5091 = vld [vmem:[#allocation2 + $0x15a] sm:$0xff]
        %v5092 = vld [vmem:[#allocation2 + $0x162] sm:$0xff]
        %v5093 = vld [vmem:[#allocation2 + $0x16a] sm:$0xff]
        %v5094 = vld [vmem:[#allocation2 + $0x172] sm:$0xff]
        %v5095 = vld [vmem:[#allocation2 + $0x17a] sm:$0xff]
        %v5096 = vld [vmem:[#allocation2 + $0x182] sm:$0xff]
        %v5097 = vld [vmem:[#allocation2 + $0x18a] sm:$0xff]
        %v5098 = vld [vmem:[#allocation2 + $0x192] sm:$0xff]
        %v5099 = vld [vmem:[#allocation2 + $0x19a] sm:$0xff]
        %v5100 = vld [vmem:[#allocation2 + $0x1a2] sm:$0xff]
        %v5101 = vld [vmem:[#allocation2 + $0x1aa] sm:$0xff]
        %v5102 = vld [vmem:[#allocation2 + $0x1b2] sm:$0xff]
        %v5103 = vld [vmem:[#allocation2 + $0x1ba] sm:$0xff]
        %v5104 = vld [vmem:[%s2380] sm:$0xff]
        %v5105 = vld [vmem:[%s2380 + $0x8] sm:$0xff]
        %v5106 = vld [vmem:[%s2380 + $0x10] sm:$0xff]
        %v5107 = vld [vmem:[%s2380 + $0x18] sm:$0xff]
        %v5109 = vsel %vm1092, %v5088, 0
        %v5112 = vsel %vm1092, %v5089, 0
        %v5115 = vsel %vm1092, %v5090, 0
        %v5118 = vsel %vm1092, %v5091, 0
        %v5121 = vsel %vm1092, %v5092, 0
        %v5124 = vsel %vm1092, %v5093, 0
        %v5127 = vsel %vm1092, %v5094, 0
        %v5130 = vsel %vm1092, %v5095, 0
        %v5133 = vsel %vm1092, %v5096, 0
        %v5136 = vsel %vm1092, %v5097, 0
        %v5139 = vsel %vm1092, %v5098, 0
        %v5142 = vsel %vm1092, %v5099, 0
        %v5145 = vsel %vm1092, %v5100, 0
        %v5148 = vsel %vm1092, %v5101, 0
        %v5151 = vsel %vm1092, %v5102, 0
        %v5154 = vsel %vm1092, %v5103, 0
        %5156 = vmatpush.msra.mxu0 0.0
        %5157 = vmatpush.msra.mxu0 0.0
        %5158 = vmatpush.msra.mxu0 0.0
        %5159 = vmatpush.msra.mxu0 0.0
        %5160 = vmatpush.msra.mxu0 0.0
        %5161 = vmatpush.msra.mxu0 0.0
        %5162 = vmatpush.msra.mxu0 0.0
        %5163 = vmatpush.msra.mxu0 0.0
        %5164 = vmatpush.msra.mxu0 0.0
        %5165 = vmatpush.msra.mxu0 0.0
        %5166 = vmatpush.msra.mxu0 0.0
        %5167 = vmatpush.msra.mxu0 0.0
        %5168 = vmatpush.msra.mxu0 %v5107
        %5169 = vmatpush.msra.mxu0 %v5106
        %5170 = vmatpush.msra.mxu0 %v5105
        %5171 = vmatpush.msra.mxu0 %v5104
        %5172 = vmatmul.f32.gmra.mxu0 %v5109
        %v5173 = vpop.f32.mrf.mxu0
        %v5174 = vadd.f32 0.0, %v5173
        %5175 = vmatmul.f32.gmra.mxu0 %v5112
        %v5176 = vpop.f32.mrf.mxu0
        %v5177 = vadd.f32 0.0, %v5176
        %5178 = vmatmul.f32.gmra.mxu0 %v5115
        %v5179 = vpop.f32.mrf.mxu0
        %v5180 = vadd.f32 0.0, %v5179
        %5181 = vmatmul.f32.gmra.mxu0 %v5118
        %v5182 = vpop.f32.mrf.mxu0
        %v5183 = vadd.f32 0.0, %v5182
        %5184 = vmatmul.f32.gmra.mxu0 %v5121
        %v5185 = vpop.f32.mrf.mxu0
        %v5186 = vadd.f32 0.0, %v5185
        %5187 = vmatmul.f32.gmra.mxu0 %v5124
        %v5188 = vpop.f32.mrf.mxu0
        %v5189 = vadd.f32 0.0, %v5188
        %5190 = vmatmul.f32.gmra.mxu0 %v5127
        %v5191 = vpop.f32.mrf.mxu0
        %v5192 = vadd.f32 0.0, %v5191
        %5193 = vmatmul.f32.gmra.mxu0 %v5130
        %v5194 = vpop.f32.mrf.mxu0
        %v5195 = vadd.f32 0.0, %v5194
        %5196 = vmatmul.f32.gmra.mxu0 %v5133
        %v5197 = vpop.f32.mrf.mxu0
        %v5198 = vadd.f32 0.0, %v5197
        %5199 = vmatmul.f32.gmra.mxu0 %v5136
        %v5200 = vpop.f32.mrf.mxu0
        %v5201 = vadd.f32 0.0, %v5200
        %5202 = vmatmul.f32.gmra.mxu0 %v5139
        %v5203 = vpop.f32.mrf.mxu0
        %v5204 = vadd.f32 0.0, %v5203
        %5205 = vmatmul.f32.gmra.mxu0 %v5142
        %v5206 = vpop.f32.mrf.mxu0
        %v5207 = vadd.f32 0.0, %v5206
        %5208 = vmatmul.f32.gmra.mxu0 %v5145
        %v5209 = vpop.f32.mrf.mxu0
        %v5210 = vadd.f32 0.0, %v5209
        %5211 = vmatmul.f32.gmra.mxu0 %v5148
        %v5212 = vpop.f32.mrf.mxu0
        %v5213 = vadd.f32 0.0, %v5212
        %5214 = vmatmul.f32.gmra.mxu0 %v5151
        %v5215 = vpop.f32.mrf.mxu0
        %v5216 = vadd.f32 0.0, %v5215
        %5217 = vmatmul.f32.gmra.mxu0 %v5154
        %v5218 = vpop.f32.mrf.mxu0
        %v5219 = vadd.f32 0.0, %v5218
        %5220 = vdwg.mxu0
        %v5221 = vadd.f32 %v5072, %v5174
        %v5222 = vadd.f32 %v5073, %v5177
        %v5223 = vadd.f32 %v5074, %v5180
        %v5224 = vadd.f32 %v5075, %v5183
        %v5225 = vadd.f32 %v5076, %v5186
        %v5226 = vadd.f32 %v5077, %v5189
        %v5227 = vadd.f32 %v5078, %v5192
        %v5228 = vadd.f32 %v5079, %v5195
        %v5229 = vadd.f32 %v5080, %v5198
        %v5230 = vadd.f32 %v5081, %v5201
        %v5231 = vadd.f32 %v5082, %v5204
        %v5232 = vadd.f32 %v5083, %v5207
        %v5233 = vadd.f32 %v5084, %v5210
        %v5234 = vadd.f32 %v5085, %v5213
        %v5235 = vadd.f32 %v5086, %v5216
        %v5236 = vadd.f32 %v5087, %v5219
        %v5237 = vld [vmem:[%s4] sm:$0x1]
        %v5239 = vperm.slane %v5237, 0
        %v5241 = vadd.f32 %v5221, %v5239
        %v5242 = vadd.f32 %v5222, %v5239
        %v5243 = vadd.f32 %v5223, %v5239
        %v5244 = vadd.f32 %v5224, %v5239
        %v5245 = vadd.f32 %v5225, %v5239
        %v5246 = vadd.f32 %v5226, %v5239
        %v5247 = vadd.f32 %v5227, %v5239
        %v5248 = vadd.f32 %v5228, %v5239
        %v5249 = vadd.f32 %v5229, %v5239
        %v5250 = vadd.f32 %v5230, %v5239
        %v5251 = vadd.f32 %v5231, %v5239
        %v5252 = vadd.f32 %v5232, %v5239
        %v5253 = vadd.f32 %v5233, %v5239
        %v5254 = vadd.f32 %v5234, %v5239
        %v5255 = vadd.f32 %v5235, %v5239
        %v5256 = vadd.f32 %v5236, %v5239
        %v5257 = vmax.f32 %v5241, 0.0
        %v5258 = vmax.f32 %v5242, 0.0
        %v5259 = vmax.f32 %v5243, 0.0
        %v5260 = vmax.f32 %v5244, 0.0
        %v5261 = vmax.f32 %v5245, 0.0
        %v5262 = vmax.f32 %v5246, 0.0
        %v5263 = vmax.f32 %v5247, 0.0
        %v5264 = vmax.f32 %v5248, 0.0
        %v5265 = vmax.f32 %v5249, 0.0
        %v5266 = vmax.f32 %v5250, 0.0
        %v5267 = vmax.f32 %v5251, 0.0
        %v5268 = vmax.f32 %v5252, 0.0
        %v5269 = vmax.f32 %v5253, 0.0
        %v5270 = vmax.f32 %v5254, 0.0
        %v5271 = vmax.f32 %v5255, 0.0
        %v5272 = vmax.f32 %v5256, 0.0
        %5273 = vst.msk [vmem:[#allocation3 + $0x100] sm:$0xff] %vm2550, %v5257
        %5274 = vst.msk [vmem:[#allocation3 + $0x108] sm:$0xff] %vm2550, %v5258
        %5275 = vst.msk [vmem:[#allocation3 + $0x110] sm:$0xff] %vm2550, %v5259
        %5276 = vst.msk [vmem:[#allocation3 + $0x118] sm:$0xff] %vm2550, %v5260
        %5277 = vst.msk [vmem:[#allocation3 + $0x120] sm:$0xff] %vm2550, %v5261
        %5278 = vst.msk [vmem:[#allocation3 + $0x128] sm:$0xff] %vm2550, %v5262
        %5279 = vst.msk [vmem:[#allocation3 + $0x130] sm:$0xff] %vm2550, %v5263
        %5280 = vst.msk [vmem:[#allocation3 + $0x138] sm:$0xff] %vm2550, %v5264
        %5281 = vst.msk [vmem:[#allocation3 + $0x140] sm:$0xff] %vm2550, %v5265
        %5282 = vst.msk [vmem:[#allocation3 + $0x148] sm:$0xff] %vm2550, %v5266
        %5283 = vst.msk [vmem:[#allocation3 + $0x150] sm:$0xff] %vm2550, %v5267
        %5284 = vst.msk [vmem:[#allocation3 + $0x158] sm:$0xff] %vm2550, %v5268
        %5285 = vst.msk [vmem:[#allocation3 + $0x160] sm:$0xff] %vm2550, %v5269
        %5286 = vst.msk [vmem:[#allocation3 + $0x168] sm:$0xff] %vm2550, %v5270
        %5287 = vst.msk [vmem:[#allocation3 + $0x170] sm:$0xff] %vm2550, %v5271
        %5288 = vst.msk [vmem:[#allocation3 + $0x178] sm:$0xff] %vm2550, %v5272
        %v5289 = vld [vmem:[#allocation2 + $0x180] sm:$0xff]
        %v5290 = vld [vmem:[#allocation2 + $0x188] sm:$0xff]
        %v5291 = vld [vmem:[#allocation2 + $0x190] sm:$0xff]
        %v5292 = vld [vmem:[#allocation2 + $0x198] sm:$0xff]
        %v5293 = vld [vmem:[#allocation2 + $0x1a0] sm:$0xff]
        %v5294 = vld [vmem:[#allocation2 + $0x1a8] sm:$0xff]
        %v5295 = vld [vmem:[#allocation2 + $0x1b0] sm:$0xff]
        %v5296 = vld [vmem:[#allocation2 + $0x1b8] sm:$0xff]
        %v5297 = vld [vmem:[#allocation2 + $0x1c0] sm:$0xff]
        %v5298 = vld [vmem:[#allocation2 + $0x1c8] sm:$0xff]
        %v5299 = vld [vmem:[#allocation2 + $0x1d0] sm:$0xff]
        %v5300 = vld [vmem:[#allocation2 + $0x1d8] sm:$0xff]
        %v5301 = vld [vmem:[#allocation2 + $0x1e0] sm:$0xff]
        %v5302 = vld [vmem:[#allocation2 + $0x1e8] sm:$0xff]
        %v5303 = vld [vmem:[#allocation2 + $0x1f0] sm:$0xff]
        %v5304 = vld [vmem:[#allocation2 + $0x1f8] sm:$0xff]
        %v5305 = vld [vmem:[%s3] sm:$0xff]
        %v5306 = vld [vmem:[%s3 + $0x8] sm:$0xff]
        %v5307 = vld [vmem:[%s3 + $0x10] sm:$0xff]
        %v5308 = vld [vmem:[%s3 + $0x18] sm:$0xff]
        %v5309 = vld [vmem:[#allocation2 + $0x181] sm:$0xff]
        %v5310 = vld [vmem:[#allocation2 + $0x189] sm:$0xff]
        %v5311 = vld [vmem:[#allocation2 + $0x191] sm:$0xff]
        %v5312 = vld [vmem:[#allocation2 + $0x199] sm:$0xff]
        %v5313 = vld [vmem:[#allocation2 + $0x1a1] sm:$0xff]
        %v5314 = vld [vmem:[#allocation2 + $0x1a9] sm:$0xff]
        %v5315 = vld [vmem:[#allocation2 + $0x1b1] sm:$0xff]
        %v5316 = vld [vmem:[#allocation2 + $0x1b9] sm:$0xff]
        %v5317 = vld [vmem:[#allocation2 + $0x1c1] sm:$0xff]
        %v5318 = vld [vmem:[#allocation2 + $0x1c9] sm:$0xff]
        %v5319 = vld [vmem:[#allocation2 + $0x1d1] sm:$0xff]
        %v5320 = vld [vmem:[#allocation2 + $0x1d9] sm:$0xff]
        %v5321 = vld [vmem:[#allocation2 + $0x1e1] sm:$0xff]
        %v5322 = vld [vmem:[#allocation2 + $0x1e9] sm:$0xff]
        %v5323 = vld [vmem:[#allocation2 + $0x1f1] sm:$0xff]
        %v5324 = vld [vmem:[#allocation2 + $0x1f9] sm:$0xff]
        %v5325 = vld [vmem:[%s1233] sm:$0xff]
        %v5326 = vld [vmem:[%s1233 + $0x8] sm:$0xff]
        %v5327 = vld [vmem:[%s1233 + $0x10] sm:$0xff]
        %v5328 = vld [vmem:[%s1233 + $0x18] sm:$0xff]
        %v5330 = vsel %vm1092, %v5309, 0
        %v5333 = vsel %vm1092, %v5310, 0
        %v5336 = vsel %vm1092, %v5311, 0
        %v5339 = vsel %vm1092, %v5312, 0
        %v5342 = vsel %vm1092, %v5313, 0
        %v5345 = vsel %vm1092, %v5314, 0
        %v5348 = vsel %vm1092, %v5315, 0
        %v5351 = vsel %vm1092, %v5316, 0
        %v5354 = vsel %vm1092, %v5317, 0
        %v5357 = vsel %vm1092, %v5318, 0
        %v5360 = vsel %vm1092, %v5319, 0
        %v5363 = vsel %vm1092, %v5320, 0
        %v5366 = vsel %vm1092, %v5321, 0
        %v5369 = vsel %vm1092, %v5322, 0
        %v5372 = vsel %vm1092, %v5323, 0
        %v5375 = vsel %vm1092, %v5324, 0
        %5377 = vmatpush.msra.mxu0 0.0
        %5378 = vmatpush.msra.mxu0 0.0
        %5379 = vmatpush.msra.mxu0 0.0
        %5380 = vmatpush.msra.mxu0 0.0
        %5381 = vmatpush.msra.mxu0 0.0
        %5382 = vmatpush.msra.mxu0 0.0
        %5383 = vmatpush.msra.mxu0 0.0
        %5384 = vmatpush.msra.mxu0 0.0
        %5385 = vmatpush.msra.mxu0 0.0
        %5386 = vmatpush.msra.mxu0 0.0
        %5387 = vmatpush.msra.mxu0 0.0
        %5388 = vmatpush.msra.mxu0 0.0
        %5389 = vmatpush.msra.mxu0 %v5328
        %5390 = vmatpush.msra.mxu0 %v5327
        %5391 = vmatpush.msra.mxu0 %v5326
        %5392 = vmatpush.msra.mxu0 %v5325
        %5393 = vmatmul.f32.gmra.mxu0 %v5330
        %v5394 = vpop.f32.mrf.mxu0
        %v5395 = vadd.f32 0.0, %v5394
        %5396 = vmatmul.f32.gmra.mxu0 %v5333
        %v5397 = vpop.f32.mrf.mxu0
        %v5398 = vadd.f32 0.0, %v5397
        %5399 = vmatmul.f32.gmra.mxu0 %v5336
        %v5400 = vpop.f32.mrf.mxu0
        %v5401 = vadd.f32 0.0, %v5400
        %5402 = vmatmul.f32.gmra.mxu0 %v5339
        %v5403 = vpop.f32.mrf.mxu0
        %v5404 = vadd.f32 0.0, %v5403
        %5405 = vmatmul.f32.gmra.mxu0 %v5342
        %v5406 = vpop.f32.mrf.mxu0
        %v5407 = vadd.f32 0.0, %v5406
        %5408 = vmatmul.f32.gmra.mxu0 %v5345
        %v5409 = vpop.f32.mrf.mxu0
        %v5410 = vadd.f32 0.0, %v5409
        %5411 = vmatmul.f32.gmra.mxu0 %v5348
        %v5412 = vpop.f32.mrf.mxu0
        %v5413 = vadd.f32 0.0, %v5412
        %5414 = vmatmul.f32.gmra.mxu0 %v5351
        %v5415 = vpop.f32.mrf.mxu0
        %v5416 = vadd.f32 0.0, %v5415
        %5417 = vmatmul.f32.gmra.mxu0 %v5354
        %v5418 = vpop.f32.mrf.mxu0
        %v5419 = vadd.f32 0.0, %v5418
        %5420 = vmatmul.f32.gmra.mxu0 %v5357
        %v5421 = vpop.f32.mrf.mxu0
        %v5422 = vadd.f32 0.0, %v5421
        %5423 = vmatmul.f32.gmra.mxu0 %v5360
        %v5424 = vpop.f32.mrf.mxu0
        %v5425 = vadd.f32 0.0, %v5424
        %5426 = vmatmul.f32.gmra.mxu0 %v5363
        %v5427 = vpop.f32.mrf.mxu0
        %v5428 = vadd.f32 0.0, %v5427
        %5429 = vmatmul.f32.gmra.mxu0 %v5366
        %v5430 = vpop.f32.mrf.mxu0
        %v5431 = vadd.f32 0.0, %v5430
        %5432 = vmatmul.f32.gmra.mxu0 %v5369
        %v5433 = vpop.f32.mrf.mxu0
        %v5434 = vadd.f32 0.0, %v5433
        %5435 = vmatmul.f32.gmra.mxu0 %v5372
        %v5436 = vpop.f32.mrf.mxu0
        %v5437 = vadd.f32 0.0, %v5436
        %5438 = vmatmul.f32.gmra.mxu0 %v5375
        %v5439 = vpop.f32.mrf.mxu0
        %v5440 = vadd.f32 0.0, %v5439
        %5441 = vdwg.mxu0
        %v5443 = vsel %vm1092, %v5289, 0
        %v5446 = vsel %vm1092, %v5290, 0
        %v5449 = vsel %vm1092, %v5291, 0
        %v5452 = vsel %vm1092, %v5292, 0
        %v5455 = vsel %vm1092, %v5293, 0
        %v5458 = vsel %vm1092, %v5294, 0
        %v5461 = vsel %vm1092, %v5295, 0
        %v5464 = vsel %vm1092, %v5296, 0
        %v5467 = vsel %vm1092, %v5297, 0
        %v5470 = vsel %vm1092, %v5298, 0
        %v5473 = vsel %vm1092, %v5299, 0
        %v5476 = vsel %vm1092, %v5300, 0
        %v5479 = vsel %vm1092, %v5301, 0
        %v5482 = vsel %vm1092, %v5302, 0
        %v5485 = vsel %vm1092, %v5303, 0
        %v5488 = vsel %vm1092, %v5304, 0
        %5490 = vmatpush.msra.mxu0 0.0
        %5491 = vmatpush.msra.mxu0 0.0
        %5492 = vmatpush.msra.mxu0 0.0
        %5493 = vmatpush.msra.mxu0 0.0
        %5494 = vmatpush.msra.mxu0 0.0
        %5495 = vmatpush.msra.mxu0 0.0
        %5496 = vmatpush.msra.mxu0 0.0
        %5497 = vmatpush.msra.mxu0 0.0
        %5498 = vmatpush.msra.mxu0 0.0
        %5499 = vmatpush.msra.mxu0 0.0
        %5500 = vmatpush.msra.mxu0 0.0
        %5501 = vmatpush.msra.mxu0 0.0
        %5502 = vmatpush.msra.mxu0 %v5308
        %5503 = vmatpush.msra.mxu0 %v5307
        %5504 = vmatpush.msra.mxu0 %v5306
        %5505 = vmatpush.msra.mxu0 %v5305
        %5506 = vmatmul.f32.gmra.mxu0 %v5443
        %v5507 = vpop.f32.mrf.mxu0
        %v5508 = vadd.f32 %v5395, %v5507
        %5509 = vmatmul.f32.gmra.mxu0 %v5446
        %v5510 = vpop.f32.mrf.mxu0
        %v5511 = vadd.f32 %v5398, %v5510
        %5512 = vmatmul.f32.gmra.mxu0 %v5449
        %v5513 = vpop.f32.mrf.mxu0
        %v5514 = vadd.f32 %v5401, %v5513
        %5515 = vmatmul.f32.gmra.mxu0 %v5452
        %v5516 = vpop.f32.mrf.mxu0
        %v5517 = vadd.f32 %v5404, %v5516
        %5518 = vmatmul.f32.gmra.mxu0 %v5455
        %v5519 = vpop.f32.mrf.mxu0
        %v5520 = vadd.f32 %v5407, %v5519
        %5521 = vmatmul.f32.gmra.mxu0 %v5458
        %v5522 = vpop.f32.mrf.mxu0
        %v5523 = vadd.f32 %v5410, %v5522
        %5524 = vmatmul.f32.gmra.mxu0 %v5461
        %v5525 = vpop.f32.mrf.mxu0
        %v5526 = vadd.f32 %v5413, %v5525
        %5527 = vmatmul.f32.gmra.mxu0 %v5464
        %v5528 = vpop.f32.mrf.mxu0
        %v5529 = vadd.f32 %v5416, %v5528
        %5530 = vmatmul.f32.gmra.mxu0 %v5467
        %v5531 = vpop.f32.mrf.mxu0
        %v5532 = vadd.f32 %v5419, %v5531
        %5533 = vmatmul.f32.gmra.mxu0 %v5470
        %v5534 = vpop.f32.mrf.mxu0
        %v5535 = vadd.f32 %v5422, %v5534
        %5536 = vmatmul.f32.gmra.mxu0 %v5473
        %v5537 = vpop.f32.mrf.mxu0
        %v5538 = vadd.f32 %v5425, %v5537
        %5539 = vmatmul.f32.gmra.mxu0 %v5476
        %v5540 = vpop.f32.mrf.mxu0
        %v5541 = vadd.f32 %v5428, %v5540
        %5542 = vmatmul.f32.gmra.mxu0 %v5479
        %v5543 = vpop.f32.mrf.mxu0
        %v5544 = vadd.f32 %v5431, %v5543
        %5545 = vmatmul.f32.gmra.mxu0 %v5482
        %v5546 = vpop.f32.mrf.mxu0
        %v5547 = vadd.f32 %v5434, %v5546
        %5548 = vmatmul.f32.gmra.mxu0 %v5485
        %v5549 = vpop.f32.mrf.mxu0
        %v5550 = vadd.f32 %v5437, %v5549
        %5551 = vmatmul.f32.gmra.mxu0 %v5488
        %v5552 = vpop.f32.mrf.mxu0
        %v5553 = vadd.f32 %v5440, %v5552
        %5554 = vdwg.mxu0
        %v5555 = vld [vmem:[#allocation2 + $0x182] sm:$0xff]
        %v5556 = vld [vmem:[#allocation2 + $0x18a] sm:$0xff]
        %v5557 = vld [vmem:[#allocation2 + $0x192] sm:$0xff]
        %v5558 = vld [vmem:[#allocation2 + $0x19a] sm:$0xff]
        %v5559 = vld [vmem:[#allocation2 + $0x1a2] sm:$0xff]
        %v5560 = vld [vmem:[#allocation2 + $0x1aa] sm:$0xff]
        %v5561 = vld [vmem:[#allocation2 + $0x1b2] sm:$0xff]
        %v5562 = vld [vmem:[#allocation2 + $0x1ba] sm:$0xff]
        %v5563 = vld [vmem:[#allocation2 + $0x1c2] sm:$0xff]
        %v5564 = vld [vmem:[#allocation2 + $0x1ca] sm:$0xff]
        %v5565 = vld [vmem:[#allocation2 + $0x1d2] sm:$0xff]
        %v5566 = vld [vmem:[#allocation2 + $0x1da] sm:$0xff]
        %v5567 = vld [vmem:[#allocation2 + $0x1e2] sm:$0xff]
        %v5568 = vld [vmem:[#allocation2 + $0x1ea] sm:$0xff]
        %v5569 = vld [vmem:[#allocation2 + $0x1f2] sm:$0xff]
        %v5570 = vld [vmem:[#allocation2 + $0x1fa] sm:$0xff]
        %v5571 = vld [vmem:[%s1480] sm:$0xff]
        %v5572 = vld [vmem:[%s1480 + $0x8] sm:$0xff]
        %v5573 = vld [vmem:[%s1480 + $0x10] sm:$0xff]
        %v5574 = vld [vmem:[%s1480 + $0x18] sm:$0xff]
        %v5576 = vsel %vm1092, %v5555, 0
        %v5579 = vsel %vm1092, %v5556, 0
        %v5582 = vsel %vm1092, %v5557, 0
        %v5585 = vsel %vm1092, %v5558, 0
        %v5588 = vsel %vm1092, %v5559, 0
        %v5591 = vsel %vm1092, %v5560, 0
        %v5594 = vsel %vm1092, %v5561, 0
        %v5597 = vsel %vm1092, %v5562, 0
        %v5600 = vsel %vm1092, %v5563, 0
        %v5603 = vsel %vm1092, %v5564, 0
        %v5606 = vsel %vm1092, %v5565, 0
        %v5609 = vsel %vm1092, %v5566, 0
        %v5612 = vsel %vm1092, %v5567, 0
        %v5615 = vsel %vm1092, %v5568, 0
        %v5618 = vsel %vm1092, %v5569, 0
        %v5621 = vsel %vm1092, %v5570, 0
        %5623 = vmatpush.msra.mxu0 0.0
        %5624 = vmatpush.msra.mxu0 0.0
        %5625 = vmatpush.msra.mxu0 0.0
        %5626 = vmatpush.msra.mxu0 0.0
        %5627 = vmatpush.msra.mxu0 0.0
        %5628 = vmatpush.msra.mxu0 0.0
        %5629 = vmatpush.msra.mxu0 0.0
        %5630 = vmatpush.msra.mxu0 0.0
        %5631 = vmatpush.msra.mxu0 0.0
        %5632 = vmatpush.msra.mxu0 0.0
        %5633 = vmatpush.msra.mxu0 0.0
        %5634 = vmatpush.msra.mxu0 0.0
        %5635 = vmatpush.msra.mxu0 %v5574
        %5636 = vmatpush.msra.mxu0 %v5573
        %5637 = vmatpush.msra.mxu0 %v5572
        %5638 = vmatpush.msra.mxu0 %v5571
        %5639 = vmatmul.f32.gmra.mxu0 %v5576
        %v5640 = vpop.f32.mrf.mxu0
        %v5641 = vadd.f32 0.0, %v5640
        %5642 = vmatmul.f32.gmra.mxu0 %v5579
        %v5643 = vpop.f32.mrf.mxu0
        %v5644 = vadd.f32 0.0, %v5643
        %5645 = vmatmul.f32.gmra.mxu0 %v5582
        %v5646 = vpop.f32.mrf.mxu0
        %v5647 = vadd.f32 0.0, %v5646
        %5648 = vmatmul.f32.gmra.mxu0 %v5585
        %v5649 = vpop.f32.mrf.mxu0
        %v5650 = vadd.f32 0.0, %v5649
        %5651 = vmatmul.f32.gmra.mxu0 %v5588
        %v5652 = vpop.f32.mrf.mxu0
        %v5653 = vadd.f32 0.0, %v5652
        %5654 = vmatmul.f32.gmra.mxu0 %v5591
        %v5655 = vpop.f32.mrf.mxu0
        %v5656 = vadd.f32 0.0, %v5655
        %5657 = vmatmul.f32.gmra.mxu0 %v5594
        %v5658 = vpop.f32.mrf.mxu0
        %v5659 = vadd.f32 0.0, %v5658
        %5660 = vmatmul.f32.gmra.mxu0 %v5597
        %v5661 = vpop.f32.mrf.mxu0
        %v5662 = vadd.f32 0.0, %v5661
        %5663 = vmatmul.f32.gmra.mxu0 %v5600
        %v5664 = vpop.f32.mrf.mxu0
        %v5665 = vadd.f32 0.0, %v5664
        %5666 = vmatmul.f32.gmra.mxu0 %v5603
        %v5667 = vpop.f32.mrf.mxu0
        %v5668 = vadd.f32 0.0, %v5667
        %5669 = vmatmul.f32.gmra.mxu0 %v5606
        %v5670 = vpop.f32.mrf.mxu0
        %v5671 = vadd.f32 0.0, %v5670
        %5672 = vmatmul.f32.gmra.mxu0 %v5609
        %v5673 = vpop.f32.mrf.mxu0
        %v5674 = vadd.f32 0.0, %v5673
        %5675 = vmatmul.f32.gmra.mxu0 %v5612
        %v5676 = vpop.f32.mrf.mxu0
        %v5677 = vadd.f32 0.0, %v5676
        %5678 = vmatmul.f32.gmra.mxu0 %v5615
        %v5679 = vpop.f32.mrf.mxu0
        %v5680 = vadd.f32 0.0, %v5679
        %5681 = vmatmul.f32.gmra.mxu0 %v5618
        %v5682 = vpop.f32.mrf.mxu0
        %v5683 = vadd.f32 0.0, %v5682
        %5684 = vmatmul.f32.gmra.mxu0 %v5621
        %v5685 = vpop.f32.mrf.mxu0
        %v5686 = vadd.f32 0.0, %v5685
        %5687 = vdwg.mxu0
        %v5688 = vadd.f32 %v5508, %v5641
        %v5689 = vadd.f32 %v5511, %v5644
        %v5690 = vadd.f32 %v5514, %v5647
        %v5691 = vadd.f32 %v5517, %v5650
        %v5692 = vadd.f32 %v5520, %v5653
        %v5693 = vadd.f32 %v5523, %v5656
        %v5694 = vadd.f32 %v5526, %v5659
        %v5695 = vadd.f32 %v5529, %v5662
        %v5696 = vadd.f32 %v5532, %v5665
        %v5697 = vadd.f32 %v5535, %v5668
        %v5698 = vadd.f32 %v5538, %v5671
        %v5699 = vadd.f32 %v5541, %v5674
        %v5700 = vadd.f32 %v5544, %v5677
        %v5701 = vadd.f32 %v5547, %v5680
        %v5702 = vadd.f32 %v5550, %v5683
        %v5703 = vadd.f32 %v5553, %v5686
        %v5704 = vld [vmem:[#allocation2 + $0x1a0] sm:$0xff]
        %v5705 = vld [vmem:[#allocation2 + $0x1a8] sm:$0xff]
        %v5706 = vld [vmem:[#allocation2 + $0x1b0] sm:$0xff]
        %v5707 = vld [vmem:[#allocation2 + $0x1b8] sm:$0xff]
        %v5708 = vld [vmem:[#allocation2 + $0x1c0] sm:$0xff]
        %v5709 = vld [vmem:[#allocation2 + $0x1c8] sm:$0xff]
        %v5710 = vld [vmem:[#allocation2 + $0x1d0] sm:$0xff]
        %v5711 = vld [vmem:[#allocation2 + $0x1d8] sm:$0xff]
        %v5712 = vld [vmem:[#allocation2 + $0x1e0] sm:$0xff]
        %v5713 = vld [vmem:[#allocation2 + $0x1e8] sm:$0xff]
        %v5714 = vld [vmem:[#allocation2 + $0x1f0] sm:$0xff]
        %v5715 = vld [vmem:[#allocation2 + $0x1f8] sm:$0xff]
        %v5716 = vld [vmem:[#allocation2 + $0x200] sm:$0xff]
        %v5717 = vld [vmem:[#allocation2 + $0x208] sm:$0xff]
        %v5718 = vld [vmem:[#allocation2 + $0x210] sm:$0xff]
        %v5719 = vld [vmem:[#allocation2 + $0x218] sm:$0xff]
        %v5720 = vld [vmem:[%s1630] sm:$0xff]
        %v5721 = vld [vmem:[%s1630 + $0x8] sm:$0xff]
        %v5722 = vld [vmem:[%s1630 + $0x10] sm:$0xff]
        %v5723 = vld [vmem:[%s1630 + $0x18] sm:$0xff]
        %v5725 = vsel %vm1092, %v5704, 0
        %v5728 = vsel %vm1092, %v5705, 0
        %v5731 = vsel %vm1092, %v5706, 0
        %v5734 = vsel %vm1092, %v5707, 0
        %v5737 = vsel %vm1092, %v5708, 0
        %v5740 = vsel %vm1092, %v5709, 0
        %v5743 = vsel %vm1092, %v5710, 0
        %v5746 = vsel %vm1092, %v5711, 0
        %v5749 = vsel %vm1092, %v5712, 0
        %v5752 = vsel %vm1092, %v5713, 0
        %v5755 = vsel %vm1092, %v5714, 0
        %v5758 = vsel %vm1092, %v5715, 0
        %v5761 = vsel %vm1092, %v5716, 0
        %v5764 = vsel %vm1092, %v5717, 0
        %v5767 = vsel %vm1092, %v5718, 0
        %v5770 = vsel %vm1092, %v5719, 0
        %5772 = vmatpush.msra.mxu0 0.0
        %5773 = vmatpush.msra.mxu0 0.0
        %5774 = vmatpush.msra.mxu0 0.0
        %5775 = vmatpush.msra.mxu0 0.0
        %5776 = vmatpush.msra.mxu0 0.0
        %5777 = vmatpush.msra.mxu0 0.0
        %5778 = vmatpush.msra.mxu0 0.0
        %5779 = vmatpush.msra.mxu0 0.0
        %5780 = vmatpush.msra.mxu0 0.0
        %5781 = vmatpush.msra.mxu0 0.0
        %5782 = vmatpush.msra.mxu0 0.0
        %5783 = vmatpush.msra.mxu0 0.0
        %5784 = vmatpush.msra.mxu0 %v5723
        %5785 = vmatpush.msra.mxu0 %v5722
        %5786 = vmatpush.msra.mxu0 %v5721
        %5787 = vmatpush.msra.mxu0 %v5720
        %5788 = vmatmul.f32.gmra.mxu0 %v5725
        %v5789 = vpop.f32.mrf.mxu0
        %v5790 = vadd.f32 0.0, %v5789
        %5791 = vmatmul.f32.gmra.mxu0 %v5728
        %v5792 = vpop.f32.mrf.mxu0
        %v5793 = vadd.f32 0.0, %v5792
        %5794 = vmatmul.f32.gmra.mxu0 %v5731
        %v5795 = vpop.f32.mrf.mxu0
        %v5796 = vadd.f32 0.0, %v5795
        %5797 = vmatmul.f32.gmra.mxu0 %v5734
        %v5798 = vpop.f32.mrf.mxu0
        %v5799 = vadd.f32 0.0, %v5798
        %5800 = vmatmul.f32.gmra.mxu0 %v5737
        %v5801 = vpop.f32.mrf.mxu0
        %v5802 = vadd.f32 0.0, %v5801
        %5803 = vmatmul.f32.gmra.mxu0 %v5740
        %v5804 = vpop.f32.mrf.mxu0
        %v5805 = vadd.f32 0.0, %v5804
        %5806 = vmatmul.f32.gmra.mxu0 %v5743
        %v5807 = vpop.f32.mrf.mxu0
        %v5808 = vadd.f32 0.0, %v5807
        %5809 = vmatmul.f32.gmra.mxu0 %v5746
        %v5810 = vpop.f32.mrf.mxu0
        %v5811 = vadd.f32 0.0, %v5810
        %5812 = vmatmul.f32.gmra.mxu0 %v5749
        %v5813 = vpop.f32.mrf.mxu0
        %v5814 = vadd.f32 0.0, %v5813
        %5815 = vmatmul.f32.gmra.mxu0 %v5752
        %v5816 = vpop.f32.mrf.mxu0
        %v5817 = vadd.f32 0.0, %v5816
        %5818 = vmatmul.f32.gmra.mxu0 %v5755
        %v5819 = vpop.f32.mrf.mxu0
        %v5820 = vadd.f32 0.0, %v5819
        %5821 = vmatmul.f32.gmra.mxu0 %v5758
        %v5822 = vpop.f32.mrf.mxu0
        %v5823 = vadd.f32 0.0, %v5822
        %5824 = vmatmul.f32.gmra.mxu0 %v5761
        %v5825 = vpop.f32.mrf.mxu0
        %v5826 = vadd.f32 0.0, %v5825
        %5827 = vmatmul.f32.gmra.mxu0 %v5764
        %v5828 = vpop.f32.mrf.mxu0
        %v5829 = vadd.f32 0.0, %v5828
        %5830 = vmatmul.f32.gmra.mxu0 %v5767
        %v5831 = vpop.f32.mrf.mxu0
        %v5832 = vadd.f32 0.0, %v5831
        %5833 = vmatmul.f32.gmra.mxu0 %v5770
        %v5834 = vpop.f32.mrf.mxu0
        %v5835 = vadd.f32 0.0, %v5834
        %5836 = vdwg.mxu0
        %v5837 = vadd.f32 %v5688, %v5790
        %v5838 = vadd.f32 %v5689, %v5793
        %v5839 = vadd.f32 %v5690, %v5796
        %v5840 = vadd.f32 %v5691, %v5799
        %v5841 = vadd.f32 %v5692, %v5802
        %v5842 = vadd.f32 %v5693, %v5805
        %v5843 = vadd.f32 %v5694, %v5808
        %v5844 = vadd.f32 %v5695, %v5811
        %v5845 = vadd.f32 %v5696, %v5814
        %v5846 = vadd.f32 %v5697, %v5817
        %v5847 = vadd.f32 %v5698, %v5820
        %v5848 = vadd.f32 %v5699, %v5823
        %v5849 = vadd.f32 %v5700, %v5826
        %v5850 = vadd.f32 %v5701, %v5829
        %v5851 = vadd.f32 %v5702, %v5832
        %v5852 = vadd.f32 %v5703, %v5835
        %v5853 = vld [vmem:[#allocation2 + $0x1a1] sm:$0xff]
        %v5854 = vld [vmem:[#allocation2 + $0x1a9] sm:$0xff]
        %v5855 = vld [vmem:[#allocation2 + $0x1b1] sm:$0xff]
        %v5856 = vld [vmem:[#allocation2 + $0x1b9] sm:$0xff]
        %v5857 = vld [vmem:[#allocation2 + $0x1c1] sm:$0xff]
        %v5858 = vld [vmem:[#allocation2 + $0x1c9] sm:$0xff]
        %v5859 = vld [vmem:[#allocation2 + $0x1d1] sm:$0xff]
        %v5860 = vld [vmem:[#allocation2 + $0x1d9] sm:$0xff]
        %v5861 = vld [vmem:[#allocation2 + $0x1e1] sm:$0xff]
        %v5862 = vld [vmem:[#allocation2 + $0x1e9] sm:$0xff]
        %v5863 = vld [vmem:[#allocation2 + $0x1f1] sm:$0xff]
        %v5864 = vld [vmem:[#allocation2 + $0x1f9] sm:$0xff]
        %v5865 = vld [vmem:[#allocation2 + $0x201] sm:$0xff]
        %v5866 = vld [vmem:[#allocation2 + $0x209] sm:$0xff]
        %v5867 = vld [vmem:[#allocation2 + $0x211] sm:$0xff]
        %v5868 = vld [vmem:[#allocation2 + $0x219] sm:$0xff]
        %v5869 = vld [vmem:[%s1780] sm:$0xff]
        %v5870 = vld [vmem:[%s1780 + $0x8] sm:$0xff]
        %v5871 = vld [vmem:[%s1780 + $0x10] sm:$0xff]
        %v5872 = vld [vmem:[%s1780 + $0x18] sm:$0xff]
        %v5874 = vsel %vm1092, %v5853, 0
        %v5877 = vsel %vm1092, %v5854, 0
        %v5880 = vsel %vm1092, %v5855, 0
        %v5883 = vsel %vm1092, %v5856, 0
        %v5886 = vsel %vm1092, %v5857, 0
        %v5889 = vsel %vm1092, %v5858, 0
        %v5892 = vsel %vm1092, %v5859, 0
        %v5895 = vsel %vm1092, %v5860, 0
        %v5898 = vsel %vm1092, %v5861, 0
        %v5901 = vsel %vm1092, %v5862, 0
        %v5904 = vsel %vm1092, %v5863, 0
        %v5907 = vsel %vm1092, %v5864, 0
        %v5910 = vsel %vm1092, %v5865, 0
        %v5913 = vsel %vm1092, %v5866, 0
        %v5916 = vsel %vm1092, %v5867, 0
        %v5919 = vsel %vm1092, %v5868, 0
        %5921 = vmatpush.msra.mxu0 0.0
        %5922 = vmatpush.msra.mxu0 0.0
        %5923 = vmatpush.msra.mxu0 0.0
        %5924 = vmatpush.msra.mxu0 0.0
        %5925 = vmatpush.msra.mxu0 0.0
        %5926 = vmatpush.msra.mxu0 0.0
        %5927 = vmatpush.msra.mxu0 0.0
        %5928 = vmatpush.msra.mxu0 0.0
        %5929 = vmatpush.msra.mxu0 0.0
        %5930 = vmatpush.msra.mxu0 0.0
        %5931 = vmatpush.msra.mxu0 0.0
        %5932 = vmatpush.msra.mxu0 0.0
        %5933 = vmatpush.msra.mxu0 %v5872
        %5934 = vmatpush.msra.mxu0 %v5871
        %5935 = vmatpush.msra.mxu0 %v5870
        %5936 = vmatpush.msra.mxu0 %v5869
        %5937 = vmatmul.f32.gmra.mxu0 %v5874
        %v5938 = vpop.f32.mrf.mxu0
        %v5939 = vadd.f32 0.0, %v5938
        %5940 = vmatmul.f32.gmra.mxu0 %v5877
        %v5941 = vpop.f32.mrf.mxu0
        %v5942 = vadd.f32 0.0, %v5941
        %5943 = vmatmul.f32.gmra.mxu0 %v5880
        %v5944 = vpop.f32.mrf.mxu0
        %v5945 = vadd.f32 0.0, %v5944
        %5946 = vmatmul.f32.gmra.mxu0 %v5883
        %v5947 = vpop.f32.mrf.mxu0
        %v5948 = vadd.f32 0.0, %v5947
        %5949 = vmatmul.f32.gmra.mxu0 %v5886
        %v5950 = vpop.f32.mrf.mxu0
        %v5951 = vadd.f32 0.0, %v5950
        %5952 = vmatmul.f32.gmra.mxu0 %v5889
        %v5953 = vpop.f32.mrf.mxu0
        %v5954 = vadd.f32 0.0, %v5953
        %5955 = vmatmul.f32.gmra.mxu0 %v5892
        %v5956 = vpop.f32.mrf.mxu0
        %v5957 = vadd.f32 0.0, %v5956
        %5958 = vmatmul.f32.gmra.mxu0 %v5895
        %v5959 = vpop.f32.mrf.mxu0
        %v5960 = vadd.f32 0.0, %v5959
        %5961 = vmatmul.f32.gmra.mxu0 %v5898
        %v5962 = vpop.f32.mrf.mxu0
        %v5963 = vadd.f32 0.0, %v5962
        %5964 = vmatmul.f32.gmra.mxu0 %v5901
        %v5965 = vpop.f32.mrf.mxu0
        %v5966 = vadd.f32 0.0, %v5965
        %5967 = vmatmul.f32.gmra.mxu0 %v5904
        %v5968 = vpop.f32.mrf.mxu0
        %v5969 = vadd.f32 0.0, %v5968
        %5970 = vmatmul.f32.gmra.mxu0 %v5907
        %v5971 = vpop.f32.mrf.mxu0
        %v5972 = vadd.f32 0.0, %v5971
        %5973 = vmatmul.f32.gmra.mxu0 %v5910
        %v5974 = vpop.f32.mrf.mxu0
        %v5975 = vadd.f32 0.0, %v5974
        %5976 = vmatmul.f32.gmra.mxu0 %v5913
        %v5977 = vpop.f32.mrf.mxu0
        %v5978 = vadd.f32 0.0, %v5977
        %5979 = vmatmul.f32.gmra.mxu0 %v5916
        %v5980 = vpop.f32.mrf.mxu0
        %v5981 = vadd.f32 0.0, %v5980
        %5982 = vmatmul.f32.gmra.mxu0 %v5919
        %v5983 = vpop.f32.mrf.mxu0
        %v5984 = vadd.f32 0.0, %v5983
        %5985 = vdwg.mxu0
        %v5986 = vadd.f32 %v5837, %v5939
        %v5987 = vadd.f32 %v5838, %v5942
        %v5988 = vadd.f32 %v5839, %v5945
        %v5989 = vadd.f32 %v5840, %v5948
        %v5990 = vadd.f32 %v5841, %v5951
        %v5991 = vadd.f32 %v5842, %v5954
        %v5992 = vadd.f32 %v5843, %v5957
        %v5993 = vadd.f32 %v5844, %v5960
        %v5994 = vadd.f32 %v5845, %v5963
        %v5995 = vadd.f32 %v5846, %v5966
        %v5996 = vadd.f32 %v5847, %v5969
        %v5997 = vadd.f32 %v5848, %v5972
        %v5998 = vadd.f32 %v5849, %v5975
        %v5999 = vadd.f32 %v5850, %v5978
        %v6000 = vadd.f32 %v5851, %v5981
        %v6001 = vadd.f32 %v5852, %v5984
        %v6002 = vld [vmem:[#allocation2 + $0x1a2] sm:$0xff]
        %v6003 = vld [vmem:[#allocation2 + $0x1aa] sm:$0xff]
        %v6004 = vld [vmem:[#allocation2 + $0x1b2] sm:$0xff]
        %v6005 = vld [vmem:[#allocation2 + $0x1ba] sm:$0xff]
        %v6006 = vld [vmem:[#allocation2 + $0x1c2] sm:$0xff]
        %v6007 = vld [vmem:[#allocation2 + $0x1ca] sm:$0xff]
        %v6008 = vld [vmem:[#allocation2 + $0x1d2] sm:$0xff]
        %v6009 = vld [vmem:[#allocation2 + $0x1da] sm:$0xff]
        %v6010 = vld [vmem:[#allocation2 + $0x1e2] sm:$0xff]
        %v6011 = vld [vmem:[#allocation2 + $0x1ea] sm:$0xff]
        %v6012 = vld [vmem:[#allocation2 + $0x1f2] sm:$0xff]
        %v6013 = vld [vmem:[#allocation2 + $0x1fa] sm:$0xff]
        %v6014 = vld [vmem:[#allocation2 + $0x202] sm:$0xff]
        %v6015 = vld [vmem:[#allocation2 + $0x20a] sm:$0xff]
        %v6016 = vld [vmem:[#allocation2 + $0x212] sm:$0xff]
        %v6017 = vld [vmem:[#allocation2 + $0x21a] sm:$0xff]
        %v6018 = vld [vmem:[%s1930] sm:$0xff]
        %v6019 = vld [vmem:[%s1930 + $0x8] sm:$0xff]
        %v6020 = vld [vmem:[%s1930 + $0x10] sm:$0xff]
        %v6021 = vld [vmem:[%s1930 + $0x18] sm:$0xff]
        %v6023 = vsel %vm1092, %v6002, 0
        %v6026 = vsel %vm1092, %v6003, 0
        %v6029 = vsel %vm1092, %v6004, 0
        %v6032 = vsel %vm1092, %v6005, 0
        %v6035 = vsel %vm1092, %v6006, 0
        %v6038 = vsel %vm1092, %v6007, 0
        %v6041 = vsel %vm1092, %v6008, 0
        %v6044 = vsel %vm1092, %v6009, 0
        %v6047 = vsel %vm1092, %v6010, 0
        %v6050 = vsel %vm1092, %v6011, 0
        %v6053 = vsel %vm1092, %v6012, 0
        %v6056 = vsel %vm1092, %v6013, 0
        %v6059 = vsel %vm1092, %v6014, 0
        %v6062 = vsel %vm1092, %v6015, 0
        %v6065 = vsel %vm1092, %v6016, 0
        %v6068 = vsel %vm1092, %v6017, 0
        %6070 = vmatpush.msra.mxu0 0.0
        %6071 = vmatpush.msra.mxu0 0.0
        %6072 = vmatpush.msra.mxu0 0.0
        %6073 = vmatpush.msra.mxu0 0.0
        %6074 = vmatpush.msra.mxu0 0.0
        %6075 = vmatpush.msra.mxu0 0.0
        %6076 = vmatpush.msra.mxu0 0.0
        %6077 = vmatpush.msra.mxu0 0.0
        %6078 = vmatpush.msra.mxu0 0.0
        %6079 = vmatpush.msra.mxu0 0.0
        %6080 = vmatpush.msra.mxu0 0.0
        %6081 = vmatpush.msra.mxu0 0.0
        %6082 = vmatpush.msra.mxu0 %v6021
        %6083 = vmatpush.msra.mxu0 %v6020
        %6084 = vmatpush.msra.mxu0 %v6019
        %6085 = vmatpush.msra.mxu0 %v6018
        %6086 = vmatmul.f32.gmra.mxu0 %v6023
        %v6087 = vpop.f32.mrf.mxu0
        %v6088 = vadd.f32 0.0, %v6087
        %6089 = vmatmul.f32.gmra.mxu0 %v6026
        %v6090 = vpop.f32.mrf.mxu0
        %v6091 = vadd.f32 0.0, %v6090
        %6092 = vmatmul.f32.gmra.mxu0 %v6029
        %v6093 = vpop.f32.mrf.mxu0
        %v6094 = vadd.f32 0.0, %v6093
        %6095 = vmatmul.f32.gmra.mxu0 %v6032
        %v6096 = vpop.f32.mrf.mxu0
        %v6097 = vadd.f32 0.0, %v6096
        %6098 = vmatmul.f32.gmra.mxu0 %v6035
        %v6099 = vpop.f32.mrf.mxu0
        %v6100 = vadd.f32 0.0, %v6099
        %6101 = vmatmul.f32.gmra.mxu0 %v6038
        %v6102 = vpop.f32.mrf.mxu0
        %v6103 = vadd.f32 0.0, %v6102
        %6104 = vmatmul.f32.gmra.mxu0 %v6041
        %v6105 = vpop.f32.mrf.mxu0
        %v6106 = vadd.f32 0.0, %v6105
        %6107 = vmatmul.f32.gmra.mxu0 %v6044
        %v6108 = vpop.f32.mrf.mxu0
        %v6109 = vadd.f32 0.0, %v6108
        %6110 = vmatmul.f32.gmra.mxu0 %v6047
        %v6111 = vpop.f32.mrf.mxu0
        %v6112 = vadd.f32 0.0, %v6111
        %6113 = vmatmul.f32.gmra.mxu0 %v6050
        %v6114 = vpop.f32.mrf.mxu0
        %v6115 = vadd.f32 0.0, %v6114
        %6116 = vmatmul.f32.gmra.mxu0 %v6053
        %v6117 = vpop.f32.mrf.mxu0
        %v6118 = vadd.f32 0.0, %v6117
        %6119 = vmatmul.f32.gmra.mxu0 %v6056
        %v6120 = vpop.f32.mrf.mxu0
        %v6121 = vadd.f32 0.0, %v6120
        %6122 = vmatmul.f32.gmra.mxu0 %v6059
        %v6123 = vpop.f32.mrf.mxu0
        %v6124 = vadd.f32 0.0, %v6123
        %6125 = vmatmul.f32.gmra.mxu0 %v6062
        %v6126 = vpop.f32.mrf.mxu0
        %v6127 = vadd.f32 0.0, %v6126
        %6128 = vmatmul.f32.gmra.mxu0 %v6065
        %v6129 = vpop.f32.mrf.mxu0
        %v6130 = vadd.f32 0.0, %v6129
        %6131 = vmatmul.f32.gmra.mxu0 %v6068
        %v6132 = vpop.f32.mrf.mxu0
        %v6133 = vadd.f32 0.0, %v6132
        %6134 = vdwg.mxu0
        %v6135 = vadd.f32 %v5986, %v6088
        %v6136 = vadd.f32 %v5987, %v6091
        %v6137 = vadd.f32 %v5988, %v6094
        %v6138 = vadd.f32 %v5989, %v6097
        %v6139 = vadd.f32 %v5990, %v6100
        %v6140 = vadd.f32 %v5991, %v6103
        %v6141 = vadd.f32 %v5992, %v6106
        %v6142 = vadd.f32 %v5993, %v6109
        %v6143 = vadd.f32 %v5994, %v6112
        %v6144 = vadd.f32 %v5995, %v6115
        %v6145 = vadd.f32 %v5996, %v6118
        %v6146 = vadd.f32 %v5997, %v6121
        %v6147 = vadd.f32 %v5998, %v6124
        %v6148 = vadd.f32 %v5999, %v6127
        %v6149 = vadd.f32 %v6000, %v6130
        %v6150 = vadd.f32 %v6001, %v6133
        %v6151 = vld [vmem:[#allocation2 + $0x1c0] sm:$0xff]
        %v6152 = vld [vmem:[#allocation2 + $0x1c8] sm:$0xff]
        %v6153 = vld [vmem:[#allocation2 + $0x1d0] sm:$0xff]
        %v6154 = vld [vmem:[#allocation2 + $0x1d8] sm:$0xff]
        %v6155 = vld [vmem:[#allocation2 + $0x1e0] sm:$0xff]
        %v6156 = vld [vmem:[#allocation2 + $0x1e8] sm:$0xff]
        %v6157 = vld [vmem:[#allocation2 + $0x1f0] sm:$0xff]
        %v6158 = vld [vmem:[#allocation2 + $0x1f8] sm:$0xff]
        %v6159 = vld [vmem:[#allocation2 + $0x200] sm:$0xff]
        %v6160 = vld [vmem:[#allocation2 + $0x208] sm:$0xff]
        %v6161 = vld [vmem:[#allocation2 + $0x210] sm:$0xff]
        %v6162 = vld [vmem:[#allocation2 + $0x218] sm:$0xff]
        %v6163 = vld [vmem:[#allocation2 + $0x220] sm:$0xff]
        %v6164 = vld [vmem:[#allocation2 + $0x228] sm:$0xff]
        %v6165 = vld [vmem:[#allocation2 + $0x230] sm:$0xff]
        %v6166 = vld [vmem:[#allocation2 + $0x238] sm:$0xff]
        %v6167 = vld [vmem:[%s2080] sm:$0xff]
        %v6168 = vld [vmem:[%s2080 + $0x8] sm:$0xff]
        %v6169 = vld [vmem:[%s2080 + $0x10] sm:$0xff]
        %v6170 = vld [vmem:[%s2080 + $0x18] sm:$0xff]
        %v6172 = vsel %vm1092, %v6151, 0
        %v6175 = vsel %vm1092, %v6152, 0
        %v6178 = vsel %vm1092, %v6153, 0
        %v6181 = vsel %vm1092, %v6154, 0
        %v6184 = vsel %vm1092, %v6155, 0
        %v6187 = vsel %vm1092, %v6156, 0
        %v6190 = vsel %vm1092, %v6157, 0
        %v6193 = vsel %vm1092, %v6158, 0
        %v6196 = vsel %vm1092, %v6159, 0
        %v6199 = vsel %vm1092, %v6160, 0
        %v6202 = vsel %vm1092, %v6161, 0
        %v6205 = vsel %vm1092, %v6162, 0
        %v6208 = vsel %vm1092, %v6163, 0
        %v6211 = vsel %vm1092, %v6164, 0
        %v6214 = vsel %vm1092, %v6165, 0
        %v6217 = vsel %vm1092, %v6166, 0
        %6219 = vmatpush.msra.mxu0 0.0
        %6220 = vmatpush.msra.mxu0 0.0
        %6221 = vmatpush.msra.mxu0 0.0
        %6222 = vmatpush.msra.mxu0 0.0
        %6223 = vmatpush.msra.mxu0 0.0
        %6224 = vmatpush.msra.mxu0 0.0
        %6225 = vmatpush.msra.mxu0 0.0
        %6226 = vmatpush.msra.mxu0 0.0
        %6227 = vmatpush.msra.mxu0 0.0
        %6228 = vmatpush.msra.mxu0 0.0
        %6229 = vmatpush.msra.mxu0 0.0
        %6230 = vmatpush.msra.mxu0 0.0
        %6231 = vmatpush.msra.mxu0 %v6170
        %6232 = vmatpush.msra.mxu0 %v6169
        %6233 = vmatpush.msra.mxu0 %v6168
        %6234 = vmatpush.msra.mxu0 %v6167
        %6235 = vmatmul.f32.gmra.mxu0 %v6172
        %v6236 = vpop.f32.mrf.mxu0
        %v6237 = vadd.f32 0.0, %v6236
        %6238 = vmatmul.f32.gmra.mxu0 %v6175
        %v6239 = vpop.f32.mrf.mxu0
        %v6240 = vadd.f32 0.0, %v6239
        %6241 = vmatmul.f32.gmra.mxu0 %v6178
        %v6242 = vpop.f32.mrf.mxu0
        %v6243 = vadd.f32 0.0, %v6242
        %6244 = vmatmul.f32.gmra.mxu0 %v6181
        %v6245 = vpop.f32.mrf.mxu0
        %v6246 = vadd.f32 0.0, %v6245
        %6247 = vmatmul.f32.gmra.mxu0 %v6184
        %v6248 = vpop.f32.mrf.mxu0
        %v6249 = vadd.f32 0.0, %v6248
        %6250 = vmatmul.f32.gmra.mxu0 %v6187
        %v6251 = vpop.f32.mrf.mxu0
        %v6252 = vadd.f32 0.0, %v6251
        %6253 = vmatmul.f32.gmra.mxu0 %v6190
        %v6254 = vpop.f32.mrf.mxu0
        %v6255 = vadd.f32 0.0, %v6254
        %6256 = vmatmul.f32.gmra.mxu0 %v6193
        %v6257 = vpop.f32.mrf.mxu0
        %v6258 = vadd.f32 0.0, %v6257
        %6259 = vmatmul.f32.gmra.mxu0 %v6196
        %v6260 = vpop.f32.mrf.mxu0
        %v6261 = vadd.f32 0.0, %v6260
        %6262 = vmatmul.f32.gmra.mxu0 %v6199
        %v6263 = vpop.f32.mrf.mxu0
        %v6264 = vadd.f32 0.0, %v6263
        %6265 = vmatmul.f32.gmra.mxu0 %v6202
        %v6266 = vpop.f32.mrf.mxu0
        %v6267 = vadd.f32 0.0, %v6266
        %6268 = vmatmul.f32.gmra.mxu0 %v6205
        %v6269 = vpop.f32.mrf.mxu0
        %v6270 = vadd.f32 0.0, %v6269
        %6271 = vmatmul.f32.gmra.mxu0 %v6208
        %v6272 = vpop.f32.mrf.mxu0
        %v6273 = vadd.f32 0.0, %v6272
        %6274 = vmatmul.f32.gmra.mxu0 %v6211
        %v6275 = vpop.f32.mrf.mxu0
        %v6276 = vadd.f32 0.0, %v6275
        %6277 = vmatmul.f32.gmra.mxu0 %v6214
        %v6278 = vpop.f32.mrf.mxu0
        %v6279 = vadd.f32 0.0, %v6278
        %6280 = vmatmul.f32.gmra.mxu0 %v6217
        %v6281 = vpop.f32.mrf.mxu0
        %v6282 = vadd.f32 0.0, %v6281
        %6283 = vdwg.mxu0
        %v6284 = vadd.f32 %v6135, %v6237
        %v6285 = vadd.f32 %v6136, %v6240
        %v6286 = vadd.f32 %v6137, %v6243
        %v6287 = vadd.f32 %v6138, %v6246
        %v6288 = vadd.f32 %v6139, %v6249
        %v6289 = vadd.f32 %v6140, %v6252
        %v6290 = vadd.f32 %v6141, %v6255
        %v6291 = vadd.f32 %v6142, %v6258
        %v6292 = vadd.f32 %v6143, %v6261
        %v6293 = vadd.f32 %v6144, %v6264
        %v6294 = vadd.f32 %v6145, %v6267
        %v6295 = vadd.f32 %v6146, %v6270
        %v6296 = vadd.f32 %v6147, %v6273
        %v6297 = vadd.f32 %v6148, %v6276
        %v6298 = vadd.f32 %v6149, %v6279
        %v6299 = vadd.f32 %v6150, %v6282
        %v6300 = vld [vmem:[#allocation2 + $0x1c1] sm:$0xff]
        %v6301 = vld [vmem:[#allocation2 + $0x1c9] sm:$0xff]
        %v6302 = vld [vmem:[#allocation2 + $0x1d1] sm:$0xff]
        %v6303 = vld [vmem:[#allocation2 + $0x1d9] sm:$0xff]
        %v6304 = vld [vmem:[#allocation2 + $0x1e1] sm:$0xff]
        %v6305 = vld [vmem:[#allocation2 + $0x1e9] sm:$0xff]
        %v6306 = vld [vmem:[#allocation2 + $0x1f1] sm:$0xff]
        %v6307 = vld [vmem:[#allocation2 + $0x1f9] sm:$0xff]
        %v6308 = vld [vmem:[#allocation2 + $0x201] sm:$0xff]
        %v6309 = vld [vmem:[#allocation2 + $0x209] sm:$0xff]
        %v6310 = vld [vmem:[#allocation2 + $0x211] sm:$0xff]
        %v6311 = vld [vmem:[#allocation2 + $0x219] sm:$0xff]
        %v6312 = vld [vmem:[#allocation2 + $0x221] sm:$0xff]
        %v6313 = vld [vmem:[#allocation2 + $0x229] sm:$0xff]
        %v6314 = vld [vmem:[#allocation2 + $0x231] sm:$0xff]
        %v6315 = vld [vmem:[#allocation2 + $0x239] sm:$0xff]
        %v6316 = vld [vmem:[%s2230] sm:$0xff]
        %v6317 = vld [vmem:[%s2230 + $0x8] sm:$0xff]
        %v6318 = vld [vmem:[%s2230 + $0x10] sm:$0xff]
        %v6319 = vld [vmem:[%s2230 + $0x18] sm:$0xff]
        %v6321 = vsel %vm1092, %v6300, 0
        %v6324 = vsel %vm1092, %v6301, 0
        %v6327 = vsel %vm1092, %v6302, 0
        %v6330 = vsel %vm1092, %v6303, 0
        %v6333 = vsel %vm1092, %v6304, 0
        %v6336 = vsel %vm1092, %v6305, 0
        %v6339 = vsel %vm1092, %v6306, 0
        %v6342 = vsel %vm1092, %v6307, 0
        %v6345 = vsel %vm1092, %v6308, 0
        %v6348 = vsel %vm1092, %v6309, 0
        %v6351 = vsel %vm1092, %v6310, 0
        %v6354 = vsel %vm1092, %v6311, 0
        %v6357 = vsel %vm1092, %v6312, 0
        %v6360 = vsel %vm1092, %v6313, 0
        %v6363 = vsel %vm1092, %v6314, 0
        %v6366 = vsel %vm1092, %v6315, 0
        %6368 = vmatpush.msra.mxu0 0.0
        %6369 = vmatpush.msra.mxu0 0.0
        %6370 = vmatpush.msra.mxu0 0.0
        %6371 = vmatpush.msra.mxu0 0.0
        %6372 = vmatpush.msra.mxu0 0.0
        %6373 = vmatpush.msra.mxu0 0.0
        %6374 = vmatpush.msra.mxu0 0.0
        %6375 = vmatpush.msra.mxu0 0.0
        %6376 = vmatpush.msra.mxu0 0.0
        %6377 = vmatpush.msra.mxu0 0.0
        %6378 = vmatpush.msra.mxu0 0.0
        %6379 = vmatpush.msra.mxu0 0.0
        %6380 = vmatpush.msra.mxu0 %v6319
        %6381 = vmatpush.msra.mxu0 %v6318
        %6382 = vmatpush.msra.mxu0 %v6317
        %6383 = vmatpush.msra.mxu0 %v6316
        %6384 = vmatmul.f32.gmra.mxu0 %v6321
        %v6385 = vpop.f32.mrf.mxu0
        %v6386 = vadd.f32 0.0, %v6385
        %6387 = vmatmul.f32.gmra.mxu0 %v6324
        %v6388 = vpop.f32.mrf.mxu0
        %v6389 = vadd.f32 0.0, %v6388
        %6390 = vmatmul.f32.gmra.mxu0 %v6327
        %v6391 = vpop.f32.mrf.mxu0
        %v6392 = vadd.f32 0.0, %v6391
        %6393 = vmatmul.f32.gmra.mxu0 %v6330
        %v6394 = vpop.f32.mrf.mxu0
        %v6395 = vadd.f32 0.0, %v6394
        %6396 = vmatmul.f32.gmra.mxu0 %v6333
        %v6397 = vpop.f32.mrf.mxu0
        %v6398 = vadd.f32 0.0, %v6397
        %6399 = vmatmul.f32.gmra.mxu0 %v6336
        %v6400 = vpop.f32.mrf.mxu0
        %v6401 = vadd.f32 0.0, %v6400
        %6402 = vmatmul.f32.gmra.mxu0 %v6339
        %v6403 = vpop.f32.mrf.mxu0
        %v6404 = vadd.f32 0.0, %v6403
        %6405 = vmatmul.f32.gmra.mxu0 %v6342
        %v6406 = vpop.f32.mrf.mxu0
        %v6407 = vadd.f32 0.0, %v6406
        %6408 = vmatmul.f32.gmra.mxu0 %v6345
        %v6409 = vpop.f32.mrf.mxu0
        %v6410 = vadd.f32 0.0, %v6409
        %6411 = vmatmul.f32.gmra.mxu0 %v6348
        %v6412 = vpop.f32.mrf.mxu0
        %v6413 = vadd.f32 0.0, %v6412
        %6414 = vmatmul.f32.gmra.mxu0 %v6351
        %v6415 = vpop.f32.mrf.mxu0
        %v6416 = vadd.f32 0.0, %v6415
        %6417 = vmatmul.f32.gmra.mxu0 %v6354
        %v6418 = vpop.f32.mrf.mxu0
        %v6419 = vadd.f32 0.0, %v6418
        %6420 = vmatmul.f32.gmra.mxu0 %v6357
        %v6421 = vpop.f32.mrf.mxu0
        %v6422 = vadd.f32 0.0, %v6421
        %6423 = vmatmul.f32.gmra.mxu0 %v6360
        %v6424 = vpop.f32.mrf.mxu0
        %v6425 = vadd.f32 0.0, %v6424
        %6426 = vmatmul.f32.gmra.mxu0 %v6363
        %v6427 = vpop.f32.mrf.mxu0
        %v6428 = vadd.f32 0.0, %v6427
        %6429 = vmatmul.f32.gmra.mxu0 %v6366
        %v6430 = vpop.f32.mrf.mxu0
        %v6431 = vadd.f32 0.0, %v6430
        %6432 = vdwg.mxu0
        %v6433 = vadd.f32 %v6284, %v6386
        %v6434 = vadd.f32 %v6285, %v6389
        %v6435 = vadd.f32 %v6286, %v6392
        %v6436 = vadd.f32 %v6287, %v6395
        %v6437 = vadd.f32 %v6288, %v6398
        %v6438 = vadd.f32 %v6289, %v6401
        %v6439 = vadd.f32 %v6290, %v6404
        %v6440 = vadd.f32 %v6291, %v6407
        %v6441 = vadd.f32 %v6292, %v6410
        %v6442 = vadd.f32 %v6293, %v6413
        %v6443 = vadd.f32 %v6294, %v6416
        %v6444 = vadd.f32 %v6295, %v6419
        %v6445 = vadd.f32 %v6296, %v6422
        %v6446 = vadd.f32 %v6297, %v6425
        %v6447 = vadd.f32 %v6298, %v6428
        %v6448 = vadd.f32 %v6299, %v6431
        %v6449 = vld [vmem:[#allocation2 + $0x1c2] sm:$0xff]
        %v6450 = vld [vmem:[#allocation2 + $0x1ca] sm:$0xff]
        %v6451 = vld [vmem:[#allocation2 + $0x1d2] sm:$0xff]
        %v6452 = vld [vmem:[#allocation2 + $0x1da] sm:$0xff]
        %v6453 = vld [vmem:[#allocation2 + $0x1e2] sm:$0xff]
        %v6454 = vld [vmem:[#allocation2 + $0x1ea] sm:$0xff]
        %v6455 = vld [vmem:[#allocation2 + $0x1f2] sm:$0xff]
        %v6456 = vld [vmem:[#allocation2 + $0x1fa] sm:$0xff]
        %v6457 = vld [vmem:[#allocation2 + $0x202] sm:$0xff]
        %v6458 = vld [vmem:[#allocation2 + $0x20a] sm:$0xff]
        %v6459 = vld [vmem:[#allocation2 + $0x212] sm:$0xff]
        %v6460 = vld [vmem:[#allocation2 + $0x21a] sm:$0xff]
        %v6461 = vld [vmem:[#allocation2 + $0x222] sm:$0xff]
        %v6462 = vld [vmem:[#allocation2 + $0x22a] sm:$0xff]
        %v6463 = vld [vmem:[#allocation2 + $0x232] sm:$0xff]
        %v6464 = vld [vmem:[#allocation2 + $0x23a] sm:$0xff]
        %v6465 = vld [vmem:[%s2380] sm:$0xff]
        %v6466 = vld [vmem:[%s2380 + $0x8] sm:$0xff]
        %v6467 = vld [vmem:[%s2380 + $0x10] sm:$0xff]
        %v6468 = vld [vmem:[%s2380 + $0x18] sm:$0xff]
        %v6470 = vsel %vm1092, %v6449, 0
        %v6473 = vsel %vm1092, %v6450, 0
        %v6476 = vsel %vm1092, %v6451, 0
        %v6479 = vsel %vm1092, %v6452, 0
        %v6482 = vsel %vm1092, %v6453, 0
        %v6485 = vsel %vm1092, %v6454, 0
        %v6488 = vsel %vm1092, %v6455, 0
        %v6491 = vsel %vm1092, %v6456, 0
        %v6494 = vsel %vm1092, %v6457, 0
        %v6497 = vsel %vm1092, %v6458, 0
        %v6500 = vsel %vm1092, %v6459, 0
        %v6503 = vsel %vm1092, %v6460, 0
        %v6506 = vsel %vm1092, %v6461, 0
        %v6509 = vsel %vm1092, %v6462, 0
        %v6512 = vsel %vm1092, %v6463, 0
        %v6515 = vsel %vm1092, %v6464, 0
        %6517 = vmatpush.msra.mxu0 0.0
        %6518 = vmatpush.msra.mxu0 0.0
        %6519 = vmatpush.msra.mxu0 0.0
        %6520 = vmatpush.msra.mxu0 0.0
        %6521 = vmatpush.msra.mxu0 0.0
        %6522 = vmatpush.msra.mxu0 0.0
        %6523 = vmatpush.msra.mxu0 0.0
        %6524 = vmatpush.msra.mxu0 0.0
        %6525 = vmatpush.msra.mxu0 0.0
        %6526 = vmatpush.msra.mxu0 0.0
        %6527 = vmatpush.msra.mxu0 0.0
        %6528 = vmatpush.msra.mxu0 0.0
        %6529 = vmatpush.msra.mxu0 %v6468
        %6530 = vmatpush.msra.mxu0 %v6467
        %6531 = vmatpush.msra.mxu0 %v6466
        %6532 = vmatpush.msra.mxu0 %v6465
        %6533 = vmatmul.f32.gmra.mxu0 %v6470
        %v6534 = vpop.f32.mrf.mxu0
        %v6535 = vadd.f32 0.0, %v6534
        %6536 = vmatmul.f32.gmra.mxu0 %v6473
        %v6537 = vpop.f32.mrf.mxu0
        %v6538 = vadd.f32 0.0, %v6537
        %6539 = vmatmul.f32.gmra.mxu0 %v6476
        %v6540 = vpop.f32.mrf.mxu0
        %v6541 = vadd.f32 0.0, %v6540
        %6542 = vmatmul.f32.gmra.mxu0 %v6479
        %v6543 = vpop.f32.mrf.mxu0
        %v6544 = vadd.f32 0.0, %v6543
        %6545 = vmatmul.f32.gmra.mxu0 %v6482
        %v6546 = vpop.f32.mrf.mxu0
        %v6547 = vadd.f32 0.0, %v6546
        %6548 = vmatmul.f32.gmra.mxu0 %v6485
        %v6549 = vpop.f32.mrf.mxu0
        %v6550 = vadd.f32 0.0, %v6549
        %6551 = vmatmul.f32.gmra.mxu0 %v6488
        %v6552 = vpop.f32.mrf.mxu0
        %v6553 = vadd.f32 0.0, %v6552
        %6554 = vmatmul.f32.gmra.mxu0 %v6491
        %v6555 = vpop.f32.mrf.mxu0
        %v6556 = vadd.f32 0.0, %v6555
        %6557 = vmatmul.f32.gmra.mxu0 %v6494
        %v6558 = vpop.f32.mrf.mxu0
        %v6559 = vadd.f32 0.0, %v6558
        %6560 = vmatmul.f32.gmra.mxu0 %v6497
        %v6561 = vpop.f32.mrf.mxu0
        %v6562 = vadd.f32 0.0, %v6561
        %6563 = vmatmul.f32.gmra.mxu0 %v6500
        %v6564 = vpop.f32.mrf.mxu0
        %v6565 = vadd.f32 0.0, %v6564
        %6566 = vmatmul.f32.gmra.mxu0 %v6503
        %v6567 = vpop.f32.mrf.mxu0
        %v6568 = vadd.f32 0.0, %v6567
        %6569 = vmatmul.f32.gmra.mxu0 %v6506
        %v6570 = vpop.f32.mrf.mxu0
        %v6571 = vadd.f32 0.0, %v6570
        %6572 = vmatmul.f32.gmra.mxu0 %v6509
        %v6573 = vpop.f32.mrf.mxu0
        %v6574 = vadd.f32 0.0, %v6573
        %6575 = vmatmul.f32.gmra.mxu0 %v6512
        %v6576 = vpop.f32.mrf.mxu0
        %v6577 = vadd.f32 0.0, %v6576
        %6578 = vmatmul.f32.gmra.mxu0 %v6515
        %v6579 = vpop.f32.mrf.mxu0
        %v6580 = vadd.f32 0.0, %v6579
        %6581 = vdwg.mxu0
        %v6582 = vadd.f32 %v6433, %v6535
        %v6583 = vadd.f32 %v6434, %v6538
        %v6584 = vadd.f32 %v6435, %v6541
        %v6585 = vadd.f32 %v6436, %v6544
        %v6586 = vadd.f32 %v6437, %v6547
        %v6587 = vadd.f32 %v6438, %v6550
        %v6588 = vadd.f32 %v6439, %v6553
        %v6589 = vadd.f32 %v6440, %v6556
        %v6590 = vadd.f32 %v6441, %v6559
        %v6591 = vadd.f32 %v6442, %v6562
        %v6592 = vadd.f32 %v6443, %v6565
        %v6593 = vadd.f32 %v6444, %v6568
        %v6594 = vadd.f32 %v6445, %v6571
        %v6595 = vadd.f32 %v6446, %v6574
        %v6596 = vadd.f32 %v6447, %v6577
        %v6597 = vadd.f32 %v6448, %v6580
        %v6598 = vld [vmem:[%s4] sm:$0x1]
        %v6600 = vperm.slane %v6598, 0
        %v6602 = vadd.f32 %v6582, %v6600
        %v6603 = vadd.f32 %v6583, %v6600
        %v6604 = vadd.f32 %v6584, %v6600
        %v6605 = vadd.f32 %v6585, %v6600
        %v6606 = vadd.f32 %v6586, %v6600
        %v6607 = vadd.f32 %v6587, %v6600
        %v6608 = vadd.f32 %v6588, %v6600
        %v6609 = vadd.f32 %v6589, %v6600
        %v6610 = vadd.f32 %v6590, %v6600
        %v6611 = vadd.f32 %v6591, %v6600
        %v6612 = vadd.f32 %v6592, %v6600
        %v6613 = vadd.f32 %v6593, %v6600
        %v6614 = vadd.f32 %v6594, %v6600
        %v6615 = vadd.f32 %v6595, %v6600
        %v6616 = vadd.f32 %v6596, %v6600
        %v6617 = vadd.f32 %v6597, %v6600
        %v6618 = vmax.f32 %v6602, 0.0
        %v6619 = vmax.f32 %v6603, 0.0
        %v6620 = vmax.f32 %v6604, 0.0
        %v6621 = vmax.f32 %v6605, 0.0
        %v6622 = vmax.f32 %v6606, 0.0
        %v6623 = vmax.f32 %v6607, 0.0
        %v6624 = vmax.f32 %v6608, 0.0
        %v6625 = vmax.f32 %v6609, 0.0
        %v6626 = vmax.f32 %v6610, 0.0
        %v6627 = vmax.f32 %v6611, 0.0
        %v6628 = vmax.f32 %v6612, 0.0
        %v6629 = vmax.f32 %v6613, 0.0
        %v6630 = vmax.f32 %v6614, 0.0
        %v6631 = vmax.f32 %v6615, 0.0
        %v6632 = vmax.f32 %v6616, 0.0
        %v6633 = vmax.f32 %v6617, 0.0
        %6634 = vst.msk [vmem:[#allocation3 + $0x180] sm:$0xff] %vm2550, %v6618
        %6635 = vst.msk [vmem:[#allocation3 + $0x188] sm:$0xff] %vm2550, %v6619
        %6636 = vst.msk [vmem:[#allocation3 + $0x190] sm:$0xff] %vm2550, %v6620
        %6637 = vst.msk [vmem:[#allocation3 + $0x198] sm:$0xff] %vm2550, %v6621
        %6638 = vst.msk [vmem:[#allocation3 + $0x1a0] sm:$0xff] %vm2550, %v6622
        %6639 = vst.msk [vmem:[#allocation3 + $0x1a8] sm:$0xff] %vm2550, %v6623
        %6640 = vst.msk [vmem:[#allocation3 + $0x1b0] sm:$0xff] %vm2550, %v6624
        %6641 = vst.msk [vmem:[#allocation3 + $0x1b8] sm:$0xff] %vm2550, %v6625
        %6642 = vst.msk [vmem:[#allocation3 + $0x1c0] sm:$0xff] %vm2550, %v6626
        %6643 = vst.msk [vmem:[#allocation3 + $0x1c8] sm:$0xff] %vm2550, %v6627
        %6644 = vst.msk [vmem:[#allocation3 + $0x1d0] sm:$0xff] %vm2550, %v6628
        %6645 = vst.msk [vmem:[#allocation3 + $0x1d8] sm:$0xff] %vm2550, %v6629
        %6646 = vst.msk [vmem:[#allocation3 + $0x1e0] sm:$0xff] %vm2550, %v6630
        %6647 = vst.msk [vmem:[#allocation3 + $0x1e8] sm:$0xff] %vm2550, %v6631
        %6648 = vst.msk [vmem:[#allocation3 + $0x1f0] sm:$0xff] %vm2550, %v6632
        %6649 = vst.msk [vmem:[#allocation3 + $0x1f8] sm:$0xff] %vm2550, %v6633
        %v6650 = vld [vmem:[#allocation2 + $0x200] sm:$0xff]
        %v6651 = vld [vmem:[#allocation2 + $0x208] sm:$0xff]
        %v6652 = vld [vmem:[#allocation2 + $0x210] sm:$0xff]
        %v6653 = vld [vmem:[#allocation2 + $0x218] sm:$0xff]
        %v6654 = vld [vmem:[#allocation2 + $0x220] sm:$0xff]
        %v6655 = vld [vmem:[#allocation2 + $0x228] sm:$0xff]
        %v6656 = vld [vmem:[#allocation2 + $0x230] sm:$0xff]
        %v6657 = vld [vmem:[#allocation2 + $0x238] sm:$0xff]
        %v6658 = vld [vmem:[#allocation2 + $0x240] sm:$0xff]
        %v6659 = vld [vmem:[#allocation2 + $0x248] sm:$0xff]
        %v6660 = vld [vmem:[#allocation2 + $0x250] sm:$0xff]
        %v6661 = vld [vmem:[#allocation2 + $0x258] sm:$0xff]
        %v6662 = vld [vmem:[#allocation2 + $0x260] sm:$0xff]
        %v6663 = vld [vmem:[#allocation2 + $0x268] sm:$0xff]
        %v6664 = vld [vmem:[#allocation2 + $0x270] sm:$0xff]
        %v6665 = vld [vmem:[#allocation2 + $0x278] sm:$0xff]
        %v6666 = vld [vmem:[%s3] sm:$0xff]
        %v6667 = vld [vmem:[%s3 + $0x8] sm:$0xff]
        %v6668 = vld [vmem:[%s3 + $0x10] sm:$0xff]
        %v6669 = vld [vmem:[%s3 + $0x18] sm:$0xff]
        %v6670 = vld [vmem:[#allocation2 + $0x201] sm:$0xff]
        %v6671 = vld [vmem:[#allocation2 + $0x209] sm:$0xff]
        %v6672 = vld [vmem:[#allocation2 + $0x211] sm:$0xff]
        %v6673 = vld [vmem:[#allocation2 + $0x219] sm:$0xff]
        %v6674 = vld [vmem:[#allocation2 + $0x221] sm:$0xff]
        %v6675 = vld [vmem:[#allocation2 + $0x229] sm:$0xff]
        %v6676 = vld [vmem:[#allocation2 + $0x231] sm:$0xff]
        %v6677 = vld [vmem:[#allocation2 + $0x239] sm:$0xff]
        %v6678 = vld [vmem:[#allocation2 + $0x241] sm:$0xff]
        %v6679 = vld [vmem:[#allocation2 + $0x249] sm:$0xff]
        %v6680 = vld [vmem:[#allocation2 + $0x251] sm:$0xff]
        %v6681 = vld [vmem:[#allocation2 + $0x259] sm:$0xff]
        %v6682 = vld [vmem:[#allocation2 + $0x261] sm:$0xff]
        %v6683 = vld [vmem:[#allocation2 + $0x269] sm:$0xff]
        %v6684 = vld [vmem:[#allocation2 + $0x271] sm:$0xff]
        %v6685 = vld [vmem:[#allocation2 + $0x279] sm:$0xff]
        %v6686 = vld [vmem:[%s1233] sm:$0xff]
        %v6687 = vld [vmem:[%s1233 + $0x8] sm:$0xff]
        %v6688 = vld [vmem:[%s1233 + $0x10] sm:$0xff]
        %v6689 = vld [vmem:[%s1233 + $0x18] sm:$0xff]
        %v6691 = vsel %vm1092, %v6670, 0
        %v6694 = vsel %vm1092, %v6671, 0
        %v6697 = vsel %vm1092, %v6672, 0
        %v6700 = vsel %vm1092, %v6673, 0
        %v6703 = vsel %vm1092, %v6674, 0
        %v6706 = vsel %vm1092, %v6675, 0
        %v6709 = vsel %vm1092, %v6676, 0
        %v6712 = vsel %vm1092, %v6677, 0
        %v6715 = vsel %vm1092, %v6678, 0
        %v6718 = vsel %vm1092, %v6679, 0
        %v6721 = vsel %vm1092, %v6680, 0
        %v6724 = vsel %vm1092, %v6681, 0
        %v6727 = vsel %vm1092, %v6682, 0
        %v6730 = vsel %vm1092, %v6683, 0
        %v6733 = vsel %vm1092, %v6684, 0
        %v6736 = vsel %vm1092, %v6685, 0
        %6738 = vmatpush.msra.mxu0 0.0
        %6739 = vmatpush.msra.mxu0 0.0
        %6740 = vmatpush.msra.mxu0 0.0
        %6741 = vmatpush.msra.mxu0 0.0
        %6742 = vmatpush.msra.mxu0 0.0
        %6743 = vmatpush.msra.mxu0 0.0
        %6744 = vmatpush.msra.mxu0 0.0
        %6745 = vmatpush.msra.mxu0 0.0
        %6746 = vmatpush.msra.mxu0 0.0
        %6747 = vmatpush.msra.mxu0 0.0
        %6748 = vmatpush.msra.mxu0 0.0
        %6749 = vmatpush.msra.mxu0 0.0
        %6750 = vmatpush.msra.mxu0 %v6689
        %6751 = vmatpush.msra.mxu0 %v6688
        %6752 = vmatpush.msra.mxu0 %v6687
        %6753 = vmatpush.msra.mxu0 %v6686
        %6754 = vmatmul.f32.gmra.mxu0 %v6691
        %v6755 = vpop.f32.mrf.mxu0
        %v6756 = vadd.f32 0.0, %v6755
        %6757 = vmatmul.f32.gmra.mxu0 %v6694
        %v6758 = vpop.f32.mrf.mxu0
        %v6759 = vadd.f32 0.0, %v6758
        %6760 = vmatmul.f32.gmra.mxu0 %v6697
        %v6761 = vpop.f32.mrf.mxu0
        %v6762 = vadd.f32 0.0, %v6761
        %6763 = vmatmul.f32.gmra.mxu0 %v6700
        %v6764 = vpop.f32.mrf.mxu0
        %v6765 = vadd.f32 0.0, %v6764
        %6766 = vmatmul.f32.gmra.mxu0 %v6703
        %v6767 = vpop.f32.mrf.mxu0
        %v6768 = vadd.f32 0.0, %v6767
        %6769 = vmatmul.f32.gmra.mxu0 %v6706
        %v6770 = vpop.f32.mrf.mxu0
        %v6771 = vadd.f32 0.0, %v6770
        %6772 = vmatmul.f32.gmra.mxu0 %v6709
        %v6773 = vpop.f32.mrf.mxu0
        %v6774 = vadd.f32 0.0, %v6773
        %6775 = vmatmul.f32.gmra.mxu0 %v6712
        %v6776 = vpop.f32.mrf.mxu0
        %v6777 = vadd.f32 0.0, %v6776
        %6778 = vmatmul.f32.gmra.mxu0 %v6715
        %v6779 = vpop.f32.mrf.mxu0
        %v6780 = vadd.f32 0.0, %v6779
        %6781 = vmatmul.f32.gmra.mxu0 %v6718
        %v6782 = vpop.f32.mrf.mxu0
        %v6783 = vadd.f32 0.0, %v6782
        %6784 = vmatmul.f32.gmra.mxu0 %v6721
        %v6785 = vpop.f32.mrf.mxu0
        %v6786 = vadd.f32 0.0, %v6785
        %6787 = vmatmul.f32.gmra.mxu0 %v6724
        %v6788 = vpop.f32.mrf.mxu0
        %v6789 = vadd.f32 0.0, %v6788
        %6790 = vmatmul.f32.gmra.mxu0 %v6727
        %v6791 = vpop.f32.mrf.mxu0
        %v6792 = vadd.f32 0.0, %v6791
        %6793 = vmatmul.f32.gmra.mxu0 %v6730
        %v6794 = vpop.f32.mrf.mxu0
        %v6795 = vadd.f32 0.0, %v6794
        %6796 = vmatmul.f32.gmra.mxu0 %v6733
        %v6797 = vpop.f32.mrf.mxu0
        %v6798 = vadd.f32 0.0, %v6797
        %6799 = vmatmul.f32.gmra.mxu0 %v6736
        %v6800 = vpop.f32.mrf.mxu0
        %v6801 = vadd.f32 0.0, %v6800
        %6802 = vdwg.mxu0
        %v6804 = vsel %vm1092, %v6650, 0
        %v6807 = vsel %vm1092, %v6651, 0
        %v6810 = vsel %vm1092, %v6652, 0
        %v6813 = vsel %vm1092, %v6653, 0
        %v6816 = vsel %vm1092, %v6654, 0
        %v6819 = vsel %vm1092, %v6655, 0
        %v6822 = vsel %vm1092, %v6656, 0
        %v6825 = vsel %vm1092, %v6657, 0
        %v6828 = vsel %vm1092, %v6658, 0
        %v6831 = vsel %vm1092, %v6659, 0
        %v6834 = vsel %vm1092, %v6660, 0
        %v6837 = vsel %vm1092, %v6661, 0
        %v6840 = vsel %vm1092, %v6662, 0
        %v6843 = vsel %vm1092, %v6663, 0
        %v6846 = vsel %vm1092, %v6664, 0
        %v6849 = vsel %vm1092, %v6665, 0
        %6851 = vmatpush.msra.mxu0 0.0
        %6852 = vmatpush.msra.mxu0 0.0
        %6853 = vmatpush.msra.mxu0 0.0
        %6854 = vmatpush.msra.mxu0 0.0
        %6855 = vmatpush.msra.mxu0 0.0
        %6856 = vmatpush.msra.mxu0 0.0
        %6857 = vmatpush.msra.mxu0 0.0
        %6858 = vmatpush.msra.mxu0 0.0
        %6859 = vmatpush.msra.mxu0 0.0
        %6860 = vmatpush.msra.mxu0 0.0
        %6861 = vmatpush.msra.mxu0 0.0
        %6862 = vmatpush.msra.mxu0 0.0
        %6863 = vmatpush.msra.mxu0 %v6669
        %6864 = vmatpush.msra.mxu0 %v6668
        %6865 = vmatpush.msra.mxu0 %v6667
        %6866 = vmatpush.msra.mxu0 %v6666
        %6867 = vmatmul.f32.gmra.mxu0 %v6804
        %v6868 = vpop.f32.mrf.mxu0
        %v6869 = vadd.f32 %v6756, %v6868
        %6870 = vmatmul.f32.gmra.mxu0 %v6807
        %v6871 = vpop.f32.mrf.mxu0
        %v6872 = vadd.f32 %v6759, %v6871
        %6873 = vmatmul.f32.gmra.mxu0 %v6810
        %v6874 = vpop.f32.mrf.mxu0
        %v6875 = vadd.f32 %v6762, %v6874
        %6876 = vmatmul.f32.gmra.mxu0 %v6813
        %v6877 = vpop.f32.mrf.mxu0
        %v6878 = vadd.f32 %v6765, %v6877
        %6879 = vmatmul.f32.gmra.mxu0 %v6816
        %v6880 = vpop.f32.mrf.mxu0
        %v6881 = vadd.f32 %v6768, %v6880
        %6882 = vmatmul.f32.gmra.mxu0 %v6819
        %v6883 = vpop.f32.mrf.mxu0
        %v6884 = vadd.f32 %v6771, %v6883
        %6885 = vmatmul.f32.gmra.mxu0 %v6822
        %v6886 = vpop.f32.mrf.mxu0
        %v6887 = vadd.f32 %v6774, %v6886
        %6888 = vmatmul.f32.gmra.mxu0 %v6825
        %v6889 = vpop.f32.mrf.mxu0
        %v6890 = vadd.f32 %v6777, %v6889
        %6891 = vmatmul.f32.gmra.mxu0 %v6828
        %v6892 = vpop.f32.mrf.mxu0
        %v6893 = vadd.f32 %v6780, %v6892
        %6894 = vmatmul.f32.gmra.mxu0 %v6831
        %v6895 = vpop.f32.mrf.mxu0
        %v6896 = vadd.f32 %v6783, %v6895
        %6897 = vmatmul.f32.gmra.mxu0 %v6834
        %v6898 = vpop.f32.mrf.mxu0
        %v6899 = vadd.f32 %v6786, %v6898
        %6900 = vmatmul.f32.gmra.mxu0 %v6837
        %v6901 = vpop.f32.mrf.mxu0
        %v6902 = vadd.f32 %v6789, %v6901
        %6903 = vmatmul.f32.gmra.mxu0 %v6840
        %v6904 = vpop.f32.mrf.mxu0
        %v6905 = vadd.f32 %v6792, %v6904
        %6906 = vmatmul.f32.gmra.mxu0 %v6843
        %v6907 = vpop.f32.mrf.mxu0
        %v6908 = vadd.f32 %v6795, %v6907
        %6909 = vmatmul.f32.gmra.mxu0 %v6846
        %v6910 = vpop.f32.mrf.mxu0
        %v6911 = vadd.f32 %v6798, %v6910
        %6912 = vmatmul.f32.gmra.mxu0 %v6849
        %v6913 = vpop.f32.mrf.mxu0
        %v6914 = vadd.f32 %v6801, %v6913
        %6915 = vdwg.mxu0
        %v6916 = vld [vmem:[#allocation2 + $0x202] sm:$0xff]
        %v6917 = vld [vmem:[#allocation2 + $0x20a] sm:$0xff]
        %v6918 = vld [vmem:[#allocation2 + $0x212] sm:$0xff]
        %v6919 = vld [vmem:[#allocation2 + $0x21a] sm:$0xff]
        %v6920 = vld [vmem:[#allocation2 + $0x222] sm:$0xff]
        %v6921 = vld [vmem:[#allocation2 + $0x22a] sm:$0xff]
        %v6922 = vld [vmem:[#allocation2 + $0x232] sm:$0xff]
        %v6923 = vld [vmem:[#allocation2 + $0x23a] sm:$0xff]
        %v6924 = vld [vmem:[#allocation2 + $0x242] sm:$0xff]
        %v6925 = vld [vmem:[#allocation2 + $0x24a] sm:$0xff]
        %v6926 = vld [vmem:[#allocation2 + $0x252] sm:$0xff]
        %v6927 = vld [vmem:[#allocation2 + $0x25a] sm:$0xff]
        %v6928 = vld [vmem:[#allocation2 + $0x262] sm:$0xff]
        %v6929 = vld [vmem:[#allocation2 + $0x26a] sm:$0xff]
        %v6930 = vld [vmem:[#allocation2 + $0x272] sm:$0xff]
        %v6931 = vld [vmem:[#allocation2 + $0x27a] sm:$0xff]
        %v6932 = vld [vmem:[%s1480] sm:$0xff]
        %v6933 = vld [vmem:[%s1480 + $0x8] sm:$0xff]
        %v6934 = vld [vmem:[%s1480 + $0x10] sm:$0xff]
        %v6935 = vld [vmem:[%s1480 + $0x18] sm:$0xff]
        %v6937 = vsel %vm1092, %v6916, 0
        %v6940 = vsel %vm1092, %v6917, 0
        %v6943 = vsel %vm1092, %v6918, 0
        %v6946 = vsel %vm1092, %v6919, 0
        %v6949 = vsel %vm1092, %v6920, 0
        %v6952 = vsel %vm1092, %v6921, 0
        %v6955 = vsel %vm1092, %v6922, 0
        %v6958 = vsel %vm1092, %v6923, 0
        %v6961 = vsel %vm1092, %v6924, 0
        %v6964 = vsel %vm1092, %v6925, 0
        %v6967 = vsel %vm1092, %v6926, 0
        %v6970 = vsel %vm1092, %v6927, 0
        %v6973 = vsel %vm1092, %v6928, 0
        %v6976 = vsel %vm1092, %v6929, 0
        %v6979 = vsel %vm1092, %v6930, 0
        %v6982 = vsel %vm1092, %v6931, 0
        %6984 = vmatpush.msra.mxu0 0.0
        %6985 = vmatpush.msra.mxu0 0.0
        %6986 = vmatpush.msra.mxu0 0.0
        %6987 = vmatpush.msra.mxu0 0.0
        %6988 = vmatpush.msra.mxu0 0.0
        %6989 = vmatpush.msra.mxu0 0.0
        %6990 = vmatpush.msra.mxu0 0.0
        %6991 = vmatpush.msra.mxu0 0.0
        %6992 = vmatpush.msra.mxu0 0.0
        %6993 = vmatpush.msra.mxu0 0.0
        %6994 = vmatpush.msra.mxu0 0.0
        %6995 = vmatpush.msra.mxu0 0.0
        %6996 = vmatpush.msra.mxu0 %v6935
        %6997 = vmatpush.msra.mxu0 %v6934
        %6998 = vmatpush.msra.mxu0 %v6933
        %6999 = vmatpush.msra.mxu0 %v6932
        %7000 = vmatmul.f32.gmra.mxu0 %v6937
        %v7001 = vpop.f32.mrf.mxu0
        %v7002 = vadd.f32 0.0, %v7001
        %7003 = vmatmul.f32.gmra.mxu0 %v6940
        %v7004 = vpop.f32.mrf.mxu0
        %v7005 = vadd.f32 0.0, %v7004
        %7006 = vmatmul.f32.gmra.mxu0 %v6943
        %v7007 = vpop.f32.mrf.mxu0
        %v7008 = vadd.f32 0.0, %v7007
        %7009 = vmatmul.f32.gmra.mxu0 %v6946
        %v7010 = vpop.f32.mrf.mxu0
        %v7011 = vadd.f32 0.0, %v7010
        %7012 = vmatmul.f32.gmra.mxu0 %v6949
        %v7013 = vpop.f32.mrf.mxu0
        %v7014 = vadd.f32 0.0, %v7013
        %7015 = vmatmul.f32.gmra.mxu0 %v6952
        %v7016 = vpop.f32.mrf.mxu0
        %v7017 = vadd.f32 0.0, %v7016
        %7018 = vmatmul.f32.gmra.mxu0 %v6955
        %v7019 = vpop.f32.mrf.mxu0
        %v7020 = vadd.f32 0.0, %v7019
        %7021 = vmatmul.f32.gmra.mxu0 %v6958
        %v7022 = vpop.f32.mrf.mxu0
        %v7023 = vadd.f32 0.0, %v7022
        %7024 = vmatmul.f32.gmra.mxu0 %v6961
        %v7025 = vpop.f32.mrf.mxu0
        %v7026 = vadd.f32 0.0, %v7025
        %7027 = vmatmul.f32.gmra.mxu0 %v6964
        %v7028 = vpop.f32.mrf.mxu0
        %v7029 = vadd.f32 0.0, %v7028
        %7030 = vmatmul.f32.gmra.mxu0 %v6967
        %v7031 = vpop.f32.mrf.mxu0
        %v7032 = vadd.f32 0.0, %v7031
        %7033 = vmatmul.f32.gmra.mxu0 %v6970
        %v7034 = vpop.f32.mrf.mxu0
        %v7035 = vadd.f32 0.0, %v7034
        %7036 = vmatmul.f32.gmra.mxu0 %v6973
        %v7037 = vpop.f32.mrf.mxu0
        %v7038 = vadd.f32 0.0, %v7037
        %7039 = vmatmul.f32.gmra.mxu0 %v6976
        %v7040 = vpop.f32.mrf.mxu0
        %v7041 = vadd.f32 0.0, %v7040
        %7042 = vmatmul.f32.gmra.mxu0 %v6979
        %v7043 = vpop.f32.mrf.mxu0
        %v7044 = vadd.f32 0.0, %v7043
        %7045 = vmatmul.f32.gmra.mxu0 %v6982
        %v7046 = vpop.f32.mrf.mxu0
        %v7047 = vadd.f32 0.0, %v7046
        %7048 = vdwg.mxu0
        %v7049 = vadd.f32 %v6869, %v7002
        %v7050 = vadd.f32 %v6872, %v7005
        %v7051 = vadd.f32 %v6875, %v7008
        %v7052 = vadd.f32 %v6878, %v7011
        %v7053 = vadd.f32 %v6881, %v7014
        %v7054 = vadd.f32 %v6884, %v7017
        %v7055 = vadd.f32 %v6887, %v7020
        %v7056 = vadd.f32 %v6890, %v7023
        %v7057 = vadd.f32 %v6893, %v7026
        %v7058 = vadd.f32 %v6896, %v7029
        %v7059 = vadd.f32 %v6899, %v7032
        %v7060 = vadd.f32 %v6902, %v7035
        %v7061 = vadd.f32 %v6905, %v7038
        %v7062 = vadd.f32 %v6908, %v7041
        %v7063 = vadd.f32 %v6911, %v7044
        %v7064 = vadd.f32 %v6914, %v7047
        %v7065 = vld [vmem:[#allocation2 + $0x220] sm:$0xff]
        %v7066 = vld [vmem:[#allocation2 + $0x228] sm:$0xff]
        %v7067 = vld [vmem:[#allocation2 + $0x230] sm:$0xff]
        %v7068 = vld [vmem:[#allocation2 + $0x238] sm:$0xff]
        %v7069 = vld [vmem:[#allocation2 + $0x240] sm:$0xff]
        %v7070 = vld [vmem:[#allocation2 + $0x248] sm:$0xff]
        %v7071 = vld [vmem:[#allocation2 + $0x250] sm:$0xff]
        %v7072 = vld [vmem:[#allocation2 + $0x258] sm:$0xff]
        %v7073 = vld [vmem:[#allocation2 + $0x260] sm:$0xff]
        %v7074 = vld [vmem:[#allocation2 + $0x268] sm:$0xff]
        %v7075 = vld [vmem:[#allocation2 + $0x270] sm:$0xff]
        %v7076 = vld [vmem:[#allocation2 + $0x278] sm:$0xff]
        %v7077 = vld [vmem:[#allocation2 + $0x280] sm:$0xff]
        %v7078 = vld [vmem:[#allocation2 + $0x288] sm:$0xff]
        %v7079 = vld [vmem:[#allocation2 + $0x290] sm:$0xff]
        %v7080 = vld [vmem:[#allocation2 + $0x298] sm:$0xff]
        %v7081 = vld [vmem:[%s1630] sm:$0xff]
        %v7082 = vld [vmem:[%s1630 + $0x8] sm:$0xff]
        %v7083 = vld [vmem:[%s1630 + $0x10] sm:$0xff]
        %v7084 = vld [vmem:[%s1630 + $0x18] sm:$0xff]
        %v7086 = vsel %vm1092, %v7065, 0
        %v7089 = vsel %vm1092, %v7066, 0
        %v7092 = vsel %vm1092, %v7067, 0
        %v7095 = vsel %vm1092, %v7068, 0
        %v7098 = vsel %vm1092, %v7069, 0
        %v7101 = vsel %vm1092, %v7070, 0
        %v7104 = vsel %vm1092, %v7071, 0
        %v7107 = vsel %vm1092, %v7072, 0
        %v7110 = vsel %vm1092, %v7073, 0
        %v7113 = vsel %vm1092, %v7074, 0
        %v7116 = vsel %vm1092, %v7075, 0
        %v7119 = vsel %vm1092, %v7076, 0
        %v7122 = vsel %vm1092, %v7077, 0
        %v7125 = vsel %vm1092, %v7078, 0
        %v7128 = vsel %vm1092, %v7079, 0
        %v7131 = vsel %vm1092, %v7080, 0
        %7133 = vmatpush.msra.mxu0 0.0
        %7134 = vmatpush.msra.mxu0 0.0
        %7135 = vmatpush.msra.mxu0 0.0
        %7136 = vmatpush.msra.mxu0 0.0
        %7137 = vmatpush.msra.mxu0 0.0
        %7138 = vmatpush.msra.mxu0 0.0
        %7139 = vmatpush.msra.mxu0 0.0
        %7140 = vmatpush.msra.mxu0 0.0
        %7141 = vmatpush.msra.mxu0 0.0
        %7142 = vmatpush.msra.mxu0 0.0
        %7143 = vmatpush.msra.mxu0 0.0
        %7144 = vmatpush.msra.mxu0 0.0
        %7145 = vmatpush.msra.mxu0 %v7084
        %7146 = vmatpush.msra.mxu0 %v7083
        %7147 = vmatpush.msra.mxu0 %v7082
        %7148 = vmatpush.msra.mxu0 %v7081
        %7149 = vmatmul.f32.gmra.mxu0 %v7086
        %v7150 = vpop.f32.mrf.mxu0
        %v7151 = vadd.f32 0.0, %v7150
        %7152 = vmatmul.f32.gmra.mxu0 %v7089
        %v7153 = vpop.f32.mrf.mxu0
        %v7154 = vadd.f32 0.0, %v7153
        %7155 = vmatmul.f32.gmra.mxu0 %v7092
        %v7156 = vpop.f32.mrf.mxu0
        %v7157 = vadd.f32 0.0, %v7156
        %7158 = vmatmul.f32.gmra.mxu0 %v7095
        %v7159 = vpop.f32.mrf.mxu0
        %v7160 = vadd.f32 0.0, %v7159
        %7161 = vmatmul.f32.gmra.mxu0 %v7098
        %v7162 = vpop.f32.mrf.mxu0
        %v7163 = vadd.f32 0.0, %v7162
        %7164 = vmatmul.f32.gmra.mxu0 %v7101
        %v7165 = vpop.f32.mrf.mxu0
        %v7166 = vadd.f32 0.0, %v7165
        %7167 = vmatmul.f32.gmra.mxu0 %v7104
        %v7168 = vpop.f32.mrf.mxu0
        %v7169 = vadd.f32 0.0, %v7168
        %7170 = vmatmul.f32.gmra.mxu0 %v7107
        %v7171 = vpop.f32.mrf.mxu0
        %v7172 = vadd.f32 0.0, %v7171
        %7173 = vmatmul.f32.gmra.mxu0 %v7110
        %v7174 = vpop.f32.mrf.mxu0
        %v7175 = vadd.f32 0.0, %v7174
        %7176 = vmatmul.f32.gmra.mxu0 %v7113
        %v7177 = vpop.f32.mrf.mxu0
        %v7178 = vadd.f32 0.0, %v7177
        %7179 = vmatmul.f32.gmra.mxu0 %v7116
        %v7180 = vpop.f32.mrf.mxu0
        %v7181 = vadd.f32 0.0, %v7180
        %7182 = vmatmul.f32.gmra.mxu0 %v7119
        %v7183 = vpop.f32.mrf.mxu0
        %v7184 = vadd.f32 0.0, %v7183
        %7185 = vmatmul.f32.gmra.mxu0 %v7122
        %v7186 = vpop.f32.mrf.mxu0
        %v7187 = vadd.f32 0.0, %v7186
        %7188 = vmatmul.f32.gmra.mxu0 %v7125
        %v7189 = vpop.f32.mrf.mxu0
        %v7190 = vadd.f32 0.0, %v7189
        %7191 = vmatmul.f32.gmra.mxu0 %v7128
        %v7192 = vpop.f32.mrf.mxu0
        %v7193 = vadd.f32 0.0, %v7192
        %7194 = vmatmul.f32.gmra.mxu0 %v7131
        %v7195 = vpop.f32.mrf.mxu0
        %v7196 = vadd.f32 0.0, %v7195
        %7197 = vdwg.mxu0
        %v7198 = vadd.f32 %v7049, %v7151
        %v7199 = vadd.f32 %v7050, %v7154
        %v7200 = vadd.f32 %v7051, %v7157
        %v7201 = vadd.f32 %v7052, %v7160
        %v7202 = vadd.f32 %v7053, %v7163
        %v7203 = vadd.f32 %v7054, %v7166
        %v7204 = vadd.f32 %v7055, %v7169
        %v7205 = vadd.f32 %v7056, %v7172
        %v7206 = vadd.f32 %v7057, %v7175
        %v7207 = vadd.f32 %v7058, %v7178
        %v7208 = vadd.f32 %v7059, %v7181
        %v7209 = vadd.f32 %v7060, %v7184
        %v7210 = vadd.f32 %v7061, %v7187
        %v7211 = vadd.f32 %v7062, %v7190
        %v7212 = vadd.f32 %v7063, %v7193
        %v7213 = vadd.f32 %v7064, %v7196
        %v7214 = vld [vmem:[#allocation2 + $0x221] sm:$0xff]
        %v7215 = vld [vmem:[#allocation2 + $0x229] sm:$0xff]
        %v7216 = vld [vmem:[#allocation2 + $0x231] sm:$0xff]
        %v7217 = vld [vmem:[#allocation2 + $0x239] sm:$0xff]
        %v7218 = vld [vmem:[#allocation2 + $0x241] sm:$0xff]
        %v7219 = vld [vmem:[#allocation2 + $0x249] sm:$0xff]
        %v7220 = vld [vmem:[#allocation2 + $0x251] sm:$0xff]
        %v7221 = vld [vmem:[#allocation2 + $0x259] sm:$0xff]
        %v7222 = vld [vmem:[#allocation2 + $0x261] sm:$0xff]
        %v7223 = vld [vmem:[#allocation2 + $0x269] sm:$0xff]
        %v7224 = vld [vmem:[#allocation2 + $0x271] sm:$0xff]
        %v7225 = vld [vmem:[#allocation2 + $0x279] sm:$0xff]
        %v7226 = vld [vmem:[#allocation2 + $0x281] sm:$0xff]
        %v7227 = vld [vmem:[#allocation2 + $0x289] sm:$0xff]
        %v7228 = vld [vmem:[#allocation2 + $0x291] sm:$0xff]
        %v7229 = vld [vmem:[#allocation2 + $0x299] sm:$0xff]
        %v7230 = vld [vmem:[%s1780] sm:$0xff]
        %v7231 = vld [vmem:[%s1780 + $0x8] sm:$0xff]
        %v7232 = vld [vmem:[%s1780 + $0x10] sm:$0xff]
        %v7233 = vld [vmem:[%s1780 + $0x18] sm:$0xff]
        %v7235 = vsel %vm1092, %v7214, 0
        %v7238 = vsel %vm1092, %v7215, 0
        %v7241 = vsel %vm1092, %v7216, 0
        %v7244 = vsel %vm1092, %v7217, 0
        %v7247 = vsel %vm1092, %v7218, 0
        %v7250 = vsel %vm1092, %v7219, 0
        %v7253 = vsel %vm1092, %v7220, 0
        %v7256 = vsel %vm1092, %v7221, 0
        %v7259 = vsel %vm1092, %v7222, 0
        %v7262 = vsel %vm1092, %v7223, 0
        %v7265 = vsel %vm1092, %v7224, 0
        %v7268 = vsel %vm1092, %v7225, 0
        %v7271 = vsel %vm1092, %v7226, 0
        %v7274 = vsel %vm1092, %v7227, 0
        %v7277 = vsel %vm1092, %v7228, 0
        %v7280 = vsel %vm1092, %v7229, 0
        %7282 = vmatpush.msra.mxu0 0.0
        %7283 = vmatpush.msra.mxu0 0.0
        %7284 = vmatpush.msra.mxu0 0.0
        %7285 = vmatpush.msra.mxu0 0.0
        %7286 = vmatpush.msra.mxu0 0.0
        %7287 = vmatpush.msra.mxu0 0.0
        %7288 = vmatpush.msra.mxu0 0.0
        %7289 = vmatpush.msra.mxu0 0.0
        %7290 = vmatpush.msra.mxu0 0.0
        %7291 = vmatpush.msra.mxu0 0.0
        %7292 = vmatpush.msra.mxu0 0.0
        %7293 = vmatpush.msra.mxu0 0.0
        %7294 = vmatpush.msra.mxu0 %v7233
        %7295 = vmatpush.msra.mxu0 %v7232
        %7296 = vmatpush.msra.mxu0 %v7231
        %7297 = vmatpush.msra.mxu0 %v7230
        %7298 = vmatmul.f32.gmra.mxu0 %v7235
        %v7299 = vpop.f32.mrf.mxu0
        %v7300 = vadd.f32 0.0, %v7299
        %7301 = vmatmul.f32.gmra.mxu0 %v7238
        %v7302 = vpop.f32.mrf.mxu0
        %v7303 = vadd.f32 0.0, %v7302
        %7304 = vmatmul.f32.gmra.mxu0 %v7241
        %v7305 = vpop.f32.mrf.mxu0
        %v7306 = vadd.f32 0.0, %v7305
        %7307 = vmatmul.f32.gmra.mxu0 %v7244
        %v7308 = vpop.f32.mrf.mxu0
        %v7309 = vadd.f32 0.0, %v7308
        %7310 = vmatmul.f32.gmra.mxu0 %v7247
        %v7311 = vpop.f32.mrf.mxu0
        %v7312 = vadd.f32 0.0, %v7311
        %7313 = vmatmul.f32.gmra.mxu0 %v7250
        %v7314 = vpop.f32.mrf.mxu0
        %v7315 = vadd.f32 0.0, %v7314
        %7316 = vmatmul.f32.gmra.mxu0 %v7253
        %v7317 = vpop.f32.mrf.mxu0
        %v7318 = vadd.f32 0.0, %v7317
        %7319 = vmatmul.f32.gmra.mxu0 %v7256
        %v7320 = vpop.f32.mrf.mxu0
        %v7321 = vadd.f32 0.0, %v7320
        %7322 = vmatmul.f32.gmra.mxu0 %v7259
        %v7323 = vpop.f32.mrf.mxu0
        %v7324 = vadd.f32 0.0, %v7323
        %7325 = vmatmul.f32.gmra.mxu0 %v7262
        %v7326 = vpop.f32.mrf.mxu0
        %v7327 = vadd.f32 0.0, %v7326
        %7328 = vmatmul.f32.gmra.mxu0 %v7265
        %v7329 = vpop.f32.mrf.mxu0
        %v7330 = vadd.f32 0.0, %v7329
        %7331 = vmatmul.f32.gmra.mxu0 %v7268
        %v7332 = vpop.f32.mrf.mxu0
        %v7333 = vadd.f32 0.0, %v7332
        %7334 = vmatmul.f32.gmra.mxu0 %v7271
        %v7335 = vpop.f32.mrf.mxu0
        %v7336 = vadd.f32 0.0, %v7335
        %7337 = vmatmul.f32.gmra.mxu0 %v7274
        %v7338 = vpop.f32.mrf.mxu0
        %v7339 = vadd.f32 0.0, %v7338
        %7340 = vmatmul.f32.gmra.mxu0 %v7277
        %v7341 = vpop.f32.mrf.mxu0
        %v7342 = vadd.f32 0.0, %v7341
        %7343 = vmatmul.f32.gmra.mxu0 %v7280
        %v7344 = vpop.f32.mrf.mxu0
        %v7345 = vadd.f32 0.0, %v7344
        %7346 = vdwg.mxu0
        %v7347 = vadd.f32 %v7198, %v7300
        %v7348 = vadd.f32 %v7199, %v7303
        %v7349 = vadd.f32 %v7200, %v7306
        %v7350 = vadd.f32 %v7201, %v7309
        %v7351 = vadd.f32 %v7202, %v7312
        %v7352 = vadd.f32 %v7203, %v7315
        %v7353 = vadd.f32 %v7204, %v7318
        %v7354 = vadd.f32 %v7205, %v7321
        %v7355 = vadd.f32 %v7206, %v7324
        %v7356 = vadd.f32 %v7207, %v7327
        %v7357 = vadd.f32 %v7208, %v7330
        %v7358 = vadd.f32 %v7209, %v7333
        %v7359 = vadd.f32 %v7210, %v7336
        %v7360 = vadd.f32 %v7211, %v7339
        %v7361 = vadd.f32 %v7212, %v7342
        %v7362 = vadd.f32 %v7213, %v7345
        %v7363 = vld [vmem:[#allocation2 + $0x222] sm:$0xff]
        %v7364 = vld [vmem:[#allocation2 + $0x22a] sm:$0xff]
        %v7365 = vld [vmem:[#allocation2 + $0x232] sm:$0xff]
        %v7366 = vld [vmem:[#allocation2 + $0x23a] sm:$0xff]
        %v7367 = vld [vmem:[#allocation2 + $0x242] sm:$0xff]
        %v7368 = vld [vmem:[#allocation2 + $0x24a] sm:$0xff]
        %v7369 = vld [vmem:[#allocation2 + $0x252] sm:$0xff]
        %v7370 = vld [vmem:[#allocation2 + $0x25a] sm:$0xff]
        %v7371 = vld [vmem:[#allocation2 + $0x262] sm:$0xff]
        %v7372 = vld [vmem:[#allocation2 + $0x26a] sm:$0xff]
        %v7373 = vld [vmem:[#allocation2 + $0x272] sm:$0xff]
        %v7374 = vld [vmem:[#allocation2 + $0x27a] sm:$0xff]
        %v7375 = vld [vmem:[#allocation2 + $0x282] sm:$0xff]
        %v7376 = vld [vmem:[#allocation2 + $0x28a] sm:$0xff]
        %v7377 = vld [vmem:[#allocation2 + $0x292] sm:$0xff]
        %v7378 = vld [vmem:[#allocation2 + $0x29a] sm:$0xff]
        %v7379 = vld [vmem:[%s1930] sm:$0xff]
        %v7380 = vld [vmem:[%s1930 + $0x8] sm:$0xff]
        %v7381 = vld [vmem:[%s1930 + $0x10] sm:$0xff]
        %v7382 = vld [vmem:[%s1930 + $0x18] sm:$0xff]
        %v7384 = vsel %vm1092, %v7363, 0
        %v7387 = vsel %vm1092, %v7364, 0
        %v7390 = vsel %vm1092, %v7365, 0
        %v7393 = vsel %vm1092, %v7366, 0
        %v7396 = vsel %vm1092, %v7367, 0
        %v7399 = vsel %vm1092, %v7368, 0
        %v7402 = vsel %vm1092, %v7369, 0
        %v7405 = vsel %vm1092, %v7370, 0
        %v7408 = vsel %vm1092, %v7371, 0
        %v7411 = vsel %vm1092, %v7372, 0
        %v7414 = vsel %vm1092, %v7373, 0
        %v7417 = vsel %vm1092, %v7374, 0
        %v7420 = vsel %vm1092, %v7375, 0
        %v7423 = vsel %vm1092, %v7376, 0
        %v7426 = vsel %vm1092, %v7377, 0
        %v7429 = vsel %vm1092, %v7378, 0
        %7431 = vmatpush.msra.mxu0 0.0
        %7432 = vmatpush.msra.mxu0 0.0
        %7433 = vmatpush.msra.mxu0 0.0
        %7434 = vmatpush.msra.mxu0 0.0
        %7435 = vmatpush.msra.mxu0 0.0
        %7436 = vmatpush.msra.mxu0 0.0
        %7437 = vmatpush.msra.mxu0 0.0
        %7438 = vmatpush.msra.mxu0 0.0
        %7439 = vmatpush.msra.mxu0 0.0
        %7440 = vmatpush.msra.mxu0 0.0
        %7441 = vmatpush.msra.mxu0 0.0
        %7442 = vmatpush.msra.mxu0 0.0
        %7443 = vmatpush.msra.mxu0 %v7382
        %7444 = vmatpush.msra.mxu0 %v7381
        %7445 = vmatpush.msra.mxu0 %v7380
        %7446 = vmatpush.msra.mxu0 %v7379
        %7447 = vmatmul.f32.gmra.mxu0 %v7384
        %v7448 = vpop.f32.mrf.mxu0
        %v7449 = vadd.f32 0.0, %v7448
        %7450 = vmatmul.f32.gmra.mxu0 %v7387
        %v7451 = vpop.f32.mrf.mxu0
        %v7452 = vadd.f32 0.0, %v7451
        %7453 = vmatmul.f32.gmra.mxu0 %v7390
        %v7454 = vpop.f32.mrf.mxu0
        %v7455 = vadd.f32 0.0, %v7454
        %7456 = vmatmul.f32.gmra.mxu0 %v7393
        %v7457 = vpop.f32.mrf.mxu0
        %v7458 = vadd.f32 0.0, %v7457
        %7459 = vmatmul.f32.gmra.mxu0 %v7396
        %v7460 = vpop.f32.mrf.mxu0
        %v7461 = vadd.f32 0.0, %v7460
        %7462 = vmatmul.f32.gmra.mxu0 %v7399
        %v7463 = vpop.f32.mrf.mxu0
        %v7464 = vadd.f32 0.0, %v7463
        %7465 = vmatmul.f32.gmra.mxu0 %v7402
        %v7466 = vpop.f32.mrf.mxu0
        %v7467 = vadd.f32 0.0, %v7466
        %7468 = vmatmul.f32.gmra.mxu0 %v7405
        %v7469 = vpop.f32.mrf.mxu0
        %v7470 = vadd.f32 0.0, %v7469
        %7471 = vmatmul.f32.gmra.mxu0 %v7408
        %v7472 = vpop.f32.mrf.mxu0
        %v7473 = vadd.f32 0.0, %v7472
        %7474 = vmatmul.f32.gmra.mxu0 %v7411
        %v7475 = vpop.f32.mrf.mxu0
        %v7476 = vadd.f32 0.0, %v7475
        %7477 = vmatmul.f32.gmra.mxu0 %v7414
        %v7478 = vpop.f32.mrf.mxu0
        %v7479 = vadd.f32 0.0, %v7478
        %7480 = vmatmul.f32.gmra.mxu0 %v7417
        %v7481 = vpop.f32.mrf.mxu0
        %v7482 = vadd.f32 0.0, %v7481
        %7483 = vmatmul.f32.gmra.mxu0 %v7420
        %v7484 = vpop.f32.mrf.mxu0
        %v7485 = vadd.f32 0.0, %v7484
        %7486 = vmatmul.f32.gmra.mxu0 %v7423
        %v7487 = vpop.f32.mrf.mxu0
        %v7488 = vadd.f32 0.0, %v7487
        %7489 = vmatmul.f32.gmra.mxu0 %v7426
        %v7490 = vpop.f32.mrf.mxu0
        %v7491 = vadd.f32 0.0, %v7490
        %7492 = vmatmul.f32.gmra.mxu0 %v7429
        %v7493 = vpop.f32.mrf.mxu0
        %v7494 = vadd.f32 0.0, %v7493
        %7495 = vdwg.mxu0
        %v7496 = vadd.f32 %v7347, %v7449
        %v7497 = vadd.f32 %v7348, %v7452
        %v7498 = vadd.f32 %v7349, %v7455
        %v7499 = vadd.f32 %v7350, %v7458
        %v7500 = vadd.f32 %v7351, %v7461
        %v7501 = vadd.f32 %v7352, %v7464
        %v7502 = vadd.f32 %v7353, %v7467
        %v7503 = vadd.f32 %v7354, %v7470
        %v7504 = vadd.f32 %v7355, %v7473
        %v7505 = vadd.f32 %v7356, %v7476
        %v7506 = vadd.f32 %v7357, %v7479
        %v7507 = vadd.f32 %v7358, %v7482
        %v7508 = vadd.f32 %v7359, %v7485
        %v7509 = vadd.f32 %v7360, %v7488
        %v7510 = vadd.f32 %v7361, %v7491
        %v7511 = vadd.f32 %v7362, %v7494
        %v7512 = vld [vmem:[#allocation2 + $0x240] sm:$0xff]
        %v7513 = vld [vmem:[#allocation2 + $0x248] sm:$0xff]
        %v7514 = vld [vmem:[#allocation2 + $0x250] sm:$0xff]
        %v7515 = vld [vmem:[#allocation2 + $0x258] sm:$0xff]
        %v7516 = vld [vmem:[#allocation2 + $0x260] sm:$0xff]
        %v7517 = vld [vmem:[#allocation2 + $0x268] sm:$0xff]
        %v7518 = vld [vmem:[#allocation2 + $0x270] sm:$0xff]
        %v7519 = vld [vmem:[#allocation2 + $0x278] sm:$0xff]
        %v7520 = vld [vmem:[#allocation2 + $0x280] sm:$0xff]
        %v7521 = vld [vmem:[#allocation2 + $0x288] sm:$0xff]
        %v7522 = vld [vmem:[#allocation2 + $0x290] sm:$0xff]
        %v7523 = vld [vmem:[#allocation2 + $0x298] sm:$0xff]
        %v7524 = vld [vmem:[#allocation2 + $0x2a0] sm:$0xff]
        %v7525 = vld [vmem:[#allocation2 + $0x2a8] sm:$0xff]
        %v7526 = vld [vmem:[#allocation2 + $0x2b0] sm:$0xff]
        %v7527 = vld [vmem:[#allocation2 + $0x2b8] sm:$0xff]
        %v7528 = vld [vmem:[%s2080] sm:$0xff]
        %v7529 = vld [vmem:[%s2080 + $0x8] sm:$0xff]
        %v7530 = vld [vmem:[%s2080 + $0x10] sm:$0xff]
        %v7531 = vld [vmem:[%s2080 + $0x18] sm:$0xff]
        %v7533 = vsel %vm1092, %v7512, 0
        %v7536 = vsel %vm1092, %v7513, 0
        %v7539 = vsel %vm1092, %v7514, 0
        %v7542 = vsel %vm1092, %v7515, 0
        %v7545 = vsel %vm1092, %v7516, 0
        %v7548 = vsel %vm1092, %v7517, 0
        %v7551 = vsel %vm1092, %v7518, 0
        %v7554 = vsel %vm1092, %v7519, 0
        %v7557 = vsel %vm1092, %v7520, 0
        %v7560 = vsel %vm1092, %v7521, 0
        %v7563 = vsel %vm1092, %v7522, 0
        %v7566 = vsel %vm1092, %v7523, 0
        %v7569 = vsel %vm1092, %v7524, 0
        %v7572 = vsel %vm1092, %v7525, 0
        %v7575 = vsel %vm1092, %v7526, 0
        %v7578 = vsel %vm1092, %v7527, 0
        %7580 = vmatpush.msra.mxu0 0.0
        %7581 = vmatpush.msra.mxu0 0.0
        %7582 = vmatpush.msra.mxu0 0.0
        %7583 = vmatpush.msra.mxu0 0.0
        %7584 = vmatpush.msra.mxu0 0.0
        %7585 = vmatpush.msra.mxu0 0.0
        %7586 = vmatpush.msra.mxu0 0.0
        %7587 = vmatpush.msra.mxu0 0.0
        %7588 = vmatpush.msra.mxu0 0.0
        %7589 = vmatpush.msra.mxu0 0.0
        %7590 = vmatpush.msra.mxu0 0.0
        %7591 = vmatpush.msra.mxu0 0.0
        %7592 = vmatpush.msra.mxu0 %v7531
        %7593 = vmatpush.msra.mxu0 %v7530
        %7594 = vmatpush.msra.mxu0 %v7529
        %7595 = vmatpush.msra.mxu0 %v7528
        %7596 = vmatmul.f32.gmra.mxu0 %v7533
        %v7597 = vpop.f32.mrf.mxu0
        %v7598 = vadd.f32 0.0, %v7597
        %7599 = vmatmul.f32.gmra.mxu0 %v7536
        %v7600 = vpop.f32.mrf.mxu0
        %v7601 = vadd.f32 0.0, %v7600
        %7602 = vmatmul.f32.gmra.mxu0 %v7539
        %v7603 = vpop.f32.mrf.mxu0
        %v7604 = vadd.f32 0.0, %v7603
        %7605 = vmatmul.f32.gmra.mxu0 %v7542
        %v7606 = vpop.f32.mrf.mxu0
        %v7607 = vadd.f32 0.0, %v7606
        %7608 = vmatmul.f32.gmra.mxu0 %v7545
        %v7609 = vpop.f32.mrf.mxu0
        %v7610 = vadd.f32 0.0, %v7609
        %7611 = vmatmul.f32.gmra.mxu0 %v7548
        %v7612 = vpop.f32.mrf.mxu0
        %v7613 = vadd.f32 0.0, %v7612
        %7614 = vmatmul.f32.gmra.mxu0 %v7551
        %v7615 = vpop.f32.mrf.mxu0
        %v7616 = vadd.f32 0.0, %v7615
        %7617 = vmatmul.f32.gmra.mxu0 %v7554
        %v7618 = vpop.f32.mrf.mxu0
        %v7619 = vadd.f32 0.0, %v7618
        %7620 = vmatmul.f32.gmra.mxu0 %v7557
        %v7621 = vpop.f32.mrf.mxu0
        %v7622 = vadd.f32 0.0, %v7621
        %7623 = vmatmul.f32.gmra.mxu0 %v7560
        %v7624 = vpop.f32.mrf.mxu0
        %v7625 = vadd.f32 0.0, %v7624
        %7626 = vmatmul.f32.gmra.mxu0 %v7563
        %v7627 = vpop.f32.mrf.mxu0
        %v7628 = vadd.f32 0.0, %v7627
        %7629 = vmatmul.f32.gmra.mxu0 %v7566
        %v7630 = vpop.f32.mrf.mxu0
        %v7631 = vadd.f32 0.0, %v7630
        %7632 = vmatmul.f32.gmra.mxu0 %v7569
        %v7633 = vpop.f32.mrf.mxu0
        %v7634 = vadd.f32 0.0, %v7633
        %7635 = vmatmul.f32.gmra.mxu0 %v7572
        %v7636 = vpop.f32.mrf.mxu0
        %v7637 = vadd.f32 0.0, %v7636
        %7638 = vmatmul.f32.gmra.mxu0 %v7575
        %v7639 = vpop.f32.mrf.mxu0
        %v7640 = vadd.f32 0.0, %v7639
        %7641 = vmatmul.f32.gmra.mxu0 %v7578
        %v7642 = vpop.f32.mrf.mxu0
        %v7643 = vadd.f32 0.0, %v7642
        %7644 = vdwg.mxu0
        %v7645 = vadd.f32 %v7496, %v7598
        %v7646 = vadd.f32 %v7497, %v7601
        %v7647 = vadd.f32 %v7498, %v7604
        %v7648 = vadd.f32 %v7499, %v7607
        %v7649 = vadd.f32 %v7500, %v7610
        %v7650 = vadd.f32 %v7501, %v7613
        %v7651 = vadd.f32 %v7502, %v7616
        %v7652 = vadd.f32 %v7503, %v7619
        %v7653 = vadd.f32 %v7504, %v7622
        %v7654 = vadd.f32 %v7505, %v7625
        %v7655 = vadd.f32 %v7506, %v7628
        %v7656 = vadd.f32 %v7507, %v7631
        %v7657 = vadd.f32 %v7508, %v7634
        %v7658 = vadd.f32 %v7509, %v7637
        %v7659 = vadd.f32 %v7510, %v7640
        %v7660 = vadd.f32 %v7511, %v7643
        %v7661 = vld [vmem:[#allocation2 + $0x241] sm:$0xff]
        %v7662 = vld [vmem:[#allocation2 + $0x249] sm:$0xff]
        %v7663 = vld [vmem:[#allocation2 + $0x251] sm:$0xff]
        %v7664 = vld [vmem:[#allocation2 + $0x259] sm:$0xff]
        %v7665 = vld [vmem:[#allocation2 + $0x261] sm:$0xff]
        %v7666 = vld [vmem:[#allocation2 + $0x269] sm:$0xff]
        %v7667 = vld [vmem:[#allocation2 + $0x271] sm:$0xff]
        %v7668 = vld [vmem:[#allocation2 + $0x279] sm:$0xff]
        %v7669 = vld [vmem:[#allocation2 + $0x281] sm:$0xff]
        %v7670 = vld [vmem:[#allocation2 + $0x289] sm:$0xff]
        %v7671 = vld [vmem:[#allocation2 + $0x291] sm:$0xff]
        %v7672 = vld [vmem:[#allocation2 + $0x299] sm:$0xff]
        %v7673 = vld [vmem:[#allocation2 + $0x2a1] sm:$0xff]
        %v7674 = vld [vmem:[#allocation2 + $0x2a9] sm:$0xff]
        %v7675 = vld [vmem:[#allocation2 + $0x2b1] sm:$0xff]
        %v7676 = vld [vmem:[#allocation2 + $0x2b9] sm:$0xff]
        %v7677 = vld [vmem:[%s2230] sm:$0xff]
        %v7678 = vld [vmem:[%s2230 + $0x8] sm:$0xff]
        %v7679 = vld [vmem:[%s2230 + $0x10] sm:$0xff]
        %v7680 = vld [vmem:[%s2230 + $0x18] sm:$0xff]
        %v7682 = vsel %vm1092, %v7661, 0
        %v7685 = vsel %vm1092, %v7662, 0
        %v7688 = vsel %vm1092, %v7663, 0
        %v7691 = vsel %vm1092, %v7664, 0
        %v7694 = vsel %vm1092, %v7665, 0
        %v7697 = vsel %vm1092, %v7666, 0
        %v7700 = vsel %vm1092, %v7667, 0
        %v7703 = vsel %vm1092, %v7668, 0
        %v7706 = vsel %vm1092, %v7669, 0
        %v7709 = vsel %vm1092, %v7670, 0
        %v7712 = vsel %vm1092, %v7671, 0
        %v7715 = vsel %vm1092, %v7672, 0
        %v7718 = vsel %vm1092, %v7673, 0
        %v7721 = vsel %vm1092, %v7674, 0
        %v7724 = vsel %vm1092, %v7675, 0
        %v7727 = vsel %vm1092, %v7676, 0
        %7729 = vmatpush.msra.mxu0 0.0
        %7730 = vmatpush.msra.mxu0 0.0
        %7731 = vmatpush.msra.mxu0 0.0
        %7732 = vmatpush.msra.mxu0 0.0
        %7733 = vmatpush.msra.mxu0 0.0
        %7734 = vmatpush.msra.mxu0 0.0
        %7735 = vmatpush.msra.mxu0 0.0
        %7736 = vmatpush.msra.mxu0 0.0
        %7737 = vmatpush.msra.mxu0 0.0
        %7738 = vmatpush.msra.mxu0 0.0
        %7739 = vmatpush.msra.mxu0 0.0
        %7740 = vmatpush.msra.mxu0 0.0
        %7741 = vmatpush.msra.mxu0 %v7680
        %7742 = vmatpush.msra.mxu0 %v7679
        %7743 = vmatpush.msra.mxu0 %v7678
        %7744 = vmatpush.msra.mxu0 %v7677
        %7745 = vmatmul.f32.gmra.mxu0 %v7682
        %v7746 = vpop.f32.mrf.mxu0
        %v7747 = vadd.f32 0.0, %v7746
        %7748 = vmatmul.f32.gmra.mxu0 %v7685
        %v7749 = vpop.f32.mrf.mxu0
        %v7750 = vadd.f32 0.0, %v7749
        %7751 = vmatmul.f32.gmra.mxu0 %v7688
        %v7752 = vpop.f32.mrf.mxu0
        %v7753 = vadd.f32 0.0, %v7752
        %7754 = vmatmul.f32.gmra.mxu0 %v7691
        %v7755 = vpop.f32.mrf.mxu0
        %v7756 = vadd.f32 0.0, %v7755
        %7757 = vmatmul.f32.gmra.mxu0 %v7694
        %v7758 = vpop.f32.mrf.mxu0
        %v7759 = vadd.f32 0.0, %v7758
        %7760 = vmatmul.f32.gmra.mxu0 %v7697
        %v7761 = vpop.f32.mrf.mxu0
        %v7762 = vadd.f32 0.0, %v7761
        %7763 = vmatmul.f32.gmra.mxu0 %v7700
        %v7764 = vpop.f32.mrf.mxu0
        %v7765 = vadd.f32 0.0, %v7764
        %7766 = vmatmul.f32.gmra.mxu0 %v7703
        %v7767 = vpop.f32.mrf.mxu0
        %v7768 = vadd.f32 0.0, %v7767
        %7769 = vmatmul.f32.gmra.mxu0 %v7706
        %v7770 = vpop.f32.mrf.mxu0
        %v7771 = vadd.f32 0.0, %v7770
        %7772 = vmatmul.f32.gmra.mxu0 %v7709
        %v7773 = vpop.f32.mrf.mxu0
        %v7774 = vadd.f32 0.0, %v7773
        %7775 = vmatmul.f32.gmra.mxu0 %v7712
        %v7776 = vpop.f32.mrf.mxu0
        %v7777 = vadd.f32 0.0, %v7776
        %7778 = vmatmul.f32.gmra.mxu0 %v7715
        %v7779 = vpop.f32.mrf.mxu0
        %v7780 = vadd.f32 0.0, %v7779
        %7781 = vmatmul.f32.gmra.mxu0 %v7718
        %v7782 = vpop.f32.mrf.mxu0
        %v7783 = vadd.f32 0.0, %v7782
        %7784 = vmatmul.f32.gmra.mxu0 %v7721
        %v7785 = vpop.f32.mrf.mxu0
        %v7786 = vadd.f32 0.0, %v7785
        %7787 = vmatmul.f32.gmra.mxu0 %v7724
        %v7788 = vpop.f32.mrf.mxu0
        %v7789 = vadd.f32 0.0, %v7788
        %7790 = vmatmul.f32.gmra.mxu0 %v7727
        %v7791 = vpop.f32.mrf.mxu0
        %v7792 = vadd.f32 0.0, %v7791
        %7793 = vdwg.mxu0
        %v7794 = vadd.f32 %v7645, %v7747
        %v7795 = vadd.f32 %v7646, %v7750
        %v7796 = vadd.f32 %v7647, %v7753
        %v7797 = vadd.f32 %v7648, %v7756
        %v7798 = vadd.f32 %v7649, %v7759
        %v7799 = vadd.f32 %v7650, %v7762
        %v7800 = vadd.f32 %v7651, %v7765
        %v7801 = vadd.f32 %v7652, %v7768
        %v7802 = vadd.f32 %v7653, %v7771
        %v7803 = vadd.f32 %v7654, %v7774
        %v7804 = vadd.f32 %v7655, %v7777
        %v7805 = vadd.f32 %v7656, %v7780
        %v7806 = vadd.f32 %v7657, %v7783
        %v7807 = vadd.f32 %v7658, %v7786
        %v7808 = vadd.f32 %v7659, %v7789
        %v7809 = vadd.f32 %v7660, %v7792
        %v7810 = vld [vmem:[#allocation2 + $0x242] sm:$0xff]
        %v7811 = vld [vmem:[#allocation2 + $0x24a] sm:$0xff]
        %v7812 = vld [vmem:[#allocation2 + $0x252] sm:$0xff]
        %v7813 = vld [vmem:[#allocation2 + $0x25a] sm:$0xff]
        %v7814 = vld [vmem:[#allocation2 + $0x262] sm:$0xff]
        %v7815 = vld [vmem:[#allocation2 + $0x26a] sm:$0xff]
        %v7816 = vld [vmem:[#allocation2 + $0x272] sm:$0xff]
        %v7817 = vld [vmem:[#allocation2 + $0x27a] sm:$0xff]
        %v7818 = vld [vmem:[#allocation2 + $0x282] sm:$0xff]
        %v7819 = vld [vmem:[#allocation2 + $0x28a] sm:$0xff]
        %v7820 = vld [vmem:[#allocation2 + $0x292] sm:$0xff]
        %v7821 = vld [vmem:[#allocation2 + $0x29a] sm:$0xff]
        %v7822 = vld [vmem:[#allocation2 + $0x2a2] sm:$0xff]
        %v7823 = vld [vmem:[#allocation2 + $0x2aa] sm:$0xff]
        %v7824 = vld [vmem:[#allocation2 + $0x2b2] sm:$0xff]
        %v7825 = vld [vmem:[#allocation2 + $0x2ba] sm:$0xff]
        %v7826 = vld [vmem:[%s2380] sm:$0xff]
        %v7827 = vld [vmem:[%s2380 + $0x8] sm:$0xff]
        %v7828 = vld [vmem:[%s2380 + $0x10] sm:$0xff]
        %v7829 = vld [vmem:[%s2380 + $0x18] sm:$0xff]
        %v7831 = vsel %vm1092, %v7810, 0
        %v7834 = vsel %vm1092, %v7811, 0
        %v7837 = vsel %vm1092, %v7812, 0
        %v7840 = vsel %vm1092, %v7813, 0
        %v7843 = vsel %vm1092, %v7814, 0
        %v7846 = vsel %vm1092, %v7815, 0
        %v7849 = vsel %vm1092, %v7816, 0
        %v7852 = vsel %vm1092, %v7817, 0
        %v7855 = vsel %vm1092, %v7818, 0
        %v7858 = vsel %vm1092, %v7819, 0
        %v7861 = vsel %vm1092, %v7820, 0
        %v7864 = vsel %vm1092, %v7821, 0
        %v7867 = vsel %vm1092, %v7822, 0
        %v7870 = vsel %vm1092, %v7823, 0
        %v7873 = vsel %vm1092, %v7824, 0
        %v7876 = vsel %vm1092, %v7825, 0
        %7878 = vmatpush.msra.mxu0 0.0
        %7879 = vmatpush.msra.mxu0 0.0
        %7880 = vmatpush.msra.mxu0 0.0
        %7881 = vmatpush.msra.mxu0 0.0
        %7882 = vmatpush.msra.mxu0 0.0
        %7883 = vmatpush.msra.mxu0 0.0
        %7884 = vmatpush.msra.mxu0 0.0
        %7885 = vmatpush.msra.mxu0 0.0
        %7886 = vmatpush.msra.mxu0 0.0
        %7887 = vmatpush.msra.mxu0 0.0
        %7888 = vmatpush.msra.mxu0 0.0
        %7889 = vmatpush.msra.mxu0 0.0
        %7890 = vmatpush.msra.mxu0 %v7829
        %7891 = vmatpush.msra.mxu0 %v7828
        %7892 = vmatpush.msra.mxu0 %v7827
        %7893 = vmatpush.msra.mxu0 %v7826
        %7894 = vmatmul.f32.gmra.mxu0 %v7831
        %v7895 = vpop.f32.mrf.mxu0
        %v7896 = vadd.f32 0.0, %v7895
        %7897 = vmatmul.f32.gmra.mxu0 %v7834
        %v7898 = vpop.f32.mrf.mxu0
        %v7899 = vadd.f32 0.0, %v7898
        %7900 = vmatmul.f32.gmra.mxu0 %v7837
        %v7901 = vpop.f32.mrf.mxu0
        %v7902 = vadd.f32 0.0, %v7901
        %7903 = vmatmul.f32.gmra.mxu0 %v7840
        %v7904 = vpop.f32.mrf.mxu0
        %v7905 = vadd.f32 0.0, %v7904
        %7906 = vmatmul.f32.gmra.mxu0 %v7843
        %v7907 = vpop.f32.mrf.mxu0
        %v7908 = vadd.f32 0.0, %v7907
        %7909 = vmatmul.f32.gmra.mxu0 %v7846
        %v7910 = vpop.f32.mrf.mxu0
        %v7911 = vadd.f32 0.0, %v7910
        %7912 = vmatmul.f32.gmra.mxu0 %v7849
        %v7913 = vpop.f32.mrf.mxu0
        %v7914 = vadd.f32 0.0, %v7913
        %7915 = vmatmul.f32.gmra.mxu0 %v7852
        %v7916 = vpop.f32.mrf.mxu0
        %v7917 = vadd.f32 0.0, %v7916
        %7918 = vmatmul.f32.gmra.mxu0 %v7855
        %v7919 = vpop.f32.mrf.mxu0
        %v7920 = vadd.f32 0.0, %v7919
        %7921 = vmatmul.f32.gmra.mxu0 %v7858
        %v7922 = vpop.f32.mrf.mxu0
        %v7923 = vadd.f32 0.0, %v7922
        %7924 = vmatmul.f32.gmra.mxu0 %v7861
        %v7925 = vpop.f32.mrf.mxu0
        %v7926 = vadd.f32 0.0, %v7925
        %7927 = vmatmul.f32.gmra.mxu0 %v7864
        %v7928 = vpop.f32.mrf.mxu0
        %v7929 = vadd.f32 0.0, %v7928
        %7930 = vmatmul.f32.gmra.mxu0 %v7867
        %v7931 = vpop.f32.mrf.mxu0
        %v7932 = vadd.f32 0.0, %v7931
        %7933 = vmatmul.f32.gmra.mxu0 %v7870
        %v7934 = vpop.f32.mrf.mxu0
        %v7935 = vadd.f32 0.0, %v7934
        %7936 = vmatmul.f32.gmra.mxu0 %v7873
        %v7937 = vpop.f32.mrf.mxu0
        %v7938 = vadd.f32 0.0, %v7937
        %7939 = vmatmul.f32.gmra.mxu0 %v7876
        %v7940 = vpop.f32.mrf.mxu0
        %v7941 = vadd.f32 0.0, %v7940
        %7942 = vdwg.mxu0
        %v7943 = vadd.f32 %v7794, %v7896
        %v7944 = vadd.f32 %v7795, %v7899
        %v7945 = vadd.f32 %v7796, %v7902
        %v7946 = vadd.f32 %v7797, %v7905
        %v7947 = vadd.f32 %v7798, %v7908
        %v7948 = vadd.f32 %v7799, %v7911
        %v7949 = vadd.f32 %v7800, %v7914
        %v7950 = vadd.f32 %v7801, %v7917
        %v7951 = vadd.f32 %v7802, %v7920
        %v7952 = vadd.f32 %v7803, %v7923
        %v7953 = vadd.f32 %v7804, %v7926
        %v7954 = vadd.f32 %v7805, %v7929
        %v7955 = vadd.f32 %v7806, %v7932
        %v7956 = vadd.f32 %v7807, %v7935
        %v7957 = vadd.f32 %v7808, %v7938
        %v7958 = vadd.f32 %v7809, %v7941
        %v7959 = vld [vmem:[%s4] sm:$0x1]
        %v7961 = vperm.slane %v7959, 0
        %v7963 = vadd.f32 %v7943, %v7961
        %v7964 = vadd.f32 %v7944, %v7961
        %v7965 = vadd.f32 %v7945, %v7961
        %v7966 = vadd.f32 %v7946, %v7961
        %v7967 = vadd.f32 %v7947, %v7961
        %v7968 = vadd.f32 %v7948, %v7961
        %v7969 = vadd.f32 %v7949, %v7961
        %v7970 = vadd.f32 %v7950, %v7961
        %v7971 = vadd.f32 %v7951, %v7961
        %v7972 = vadd.f32 %v7952, %v7961
        %v7973 = vadd.f32 %v7953, %v7961
        %v7974 = vadd.f32 %v7954, %v7961
        %v7975 = vadd.f32 %v7955, %v7961
        %v7976 = vadd.f32 %v7956, %v7961
        %v7977 = vadd.f32 %v7957, %v7961
        %v7978 = vadd.f32 %v7958, %v7961
        %v7979 = vmax.f32 %v7963, 0.0
        %v7980 = vmax.f32 %v7964, 0.0
        %v7981 = vmax.f32 %v7965, 0.0
        %v7982 = vmax.f32 %v7966, 0.0
        %v7983 = vmax.f32 %v7967, 0.0
        %v7984 = vmax.f32 %v7968, 0.0
        %v7985 = vmax.f32 %v7969, 0.0
        %v7986 = vmax.f32 %v7970, 0.0
        %v7987 = vmax.f32 %v7971, 0.0
        %v7988 = vmax.f32 %v7972, 0.0
        %v7989 = vmax.f32 %v7973, 0.0
        %v7990 = vmax.f32 %v7974, 0.0
        %v7991 = vmax.f32 %v7975, 0.0
        %v7992 = vmax.f32 %v7976, 0.0
        %v7993 = vmax.f32 %v7977, 0.0
        %v7994 = vmax.f32 %v7978, 0.0
        %7995 = vst.msk [vmem:[#allocation3 + $0x200] sm:$0xff] %vm2550, %v7979
        %7996 = vst.msk [vmem:[#allocation3 + $0x208] sm:$0xff] %vm2550, %v7980
        %7997 = vst.msk [vmem:[#allocation3 + $0x210] sm:$0xff] %vm2550, %v7981
        %7998 = vst.msk [vmem:[#allocation3 + $0x218] sm:$0xff] %vm2550, %v7982
        %7999 = vst.msk [vmem:[#allocation3 + $0x220] sm:$0xff] %vm2550, %v7983
        %8000 = vst.msk [vmem:[#allocation3 + $0x228] sm:$0xff] %vm2550, %v7984
        %8001 = vst.msk [vmem:[#allocation3 + $0x230] sm:$0xff] %vm2550, %v7985
        %8002 = vst.msk [vmem:[#allocation3 + $0x238] sm:$0xff] %vm2550, %v7986
        %8003 = vst.msk [vmem:[#allocation3 + $0x240] sm:$0xff] %vm2550, %v7987
        %8004 = vst.msk [vmem:[#allocation3 + $0x248] sm:$0xff] %vm2550, %v7988
        %8005 = vst.msk [vmem:[#allocation3 + $0x250] sm:$0xff] %vm2550, %v7989
        %8006 = vst.msk [vmem:[#allocation3 + $0x258] sm:$0xff] %vm2550, %v7990
        %8007 = vst.msk [vmem:[#allocation3 + $0x260] sm:$0xff] %vm2550, %v7991
        %8008 = vst.msk [vmem:[#allocation3 + $0x268] sm:$0xff] %vm2550, %v7992
        %8009 = vst.msk [vmem:[#allocation3 + $0x270] sm:$0xff] %vm2550, %v7993
        %8010 = vst.msk [vmem:[#allocation3 + $0x278] sm:$0xff] %vm2550, %v7994
        %v8011 = vld [vmem:[#allocation2 + $0x280] sm:$0xff]
        %v8012 = vld [vmem:[#allocation2 + $0x288] sm:$0xff]
        %v8013 = vld [vmem:[#allocation2 + $0x290] sm:$0xff]
        %v8014 = vld [vmem:[#allocation2 + $0x298] sm:$0xff]
        %v8015 = vld [vmem:[#allocation2 + $0x2a0] sm:$0xff]
        %v8016 = vld [vmem:[#allocation2 + $0x2a8] sm:$0xff]
        %v8017 = vld [vmem:[#allocation2 + $0x2b0] sm:$0xff]
        %v8018 = vld [vmem:[#allocation2 + $0x2b8] sm:$0xff]
        %v8019 = vld [vmem:[#allocation2 + $0x2c0] sm:$0xff]
        %v8020 = vld [vmem:[#allocation2 + $0x2c8] sm:$0xff]
        %v8021 = vld [vmem:[#allocation2 + $0x2d0] sm:$0xff]
        %v8022 = vld [vmem:[#allocation2 + $0x2d8] sm:$0xff]
        %v8023 = vld [vmem:[#allocation2 + $0x2e0] sm:$0xff]
        %v8024 = vld [vmem:[#allocation2 + $0x2e8] sm:$0xff]
        %v8025 = vld [vmem:[#allocation2 + $0x2f0] sm:$0xff]
        %v8026 = vld [vmem:[#allocation2 + $0x2f8] sm:$0xff]
        %v8027 = vld [vmem:[%s3] sm:$0xff]
        %v8028 = vld [vmem:[%s3 + $0x8] sm:$0xff]
        %v8029 = vld [vmem:[%s3 + $0x10] sm:$0xff]
        %v8030 = vld [vmem:[%s3 + $0x18] sm:$0xff]
        %v8031 = vld [vmem:[#allocation2 + $0x281] sm:$0xff]
        %v8032 = vld [vmem:[#allocation2 + $0x289] sm:$0xff]
        %v8033 = vld [vmem:[#allocation2 + $0x291] sm:$0xff]
        %v8034 = vld [vmem:[#allocation2 + $0x299] sm:$0xff]
        %v8035 = vld [vmem:[#allocation2 + $0x2a1] sm:$0xff]
        %v8036 = vld [vmem:[#allocation2 + $0x2a9] sm:$0xff]
        %v8037 = vld [vmem:[#allocation2 + $0x2b1] sm:$0xff]
        %v8038 = vld [vmem:[#allocation2 + $0x2b9] sm:$0xff]
        %v8039 = vld [vmem:[#allocation2 + $0x2c1] sm:$0xff]
        %v8040 = vld [vmem:[#allocation2 + $0x2c9] sm:$0xff]
        %v8041 = vld [vmem:[#allocation2 + $0x2d1] sm:$0xff]
        %v8042 = vld [vmem:[#allocation2 + $0x2d9] sm:$0xff]
        %v8043 = vld [vmem:[#allocation2 + $0x2e1] sm:$0xff]
        %v8044 = vld [vmem:[#allocation2 + $0x2e9] sm:$0xff]
        %v8045 = vld [vmem:[#allocation2 + $0x2f1] sm:$0xff]
        %v8046 = vld [vmem:[#allocation2 + $0x2f9] sm:$0xff]
        %v8047 = vld [vmem:[%s1233] sm:$0xff]
        %v8048 = vld [vmem:[%s1233 + $0x8] sm:$0xff]
        %v8049 = vld [vmem:[%s1233 + $0x10] sm:$0xff]
        %v8050 = vld [vmem:[%s1233 + $0x18] sm:$0xff]
        %v8052 = vsel %vm1092, %v8031, 0
        %v8055 = vsel %vm1092, %v8032, 0
        %v8058 = vsel %vm1092, %v8033, 0
        %v8061 = vsel %vm1092, %v8034, 0
        %v8064 = vsel %vm1092, %v8035, 0
        %v8067 = vsel %vm1092, %v8036, 0
        %v8070 = vsel %vm1092, %v8037, 0
        %v8073 = vsel %vm1092, %v8038, 0
        %v8076 = vsel %vm1092, %v8039, 0
        %v8079 = vsel %vm1092, %v8040, 0
        %v8082 = vsel %vm1092, %v8041, 0
        %v8085 = vsel %vm1092, %v8042, 0
        %v8088 = vsel %vm1092, %v8043, 0
        %v8091 = vsel %vm1092, %v8044, 0
        %v8094 = vsel %vm1092, %v8045, 0
        %v8097 = vsel %vm1092, %v8046, 0
        %8099 = vmatpush.msra.mxu0 0.0
        %8100 = vmatpush.msra.mxu0 0.0
        %8101 = vmatpush.msra.mxu0 0.0
        %8102 = vmatpush.msra.mxu0 0.0
        %8103 = vmatpush.msra.mxu0 0.0
        %8104 = vmatpush.msra.mxu0 0.0
        %8105 = vmatpush.msra.mxu0 0.0
        %8106 = vmatpush.msra.mxu0 0.0
        %8107 = vmatpush.msra.mxu0 0.0
        %8108 = vmatpush.msra.mxu0 0.0
        %8109 = vmatpush.msra.mxu0 0.0
        %8110 = vmatpush.msra.mxu0 0.0
        %8111 = vmatpush.msra.mxu0 %v8050
        %8112 = vmatpush.msra.mxu0 %v8049
        %8113 = vmatpush.msra.mxu0 %v8048
        %8114 = vmatpush.msra.mxu0 %v8047
        %8115 = vmatmul.f32.gmra.mxu0 %v8052
        %v8116 = vpop.f32.mrf.mxu0
        %v8117 = vadd.f32 0.0, %v8116
        %8118 = vmatmul.f32.gmra.mxu0 %v8055
        %v8119 = vpop.f32.mrf.mxu0
        %v8120 = vadd.f32 0.0, %v8119
        %8121 = vmatmul.f32.gmra.mxu0 %v8058
        %v8122 = vpop.f32.mrf.mxu0
        %v8123 = vadd.f32 0.0, %v8122
        %8124 = vmatmul.f32.gmra.mxu0 %v8061
        %v8125 = vpop.f32.mrf.mxu0
        %v8126 = vadd.f32 0.0, %v8125
        %8127 = vmatmul.f32.gmra.mxu0 %v8064
        %v8128 = vpop.f32.mrf.mxu0
        %v8129 = vadd.f32 0.0, %v8128
        %8130 = vmatmul.f32.gmra.mxu0 %v8067
        %v8131 = vpop.f32.mrf.mxu0
        %v8132 = vadd.f32 0.0, %v8131
        %8133 = vmatmul.f32.gmra.mxu0 %v8070
        %v8134 = vpop.f32.mrf.mxu0
        %v8135 = vadd.f32 0.0, %v8134
        %8136 = vmatmul.f32.gmra.mxu0 %v8073
        %v8137 = vpop.f32.mrf.mxu0
        %v8138 = vadd.f32 0.0, %v8137
        %8139 = vmatmul.f32.gmra.mxu0 %v8076
        %v8140 = vpop.f32.mrf.mxu0
        %v8141 = vadd.f32 0.0, %v8140
        %8142 = vmatmul.f32.gmra.mxu0 %v8079
        %v8143 = vpop.f32.mrf.mxu0
        %v8144 = vadd.f32 0.0, %v8143
        %8145 = vmatmul.f32.gmra.mxu0 %v8082
        %v8146 = vpop.f32.mrf.mxu0
        %v8147 = vadd.f32 0.0, %v8146
        %8148 = vmatmul.f32.gmra.mxu0 %v8085
        %v8149 = vpop.f32.mrf.mxu0
        %v8150 = vadd.f32 0.0, %v8149
        %8151 = vmatmul.f32.gmra.mxu0 %v8088
        %v8152 = vpop.f32.mrf.mxu0
        %v8153 = vadd.f32 0.0, %v8152
        %8154 = vmatmul.f32.gmra.mxu0 %v8091
        %v8155 = vpop.f32.mrf.mxu0
        %v8156 = vadd.f32 0.0, %v8155
        %8157 = vmatmul.f32.gmra.mxu0 %v8094
        %v8158 = vpop.f32.mrf.mxu0
        %v8159 = vadd.f32 0.0, %v8158
        %8160 = vmatmul.f32.gmra.mxu0 %v8097
        %v8161 = vpop.f32.mrf.mxu0
        %v8162 = vadd.f32 0.0, %v8161
        %8163 = vdwg.mxu0
        %v8165 = vsel %vm1092, %v8011, 0
        %v8168 = vsel %vm1092, %v8012, 0
        %v8171 = vsel %vm1092, %v8013, 0
        %v8174 = vsel %vm1092, %v8014, 0
        %v8177 = vsel %vm1092, %v8015, 0
        %v8180 = vsel %vm1092, %v8016, 0
        %v8183 = vsel %vm1092, %v8017, 0
        %v8186 = vsel %vm1092, %v8018, 0
        %v8189 = vsel %vm1092, %v8019, 0
        %v8192 = vsel %vm1092, %v8020, 0
        %v8195 = vsel %vm1092, %v8021, 0
        %v8198 = vsel %vm1092, %v8022, 0
        %v8201 = vsel %vm1092, %v8023, 0
        %v8204 = vsel %vm1092, %v8024, 0
        %v8207 = vsel %vm1092, %v8025, 0
        %v8210 = vsel %vm1092, %v8026, 0
        %8212 = vmatpush.msra.mxu0 0.0
        %8213 = vmatpush.msra.mxu0 0.0
        %8214 = vmatpush.msra.mxu0 0.0
        %8215 = vmatpush.msra.mxu0 0.0
        %8216 = vmatpush.msra.mxu0 0.0
        %8217 = vmatpush.msra.mxu0 0.0
        %8218 = vmatpush.msra.mxu0 0.0
        %8219 = vmatpush.msra.mxu0 0.0
        %8220 = vmatpush.msra.mxu0 0.0
        %8221 = vmatpush.msra.mxu0 0.0
        %8222 = vmatpush.msra.mxu0 0.0
        %8223 = vmatpush.msra.mxu0 0.0
        %8224 = vmatpush.msra.mxu0 %v8030
        %8225 = vmatpush.msra.mxu0 %v8029
        %8226 = vmatpush.msra.mxu0 %v8028
        %8227 = vmatpush.msra.mxu0 %v8027
        %8228 = vmatmul.f32.gmra.mxu0 %v8165
        %v8229 = vpop.f32.mrf.mxu0
        %v8230 = vadd.f32 %v8117, %v8229
        %8231 = vmatmul.f32.gmra.mxu0 %v8168
        %v8232 = vpop.f32.mrf.mxu0
        %v8233 = vadd.f32 %v8120, %v8232
        %8234 = vmatmul.f32.gmra.mxu0 %v8171
        %v8235 = vpop.f32.mrf.mxu0
        %v8236 = vadd.f32 %v8123, %v8235
        %8237 = vmatmul.f32.gmra.mxu0 %v8174
        %v8238 = vpop.f32.mrf.mxu0
        %v8239 = vadd.f32 %v8126, %v8238
        %8240 = vmatmul.f32.gmra.mxu0 %v8177
        %v8241 = vpop.f32.mrf.mxu0
        %v8242 = vadd.f32 %v8129, %v8241
        %8243 = vmatmul.f32.gmra.mxu0 %v8180
        %v8244 = vpop.f32.mrf.mxu0
        %v8245 = vadd.f32 %v8132, %v8244
        %8246 = vmatmul.f32.gmra.mxu0 %v8183
        %v8247 = vpop.f32.mrf.mxu0
        %v8248 = vadd.f32 %v8135, %v8247
        %8249 = vmatmul.f32.gmra.mxu0 %v8186
        %v8250 = vpop.f32.mrf.mxu0
        %v8251 = vadd.f32 %v8138, %v8250
        %8252 = vmatmul.f32.gmra.mxu0 %v8189
        %v8253 = vpop.f32.mrf.mxu0
        %v8254 = vadd.f32 %v8141, %v8253
        %8255 = vmatmul.f32.gmra.mxu0 %v8192
        %v8256 = vpop.f32.mrf.mxu0
        %v8257 = vadd.f32 %v8144, %v8256
        %8258 = vmatmul.f32.gmra.mxu0 %v8195
        %v8259 = vpop.f32.mrf.mxu0
        %v8260 = vadd.f32 %v8147, %v8259
        %8261 = vmatmul.f32.gmra.mxu0 %v8198
        %v8262 = vpop.f32.mrf.mxu0
        %v8263 = vadd.f32 %v8150, %v8262
        %8264 = vmatmul.f32.gmra.mxu0 %v8201
        %v8265 = vpop.f32.mrf.mxu0
        %v8266 = vadd.f32 %v8153, %v8265
        %8267 = vmatmul.f32.gmra.mxu0 %v8204
        %v8268 = vpop.f32.mrf.mxu0
        %v8269 = vadd.f32 %v8156, %v8268
        %8270 = vmatmul.f32.gmra.mxu0 %v8207
        %v8271 = vpop.f32.mrf.mxu0
        %v8272 = vadd.f32 %v8159, %v8271
        %8273 = vmatmul.f32.gmra.mxu0 %v8210
        %v8274 = vpop.f32.mrf.mxu0
        %v8275 = vadd.f32 %v8162, %v8274
        %8276 = vdwg.mxu0
        %v8277 = vld [vmem:[#allocation2 + $0x282] sm:$0xff]
        %v8278 = vld [vmem:[#allocation2 + $0x28a] sm:$0xff]
        %v8279 = vld [vmem:[#allocation2 + $0x292] sm:$0xff]
        %v8280 = vld [vmem:[#allocation2 + $0x29a] sm:$0xff]
        %v8281 = vld [vmem:[#allocation2 + $0x2a2] sm:$0xff]
        %v8282 = vld [vmem:[#allocation2 + $0x2aa] sm:$0xff]
        %v8283 = vld [vmem:[#allocation2 + $0x2b2] sm:$0xff]
        %v8284 = vld [vmem:[#allocation2 + $0x2ba] sm:$0xff]
        %v8285 = vld [vmem:[#allocation2 + $0x2c2] sm:$0xff]
        %v8286 = vld [vmem:[#allocation2 + $0x2ca] sm:$0xff]
        %v8287 = vld [vmem:[#allocation2 + $0x2d2] sm:$0xff]
        %v8288 = vld [vmem:[#allocation2 + $0x2da] sm:$0xff]
        %v8289 = vld [vmem:[#allocation2 + $0x2e2] sm:$0xff]
        %v8290 = vld [vmem:[#allocation2 + $0x2ea] sm:$0xff]
        %v8291 = vld [vmem:[#allocation2 + $0x2f2] sm:$0xff]
        %v8292 = vld [vmem:[#allocation2 + $0x2fa] sm:$0xff]
        %v8293 = vld [vmem:[%s1480] sm:$0xff]
        %v8294 = vld [vmem:[%s1480 + $0x8] sm:$0xff]
        %v8295 = vld [vmem:[%s1480 + $0x10] sm:$0xff]
        %v8296 = vld [vmem:[%s1480 + $0x18] sm:$0xff]
        %v8298 = vsel %vm1092, %v8277, 0
        %v8301 = vsel %vm1092, %v8278, 0
        %v8304 = vsel %vm1092, %v8279, 0
        %v8307 = vsel %vm1092, %v8280, 0
        %v8310 = vsel %vm1092, %v8281, 0
        %v8313 = vsel %vm1092, %v8282, 0
        %v8316 = vsel %vm1092, %v8283, 0
        %v8319 = vsel %vm1092, %v8284, 0
        %v8322 = vsel %vm1092, %v8285, 0
        %v8325 = vsel %vm1092, %v8286, 0
        %v8328 = vsel %vm1092, %v8287, 0
        %v8331 = vsel %vm1092, %v8288, 0
        %v8334 = vsel %vm1092, %v8289, 0
        %v8337 = vsel %vm1092, %v8290, 0
        %v8340 = vsel %vm1092, %v8291, 0
        %v8343 = vsel %vm1092, %v8292, 0
        %8345 = vmatpush.msra.mxu0 0.0
        %8346 = vmatpush.msra.mxu0 0.0
        %8347 = vmatpush.msra.mxu0 0.0
        %8348 = vmatpush.msra.mxu0 0.0
        %8349 = vmatpush.msra.mxu0 0.0
        %8350 = vmatpush.msra.mxu0 0.0
        %8351 = vmatpush.msra.mxu0 0.0
        %8352 = vmatpush.msra.mxu0 0.0
        %8353 = vmatpush.msra.mxu0 0.0
        %8354 = vmatpush.msra.mxu0 0.0
        %8355 = vmatpush.msra.mxu0 0.0
        %8356 = vmatpush.msra.mxu0 0.0
        %8357 = vmatpush.msra.mxu0 %v8296
        %8358 = vmatpush.msra.mxu0 %v8295
        %8359 = vmatpush.msra.mxu0 %v8294
        %8360 = vmatpush.msra.mxu0 %v8293
        %8361 = vmatmul.f32.gmra.mxu0 %v8298
        %v8362 = vpop.f32.mrf.mxu0
        %v8363 = vadd.f32 0.0, %v8362
        %8364 = vmatmul.f32.gmra.mxu0 %v8301
        %v8365 = vpop.f32.mrf.mxu0
        %v8366 = vadd.f32 0.0, %v8365
        %8367 = vmatmul.f32.gmra.mxu0 %v8304
        %v8368 = vpop.f32.mrf.mxu0
        %v8369 = vadd.f32 0.0, %v8368
        %8370 = vmatmul.f32.gmra.mxu0 %v8307
        %v8371 = vpop.f32.mrf.mxu0
        %v8372 = vadd.f32 0.0, %v8371
        %8373 = vmatmul.f32.gmra.mxu0 %v8310
        %v8374 = vpop.f32.mrf.mxu0
        %v8375 = vadd.f32 0.0, %v8374
        %8376 = vmatmul.f32.gmra.mxu0 %v8313
        %v8377 = vpop.f32.mrf.mxu0
        %v8378 = vadd.f32 0.0, %v8377
        %8379 = vmatmul.f32.gmra.mxu0 %v8316
        %v8380 = vpop.f32.mrf.mxu0
        %v8381 = vadd.f32 0.0, %v8380
        %8382 = vmatmul.f32.gmra.mxu0 %v8319
        %v8383 = vpop.f32.mrf.mxu0
        %v8384 = vadd.f32 0.0, %v8383
        %8385 = vmatmul.f32.gmra.mxu0 %v8322
        %v8386 = vpop.f32.mrf.mxu0
        %v8387 = vadd.f32 0.0, %v8386
        %8388 = vmatmul.f32.gmra.mxu0 %v8325
        %v8389 = vpop.f32.mrf.mxu0
        %v8390 = vadd.f32 0.0, %v8389
        %8391 = vmatmul.f32.gmra.mxu0 %v8328
        %v8392 = vpop.f32.mrf.mxu0
        %v8393 = vadd.f32 0.0, %v8392
        %8394 = vmatmul.f32.gmra.mxu0 %v8331
        %v8395 = vpop.f32.mrf.mxu0
        %v8396 = vadd.f32 0.0, %v8395
        %8397 = vmatmul.f32.gmra.mxu0 %v8334
        %v8398 = vpop.f32.mrf.mxu0
        %v8399 = vadd.f32 0.0, %v8398
        %8400 = vmatmul.f32.gmra.mxu0 %v8337
        %v8401 = vpop.f32.mrf.mxu0
        %v8402 = vadd.f32 0.0, %v8401
        %8403 = vmatmul.f32.gmra.mxu0 %v8340
        %v8404 = vpop.f32.mrf.mxu0
        %v8405 = vadd.f32 0.0, %v8404
        %8406 = vmatmul.f32.gmra.mxu0 %v8343
        %v8407 = vpop.f32.mrf.mxu0
        %v8408 = vadd.f32 0.0, %v8407
        %8409 = vdwg.mxu0
        %v8410 = vadd.f32 %v8230, %v8363
        %v8411 = vadd.f32 %v8233, %v8366
        %v8412 = vadd.f32 %v8236, %v8369
        %v8413 = vadd.f32 %v8239, %v8372
        %v8414 = vadd.f32 %v8242, %v8375
        %v8415 = vadd.f32 %v8245, %v8378
        %v8416 = vadd.f32 %v8248, %v8381
        %v8417 = vadd.f32 %v8251, %v8384
        %v8418 = vadd.f32 %v8254, %v8387
        %v8419 = vadd.f32 %v8257, %v8390
        %v8420 = vadd.f32 %v8260, %v8393
        %v8421 = vadd.f32 %v8263, %v8396
        %v8422 = vadd.f32 %v8266, %v8399
        %v8423 = vadd.f32 %v8269, %v8402
        %v8424 = vadd.f32 %v8272, %v8405
        %v8425 = vadd.f32 %v8275, %v8408
        %v8426 = vld [vmem:[#allocation2 + $0x2a0] sm:$0xff]
        %v8427 = vld [vmem:[#allocation2 + $0x2a8] sm:$0xff]
        %v8428 = vld [vmem:[#allocation2 + $0x2b0] sm:$0xff]
        %v8429 = vld [vmem:[#allocation2 + $0x2b8] sm:$0xff]
        %v8430 = vld [vmem:[#allocation2 + $0x2c0] sm:$0xff]
        %v8431 = vld [vmem:[#allocation2 + $0x2c8] sm:$0xff]
        %v8432 = vld [vmem:[#allocation2 + $0x2d0] sm:$0xff]
        %v8433 = vld [vmem:[#allocation2 + $0x2d8] sm:$0xff]
        %v8434 = vld [vmem:[#allocation2 + $0x2e0] sm:$0xff]
        %v8435 = vld [vmem:[#allocation2 + $0x2e8] sm:$0xff]
        %v8436 = vld [vmem:[#allocation2 + $0x2f0] sm:$0xff]
        %v8437 = vld [vmem:[#allocation2 + $0x2f8] sm:$0xff]
        %v8438 = vld [vmem:[#allocation2 + $0x300] sm:$0xff]
        %v8439 = vld [vmem:[#allocation2 + $0x308] sm:$0xff]
        %v8440 = vld [vmem:[#allocation2 + $0x310] sm:$0xff]
        %v8441 = vld [vmem:[#allocation2 + $0x318] sm:$0xff]
        %v8442 = vld [vmem:[%s1630] sm:$0xff]
        %v8443 = vld [vmem:[%s1630 + $0x8] sm:$0xff]
        %v8444 = vld [vmem:[%s1630 + $0x10] sm:$0xff]
        %v8445 = vld [vmem:[%s1630 + $0x18] sm:$0xff]
        %v8447 = vsel %vm1092, %v8426, 0
        %v8450 = vsel %vm1092, %v8427, 0
        %v8453 = vsel %vm1092, %v8428, 0
        %v8456 = vsel %vm1092, %v8429, 0
        %v8459 = vsel %vm1092, %v8430, 0
        %v8462 = vsel %vm1092, %v8431, 0
        %v8465 = vsel %vm1092, %v8432, 0
        %v8468 = vsel %vm1092, %v8433, 0
        %v8471 = vsel %vm1092, %v8434, 0
        %v8474 = vsel %vm1092, %v8435, 0
        %v8477 = vsel %vm1092, %v8436, 0
        %v8480 = vsel %vm1092, %v8437, 0
        %v8483 = vsel %vm1092, %v8438, 0
        %v8486 = vsel %vm1092, %v8439, 0
        %v8489 = vsel %vm1092, %v8440, 0
        %v8492 = vsel %vm1092, %v8441, 0
        %8494 = vmatpush.msra.mxu0 0.0
        %8495 = vmatpush.msra.mxu0 0.0
        %8496 = vmatpush.msra.mxu0 0.0
        %8497 = vmatpush.msra.mxu0 0.0
        %8498 = vmatpush.msra.mxu0 0.0
        %8499 = vmatpush.msra.mxu0 0.0
        %8500 = vmatpush.msra.mxu0 0.0
        %8501 = vmatpush.msra.mxu0 0.0
        %8502 = vmatpush.msra.mxu0 0.0
        %8503 = vmatpush.msra.mxu0 0.0
        %8504 = vmatpush.msra.mxu0 0.0
        %8505 = vmatpush.msra.mxu0 0.0
        %8506 = vmatpush.msra.mxu0 %v8445
        %8507 = vmatpush.msra.mxu0 %v8444
        %8508 = vmatpush.msra.mxu0 %v8443
        %8509 = vmatpush.msra.mxu0 %v8442
        %8510 = vmatmul.f32.gmra.mxu0 %v8447
        %v8511 = vpop.f32.mrf.mxu0
        %v8512 = vadd.f32 0.0, %v8511
        %8513 = vmatmul.f32.gmra.mxu0 %v8450
        %v8514 = vpop.f32.mrf.mxu0
        %v8515 = vadd.f32 0.0, %v8514
        %8516 = vmatmul.f32.gmra.mxu0 %v8453
        %v8517 = vpop.f32.mrf.mxu0
        %v8518 = vadd.f32 0.0, %v8517
        %8519 = vmatmul.f32.gmra.mxu0 %v8456
        %v8520 = vpop.f32.mrf.mxu0
        %v8521 = vadd.f32 0.0, %v8520
        %8522 = vmatmul.f32.gmra.mxu0 %v8459
        %v8523 = vpop.f32.mrf.mxu0
        %v8524 = vadd.f32 0.0, %v8523
        %8525 = vmatmul.f32.gmra.mxu0 %v8462
        %v8526 = vpop.f32.mrf.mxu0
        %v8527 = vadd.f32 0.0, %v8526
        %8528 = vmatmul.f32.gmra.mxu0 %v8465
        %v8529 = vpop.f32.mrf.mxu0
        %v8530 = vadd.f32 0.0, %v8529
        %8531 = vmatmul.f32.gmra.mxu0 %v8468
        %v8532 = vpop.f32.mrf.mxu0
        %v8533 = vadd.f32 0.0, %v8532
        %8534 = vmatmul.f32.gmra.mxu0 %v8471
        %v8535 = vpop.f32.mrf.mxu0
        %v8536 = vadd.f32 0.0, %v8535
        %8537 = vmatmul.f32.gmra.mxu0 %v8474
        %v8538 = vpop.f32.mrf.mxu0
        %v8539 = vadd.f32 0.0, %v8538
        %8540 = vmatmul.f32.gmra.mxu0 %v8477
        %v8541 = vpop.f32.mrf.mxu0
        %v8542 = vadd.f32 0.0, %v8541
        %8543 = vmatmul.f32.gmra.mxu0 %v8480
        %v8544 = vpop.f32.mrf.mxu0
        %v8545 = vadd.f32 0.0, %v8544
        %8546 = vmatmul.f32.gmra.mxu0 %v8483
        %v8547 = vpop.f32.mrf.mxu0
        %v8548 = vadd.f32 0.0, %v8547
        %8549 = vmatmul.f32.gmra.mxu0 %v8486
        %v8550 = vpop.f32.mrf.mxu0
        %v8551 = vadd.f32 0.0, %v8550
        %8552 = vmatmul.f32.gmra.mxu0 %v8489
        %v8553 = vpop.f32.mrf.mxu0
        %v8554 = vadd.f32 0.0, %v8553
        %8555 = vmatmul.f32.gmra.mxu0 %v8492
        %v8556 = vpop.f32.mrf.mxu0
        %v8557 = vadd.f32 0.0, %v8556
        %8558 = vdwg.mxu0
        %v8559 = vadd.f32 %v8410, %v8512
        %v8560 = vadd.f32 %v8411, %v8515
        %v8561 = vadd.f32 %v8412, %v8518
        %v8562 = vadd.f32 %v8413, %v8521
        %v8563 = vadd.f32 %v8414, %v8524
        %v8564 = vadd.f32 %v8415, %v8527
        %v8565 = vadd.f32 %v8416, %v8530
        %v8566 = vadd.f32 %v8417, %v8533
        %v8567 = vadd.f32 %v8418, %v8536
        %v8568 = vadd.f32 %v8419, %v8539
        %v8569 = vadd.f32 %v8420, %v8542
        %v8570 = vadd.f32 %v8421, %v8545
        %v8571 = vadd.f32 %v8422, %v8548
        %v8572 = vadd.f32 %v8423, %v8551
        %v8573 = vadd.f32 %v8424, %v8554
        %v8574 = vadd.f32 %v8425, %v8557
        %v8575 = vld [vmem:[#allocation2 + $0x2a1] sm:$0xff]
        %v8576 = vld [vmem:[#allocation2 + $0x2a9] sm:$0xff]
        %v8577 = vld [vmem:[#allocation2 + $0x2b1] sm:$0xff]
        %v8578 = vld [vmem:[#allocation2 + $0x2b9] sm:$0xff]
        %v8579 = vld [vmem:[#allocation2 + $0x2c1] sm:$0xff]
        %v8580 = vld [vmem:[#allocation2 + $0x2c9] sm:$0xff]
        %v8581 = vld [vmem:[#allocation2 + $0x2d1] sm:$0xff]
        %v8582 = vld [vmem:[#allocation2 + $0x2d9] sm:$0xff]
        %v8583 = vld [vmem:[#allocation2 + $0x2e1] sm:$0xff]
        %v8584 = vld [vmem:[#allocation2 + $0x2e9] sm:$0xff]
        %v8585 = vld [vmem:[#allocation2 + $0x2f1] sm:$0xff]
        %v8586 = vld [vmem:[#allocation2 + $0x2f9] sm:$0xff]
        %v8587 = vld [vmem:[#allocation2 + $0x301] sm:$0xff]
        %v8588 = vld [vmem:[#allocation2 + $0x309] sm:$0xff]
        %v8589 = vld [vmem:[#allocation2 + $0x311] sm:$0xff]
        %v8590 = vld [vmem:[#allocation2 + $0x319] sm:$0xff]
        %v8591 = vld [vmem:[%s1780] sm:$0xff]
        %v8592 = vld [vmem:[%s1780 + $0x8] sm:$0xff]
        %v8593 = vld [vmem:[%s1780 + $0x10] sm:$0xff]
        %v8594 = vld [vmem:[%s1780 + $0x18] sm:$0xff]
        %v8596 = vsel %vm1092, %v8575, 0
        %v8599 = vsel %vm1092, %v8576, 0
        %v8602 = vsel %vm1092, %v8577, 0
        %v8605 = vsel %vm1092, %v8578, 0
        %v8608 = vsel %vm1092, %v8579, 0
        %v8611 = vsel %vm1092, %v8580, 0
        %v8614 = vsel %vm1092, %v8581, 0
        %v8617 = vsel %vm1092, %v8582, 0
        %v8620 = vsel %vm1092, %v8583, 0
        %v8623 = vsel %vm1092, %v8584, 0
        %v8626 = vsel %vm1092, %v8585, 0
        %v8629 = vsel %vm1092, %v8586, 0
        %v8632 = vsel %vm1092, %v8587, 0
        %v8635 = vsel %vm1092, %v8588, 0
        %v8638 = vsel %vm1092, %v8589, 0
        %v8641 = vsel %vm1092, %v8590, 0
        %8643 = vmatpush.msra.mxu0 0.0
        %8644 = vmatpush.msra.mxu0 0.0
        %8645 = vmatpush.msra.mxu0 0.0
        %8646 = vmatpush.msra.mxu0 0.0
        %8647 = vmatpush.msra.mxu0 0.0
        %8648 = vmatpush.msra.mxu0 0.0
        %8649 = vmatpush.msra.mxu0 0.0
        %8650 = vmatpush.msra.mxu0 0.0
        %8651 = vmatpush.msra.mxu0 0.0
        %8652 = vmatpush.msra.mxu0 0.0
        %8653 = vmatpush.msra.mxu0 0.0
        %8654 = vmatpush.msra.mxu0 0.0
        %8655 = vmatpush.msra.mxu0 %v8594
        %8656 = vmatpush.msra.mxu0 %v8593
        %8657 = vmatpush.msra.mxu0 %v8592
        %8658 = vmatpush.msra.mxu0 %v8591
        %8659 = vmatmul.f32.gmra.mxu0 %v8596
        %v8660 = vpop.f32.mrf.mxu0
        %v8661 = vadd.f32 0.0, %v8660
        %8662 = vmatmul.f32.gmra.mxu0 %v8599
        %v8663 = vpop.f32.mrf.mxu0
        %v8664 = vadd.f32 0.0, %v8663
        %8665 = vmatmul.f32.gmra.mxu0 %v8602
        %v8666 = vpop.f32.mrf.mxu0
        %v8667 = vadd.f32 0.0, %v8666
        %8668 = vmatmul.f32.gmra.mxu0 %v8605
        %v8669 = vpop.f32.mrf.mxu0
        %v8670 = vadd.f32 0.0, %v8669
        %8671 = vmatmul.f32.gmra.mxu0 %v8608
        %v8672 = vpop.f32.mrf.mxu0
        %v8673 = vadd.f32 0.0, %v8672
        %8674 = vmatmul.f32.gmra.mxu0 %v8611
        %v8675 = vpop.f32.mrf.mxu0
        %v8676 = vadd.f32 0.0, %v8675
        %8677 = vmatmul.f32.gmra.mxu0 %v8614
        %v8678 = vpop.f32.mrf.mxu0
        %v8679 = vadd.f32 0.0, %v8678
        %8680 = vmatmul.f32.gmra.mxu0 %v8617
        %v8681 = vpop.f32.mrf.mxu0
        %v8682 = vadd.f32 0.0, %v8681
        %8683 = vmatmul.f32.gmra.mxu0 %v8620
        %v8684 = vpop.f32.mrf.mxu0
        %v8685 = vadd.f32 0.0, %v8684
        %8686 = vmatmul.f32.gmra.mxu0 %v8623
        %v8687 = vpop.f32.mrf.mxu0
        %v8688 = vadd.f32 0.0, %v8687
        %8689 = vmatmul.f32.gmra.mxu0 %v8626
        %v8690 = vpop.f32.mrf.mxu0
        %v8691 = vadd.f32 0.0, %v8690
        %8692 = vmatmul.f32.gmra.mxu0 %v8629
        %v8693 = vpop.f32.mrf.mxu0
        %v8694 = vadd.f32 0.0, %v8693
        %8695 = vmatmul.f32.gmra.mxu0 %v8632
        %v8696 = vpop.f32.mrf.mxu0
        %v8697 = vadd.f32 0.0, %v8696
        %8698 = vmatmul.f32.gmra.mxu0 %v8635
        %v8699 = vpop.f32.mrf.mxu0
        %v8700 = vadd.f32 0.0, %v8699
        %8701 = vmatmul.f32.gmra.mxu0 %v8638
        %v8702 = vpop.f32.mrf.mxu0
        %v8703 = vadd.f32 0.0, %v8702
        %8704 = vmatmul.f32.gmra.mxu0 %v8641
        %v8705 = vpop.f32.mrf.mxu0
        %v8706 = vadd.f32 0.0, %v8705
        %8707 = vdwg.mxu0
        %v8708 = vadd.f32 %v8559, %v8661
        %v8709 = vadd.f32 %v8560, %v8664
        %v8710 = vadd.f32 %v8561, %v8667
        %v8711 = vadd.f32 %v8562, %v8670
        %v8712 = vadd.f32 %v8563, %v8673
        %v8713 = vadd.f32 %v8564, %v8676
        %v8714 = vadd.f32 %v8565, %v8679
        %v8715 = vadd.f32 %v8566, %v8682
        %v8716 = vadd.f32 %v8567, %v8685
        %v8717 = vadd.f32 %v8568, %v8688
        %v8718 = vadd.f32 %v8569, %v8691
        %v8719 = vadd.f32 %v8570, %v8694
        %v8720 = vadd.f32 %v8571, %v8697
        %v8721 = vadd.f32 %v8572, %v8700
        %v8722 = vadd.f32 %v8573, %v8703
        %v8723 = vadd.f32 %v8574, %v8706
        %v8724 = vld [vmem:[#allocation2 + $0x2a2] sm:$0xff]
        %v8725 = vld [vmem:[#allocation2 + $0x2aa] sm:$0xff]
        %v8726 = vld [vmem:[#allocation2 + $0x2b2] sm:$0xff]
        %v8727 = vld [vmem:[#allocation2 + $0x2ba] sm:$0xff]
        %v8728 = vld [vmem:[#allocation2 + $0x2c2] sm:$0xff]
        %v8729 = vld [vmem:[#allocation2 + $0x2ca] sm:$0xff]
        %v8730 = vld [vmem:[#allocation2 + $0x2d2] sm:$0xff]
        %v8731 = vld [vmem:[#allocation2 + $0x2da] sm:$0xff]
        %v8732 = vld [vmem:[#allocation2 + $0x2e2] sm:$0xff]
        %v8733 = vld [vmem:[#allocation2 + $0x2ea] sm:$0xff]
        %v8734 = vld [vmem:[#allocation2 + $0x2f2] sm:$0xff]
        %v8735 = vld [vmem:[#allocation2 + $0x2fa] sm:$0xff]
        %v8736 = vld [vmem:[#allocation2 + $0x302] sm:$0xff]
        %v8737 = vld [vmem:[#allocation2 + $0x30a] sm:$0xff]
        %v8738 = vld [vmem:[#allocation2 + $0x312] sm:$0xff]
        %v8739 = vld [vmem:[#allocation2 + $0x31a] sm:$0xff]
        %v8740 = vld [vmem:[%s1930] sm:$0xff]
        %v8741 = vld [vmem:[%s1930 + $0x8] sm:$0xff]
        %v8742 = vld [vmem:[%s1930 + $0x10] sm:$0xff]
        %v8743 = vld [vmem:[%s1930 + $0x18] sm:$0xff]
        %v8745 = vsel %vm1092, %v8724, 0
        %v8748 = vsel %vm1092, %v8725, 0
        %v8751 = vsel %vm1092, %v8726, 0
        %v8754 = vsel %vm1092, %v8727, 0
        %v8757 = vsel %vm1092, %v8728, 0
        %v8760 = vsel %vm1092, %v8729, 0
        %v8763 = vsel %vm1092, %v8730, 0
        %v8766 = vsel %vm1092, %v8731, 0
        %v8769 = vsel %vm1092, %v8732, 0
        %v8772 = vsel %vm1092, %v8733, 0
        %v8775 = vsel %vm1092, %v8734, 0
        %v8778 = vsel %vm1092, %v8735, 0
        %v8781 = vsel %vm1092, %v8736, 0
        %v8784 = vsel %vm1092, %v8737, 0
        %v8787 = vsel %vm1092, %v8738, 0
        %v8790 = vsel %vm1092, %v8739, 0
        %8792 = vmatpush.msra.mxu0 0.0
        %8793 = vmatpush.msra.mxu0 0.0
        %8794 = vmatpush.msra.mxu0 0.0
        %8795 = vmatpush.msra.mxu0 0.0
        %8796 = vmatpush.msra.mxu0 0.0
        %8797 = vmatpush.msra.mxu0 0.0
        %8798 = vmatpush.msra.mxu0 0.0
        %8799 = vmatpush.msra.mxu0 0.0
        %8800 = vmatpush.msra.mxu0 0.0
        %8801 = vmatpush.msra.mxu0 0.0
        %8802 = vmatpush.msra.mxu0 0.0
        %8803 = vmatpush.msra.mxu0 0.0
        %8804 = vmatpush.msra.mxu0 %v8743
        %8805 = vmatpush.msra.mxu0 %v8742
        %8806 = vmatpush.msra.mxu0 %v8741
        %8807 = vmatpush.msra.mxu0 %v8740
        %8808 = vmatmul.f32.gmra.mxu0 %v8745
        %v8809 = vpop.f32.mrf.mxu0
        %v8810 = vadd.f32 0.0, %v8809
        %8811 = vmatmul.f32.gmra.mxu0 %v8748
        %v8812 = vpop.f32.mrf.mxu0
        %v8813 = vadd.f32 0.0, %v8812
        %8814 = vmatmul.f32.gmra.mxu0 %v8751
        %v8815 = vpop.f32.mrf.mxu0
        %v8816 = vadd.f32 0.0, %v8815
        %8817 = vmatmul.f32.gmra.mxu0 %v8754
        %v8818 = vpop.f32.mrf.mxu0
        %v8819 = vadd.f32 0.0, %v8818
        %8820 = vmatmul.f32.gmra.mxu0 %v8757
        %v8821 = vpop.f32.mrf.mxu0
        %v8822 = vadd.f32 0.0, %v8821
        %8823 = vmatmul.f32.gmra.mxu0 %v8760
        %v8824 = vpop.f32.mrf.mxu0
        %v8825 = vadd.f32 0.0, %v8824
        %8826 = vmatmul.f32.gmra.mxu0 %v8763
        %v8827 = vpop.f32.mrf.mxu0
        %v8828 = vadd.f32 0.0, %v8827
        %8829 = vmatmul.f32.gmra.mxu0 %v8766
        %v8830 = vpop.f32.mrf.mxu0
        %v8831 = vadd.f32 0.0, %v8830
        %8832 = vmatmul.f32.gmra.mxu0 %v8769
        %v8833 = vpop.f32.mrf.mxu0
        %v8834 = vadd.f32 0.0, %v8833
        %8835 = vmatmul.f32.gmra.mxu0 %v8772
        %v8836 = vpop.f32.mrf.mxu0
        %v8837 = vadd.f32 0.0, %v8836
        %8838 = vmatmul.f32.gmra.mxu0 %v8775
        %v8839 = vpop.f32.mrf.mxu0
        %v8840 = vadd.f32 0.0, %v8839
        %8841 = vmatmul.f32.gmra.mxu0 %v8778
        %v8842 = vpop.f32.mrf.mxu0
        %v8843 = vadd.f32 0.0, %v8842
        %8844 = vmatmul.f32.gmra.mxu0 %v8781
        %v8845 = vpop.f32.mrf.mxu0
        %v8846 = vadd.f32 0.0, %v8845
        %8847 = vmatmul.f32.gmra.mxu0 %v8784
        %v8848 = vpop.f32.mrf.mxu0
        %v8849 = vadd.f32 0.0, %v8848
        %8850 = vmatmul.f32.gmra.mxu0 %v8787
        %v8851 = vpop.f32.mrf.mxu0
        %v8852 = vadd.f32 0.0, %v8851
        %8853 = vmatmul.f32.gmra.mxu0 %v8790
        %v8854 = vpop.f32.mrf.mxu0
        %v8855 = vadd.f32 0.0, %v8854
        %8856 = vdwg.mxu0
        %v8857 = vadd.f32 %v8708, %v8810
        %v8858 = vadd.f32 %v8709, %v8813
        %v8859 = vadd.f32 %v8710, %v8816
        %v8860 = vadd.f32 %v8711, %v8819
        %v8861 = vadd.f32 %v8712, %v8822
        %v8862 = vadd.f32 %v8713, %v8825
        %v8863 = vadd.f32 %v8714, %v8828
        %v8864 = vadd.f32 %v8715, %v8831
        %v8865 = vadd.f32 %v8716, %v8834
        %v8866 = vadd.f32 %v8717, %v8837
        %v8867 = vadd.f32 %v8718, %v8840
        %v8868 = vadd.f32 %v8719, %v8843
        %v8869 = vadd.f32 %v8720, %v8846
        %v8870 = vadd.f32 %v8721, %v8849
        %v8871 = vadd.f32 %v8722, %v8852
        %v8872 = vadd.f32 %v8723, %v8855
        %v8873 = vld [vmem:[#allocation2 + $0x2c0] sm:$0xff]
        %v8874 = vld [vmem:[#allocation2 + $0x2c8] sm:$0xff]
        %v8875 = vld [vmem:[#allocation2 + $0x2d0] sm:$0xff]
        %v8876 = vld [vmem:[#allocation2 + $0x2d8] sm:$0xff]
        %v8877 = vld [vmem:[#allocation2 + $0x2e0] sm:$0xff]
        %v8878 = vld [vmem:[#allocation2 + $0x2e8] sm:$0xff]
        %v8879 = vld [vmem:[#allocation2 + $0x2f0] sm:$0xff]
        %v8880 = vld [vmem:[#allocation2 + $0x2f8] sm:$0xff]
        %v8881 = vld [vmem:[#allocation2 + $0x300] sm:$0xff]
        %v8882 = vld [vmem:[#allocation2 + $0x308] sm:$0xff]
        %v8883 = vld [vmem:[#allocation2 + $0x310] sm:$0xff]
        %v8884 = vld [vmem:[#allocation2 + $0x318] sm:$0xff]
        %v8885 = vld [vmem:[#allocation2 + $0x320] sm:$0xff]
        %v8886 = vld [vmem:[#allocation2 + $0x328] sm:$0xff]
        %v8887 = vld [vmem:[#allocation2 + $0x330] sm:$0xff]
        %v8888 = vld [vmem:[#allocation2 + $0x338] sm:$0xff]
        %v8889 = vld [vmem:[%s2080] sm:$0xff]
        %v8890 = vld [vmem:[%s2080 + $0x8] sm:$0xff]
        %v8891 = vld [vmem:[%s2080 + $0x10] sm:$0xff]
        %v8892 = vld [vmem:[%s2080 + $0x18] sm:$0xff]
        %v8894 = vsel %vm1092, %v8873, 0
        %v8897 = vsel %vm1092, %v8874, 0
        %v8900 = vsel %vm1092, %v8875, 0
        %v8903 = vsel %vm1092, %v8876, 0
        %v8906 = vsel %vm1092, %v8877, 0
        %v8909 = vsel %vm1092, %v8878, 0
        %v8912 = vsel %vm1092, %v8879, 0
        %v8915 = vsel %vm1092, %v8880, 0
        %v8918 = vsel %vm1092, %v8881, 0
        %v8921 = vsel %vm1092, %v8882, 0
        %v8924 = vsel %vm1092, %v8883, 0
        %v8927 = vsel %vm1092, %v8884, 0
        %v8930 = vsel %vm1092, %v8885, 0
        %v8933 = vsel %vm1092, %v8886, 0
        %v8936 = vsel %vm1092, %v8887, 0
        %v8939 = vsel %vm1092, %v8888, 0
        %8941 = vmatpush.msra.mxu0 0.0
        %8942 = vmatpush.msra.mxu0 0.0
        %8943 = vmatpush.msra.mxu0 0.0
        %8944 = vmatpush.msra.mxu0 0.0
        %8945 = vmatpush.msra.mxu0 0.0
        %8946 = vmatpush.msra.mxu0 0.0
        %8947 = vmatpush.msra.mxu0 0.0
        %8948 = vmatpush.msra.mxu0 0.0
        %8949 = vmatpush.msra.mxu0 0.0
        %8950 = vmatpush.msra.mxu0 0.0
        %8951 = vmatpush.msra.mxu0 0.0
        %8952 = vmatpush.msra.mxu0 0.0
        %8953 = vmatpush.msra.mxu0 %v8892
        %8954 = vmatpush.msra.mxu0 %v8891
        %8955 = vmatpush.msra.mxu0 %v8890
        %8956 = vmatpush.msra.mxu0 %v8889
        %8957 = vmatmul.f32.gmra.mxu0 %v8894
        %v8958 = vpop.f32.mrf.mxu0
        %v8959 = vadd.f32 0.0, %v8958
        %8960 = vmatmul.f32.gmra.mxu0 %v8897
        %v8961 = vpop.f32.mrf.mxu0
        %v8962 = vadd.f32 0.0, %v8961
        %8963 = vmatmul.f32.gmra.mxu0 %v8900
        %v8964 = vpop.f32.mrf.mxu0
        %v8965 = vadd.f32 0.0, %v8964
        %8966 = vmatmul.f32.gmra.mxu0 %v8903
        %v8967 = vpop.f32.mrf.mxu0
        %v8968 = vadd.f32 0.0, %v8967
        %8969 = vmatmul.f32.gmra.mxu0 %v8906
        %v8970 = vpop.f32.mrf.mxu0
        %v8971 = vadd.f32 0.0, %v8970
        %8972 = vmatmul.f32.gmra.mxu0 %v8909
        %v8973 = vpop.f32.mrf.mxu0
        %v8974 = vadd.f32 0.0, %v8973
        %8975 = vmatmul.f32.gmra.mxu0 %v8912
        %v8976 = vpop.f32.mrf.mxu0
        %v8977 = vadd.f32 0.0, %v8976
        %8978 = vmatmul.f32.gmra.mxu0 %v8915
        %v8979 = vpop.f32.mrf.mxu0
        %v8980 = vadd.f32 0.0, %v8979
        %8981 = vmatmul.f32.gmra.mxu0 %v8918
        %v8982 = vpop.f32.mrf.mxu0
        %v8983 = vadd.f32 0.0, %v8982
        %8984 = vmatmul.f32.gmra.mxu0 %v8921
        %v8985 = vpop.f32.mrf.mxu0
        %v8986 = vadd.f32 0.0, %v8985
        %8987 = vmatmul.f32.gmra.mxu0 %v8924
        %v8988 = vpop.f32.mrf.mxu0
        %v8989 = vadd.f32 0.0, %v8988
        %8990 = vmatmul.f32.gmra.mxu0 %v8927
        %v8991 = vpop.f32.mrf.mxu0
        %v8992 = vadd.f32 0.0, %v8991
        %8993 = vmatmul.f32.gmra.mxu0 %v8930
        %v8994 = vpop.f32.mrf.mxu0
        %v8995 = vadd.f32 0.0, %v8994
        %8996 = vmatmul.f32.gmra.mxu0 %v8933
        %v8997 = vpop.f32.mrf.mxu0
        %v8998 = vadd.f32 0.0, %v8997
        %8999 = vmatmul.f32.gmra.mxu0 %v8936
        %v9000 = vpop.f32.mrf.mxu0
        %v9001 = vadd.f32 0.0, %v9000
        %9002 = vmatmul.f32.gmra.mxu0 %v8939
        %v9003 = vpop.f32.mrf.mxu0
        %v9004 = vadd.f32 0.0, %v9003
        %9005 = vdwg.mxu0
        %v9006 = vadd.f32 %v8857, %v8959
        %v9007 = vadd.f32 %v8858, %v8962
        %v9008 = vadd.f32 %v8859, %v8965
        %v9009 = vadd.f32 %v8860, %v8968
        %v9010 = vadd.f32 %v8861, %v8971
        %v9011 = vadd.f32 %v8862, %v8974
        %v9012 = vadd.f32 %v8863, %v8977
        %v9013 = vadd.f32 %v8864, %v8980
        %v9014 = vadd.f32 %v8865, %v8983
        %v9015 = vadd.f32 %v8866, %v8986
        %v9016 = vadd.f32 %v8867, %v8989
        %v9017 = vadd.f32 %v8868, %v8992
        %v9018 = vadd.f32 %v8869, %v8995
        %v9019 = vadd.f32 %v8870, %v8998
        %v9020 = vadd.f32 %v8871, %v9001
        %v9021 = vadd.f32 %v8872, %v9004
        %v9022 = vld [vmem:[#allocation2 + $0x2c1] sm:$0xff]
        %v9023 = vld [vmem:[#allocation2 + $0x2c9] sm:$0xff]
        %v9024 = vld [vmem:[#allocation2 + $0x2d1] sm:$0xff]
        %v9025 = vld [vmem:[#allocation2 + $0x2d9] sm:$0xff]
        %v9026 = vld [vmem:[#allocation2 + $0x2e1] sm:$0xff]
        %v9027 = vld [vmem:[#allocation2 + $0x2e9] sm:$0xff]
        %v9028 = vld [vmem:[#allocation2 + $0x2f1] sm:$0xff]
        %v9029 = vld [vmem:[#allocation2 + $0x2f9] sm:$0xff]
        %v9030 = vld [vmem:[#allocation2 + $0x301] sm:$0xff]
        %v9031 = vld [vmem:[#allocation2 + $0x309] sm:$0xff]
        %v9032 = vld [vmem:[#allocation2 + $0x311] sm:$0xff]
        %v9033 = vld [vmem:[#allocation2 + $0x319] sm:$0xff]
        %v9034 = vld [vmem:[#allocation2 + $0x321] sm:$0xff]
        %v9035 = vld [vmem:[#allocation2 + $0x329] sm:$0xff]
        %v9036 = vld [vmem:[#allocation2 + $0x331] sm:$0xff]
        %v9037 = vld [vmem:[#allocation2 + $0x339] sm:$0xff]
        %v9038 = vld [vmem:[%s2230] sm:$0xff]
        %v9039 = vld [vmem:[%s2230 + $0x8] sm:$0xff]
        %v9040 = vld [vmem:[%s2230 + $0x10] sm:$0xff]
        %v9041 = vld [vmem:[%s2230 + $0x18] sm:$0xff]
        %v9043 = vsel %vm1092, %v9022, 0
        %v9046 = vsel %vm1092, %v9023, 0
        %v9049 = vsel %vm1092, %v9024, 0
        %v9052 = vsel %vm1092, %v9025, 0
        %v9055 = vsel %vm1092, %v9026, 0
        %v9058 = vsel %vm1092, %v9027, 0
        %v9061 = vsel %vm1092, %v9028, 0
        %v9064 = vsel %vm1092, %v9029, 0
        %v9067 = vsel %vm1092, %v9030, 0
        %v9070 = vsel %vm1092, %v9031, 0
        %v9073 = vsel %vm1092, %v9032, 0
        %v9076 = vsel %vm1092, %v9033, 0
        %v9079 = vsel %vm1092, %v9034, 0
        %v9082 = vsel %vm1092, %v9035, 0
        %v9085 = vsel %vm1092, %v9036, 0
        %v9088 = vsel %vm1092, %v9037, 0
        %9090 = vmatpush.msra.mxu0 0.0
        %9091 = vmatpush.msra.mxu0 0.0
        %9092 = vmatpush.msra.mxu0 0.0
        %9093 = vmatpush.msra.mxu0 0.0
        %9094 = vmatpush.msra.mxu0 0.0
        %9095 = vmatpush.msra.mxu0 0.0
        %9096 = vmatpush.msra.mxu0 0.0
        %9097 = vmatpush.msra.mxu0 0.0
        %9098 = vmatpush.msra.mxu0 0.0
        %9099 = vmatpush.msra.mxu0 0.0
        %9100 = vmatpush.msra.mxu0 0.0
        %9101 = vmatpush.msra.mxu0 0.0
        %9102 = vmatpush.msra.mxu0 %v9041
        %9103 = vmatpush.msra.mxu0 %v9040
        %9104 = vmatpush.msra.mxu0 %v9039
        %9105 = vmatpush.msra.mxu0 %v9038
        %9106 = vmatmul.f32.gmra.mxu0 %v9043
        %v9107 = vpop.f32.mrf.mxu0
        %v9108 = vadd.f32 0.0, %v9107
        %9109 = vmatmul.f32.gmra.mxu0 %v9046
        %v9110 = vpop.f32.mrf.mxu0
        %v9111 = vadd.f32 0.0, %v9110
        %9112 = vmatmul.f32.gmra.mxu0 %v9049
        %v9113 = vpop.f32.mrf.mxu0
        %v9114 = vadd.f32 0.0, %v9113
        %9115 = vmatmul.f32.gmra.mxu0 %v9052
        %v9116 = vpop.f32.mrf.mxu0
        %v9117 = vadd.f32 0.0, %v9116
        %9118 = vmatmul.f32.gmra.mxu0 %v9055
        %v9119 = vpop.f32.mrf.mxu0
        %v9120 = vadd.f32 0.0, %v9119
        %9121 = vmatmul.f32.gmra.mxu0 %v9058
        %v9122 = vpop.f32.mrf.mxu0
        %v9123 = vadd.f32 0.0, %v9122
        %9124 = vmatmul.f32.gmra.mxu0 %v9061
        %v9125 = vpop.f32.mrf.mxu0
        %v9126 = vadd.f32 0.0, %v9125
        %9127 = vmatmul.f32.gmra.mxu0 %v9064
        %v9128 = vpop.f32.mrf.mxu0
        %v9129 = vadd.f32 0.0, %v9128
        %9130 = vmatmul.f32.gmra.mxu0 %v9067
        %v9131 = vpop.f32.mrf.mxu0
        %v9132 = vadd.f32 0.0, %v9131
        %9133 = vmatmul.f32.gmra.mxu0 %v9070
        %v9134 = vpop.f32.mrf.mxu0
        %v9135 = vadd.f32 0.0, %v9134
        %9136 = vmatmul.f32.gmra.mxu0 %v9073
        %v9137 = vpop.f32.mrf.mxu0
        %v9138 = vadd.f32 0.0, %v9137
        %9139 = vmatmul.f32.gmra.mxu0 %v9076
        %v9140 = vpop.f32.mrf.mxu0
        %v9141 = vadd.f32 0.0, %v9140
        %9142 = vmatmul.f32.gmra.mxu0 %v9079
        %v9143 = vpop.f32.mrf.mxu0
        %v9144 = vadd.f32 0.0, %v9143
        %9145 = vmatmul.f32.gmra.mxu0 %v9082
        %v9146 = vpop.f32.mrf.mxu0
        %v9147 = vadd.f32 0.0, %v9146
        %9148 = vmatmul.f32.gmra.mxu0 %v9085
        %v9149 = vpop.f32.mrf.mxu0
        %v9150 = vadd.f32 0.0, %v9149
        %9151 = vmatmul.f32.gmra.mxu0 %v9088
        %v9152 = vpop.f32.mrf.mxu0
        %v9153 = vadd.f32 0.0, %v9152
        %9154 = vdwg.mxu0
        %v9155 = vadd.f32 %v9006, %v9108
        %v9156 = vadd.f32 %v9007, %v9111
        %v9157 = vadd.f32 %v9008, %v9114
        %v9158 = vadd.f32 %v9009, %v9117
        %v9159 = vadd.f32 %v9010, %v9120
        %v9160 = vadd.f32 %v9011, %v9123
        %v9161 = vadd.f32 %v9012, %v9126
        %v9162 = vadd.f32 %v9013, %v9129
        %v9163 = vadd.f32 %v9014, %v9132
        %v9164 = vadd.f32 %v9015, %v9135
        %v9165 = vadd.f32 %v9016, %v9138
        %v9166 = vadd.f32 %v9017, %v9141
        %v9167 = vadd.f32 %v9018, %v9144
        %v9168 = vadd.f32 %v9019, %v9147
        %v9169 = vadd.f32 %v9020, %v9150
        %v9170 = vadd.f32 %v9021, %v9153
        %v9171 = vld [vmem:[#allocation2 + $0x2c2] sm:$0xff]
        %v9172 = vld [vmem:[#allocation2 + $0x2ca] sm:$0xff]
        %v9173 = vld [vmem:[#allocation2 + $0x2d2] sm:$0xff]
        %v9174 = vld [vmem:[#allocation2 + $0x2da] sm:$0xff]
        %v9175 = vld [vmem:[#allocation2 + $0x2e2] sm:$0xff]
        %v9176 = vld [vmem:[#allocation2 + $0x2ea] sm:$0xff]
        %v9177 = vld [vmem:[#allocation2 + $0x2f2] sm:$0xff]
        %v9178 = vld [vmem:[#allocation2 + $0x2fa] sm:$0xff]
        %v9179 = vld [vmem:[#allocation2 + $0x302] sm:$0xff]
        %v9180 = vld [vmem:[#allocation2 + $0x30a] sm:$0xff]
        %v9181 = vld [vmem:[#allocation2 + $0x312] sm:$0xff]
        %v9182 = vld [vmem:[#allocation2 + $0x31a] sm:$0xff]
        %v9183 = vld [vmem:[#allocation2 + $0x322] sm:$0xff]
        %v9184 = vld [vmem:[#allocation2 + $0x32a] sm:$0xff]
        %v9185 = vld [vmem:[#allocation2 + $0x332] sm:$0xff]
        %v9186 = vld [vmem:[#allocation2 + $0x33a] sm:$0xff]
        %v9187 = vld [vmem:[%s2380] sm:$0xff]
        %v9188 = vld [vmem:[%s2380 + $0x8] sm:$0xff]
        %v9189 = vld [vmem:[%s2380 + $0x10] sm:$0xff]
        %v9190 = vld [vmem:[%s2380 + $0x18] sm:$0xff]
        %v9192 = vsel %vm1092, %v9171, 0
        %v9195 = vsel %vm1092, %v9172, 0
        %v9198 = vsel %vm1092, %v9173, 0
        %v9201 = vsel %vm1092, %v9174, 0
        %v9204 = vsel %vm1092, %v9175, 0
        %v9207 = vsel %vm1092, %v9176, 0
        %v9210 = vsel %vm1092, %v9177, 0
        %v9213 = vsel %vm1092, %v9178, 0
        %v9216 = vsel %vm1092, %v9179, 0
        %v9219 = vsel %vm1092, %v9180, 0
        %v9222 = vsel %vm1092, %v9181, 0
        %v9225 = vsel %vm1092, %v9182, 0
        %v9228 = vsel %vm1092, %v9183, 0
        %v9231 = vsel %vm1092, %v9184, 0
        %v9234 = vsel %vm1092, %v9185, 0
        %v9237 = vsel %vm1092, %v9186, 0
        %9239 = vmatpush.msra.mxu0 0.0
        %9240 = vmatpush.msra.mxu0 0.0
        %9241 = vmatpush.msra.mxu0 0.0
        %9242 = vmatpush.msra.mxu0 0.0
        %9243 = vmatpush.msra.mxu0 0.0
        %9244 = vmatpush.msra.mxu0 0.0
        %9245 = vmatpush.msra.mxu0 0.0
        %9246 = vmatpush.msra.mxu0 0.0
        %9247 = vmatpush.msra.mxu0 0.0
        %9248 = vmatpush.msra.mxu0 0.0
        %9249 = vmatpush.msra.mxu0 0.0
        %9250 = vmatpush.msra.mxu0 0.0
        %9251 = vmatpush.msra.mxu0 %v9190
        %9252 = vmatpush.msra.mxu0 %v9189
        %9253 = vmatpush.msra.mxu0 %v9188
        %9254 = vmatpush.msra.mxu0 %v9187
        %9255 = vmatmul.f32.gmra.mxu0 %v9192
        %v9256 = vpop.f32.mrf.mxu0
        %v9257 = vadd.f32 0.0, %v9256
        %9258 = vmatmul.f32.gmra.mxu0 %v9195
        %v9259 = vpop.f32.mrf.mxu0
        %v9260 = vadd.f32 0.0, %v9259
        %9261 = vmatmul.f32.gmra.mxu0 %v9198
        %v9262 = vpop.f32.mrf.mxu0
        %v9263 = vadd.f32 0.0, %v9262
        %9264 = vmatmul.f32.gmra.mxu0 %v9201
        %v9265 = vpop.f32.mrf.mxu0
        %v9266 = vadd.f32 0.0, %v9265
        %9267 = vmatmul.f32.gmra.mxu0 %v9204
        %v9268 = vpop.f32.mrf.mxu0
        %v9269 = vadd.f32 0.0, %v9268
        %9270 = vmatmul.f32.gmra.mxu0 %v9207
        %v9271 = vpop.f32.mrf.mxu0
        %v9272 = vadd.f32 0.0, %v9271
        %9273 = vmatmul.f32.gmra.mxu0 %v9210
        %v9274 = vpop.f32.mrf.mxu0
        %v9275 = vadd.f32 0.0, %v9274
        %9276 = vmatmul.f32.gmra.mxu0 %v9213
        %v9277 = vpop.f32.mrf.mxu0
        %v9278 = vadd.f32 0.0, %v9277
        %9279 = vmatmul.f32.gmra.mxu0 %v9216
        %v9280 = vpop.f32.mrf.mxu0
        %v9281 = vadd.f32 0.0, %v9280
        %9282 = vmatmul.f32.gmra.mxu0 %v9219
        %v9283 = vpop.f32.mrf.mxu0
        %v9284 = vadd.f32 0.0, %v9283
        %9285 = vmatmul.f32.gmra.mxu0 %v9222
        %v9286 = vpop.f32.mrf.mxu0
        %v9287 = vadd.f32 0.0, %v9286
        %9288 = vmatmul.f32.gmra.mxu0 %v9225
        %v9289 = vpop.f32.mrf.mxu0
        %v9290 = vadd.f32 0.0, %v9289
        %9291 = vmatmul.f32.gmra.mxu0 %v9228
        %v9292 = vpop.f32.mrf.mxu0
        %v9293 = vadd.f32 0.0, %v9292
        %9294 = vmatmul.f32.gmra.mxu0 %v9231
        %v9295 = vpop.f32.mrf.mxu0
        %v9296 = vadd.f32 0.0, %v9295
        %9297 = vmatmul.f32.gmra.mxu0 %v9234
        %v9298 = vpop.f32.mrf.mxu0
        %v9299 = vadd.f32 0.0, %v9298
        %9300 = vmatmul.f32.gmra.mxu0 %v9237
        %v9301 = vpop.f32.mrf.mxu0
        %v9302 = vadd.f32 0.0, %v9301
        %9303 = vdwg.mxu0
        %v9304 = vadd.f32 %v9155, %v9257
        %v9305 = vadd.f32 %v9156, %v9260
        %v9306 = vadd.f32 %v9157, %v9263
        %v9307 = vadd.f32 %v9158, %v9266
        %v9308 = vadd.f32 %v9159, %v9269
        %v9309 = vadd.f32 %v9160, %v9272
        %v9310 = vadd.f32 %v9161, %v9275
        %v9311 = vadd.f32 %v9162, %v9278
        %v9312 = vadd.f32 %v9163, %v9281
        %v9313 = vadd.f32 %v9164, %v9284
        %v9314 = vadd.f32 %v9165, %v9287
        %v9315 = vadd.f32 %v9166, %v9290
        %v9316 = vadd.f32 %v9167, %v9293
        %v9317 = vadd.f32 %v9168, %v9296
        %v9318 = vadd.f32 %v9169, %v9299
        %v9319 = vadd.f32 %v9170, %v9302
        %v9320 = vld [vmem:[%s4] sm:$0x1]
        %v9322 = vperm.slane %v9320, 0
        %v9324 = vadd.f32 %v9304, %v9322
        %v9325 = vadd.f32 %v9305, %v9322
        %v9326 = vadd.f32 %v9306, %v9322
        %v9327 = vadd.f32 %v9307, %v9322
        %v9328 = vadd.f32 %v9308, %v9322
        %v9329 = vadd.f32 %v9309, %v9322
        %v9330 = vadd.f32 %v9310, %v9322
        %v9331 = vadd.f32 %v9311, %v9322
        %v9332 = vadd.f32 %v9312, %v9322
        %v9333 = vadd.f32 %v9313, %v9322
        %v9334 = vadd.f32 %v9314, %v9322
        %v9335 = vadd.f32 %v9315, %v9322
        %v9336 = vadd.f32 %v9316, %v9322
        %v9337 = vadd.f32 %v9317, %v9322
        %v9338 = vadd.f32 %v9318, %v9322
        %v9339 = vadd.f32 %v9319, %v9322
        %v9340 = vmax.f32 %v9324, 0.0
        %v9341 = vmax.f32 %v9325, 0.0
        %v9342 = vmax.f32 %v9326, 0.0
        %v9343 = vmax.f32 %v9327, 0.0
        %v9344 = vmax.f32 %v9328, 0.0
        %v9345 = vmax.f32 %v9329, 0.0
        %v9346 = vmax.f32 %v9330, 0.0
        %v9347 = vmax.f32 %v9331, 0.0
        %v9348 = vmax.f32 %v9332, 0.0
        %v9349 = vmax.f32 %v9333, 0.0
        %v9350 = vmax.f32 %v9334, 0.0
        %v9351 = vmax.f32 %v9335, 0.0
        %v9352 = vmax.f32 %v9336, 0.0
        %v9353 = vmax.f32 %v9337, 0.0
        %v9354 = vmax.f32 %v9338, 0.0
        %v9355 = vmax.f32 %v9339, 0.0
        %9356 = vst.msk [vmem:[#allocation3 + $0x280] sm:$0xff] %vm2550, %v9340
        %9357 = vst.msk [vmem:[#allocation3 + $0x288] sm:$0xff] %vm2550, %v9341
        %9358 = vst.msk [vmem:[#allocation3 + $0x290] sm:$0xff] %vm2550, %v9342
        %9359 = vst.msk [vmem:[#allocation3 + $0x298] sm:$0xff] %vm2550, %v9343
        %9360 = vst.msk [vmem:[#allocation3 + $0x2a0] sm:$0xff] %vm2550, %v9344
        %9361 = vst.msk [vmem:[#allocation3 + $0x2a8] sm:$0xff] %vm2550, %v9345
        %9362 = vst.msk [vmem:[#allocation3 + $0x2b0] sm:$0xff] %vm2550, %v9346
        %9363 = vst.msk [vmem:[#allocation3 + $0x2b8] sm:$0xff] %vm2550, %v9347
        %9364 = vst.msk [vmem:[#allocation3 + $0x2c0] sm:$0xff] %vm2550, %v9348
        %9365 = vst.msk [vmem:[#allocation3 + $0x2c8] sm:$0xff] %vm2550, %v9349
        %9366 = vst.msk [vmem:[#allocation3 + $0x2d0] sm:$0xff] %vm2550, %v9350
        %9367 = vst.msk [vmem:[#allocation3 + $0x2d8] sm:$0xff] %vm2550, %v9351
        %9368 = vst.msk [vmem:[#allocation3 + $0x2e0] sm:$0xff] %vm2550, %v9352
        %9369 = vst.msk [vmem:[#allocation3 + $0x2e8] sm:$0xff] %vm2550, %v9353
        %9370 = vst.msk [vmem:[#allocation3 + $0x2f0] sm:$0xff] %vm2550, %v9354
        %9371 = vst.msk [vmem:[#allocation3 + $0x2f8] sm:$0xff] %vm2550, %v9355
        %v9372 = vld [vmem:[#allocation3] ss:$2 sm:$0xff]
        %s9373 = scalar_lea.vmem [#allocation3], 16
        %v9374 = vld [vmem:[%s9373] ss:$2 sm:$0xff]
        %s9375 = scalar_lea.vmem [#allocation3], 32
        %v9376 = vld [vmem:[%s9375] ss:$2 sm:$0xff]
        %s9377 = scalar_lea.vmem [#allocation3], 48
        %v9378 = vld [vmem:[%s9377] ss:$2 sm:$0xff]
        %s9379 = scalar_lea.vmem [#allocation3], 64
        %v9380 = vld [vmem:[%s9379] ss:$2 sm:$0xff]
        %s9381 = scalar_lea.vmem [#allocation3], 80
        %v9382 = vld [vmem:[%s9381] ss:$2 sm:$0xff]
        %s9383 = scalar_lea.vmem [#allocation3], 96
        %v9384 = vld [vmem:[%s9383] ss:$2 sm:$0xff]
        %s9385 = scalar_lea.vmem [#allocation3], 112
        %v9386 = vld [vmem:[%s9385] ss:$2 sm:$0xff]
        %s9387 = scalar_lea.vmem [#allocation3], 128
        %v9388 = vld [vmem:[%s9387] ss:$2 sm:$0xff]
        %s9389 = scalar_lea.vmem [#allocation3], 144
        %v9390 = vld [vmem:[%s9389] ss:$2 sm:$0xff]
        %s9391 = scalar_lea.vmem [#allocation3], 160
        %v9392 = vld [vmem:[%s9391] ss:$2 sm:$0xff]
        %s9393 = scalar_lea.vmem [#allocation3], 176
        %v9394 = vld [vmem:[%s9393] ss:$2 sm:$0xff]
        %s9395 = scalar_lea.vmem [#allocation3], 192
        %v9396 = vld [vmem:[%s9395] ss:$2 sm:$0xff]
        %s9397 = scalar_lea.vmem [#allocation3], 208
        %v9398 = vld [vmem:[%s9397] ss:$2 sm:$0xff]
        %s9399 = scalar_lea.vmem [#allocation3], 224
        %v9400 = vld [vmem:[%s9399] ss:$2 sm:$0xff]
        %s9401 = scalar_lea.vmem [#allocation3], 240
        %v9402 = vld [vmem:[%s9401] ss:$2 sm:$0xff]
        %s9403 = scalar_lea.vmem [#allocation3], 256
        %v9404 = vld [vmem:[%s9403] ss:$2 sm:$0xff]
        %s9405 = scalar_lea.vmem [#allocation3], 272
        %v9406 = vld [vmem:[%s9405] ss:$2 sm:$0xff]
        %s9407 = scalar_lea.vmem [#allocation3], 288
        %v9408 = vld [vmem:[%s9407] ss:$2 sm:$0xff]
        %s9409 = scalar_lea.vmem [#allocation3], 304
        %v9410 = vld [vmem:[%s9409] ss:$2 sm:$0xff]
        %s9411 = scalar_lea.vmem [#allocation3], 320
        %v9412 = vld [vmem:[%s9411] ss:$2 sm:$0xff]
        %s9413 = scalar_lea.vmem [#allocation3], 336
        %v9414 = vld [vmem:[%s9413] ss:$2 sm:$0xff]
        %s9415 = scalar_lea.vmem [#allocation3], 352
        %v9416 = vld [vmem:[%s9415] ss:$2 sm:$0xff]
        %s9417 = scalar_lea.vmem [#allocation3], 368
        %v9418 = vld [vmem:[%s9417] ss:$2 sm:$0xff]
        %s9419 = scalar_lea.vmem [#allocation3], 384
        %v9420 = vld [vmem:[%s9419] ss:$2 sm:$0xff]
        %s9421 = scalar_lea.vmem [#allocation3], 400
        %v9422 = vld [vmem:[%s9421] ss:$2 sm:$0xff]
        %s9423 = scalar_lea.vmem [#allocation3], 416
        %v9424 = vld [vmem:[%s9423] ss:$2 sm:$0xff]
        %s9425 = scalar_lea.vmem [#allocation3], 432
        %v9426 = vld [vmem:[%s9425] ss:$2 sm:$0xff]
        %s9427 = scalar_lea.vmem [#allocation3], 448
        %v9428 = vld [vmem:[%s9427] ss:$2 sm:$0xff]
        %s9429 = scalar_lea.vmem [#allocation3], 464
        %v9430 = vld [vmem:[%s9429] ss:$2 sm:$0xff]
        %s9431 = scalar_lea.vmem [#allocation3], 480
        %v9432 = vld [vmem:[%s9431] ss:$2 sm:$0xff]
        %s9433 = scalar_lea.vmem [#allocation3], 496
        %v9434 = vld [vmem:[%s9433] ss:$2 sm:$0xff]
        %s9435 = scalar_lea.vmem [#allocation3], 512
        %v9436 = vld [vmem:[%s9435] ss:$2 sm:$0xff]
        %s9437 = scalar_lea.vmem [#allocation3], 528
        %v9438 = vld [vmem:[%s9437] ss:$2 sm:$0xff]
        %s9439 = scalar_lea.vmem [#allocation3], 544
        %v9440 = vld [vmem:[%s9439] ss:$2 sm:$0xff]
        %s9441 = scalar_lea.vmem [#allocation3], 560
        %v9442 = vld [vmem:[%s9441] ss:$2 sm:$0xff]
        %s9443 = scalar_lea.vmem [#allocation3], 576
        %v9444 = vld [vmem:[%s9443] ss:$2 sm:$0xff]
        %s9445 = scalar_lea.vmem [#allocation3], 592
        %v9446 = vld [vmem:[%s9445] ss:$2 sm:$0xff]
        %s9447 = scalar_lea.vmem [#allocation3], 608
        %v9448 = vld [vmem:[%s9447] ss:$2 sm:$0xff]
        %s9449 = scalar_lea.vmem [#allocation3], 624
        %v9450 = vld [vmem:[%s9449] ss:$2 sm:$0xff]
        %s9451 = scalar_lea.vmem [#allocation3], 640
        %v9452 = vld [vmem:[%s9451] ss:$2 sm:$0xff]
        %s9453 = scalar_lea.vmem [#allocation3], 656
        %v9454 = vld [vmem:[%s9453] ss:$2 sm:$0xff]
        %s9455 = scalar_lea.vmem [#allocation3], 672
        %v9456 = vld [vmem:[%s9455] ss:$2 sm:$0xff]
        %s9457 = scalar_lea.vmem [#allocation3], 688
        %v9458 = vld [vmem:[%s9457] ss:$2 sm:$0xff]
        %s9459 = scalar_lea.vmem [#allocation3], 704
        %v9460 = vld [vmem:[%s9459] ss:$2 sm:$0xff]
        %s9461 = scalar_lea.vmem [#allocation3], 720
        %v9462 = vld [vmem:[%s9461] ss:$2 sm:$0xff]
        %s9463 = scalar_lea.vmem [#allocation3], 736
        %v9464 = vld [vmem:[%s9463] ss:$2 sm:$0xff]
        %s9465 = scalar_lea.vmem [#allocation3], 752
        %v9466 = vld [vmem:[%s9465] ss:$2 sm:$0xff]
        %s9467 = scalar_lea.vmem [#allocation3], 1
        %v9468 = vld [vmem:[%s9467] ss:$2 sm:$0xff]
        %s9469 = scalar_lea.vmem [#allocation3], 17
        %v9470 = vld [vmem:[%s9469] ss:$2 sm:$0xff]
        %s9471 = scalar_lea.vmem [#allocation3], 33
        %v9472 = vld [vmem:[%s9471] ss:$2 sm:$0xff]
        %s9473 = scalar_lea.vmem [#allocation3], 49
        %v9474 = vld [vmem:[%s9473] ss:$2 sm:$0xff]
        %s9475 = scalar_lea.vmem [#allocation3], 65
        %v9476 = vld [vmem:[%s9475] ss:$2 sm:$0xff]
        %s9477 = scalar_lea.vmem [#allocation3], 81
        %v9478 = vld [vmem:[%s9477] ss:$2 sm:$0xff]
        %s9479 = scalar_lea.vmem [#allocation3], 97
        %v9480 = vld [vmem:[%s9479] ss:$2 sm:$0xff]
        %s9481 = scalar_lea.vmem [#allocation3], 113
        %v9482 = vld [vmem:[%s9481] ss:$2 sm:$0xff]
        %s9483 = scalar_lea.vmem [#allocation3], 129
        %v9484 = vld [vmem:[%s9483] ss:$2 sm:$0xff]
        %s9485 = scalar_lea.vmem [#allocation3], 145
        %v9486 = vld [vmem:[%s9485] ss:$2 sm:$0xff]
        %s9487 = scalar_lea.vmem [#allocation3], 161
        %v9488 = vld [vmem:[%s9487] ss:$2 sm:$0xff]
        %s9489 = scalar_lea.vmem [#allocation3], 177
        %v9490 = vld [vmem:[%s9489] ss:$2 sm:$0xff]
        %s9491 = scalar_lea.vmem [#allocation3], 193
        %v9492 = vld [vmem:[%s9491] ss:$2 sm:$0xff]
        %s9493 = scalar_lea.vmem [#allocation3], 209
        %v9494 = vld [vmem:[%s9493] ss:$2 sm:$0xff]
        %s9495 = scalar_lea.vmem [#allocation3], 225
        %v9496 = vld [vmem:[%s9495] ss:$2 sm:$0xff]
        %s9497 = scalar_lea.vmem [#allocation3], 241
        %v9498 = vld [vmem:[%s9497] ss:$2 sm:$0xff]
        %s9499 = scalar_lea.vmem [#allocation3], 257
        %v9500 = vld [vmem:[%s9499] ss:$2 sm:$0xff]
        %s9501 = scalar_lea.vmem [#allocation3], 273
        %v9502 = vld [vmem:[%s9501] ss:$2 sm:$0xff]
        %s9503 = scalar_lea.vmem [#allocation3], 289
        %v9504 = vld [vmem:[%s9503] ss:$2 sm:$0xff]
        %s9505 = scalar_lea.vmem [#allocation3], 305
        %v9506 = vld [vmem:[%s9505] ss:$2 sm:$0xff]
        %s9507 = scalar_lea.vmem [#allocation3], 321
        %v9508 = vld [vmem:[%s9507] ss:$2 sm:$0xff]
        %s9509 = scalar_lea.vmem [#allocation3], 337
        %v9510 = vld [vmem:[%s9509] ss:$2 sm:$0xff]
        %s9511 = scalar_lea.vmem [#allocation3], 353
        %v9512 = vld [vmem:[%s9511] ss:$2 sm:$0xff]
        %s9513 = scalar_lea.vmem [#allocation3], 369
        %v9514 = vld [vmem:[%s9513] ss:$2 sm:$0xff]
        %s9515 = scalar_lea.vmem [#allocation3], 385
        %v9516 = vld [vmem:[%s9515] ss:$2 sm:$0xff]
        %s9517 = scalar_lea.vmem [#allocation3], 401
        %v9518 = vld [vmem:[%s9517] ss:$2 sm:$0xff]
        %s9519 = scalar_lea.vmem [#allocation3], 417
        %v9520 = vld [vmem:[%s9519] ss:$2 sm:$0xff]
        %s9521 = scalar_lea.vmem [#allocation3], 433
        %v9522 = vld [vmem:[%s9521] ss:$2 sm:$0xff]
        %s9523 = scalar_lea.vmem [#allocation3], 449
        %v9524 = vld [vmem:[%s9523] ss:$2 sm:$0xff]
        %s9525 = scalar_lea.vmem [#allocation3], 465
        %v9526 = vld [vmem:[%s9525] ss:$2 sm:$0xff]
        %s9527 = scalar_lea.vmem [#allocation3], 481
        %v9528 = vld [vmem:[%s9527] ss:$2 sm:$0xff]
        %s9529 = scalar_lea.vmem [#allocation3], 497
        %v9530 = vld [vmem:[%s9529] ss:$2 sm:$0xff]
        %s9531 = scalar_lea.vmem [#allocation3], 513
        %v9532 = vld [vmem:[%s9531] ss:$2 sm:$0xff]
        %s9533 = scalar_lea.vmem [#allocation3], 529
        %v9534 = vld [vmem:[%s9533] ss:$2 sm:$0xff]
        %s9535 = scalar_lea.vmem [#allocation3], 545
        %v9536 = vld [vmem:[%s9535] ss:$2 sm:$0xff]
        %s9537 = scalar_lea.vmem [#allocation3], 561
        %v9538 = vld [vmem:[%s9537] ss:$2 sm:$0xff]
        %s9539 = scalar_lea.vmem [#allocation3], 577
        %v9540 = vld [vmem:[%s9539] ss:$2 sm:$0xff]
        %s9541 = scalar_lea.vmem [#allocation3], 593
        %v9542 = vld [vmem:[%s9541] ss:$2 sm:$0xff]
        %s9543 = scalar_lea.vmem [#allocation3], 609
        %v9544 = vld [vmem:[%s9543] ss:$2 sm:$0xff]
        %s9545 = scalar_lea.vmem [#allocation3], 625
        %v9546 = vld [vmem:[%s9545] ss:$2 sm:$0xff]
        %s9547 = scalar_lea.vmem [#allocation3], 641
        %v9548 = vld [vmem:[%s9547] ss:$2 sm:$0xff]
        %s9549 = scalar_lea.vmem [#allocation3], 657
        %v9550 = vld [vmem:[%s9549] ss:$2 sm:$0xff]
        %s9551 = scalar_lea.vmem [#allocation3], 673
        %v9552 = vld [vmem:[%s9551] ss:$2 sm:$0xff]
        %s9553 = scalar_lea.vmem [#allocation3], 689
        %v9554 = vld [vmem:[%s9553] ss:$2 sm:$0xff]
        %s9555 = scalar_lea.vmem [#allocation3], 705
        %v9556 = vld [vmem:[%s9555] ss:$2 sm:$0xff]
        %s9557 = scalar_lea.vmem [#allocation3], 721
        %v9558 = vld [vmem:[%s9557] ss:$2 sm:$0xff]
        %s9559 = scalar_lea.vmem [#allocation3], 737
        %v9560 = vld [vmem:[%s9559] ss:$2 sm:$0xff]
        %s9561 = scalar_lea.vmem [#allocation3], 753
        %v9562 = vld [vmem:[%s9561] ss:$2 sm:$0xff]
        %v9563 = vmax.f32 %v9372, %v9468
        %v9564 = vmax.f32 %v9374, %v9470
        %v9565 = vmax.f32 %v9376, %v9472
        %v9566 = vmax.f32 %v9378, %v9474
        %v9567 = vmax.f32 %v9380, %v9476
        %v9568 = vmax.f32 %v9382, %v9478
        %v9569 = vmax.f32 %v9384, %v9480
        %v9570 = vmax.f32 %v9386, %v9482
        %v9571 = vmax.f32 %v9388, %v9484
        %v9572 = vmax.f32 %v9390, %v9486
        %v9573 = vmax.f32 %v9392, %v9488
        %v9574 = vmax.f32 %v9394, %v9490
        %v9575 = vmax.f32 %v9396, %v9492
        %v9576 = vmax.f32 %v9398, %v9494
        %v9577 = vmax.f32 %v9400, %v9496
        %v9578 = vmax.f32 %v9402, %v9498
        %v9579 = vmax.f32 %v9404, %v9500
        %v9580 = vmax.f32 %v9406, %v9502
        %v9581 = vmax.f32 %v9408, %v9504
        %v9582 = vmax.f32 %v9410, %v9506
        %v9583 = vmax.f32 %v9412, %v9508
        %v9584 = vmax.f32 %v9414, %v9510
        %v9585 = vmax.f32 %v9416, %v9512
        %v9586 = vmax.f32 %v9418, %v9514
        %v9587 = vmax.f32 %v9420, %v9516
        %v9588 = vmax.f32 %v9422, %v9518
        %v9589 = vmax.f32 %v9424, %v9520
        %v9590 = vmax.f32 %v9426, %v9522
        %v9591 = vmax.f32 %v9428, %v9524
        %v9592 = vmax.f32 %v9430, %v9526
        %v9593 = vmax.f32 %v9432, %v9528
        %v9594 = vmax.f32 %v9434, %v9530
        %v9595 = vmax.f32 %v9436, %v9532
        %v9596 = vmax.f32 %v9438, %v9534
        %v9597 = vmax.f32 %v9440, %v9536
        %v9598 = vmax.f32 %v9442, %v9538
        %v9599 = vmax.f32 %v9444, %v9540
        %v9600 = vmax.f32 %v9446, %v9542
        %v9601 = vmax.f32 %v9448, %v9544
        %v9602 = vmax.f32 %v9450, %v9546
        %v9603 = vmax.f32 %v9452, %v9548
        %v9604 = vmax.f32 %v9454, %v9550
        %v9605 = vmax.f32 %v9456, %v9552
        %v9606 = vmax.f32 %v9458, %v9554
        %v9607 = vmax.f32 %v9460, %v9556
        %v9608 = vmax.f32 %v9462, %v9558
        %v9609 = vmax.f32 %v9464, %v9560
        %v9610 = vmax.f32 %v9466, %v9562
        %v9611 = vmax.f32 %v9563, %v9565
        %v9612 = vmax.f32 %v9564, %v9566
        %v9613 = vmax.f32 %v9567, %v9569
        %v9614 = vmax.f32 %v9568, %v9570
        %v9615 = vmax.f32 %v9571, %v9573
        %v9616 = vmax.f32 %v9572, %v9574
        %v9617 = vmax.f32 %v9575, %v9577
        %v9618 = vmax.f32 %v9576, %v9578
        %v9619 = vmax.f32 %v9579, %v9581
        %v9620 = vmax.f32 %v9580, %v9582
        %v9621 = vmax.f32 %v9583, %v9585
        %v9622 = vmax.f32 %v9584, %v9586
        %v9623 = vmax.f32 %v9587, %v9589
        %v9624 = vmax.f32 %v9588, %v9590
        %v9625 = vmax.f32 %v9591, %v9593
        %v9626 = vmax.f32 %v9592, %v9594
        %v9627 = vmax.f32 %v9595, %v9597
        %v9628 = vmax.f32 %v9596, %v9598
        %v9629 = vmax.f32 %v9599, %v9601
        %v9630 = vmax.f32 %v9600, %v9602
        %v9631 = vmax.f32 %v9603, %v9605
        %v9632 = vmax.f32 %v9604, %v9606
        %v9633 = vmax.f32 %v9607, %v9609
        %v9634 = vmax.f32 %v9608, %v9610
        %9635 = vst.msk [vmem:[%s217] sm:$0xff] %vm2550, %v9611
        %9636 = vst.msk [vmem:[%s217 + $0x8] sm:$0xff] %vm2550, %v9612
        %9637 = vst.msk [vmem:[%s217 + $0x10] sm:$0xff] %vm2550, %v9613
        %9638 = vst.msk [vmem:[%s217 + $0x18] sm:$0xff] %vm2550, %v9614
        %9639 = vst.msk [vmem:[%s217 + $0x20] sm:$0xff] %vm2550, %v9615
        %9640 = vst.msk [vmem:[%s217 + $0x28] sm:$0xff] %vm2550, %v9616
        %9641 = vst.msk [vmem:[%s217 + $0x30] sm:$0xff] %vm2550, %v9617
        %9642 = vst.msk [vmem:[%s217 + $0x38] sm:$0xff] %vm2550, %v9618
        %9643 = vst.msk [vmem:[%s217 + $0x40] sm:$0xff] %vm2550, %v9619
        %9644 = vst.msk [vmem:[%s217 + $0x48] sm:$0xff] %vm2550, %v9620
        %9645 = vst.msk [vmem:[%s217 + $0x50] sm:$0xff] %vm2550, %v9621
        %9646 = vst.msk [vmem:[%s217 + $0x58] sm:$0xff] %vm2550, %v9622
        %9647 = vst.msk [vmem:[%s217 + $0x60] sm:$0xff] %vm2550, %v9623
        %9648 = vst.msk [vmem:[%s217 + $0x68] sm:$0xff] %vm2550, %v9624
        %9649 = vst.msk [vmem:[%s217 + $0x70] sm:$0xff] %vm2550, %v9625
        %9650 = vst.msk [vmem:[%s217 + $0x78] sm:$0xff] %vm2550, %v9626
        %9651 = vst.msk [vmem:[%s217 + $0x80] sm:$0xff] %vm2550, %v9627
        %9652 = vst.msk [vmem:[%s217 + $0x88] sm:$0xff] %vm2550, %v9628
        %9653 = vst.msk [vmem:[%s217 + $0x90] sm:$0xff] %vm2550, %v9629
        %9654 = vst.msk [vmem:[%s217 + $0x98] sm:$0xff] %vm2550, %v9630
        %9655 = vst.msk [vmem:[%s217 + $0xa0] sm:$0xff] %vm2550, %v9631
        %9656 = vst.msk [vmem:[%s217 + $0xa8] sm:$0xff] %vm2550, %v9632
        %9657 = vst.msk [vmem:[%s217 + $0xb0] sm:$0xff] %vm2550, %v9633
        %9658 = vst.msk [vmem:[%s217 + $0xb8] sm:$0xff] %vm2550, %v9634
        %s9659 = sand.u32 %s137, 1
        %s9660 = scalar_lea.sflag [#allocation5], %s9659
        %s9661 = sand.u32 %s137, 1
        %s9662 = smul.addr %s9661, 192
        %s9663 = scalar_lea.vmem [#allocation4], %s9662
        // Predicated region
        $region45: #{tpu_custom_call.1} parent=39 // pred_check
          %p9664 = pneg %p147
        $region46: #{tpu_custom_call.1} parent=39 // pred_check_branch
          %9666 = sbr.rel (%p9664) target = $region48
        $region47: #{tpu_custom_call.1} parent=39 // pred_region
          %9668 = vsyncadd %s9660, 0
          %s9669 = smul.addr %s19, 24
          %s9670 = smul.addr %s9669, 8
          %s9671 = scalar_lea.hbm %s5, %s9670
          %s9672 = sshll.u32 %s9663, 4
          %s9673 = int_to_ptr.vmem [resolvable:$true] %s9672
          %s9674 = sshll.u32 %s9671, 4
          %s9675 = int_to_ptr.hbm [resolvable:$true] %s9674
          %9680 = dma.vmem_to_hbm [thread:$0]  %s9673, 3072, %s9675, %s9660, 128, 128, 8
        $region48: #{tpu_custom_call.1} parent=39 // pred_fallthru
          _
      $region40: #{tpu_custom_call.1} parent=5 // pred_fallthru
        _
      %p9681 = scmp.le.s32.totalorder 2, %s14
      // Predicated region
      $region49: #{tpu_custom_call.1} parent=5 // pred_check
        %p9682 = pneg %p9681
      $region50: #{tpu_custom_call.1} parent=5 // pred_check_branch
        %9684 = sbr.rel (%p9682) target = $region52
      $region51: #{tpu_custom_call.1} parent=5 // pred_region
        %s9685 = ssub.s32 %s14, 2
        // Predicated region
        $region53: #{tpu_custom_call.1} parent=51 // pred_check
          %p9686 = pneg %p153
        $region54: #{tpu_custom_call.1} parent=51 // pred_check_branch
          %9688 = sbr.rel (%p9686) target = $region56
        $region55: #{tpu_custom_call.1} parent=51 // pred_region
          %s9689 = sand.u32 %s138, 1
          %s9690 = scalar_lea.sflag [#allocation5], %s9689
          %s9691 = sand.u32 %s138, 1
          %s9692 = smul.addr %s9691, 192
          %s9693 = scalar_lea.vmem [#allocation4], %s9692
          %9695 = dma.done %s9690, 3072
        $region56: #{tpu_custom_call.1} parent=51 // pred_fallthru
          _
      $region52: #{tpu_custom_call.1} parent=5 // pred_fallthru
        _
    $region6: #{tpu_custom_call.1} parent=1 // loop_footer
      %s18 = sadd.s32 1, %s14
    $region7: #{tpu_custom_call.1} parent=1 // loop_footer_branch
      %13 = sbr.rel target = $region3
    $region8: #{tpu_custom_call.1} parent=1 // loop_exit
      _
    %9696 = vsyncpa [#allocation5], 1
    %s9697 = scalar_lea.sflag [#allocation5], 1
    %9698 = vsyncpa %s9697, 1

</llo_original>
